<compile_context>
chip_gen: v7x
topology: tpu7x:2x2x1
jax: 0.10.0
libtpu: 0.0.40
codegen_flags: <defaults>
</compile_context>

<pallas_src>
import jax
import jax.numpy as jnp
import numpy as np
from jax.experimental import pallas as pl
from jax.experimental.pallas import tpu as pltpu

# ---- architecture constants implied by the module -----------------------------
L_IN = 241                      # conv path input length (dim = 64*59 forces this)
C1 = 64                         # conv channels
K = 3                           # kernel size
STRIDE = 2
T1 = (L_IN - K) // STRIDE + 1   # 120
T2 = (T1 - K) // STRIDE + 1     # 59
U1 = T1 // 2                    # 60 conv1 outputs per parity (even / odd t)
NPHASE = 5                      # stride-4 phases of x used by the parity-split conv1
FLAT = C1 * T2                  # 3776 = linear1 in_features
HID = 512                       # linear1 out_features


# ---- fused kernel: conv1 (VPU) + conv2 (MXU) + flatten + linear1 (MXU) ---------
def fused_actor_cnn_kernel(xs_ref, w1_ref, b1_ref, w2_ref, b2_ref, wl_ref, bl_ref,
                           o_ref, h2s_ref, flat_ref):
    b1v = b1_ref[...]                                     # (1, 64)
    b2v = b2_ref[...]                                     # (1, 64)
    w10, w11, w12 = w1_ref[0], w1_ref[1], w1_ref[2]       # (1, 64) each
    w20, w21, w22 = w2_ref[0], w2_ref[1], w2_ref[2]       # (64, 64) each
    batch = o_ref.shape[0]                                # static

    for b in range(batch):                                # tiny static unroll
        # conv1 on the VPU: three broadcast FMAs per parity; no K=3 MXU matmul.
        # xs[j, b, u, 0] = x[b, 4u + j]
        p0 = xs_ref[0, b]                                 # (60, 1)
        p1 = xs_ref[1, b]
        p2 = xs_ref[2, b]
        p3 = xs_ref[3, b]
        p4 = xs_ref[4, b]
        h1e = jnp.maximum(p0 * w10 + p1 * w11 + p2 * w12 + b1v, 0.0)  # (60,64) = h1[2u]
        h1o = jnp.maximum(p2 * w10 + p3 * w11 + p4 * w12 + b1v, 0.0)  # (60,64) = h1[2u+1]

        # conv2 as three shifted (60,64)@(64,64) MXU matmuls, f32 accumulate, no im2col.
        g = (jnp.dot(h1e, w20, preferred_element_type=jnp.float32)[:T2]
             + jnp.dot(h1o, w21, preferred_element_type=jnp.float32)[:T2]
             + jnp.dot(h1e, w22, preferred_element_type=jnp.float32)[1:T2 + 1])
        h2s_ref[b] = jnp.maximum(g + b2v, 0.0)            # (59, 64), stays in VMEM

    # flatten time-major into a lane-contiguous (B, 3776) slab via VMEM stores;
    # the channel-major permutation PyTorch's view(B,-1) implies is folded into wl_ref.
    for t in range(T2):
        flat_ref[:, t * C1:(t + 1) * C1] = h2s_ref[:, t, :]

    # linear1 + ReLU: one lane-dense bf16 x bf16 -> f32 MXU matmul.
    flat = flat_ref[...].astype(jnp.bfloat16)             # (B, 3776)
    acc = jnp.dot(flat, wl_ref[...], preferred_element_type=jnp.float32)
    o_ref[...] = jnp.maximum(acc + bl_ref[...], 0.0)


# ---- one-time host-side parameter repack ---------------------------------------
def prepare_params(params):
    w1, b1, w2, b2, wl1, bl1 = params
    w1r = jnp.transpose(w1[:, 0, :], (1, 0))[:, None, :]           # (3, 1, 64): [k, 0, c]
    b1r = b1[None, :]                                              # (1, 64)
    w2r = jnp.transpose(w2, (2, 1, 0))                             # (3, 64, 64): [k, cin, cout]
    b2r = b2[None, :]                                              # (1, 64)
    # Fold PyTorch's channel-major flatten into the weight: row index of wl1p is
    # time-major (t*C1 + c), i.e. wl1p[t*C1 + c, o] == wl1[o, c*T2 + t].
    wl1p = (wl1.reshape(HID, C1, T2).transpose(2, 1, 0)
            .reshape(FLAT, HID).astype(jnp.bfloat16))              # (3776, 512) bf16
    bl1r = bl1[None, :]                                            # (1, 512)
    return (w1r, b1r, w2r, b2r, wl1p, bl1r)


# ---- ActorCNN.forward ----------------------------------------------------------
@jax.jit
def actor_cnn_forward(x, kparams):
    """x: (B, 241) float32 -> latent: (B, 512) float32."""
    w1r, b1r, w2r, b2r, wl1p, bl1r = kparams
    B = x.shape[0]
    # stride-4 phase slices of x (tiny): xs[j, b, u, 0] = x[b, 4u + j], u in [0, 60)
    xs = jnp.stack([x[:, j:j + 4 * (U1 - 1) + 1:4] for j in range(NPHASE)],
                   axis=0)[..., None]                              # (5, B, 60, 1)

    return pl.pallas_call(
        fused_actor_cnn_kernel,
        out_shape=jax.ShapeDtypeStruct((B, HID), jnp.float32),
        grid=(1,),
        in_specs=[
            pl.BlockSpec((NPHASE, B, U1, 1), lambda i: (0, 0, 0, 0)),
            pl.BlockSpec((K, 1, C1), lambda i: (0, 0, 0)),
            pl.BlockSpec((1, C1), lambda i: (0, 0)),
            pl.BlockSpec((K, C1, C1), lambda i: (0, 0, 0)),
            pl.BlockSpec((1, C1), lambda i: (0, 0)),
            pl.BlockSpec((FLAT, HID), lambda i: (0, 0)),
            pl.BlockSpec((1, HID), lambda i: (0, 0)),
        ],
        out_specs=pl.BlockSpec((B, HID), lambda i: (0, 0)),
        scratch_shapes=[
            pltpu.VMEM((B, T2, C1), jnp.float32),   # conv2 output, VMEM-resident only
            pltpu.VMEM((B, FLAT), jnp.float32),     # flattened activations
        ],
        compiler_params=pltpu.CompilerParams(dimension_semantics=("arbitrary",)),
    )(xs, w1r, b1r, w2r, b2r, wl1p, bl1r)


# ---- pure-JAX reference for correctness check ----------------------------------
def reference_forward(x, params):
    w1, b1, w2, b2, wl1, bl1 = params
    h = jax.lax.conv_general_dilated(
        x[:, None, :], w1, window_strides=(STRIDE,), padding="VALID",
        dimension_numbers=("NCH", "OIH", "NCH"))
    h = jnp.maximum(h + b1[None, :, None], 0.0)
    h = jax.lax.conv_general_dilated(
        h, w2, window_strides=(STRIDE,), padding="VALID",
        dimension_numbers=("NCH", "OIH", "NCH"))
    h = jnp.maximum(h + b2[None, :, None], 0.0)
    flat = h.reshape(x.shape[0], -1)
    return jnp.maximum(flat @ wl1.T + bl1, 0.0)


if __name__ == "__main__":
    key = jax.random.PRNGKey(0)
    keys = jax.random.split(key, 7)

    def torch_uniform(k, shape, fan_in):
        bound = 1.0 / float(np.sqrt(fan_in))
        return jax.random.uniform(k, shape, jnp.float32, -bound, bound)

    # deterministic PyTorch-default-style init (shapes from nn.Conv1d / nn.Linear)
    w1 = torch_uniform(keys[0], (C1, 1, K), 1 * K)      # Conv1d(1, 64, 3)
    b1 = torch_uniform(keys[1], (C1,), 1 * K)
    w2 = torch_uniform(keys[2], (C1, C1, K), C1 * K)    # Conv1d(64, 64, 3)
    b2 = torch_uniform(keys[3], (C1,), C1 * K)
    wl1 = torch_uniform(keys[4], (HID, FLAT), FLAT)     # Linear(3776, 512)
    bl1 = torch_uniform(keys[5], (HID,), FLAT)
    params = (w1, b1, w2, b2, wl1, bl1)
    kparams = prepare_params(params)                    # one-time weight repack (bf16 wl1)

    B = 2
    x = jax.random.normal(keys[6], (B, L_IN), jnp.float32)

    latent = jax.block_until_ready(actor_cnn_forward(x, kparams))
    assert latent.shape == (B, HID) and latent.dtype == jnp.float32

    ref = reference_forward(x, params)
    np.testing.assert_allclose(np.asarray(latent), np.asarray(ref),
                               rtol=1e-2, atol=5e-3)
    print("KERNEL_OK")
</pallas_src>

<mosaic_0001>
module attributes {stable_mosaic.version = 11 : i64} {
  func.func @fused_actor_cnn_kernel(%arg0: i32, %arg1: memref<5x2x60x1xf32, #tpu.memory_space<vmem>>, %arg2: memref<3x1x64xf32, #tpu.memory_space<vmem>>, %arg3: memref<1x64xf32, #tpu.memory_space<vmem>>, %arg4: memref<3x64x64xf32, #tpu.memory_space<vmem>>, %arg5: memref<1x64xf32, #tpu.memory_space<vmem>>, %arg6: memref<3776x512xbf16, #tpu.memory_space<vmem>>, %arg7: memref<1x512xf32, #tpu.memory_space<vmem>>, %arg8: memref<2x512xf32, #tpu.memory_space<vmem>>, %arg9: memref<2x59x64xf32, #tpu.memory_space<vmem>>, %arg10: memref<2x3776xf32, #tpu.memory_space<vmem>>) attributes {dimension_semantics = [#tpu.dimension_semantics<arbitrary>], iteration_bounds = array<i64: 1>, scalar_prefetch = 0 : i64, scratch_operands = 2 : i64, tpu.core_type = #tpu.core_type<tc>, window_params = [{pipeline_mode = #tpu.pipeline_mode<synchronous>, transform_indices = @transform_0, window_bounds = array<i64: 5, 2, 60, 1>}, {pipeline_mode = #tpu.pipeline_mode<synchronous>, transform_indices = @transform_1, window_bounds = array<i64: 3, 1, 64>}, {pipeline_mode = #tpu.pipeline_mode<synchronous>, transform_indices = @transform_2, window_bounds = array<i64: 1, 64>}, {pipeline_mode = #tpu.pipeline_mode<synchronous>, transform_indices = @transform_3, window_bounds = array<i64: 3, 64, 64>}, {pipeline_mode = #tpu.pipeline_mode<synchronous>, transform_indices = @transform_4, window_bounds = array<i64: 1, 64>}, {pipeline_mode = #tpu.pipeline_mode<synchronous>, transform_indices = @transform_5, window_bounds = array<i64: 3776, 512>}, {pipeline_mode = #tpu.pipeline_mode<synchronous>, transform_indices = @transform_6, window_bounds = array<i64: 1, 512>}, {pipeline_mode = #tpu.pipeline_mode<synchronous>, transform_indices = @transform_7, window_bounds = array<i64: 2, 512>}]} {
    %c0 = arith.constant 0 : index
    %c0_0 = arith.constant 0 : index
    %0 = vector.load %arg3[%c0, %c0_0] : memref<1x64xf32, #tpu.memory_space<vmem>>, vector<1x64xf32>
    %c0_1 = arith.constant 0 : index
    %c0_2 = arith.constant 0 : index
    %1 = vector.load %arg5[%c0_1, %c0_2] : memref<1x64xf32, #tpu.memory_space<vmem>>, vector<1x64xf32>
    %c0_3 = arith.constant 0 : index
    %c0_4 = arith.constant 0 : index
    %c0_5 = arith.constant 0 : index
    %2 = vector.load %arg2[%c0_3, %c0_4, %c0_5] : memref<3x1x64xf32, #tpu.memory_space<vmem>>, vector<1x1x64xf32>
    %3 = vector.shape_cast %2 : vector<1x1x64xf32> to vector<1x64xf32>
    %c1 = arith.constant 1 : index
    %c0_6 = arith.constant 0 : index
    %c0_7 = arith.constant 0 : index
    %4 = vector.load %arg2[%c1, %c0_6, %c0_7] : memref<3x1x64xf32, #tpu.memory_space<vmem>>, vector<1x1x64xf32>
    %5 = vector.shape_cast %4 : vector<1x1x64xf32> to vector<1x64xf32>
    %c2 = arith.constant 2 : index
    %c0_8 = arith.constant 0 : index
    %c0_9 = arith.constant 0 : index
    %6 = vector.load %arg2[%c2, %c0_8, %c0_9] : memref<3x1x64xf32, #tpu.memory_space<vmem>>, vector<1x1x64xf32>
    %7 = vector.shape_cast %6 : vector<1x1x64xf32> to vector<1x64xf32>
    %c0_10 = arith.constant 0 : index
    %c0_11 = arith.constant 0 : index
    %c0_12 = arith.constant 0 : index
    %8 = vector.load %arg4[%c0_10, %c0_11, %c0_12] : memref<3x64x64xf32, #tpu.memory_space<vmem>>, vector<1x64x64xf32>
    %9 = vector.shape_cast %8 : vector<1x64x64xf32> to vector<64x64xf32>
    %c1_13 = arith.constant 1 : index
    %c0_14 = arith.constant 0 : index
    %c0_15 = arith.constant 0 : index
    %10 = vector.load %arg4[%c1_13, %c0_14, %c0_15] : memref<3x64x64xf32, #tpu.memory_space<vmem>>, vector<1x64x64xf32>
    %11 = vector.shape_cast %10 : vector<1x64x64xf32> to vector<64x64xf32>
    %c2_16 = arith.constant 2 : index
    %c0_17 = arith.constant 0 : index
    %c0_18 = arith.constant 0 : index
    %12 = vector.load %arg4[%c2_16, %c0_17, %c0_18] : memref<3x64x64xf32, #tpu.memory_space<vmem>>, vector<1x64x64xf32>
    %13 = vector.shape_cast %12 : vector<1x64x64xf32> to vector<64x64xf32>
    %c0_19 = arith.constant 0 : index
    %c0_20 = arith.constant 0 : index
    %c0_21 = arith.constant 0 : index
    %c0_22 = arith.constant 0 : index
    %14 = vector.load %arg1[%c0_19, %c0_20, %c0_21, %c0_22] : memref<5x2x60x1xf32, #tpu.memory_space<vmem>>, vector<1x1x60x1xf32>
    %15 = vector.shape_cast %14 : vector<1x1x60x1xf32> to vector<60x1xf32>
    %c1_23 = arith.constant 1 : index
    %c0_24 = arith.constant 0 : index
    %c0_25 = arith.constant 0 : index
    %c0_26 = arith.constant 0 : index
    %16 = vector.load %arg1[%c1_23, %c0_24, %c0_25, %c0_26] : memref<5x2x60x1xf32, #tpu.memory_space<vmem>>, vector<1x1x60x1xf32>
    %17 = vector.shape_cast %16 : vector<1x1x60x1xf32> to vector<60x1xf32>
    %c2_27 = arith.constant 2 : index
    %c0_28 = arith.constant 0 : index
    %c0_29 = arith.constant 0 : index
    %c0_30 = arith.constant 0 : index
    %18 = vector.load %arg1[%c2_27, %c0_28, %c0_29, %c0_30] : memref<5x2x60x1xf32, #tpu.memory_space<vmem>>, vector<1x1x60x1xf32>
    %19 = vector.shape_cast %18 : vector<1x1x60x1xf32> to vector<60x1xf32>
    %c3 = arith.constant 3 : index
    %c0_31 = arith.constant 0 : index
    %c0_32 = arith.constant 0 : index
    %c0_33 = arith.constant 0 : index
    %20 = vector.load %arg1[%c3, %c0_31, %c0_32, %c0_33] : memref<5x2x60x1xf32, #tpu.memory_space<vmem>>, vector<1x1x60x1xf32>
    %21 = vector.shape_cast %20 : vector<1x1x60x1xf32> to vector<60x1xf32>
    %c4 = arith.constant 4 : index
    %c0_34 = arith.constant 0 : index
    %c0_35 = arith.constant 0 : index
    %c0_36 = arith.constant 0 : index
    %22 = vector.load %arg1[%c4, %c0_34, %c0_35, %c0_36] : memref<5x2x60x1xf32, #tpu.memory_space<vmem>>, vector<1x1x60x1xf32>
    %23 = vector.shape_cast %22 : vector<1x1x60x1xf32> to vector<60x1xf32>
    %24 = vector.broadcast %15 : vector<60x1xf32> to vector<60x64xf32>
    %25 = vector.broadcast %3 : vector<1x64xf32> to vector<60x64xf32>
    %26 = arith.mulf %24, %25 : vector<60x64xf32>
    %27 = vector.broadcast %17 : vector<60x1xf32> to vector<60x64xf32>
    %28 = vector.broadcast %5 : vector<1x64xf32> to vector<60x64xf32>
    %29 = arith.mulf %27, %28 : vector<60x64xf32>
    %30 = arith.addf %26, %29 : vector<60x64xf32>
    %31 = vector.broadcast %19 : vector<60x1xf32> to vector<60x64xf32>
    %32 = vector.broadcast %7 : vector<1x64xf32> to vector<60x64xf32>
    %33 = arith.mulf %31, %32 : vector<60x64xf32>
    %34 = arith.addf %30, %33 : vector<60x64xf32>
    %35 = vector.broadcast %0 : vector<1x64xf32> to vector<60x64xf32>
    %36 = arith.addf %34, %35 : vector<60x64xf32>
    %cst = arith.constant 0.000000e+00 : f32
    %37 = vector.broadcast %cst : f32 to vector<60x64xf32>
    %38 = arith.maximumf %36, %37 : vector<60x64xf32>
    %39 = vector.broadcast %19 : vector<60x1xf32> to vector<60x64xf32>
    %40 = vector.broadcast %3 : vector<1x64xf32> to vector<60x64xf32>
    %41 = arith.mulf %39, %40 : vector<60x64xf32>
    %42 = vector.broadcast %21 : vector<60x1xf32> to vector<60x64xf32>
    %43 = vector.broadcast %5 : vector<1x64xf32> to vector<60x64xf32>
    %44 = arith.mulf %42, %43 : vector<60x64xf32>
    %45 = arith.addf %41, %44 : vector<60x64xf32>
    %46 = vector.broadcast %23 : vector<60x1xf32> to vector<60x64xf32>
    %47 = vector.broadcast %7 : vector<1x64xf32> to vector<60x64xf32>
    %48 = arith.mulf %46, %47 : vector<60x64xf32>
    %49 = arith.addf %45, %48 : vector<60x64xf32>
    %50 = vector.broadcast %0 : vector<1x64xf32> to vector<60x64xf32>
    %51 = arith.addf %49, %50 : vector<60x64xf32>
    %cst_37 = arith.constant 0.000000e+00 : f32
    %52 = vector.broadcast %cst_37 : f32 to vector<60x64xf32>
    %53 = arith.maximumf %51, %52 : vector<60x64xf32>
    %cst_38 = arith.constant dense<0.000000e+00> : vector<60x64xf32>
    %54 = tpu.matmul %38, %9, %cst_38 {dimension_numbers = #tpu.dot_dimension_numbers<[1], [0], [0], [1], [0, 0, 1, 1], [], []>} : vector<60x64xf32>, vector<64x64xf32>, vector<60x64xf32> -> vector<60x64xf32>
    %55 = vector.extract_strided_slice %54 {offsets = [0, 0], sizes = [59, 64], strides = [1, 1]} : vector<60x64xf32> to vector<59x64xf32>
    %cst_39 = arith.constant dense<0.000000e+00> : vector<60x64xf32>
    %56 = tpu.matmul %53, %11, %cst_39 {dimension_numbers = #tpu.dot_dimension_numbers<[1], [0], [0], [1], [0, 0, 1, 1], [], []>} : vector<60x64xf32>, vector<64x64xf32>, vector<60x64xf32> -> vector<60x64xf32>
    %57 = vector.extract_strided_slice %56 {offsets = [0, 0], sizes = [59, 64], strides = [1, 1]} : vector<60x64xf32> to vector<59x64xf32>
    %58 = arith.addf %55, %57 : vector<59x64xf32>
    %cst_40 = arith.constant dense<0.000000e+00> : vector<60x64xf32>
    %59 = tpu.matmul %38, %13, %cst_40 {dimension_numbers = #tpu.dot_dimension_numbers<[1], [0], [0], [1], [0, 0, 1, 1], [], []>} : vector<60x64xf32>, vector<64x64xf32>, vector<60x64xf32> -> vector<60x64xf32>
    %60 = vector.extract_strided_slice %59 {offsets = [1, 0], sizes = [59, 64], strides = [1, 1]} : vector<60x64xf32> to vector<59x64xf32>
    %61 = arith.addf %58, %60 : vector<59x64xf32>
    %62 = vector.broadcast %1 : vector<1x64xf32> to vector<59x64xf32>
    %63 = arith.addf %61, %62 : vector<59x64xf32>
    %cst_41 = arith.constant 0.000000e+00 : f32
    %64 = vector.broadcast %cst_41 : f32 to vector<59x64xf32>
    %65 = arith.maximumf %63, %64 : vector<59x64xf32>
    %c0_42 = arith.constant 0 : index
    %c0_43 = arith.constant 0 : index
    %c0_44 = arith.constant 0 : index
    %66 = vector.load %arg9[%c0_42, %c0_43, %c0_44] : memref<2x59x64xf32, #tpu.memory_space<vmem>>, vector<1x59x64xf32>
    %67 = vector.shape_cast %66 : vector<1x59x64xf32> to vector<59x64xf32>
    %68 = vector.shape_cast %65 : vector<59x64xf32> to vector<1x59x64xf32>
    tpu.vector_store %arg9[%c0_42, %c0_43, %c0_44], %68 {strides = array<i32>} : memref<2x59x64xf32, #tpu.memory_space<vmem>>, vector<1x59x64xf32>,
    %c0_45 = arith.constant 0 : index
    %c1_46 = arith.constant 1 : index
    %c0_47 = arith.constant 0 : index
    %c0_48 = arith.constant 0 : index
    %69 = vector.load %arg1[%c0_45, %c1_46, %c0_47, %c0_48] : memref<5x2x60x1xf32, #tpu.memory_space<vmem>>, vector<1x1x60x1xf32>
    %70 = vector.shape_cast %69 : vector<1x1x60x1xf32> to vector<60x1xf32>
    %c1_49 = arith.constant 1 : index
    %c1_50 = arith.constant 1 : index
    %c0_51 = arith.constant 0 : index
    %c0_52 = arith.constant 0 : index
    %71 = vector.load %arg1[%c1_49, %c1_50, %c0_51, %c0_52] : memref<5x2x60x1xf32, #tpu.memory_space<vmem>>, vector<1x1x60x1xf32>
    %72 = vector.shape_cast %71 : vector<1x1x60x1xf32> to vector<60x1xf32>
    %c2_53 = arith.constant 2 : index
    %c1_54 = arith.constant 1 : index
    %c0_55 = arith.constant 0 : index
    %c0_56 = arith.constant 0 : index
    %73 = vector.load %arg1[%c2_53, %c1_54, %c0_55, %c0_56] : memref<5x2x60x1xf32, #tpu.memory_space<vmem>>, vector<1x1x60x1xf32>
    %74 = vector.shape_cast %73 : vector<1x1x60x1xf32> to vector<60x1xf32>
    %c3_57 = arith.constant 3 : index
    %c1_58 = arith.constant 1 : index
    %c0_59 = arith.constant 0 : index
    %c0_60 = arith.constant 0 : index
    %75 = vector.load %arg1[%c3_57, %c1_58, %c0_59, %c0_60] : memref<5x2x60x1xf32, #tpu.memory_space<vmem>>, vector<1x1x60x1xf32>
    %76 = vector.shape_cast %75 : vector<1x1x60x1xf32> to vector<60x1xf32>
    %c4_61 = arith.constant 4 : index
    %c1_62 = arith.constant 1 : index
    %c0_63 = arith.constant 0 : index
    %c0_64 = arith.constant 0 : index
    %77 = vector.load %arg1[%c4_61, %c1_62, %c0_63, %c0_64] : memref<5x2x60x1xf32, #tpu.memory_space<vmem>>, vector<1x1x60x1xf32>
    %78 = vector.shape_cast %77 : vector<1x1x60x1xf32> to vector<60x1xf32>
    %79 = vector.broadcast %70 : vector<60x1xf32> to vector<60x64xf32>
    %80 = vector.broadcast %3 : vector<1x64xf32> to vector<60x64xf32>
    %81 = arith.mulf %79, %80 : vector<60x64xf32>
    %82 = vector.broadcast %72 : vector<60x1xf32> to vector<60x64xf32>
    %83 = vector.broadcast %5 : vector<1x64xf32> to vector<60x64xf32>
    %84 = arith.mulf %82, %83 : vector<60x64xf32>
    %85 = arith.addf %81, %84 : vector<60x64xf32>
    %86 = vector.broadcast %74 : vector<60x1xf32> to vector<60x64xf32>
    %87 = vector.broadcast %7 : vector<1x64xf32> to vector<60x64xf32>
    %88 = arith.mulf %86, %87 : vector<60x64xf32>
    %89 = arith.addf %85, %88 : vector<60x64xf32>
    %90 = vector.broadcast %0 : vector<1x64xf32> to vector<60x64xf32>
    %91 = arith.addf %89, %90 : vector<60x64xf32>
    %cst_65 = arith.constant 0.000000e+00 : f32
    %92 = vector.broadcast %cst_65 : f32 to vector<60x64xf32>
    %93 = arith.maximumf %91, %92 : vector<60x64xf32>
    %94 = vector.broadcast %74 : vector<60x1xf32> to vector<60x64xf32>
    %95 = vector.broadcast %3 : vector<1x64xf32> to vector<60x64xf32>
    %96 = arith.mulf %94, %95 : vector<60x64xf32>
    %97 = vector.broadcast %76 : vector<60x1xf32> to vector<60x64xf32>
    %98 = vector.broadcast %5 : vector<1x64xf32> to vector<60x64xf32>
    %99 = arith.mulf %97, %98 : vector<60x64xf32>
    %100 = arith.addf %96, %99 : vector<60x64xf32>
    %101 = vector.broadcast %78 : vector<60x1xf32> to vector<60x64xf32>
    %102 = vector.broadcast %7 : vector<1x64xf32> to vector<60x64xf32>
    %103 = arith.mulf %101, %102 : vector<60x64xf32>
    %104 = arith.addf %100, %103 : vector<60x64xf32>
    %105 = vector.broadcast %0 : vector<1x64xf32> to vector<60x64xf32>
    %106 = arith.addf %104, %105 : vector<60x64xf32>
    %cst_66 = arith.constant 0.000000e+00 : f32
    %107 = vector.broadcast %cst_66 : f32 to vector<60x64xf32>
    %108 = arith.maximumf %106, %107 : vector<60x64xf32>
    %cst_67 = arith.constant dense<0.000000e+00> : vector<60x64xf32>
    %109 = tpu.matmul %93, %9, %cst_67 {dimension_numbers = #tpu.dot_dimension_numbers<[1], [0], [0], [1], [0, 0, 1, 1], [], []>} : vector<60x64xf32>, vector<64x64xf32>, vector<60x64xf32> -> vector<60x64xf32>
    %110 = vector.extract_strided_slice %109 {offsets = [0, 0], sizes = [59, 64], strides = [1, 1]} : vector<60x64xf32> to vector<59x64xf32>
    %cst_68 = arith.constant dense<0.000000e+00> : vector<60x64xf32>
    %111 = tpu.matmul %108, %11, %cst_68 {dimension_numbers = #tpu.dot_dimension_numbers<[1], [0], [0], [1], [0, 0, 1, 1], [], []>} : vector<60x64xf32>, vector<64x64xf32>, vector<60x64xf32> -> vector<60x64xf32>
    %112 = vector.extract_strided_slice %111 {offsets = [0, 0], sizes = [59, 64], strides = [1, 1]} : vector<60x64xf32> to vector<59x64xf32>
    %113 = arith.addf %110, %112 : vector<59x64xf32>
    %cst_69 = arith.constant dense<0.000000e+00> : vector<60x64xf32>
    %114 = tpu.matmul %93, %13, %cst_69 {dimension_numbers = #tpu.dot_dimension_numbers<[1], [0], [0], [1], [0, 0, 1, 1], [], []>} : vector<60x64xf32>, vector<64x64xf32>, vector<60x64xf32> -> vector<60x64xf32>
    %115 = vector.extract_strided_slice %114 {offsets = [1, 0], sizes = [59, 64], strides = [1, 1]} : vector<60x64xf32> to vector<59x64xf32>
    %116 = arith.addf %113, %115 : vector<59x64xf32>
    %117 = vector.broadcast %1 : vector<1x64xf32> to vector<59x64xf32>
    %118 = arith.addf %116, %117 : vector<59x64xf32>
    %cst_70 = arith.constant 0.000000e+00 : f32
    %119 = vector.broadcast %cst_70 : f32 to vector<59x64xf32>
    %120 = arith.maximumf %118, %119 : vector<59x64xf32>
    %c1_71 = arith.constant 1 : index
    %c0_72 = arith.constant 0 : index
    %c0_73 = arith.constant 0 : index
    %121 = vector.load %arg9[%c1_71, %c0_72, %c0_73] : memref<2x59x64xf32, #tpu.memory_space<vmem>>, vector<1x59x64xf32>
    %122 = vector.shape_cast %121 : vector<1x59x64xf32> to vector<59x64xf32>
    %123 = vector.shape_cast %120 : vector<59x64xf32> to vector<1x59x64xf32>
    tpu.vector_store %arg9[%c1_71, %c0_72, %c0_73], %123 {strides = array<i32>} : memref<2x59x64xf32, #tpu.memory_space<vmem>>, vector<1x59x64xf32>,
    %c0_74 = arith.constant 0 : index
    %c0_75 = arith.constant 0 : index
    %c0_76 = arith.constant 0 : index
    %124 = vector.load %arg9[%c0_74, %c0_75, %c0_76] : memref<2x59x64xf32, #tpu.memory_space<vmem>>, vector<2x1x64xf32>
    %125 = vector.shape_cast %124 : vector<2x1x64xf32> to vector<2x64xf32>
    %c0_77 = arith.constant 0 : index
    %c0_78 = arith.constant 0 : index
    %126 = vector.load %arg10[%c0_77, %c0_78] : memref<2x3776xf32, #tpu.memory_space<vmem>>, vector<2x64xf32>
    tpu.vector_store %arg10[%c0_77, %c0_78], %125 {strides = array<i32>} : memref<2x3776xf32, #tpu.memory_space<vmem>>, vector<2x64xf32>,
    %c0_79 = arith.constant 0 : index
    %c1_80 = arith.constant 1 : index
    %c0_81 = arith.constant 0 : index
    %127 = vector.load %arg9[%c0_79, %c1_80, %c0_81] : memref<2x59x64xf32, #tpu.memory_space<vmem>>, vector<2x1x64xf32>
    %128 = vector.shape_cast %127 : vector<2x1x64xf32> to vector<2x64xf32>
    %c0_82 = arith.constant 0 : index
    %c64 = arith.constant 64 : index
    %129 = vector.load %arg10[%c0_82, %c64] : memref<2x3776xf32, #tpu.memory_space<vmem>>, vector<2x64xf32>
    tpu.vector_store %arg10[%c0_82, %c64], %128 {strides = array<i32>} : memref<2x3776xf32, #tpu.memory_space<vmem>>, vector<2x64xf32>,
    %c0_83 = arith.constant 0 : index
    %c2_84 = arith.constant 2 : index
    %c0_85 = arith.constant 0 : index
    %130 = vector.load %arg9[%c0_83, %c2_84, %c0_85] : memref<2x59x64xf32, #tpu.memory_space<vmem>>, vector<2x1x64xf32>
    %131 = vector.shape_cast %130 : vector<2x1x64xf32> to vector<2x64xf32>
    %c0_86 = arith.constant 0 : index
    %c128 = arith.constant 128 : index
    %132 = vector.load %arg10[%c0_86, %c128] : memref<2x3776xf32, #tpu.memory_space<vmem>>, vector<2x64xf32>
    tpu.vector_store %arg10[%c0_86, %c128], %131 {strides = array<i32>} : memref<2x3776xf32, #tpu.memory_space<vmem>>, vector<2x64xf32>,
    %c0_87 = arith.constant 0 : index
    %c3_88 = arith.constant 3 : index
    %c0_89 = arith.constant 0 : index
    %133 = vector.load %arg9[%c0_87, %c3_88, %c0_89] : memref<2x59x64xf32, #tpu.memory_space<vmem>>, vector<2x1x64xf32>
    %134 = vector.shape_cast %133 : vector<2x1x64xf32> to vector<2x64xf32>
    %c0_90 = arith.constant 0 : index
    %c192 = arith.constant 192 : index
    %135 = vector.load %arg10[%c0_90, %c192] : memref<2x3776xf32, #tpu.memory_space<vmem>>, vector<2x64xf32>
    tpu.vector_store %arg10[%c0_90, %c192], %134 {strides = array<i32>} : memref<2x3776xf32, #tpu.memory_space<vmem>>, vector<2x64xf32>,
    %c0_91 = arith.constant 0 : index
    %c4_92 = arith.constant 4 : index
    %c0_93 = arith.constant 0 : index
    %136 = vector.load %arg9[%c0_91, %c4_92, %c0_93] : memref<2x59x64xf32, #tpu.memory_space<vmem>>, vector<2x1x64xf32>
    %137 = vector.shape_cast %136 : vector<2x1x64xf32> to vector<2x64xf32>
    %c0_94 = arith.constant 0 : index
    %c256 = arith.constant 256 : index
    %138 = vector.load %arg10[%c0_94, %c256] : memref<2x3776xf32, #tpu.memory_space<vmem>>, vector<2x64xf32>
    tpu.vector_store %arg10[%c0_94, %c256], %137 {strides = array<i32>} : memref<2x3776xf32, #tpu.memory_space<vmem>>, vector<2x64xf32>,
    %c0_95 = arith.constant 0 : index
    %c5 = arith.constant 5 : index
    %c0_96 = arith.constant 0 : index
    %139 = vector.load %arg9[%c0_95, %c5, %c0_96] : memref<2x59x64xf32, #tpu.memory_space<vmem>>, vector<2x1x64xf32>
    %140 = vector.shape_cast %139 : vector<2x1x64xf32> to vector<2x64xf32>
    %c0_97 = arith.constant 0 : index
    %c320 = arith.constant 320 : index
    %141 = vector.load %arg10[%c0_97, %c320] : memref<2x3776xf32, #tpu.memory_space<vmem>>, vector<2x64xf32>
    tpu.vector_store %arg10[%c0_97, %c320], %140 {strides = array<i32>} : memref<2x3776xf32, #tpu.memory_space<vmem>>, vector<2x64xf32>,
    %c0_98 = arith.constant 0 : index
    %c6 = arith.constant 6 : index
    %c0_99 = arith.constant 0 : index
    %142 = vector.load %arg9[%c0_98, %c6, %c0_99] : memref<2x59x64xf32, #tpu.memory_space<vmem>>, vector<2x1x64xf32>
    %143 = vector.shape_cast %142 : vector<2x1x64xf32> to vector<2x64xf32>
    %c0_100 = arith.constant 0 : index
    %c384 = arith.constant 384 : index
    %144 = vector.load %arg10[%c0_100, %c384] : memref<2x3776xf32, #tpu.memory_space<vmem>>, vector<2x64xf32>
    tpu.vector_store %arg10[%c0_100, %c384], %143 {strides = array<i32>} : memref<2x3776xf32, #tpu.memory_space<vmem>>, vector<2x64xf32>,
    %c0_101 = arith.constant 0 : index
    %c7 = arith.constant 7 : index
    %c0_102 = arith.constant 0 : index
    %145 = vector.load %arg9[%c0_101, %c7, %c0_102] : memref<2x59x64xf32, #tpu.memory_space<vmem>>, vector<2x1x64xf32>
    %146 = vector.shape_cast %145 : vector<2x1x64xf32> to vector<2x64xf32>
    %c0_103 = arith.constant 0 : index
    %c448 = arith.constant 448 : index
    %147 = vector.load %arg10[%c0_103, %c448] : memref<2x3776xf32, #tpu.memory_space<vmem>>, vector<2x64xf32>
    tpu.vector_store %arg10[%c0_103, %c448], %146 {strides = array<i32>} : memref<2x3776xf32, #tpu.memory_space<vmem>>, vector<2x64xf32>,
    %c0_104 = arith.constant 0 : index
    %c8 = arith.constant 8 : index
    %c0_105 = arith.constant 0 : index
    %148 = vector.load %arg9[%c0_104, %c8, %c0_105] : memref<2x59x64xf32, #tpu.memory_space<vmem>>, vector<2x1x64xf32>
    %149 = vector.shape_cast %148 : vector<2x1x64xf32> to vector<2x64xf32>
    %c0_106 = arith.constant 0 : index
    %c512 = arith.constant 512 : index
    %150 = vector.load %arg10[%c0_106, %c512] : memref<2x3776xf32, #tpu.memory_space<vmem>>, vector<2x64xf32>
    tpu.vector_store %arg10[%c0_106, %c512], %149 {strides = array<i32>} : memref<2x3776xf32, #tpu.memory_space<vmem>>, vector<2x64xf32>,
    %c0_107 = arith.constant 0 : index
    %c9 = arith.constant 9 : index
    %c0_108 = arith.constant 0 : index
    %151 = vector.load %arg9[%c0_107, %c9, %c0_108] : memref<2x59x64xf32, #tpu.memory_space<vmem>>, vector<2x1x64xf32>
    %152 = vector.shape_cast %151 : vector<2x1x64xf32> to vector<2x64xf32>
    %c0_109 = arith.constant 0 : index
    %c576 = arith.constant 576 : index
    %153 = vector.load %arg10[%c0_109, %c576] : memref<2x3776xf32, #tpu.memory_space<vmem>>, vector<2x64xf32>
    tpu.vector_store %arg10[%c0_109, %c576], %152 {strides = array<i32>} : memref<2x3776xf32, #tpu.memory_space<vmem>>, vector<2x64xf32>,
    %c0_110 = arith.constant 0 : index
    %c10 = arith.constant 10 : index
    %c0_111 = arith.constant 0 : index
    %154 = vector.load %arg9[%c0_110, %c10, %c0_111] : memref<2x59x64xf32, #tpu.memory_space<vmem>>, vector<2x1x64xf32>
    %155 = vector.shape_cast %154 : vector<2x1x64xf32> to vector<2x64xf32>
    %c0_112 = arith.constant 0 : index
    %c640 = arith.constant 640 : index
    %156 = vector.load %arg10[%c0_112, %c640] : memref<2x3776xf32, #tpu.memory_space<vmem>>, vector<2x64xf32>
    tpu.vector_store %arg10[%c0_112, %c640], %155 {strides = array<i32>} : memref<2x3776xf32, #tpu.memory_space<vmem>>, vector<2x64xf32>,
    %c0_113 = arith.constant 0 : index
    %c11 = arith.constant 11 : index
    %c0_114 = arith.constant 0 : index
    %157 = vector.load %arg9[%c0_113, %c11, %c0_114] : memref<2x59x64xf32, #tpu.memory_space<vmem>>, vector<2x1x64xf32>
    %158 = vector.shape_cast %157 : vector<2x1x64xf32> to vector<2x64xf32>
    %c0_115 = arith.constant 0 : index
    %c704 = arith.constant 704 : index
    %159 = vector.load %arg10[%c0_115, %c704] : memref<2x3776xf32, #tpu.memory_space<vmem>>, vector<2x64xf32>
    tpu.vector_store %arg10[%c0_115, %c704], %158 {strides = array<i32>} : memref<2x3776xf32, #tpu.memory_space<vmem>>, vector<2x64xf32>,
    %c0_116 = arith.constant 0 : index
    %c12 = arith.constant 12 : index
    %c0_117 = arith.constant 0 : index
    %160 = vector.load %arg9[%c0_116, %c12, %c0_117] : memref<2x59x64xf32, #tpu.memory_space<vmem>>, vector<2x1x64xf32>
    %161 = vector.shape_cast %160 : vector<2x1x64xf32> to vector<2x64xf32>
    %c0_118 = arith.constant 0 : index
    %c768 = arith.constant 768 : index
    %162 = vector.load %arg10[%c0_118, %c768] : memref<2x3776xf32, #tpu.memory_space<vmem>>, vector<2x64xf32>
    tpu.vector_store %arg10[%c0_118, %c768], %161 {strides = array<i32>} : memref<2x3776xf32, #tpu.memory_space<vmem>>, vector<2x64xf32>,
    %c0_119 = arith.constant 0 : index
    %c13 = arith.constant 13 : index
    %c0_120 = arith.constant 0 : index
    %163 = vector.load %arg9[%c0_119, %c13, %c0_120] : memref<2x59x64xf32, #tpu.memory_space<vmem>>, vector<2x1x64xf32>
    %164 = vector.shape_cast %163 : vector<2x1x64xf32> to vector<2x64xf32>
    %c0_121 = arith.constant 0 : index
    %c832 = arith.constant 832 : index
    %165 = vector.load %arg10[%c0_121, %c832] : memref<2x3776xf32, #tpu.memory_space<vmem>>, vector<2x64xf32>
    tpu.vector_store %arg10[%c0_121, %c832], %164 {strides = array<i32>} : memref<2x3776xf32, #tpu.memory_space<vmem>>, vector<2x64xf32>,
    %c0_122 = arith.constant 0 : index
    %c14 = arith.constant 14 : index
    %c0_123 = arith.constant 0 : index
    %166 = vector.load %arg9[%c0_122, %c14, %c0_123] : memref<2x59x64xf32, #tpu.memory_space<vmem>>, vector<2x1x64xf32>
    %167 = vector.shape_cast %166 : vector<2x1x64xf32> to vector<2x64xf32>
    %c0_124 = arith.constant 0 : index
    %c896 = arith.constant 896 : index
    %168 = vector.load %arg10[%c0_124, %c896] : memref<2x3776xf32, #tpu.memory_space<vmem>>, vector<2x64xf32>
    tpu.vector_store %arg10[%c0_124, %c896], %167 {strides = array<i32>} : memref<2x3776xf32, #tpu.memory_space<vmem>>, vector<2x64xf32>,
    %c0_125 = arith.constant 0 : index
    %c15 = arith.constant 15 : index
    %c0_126 = arith.constant 0 : index
    %169 = vector.load %arg9[%c0_125, %c15, %c0_126] : memref<2x59x64xf32, #tpu.memory_space<vmem>>, vector<2x1x64xf32>
    %170 = vector.shape_cast %169 : vector<2x1x64xf32> to vector<2x64xf32>
    %c0_127 = arith.constant 0 : index
    %c960 = arith.constant 960 : index
    %171 = vector.load %arg10[%c0_127, %c960] : memref<2x3776xf32, #tpu.memory_space<vmem>>, vector<2x64xf32>
    tpu.vector_store %arg10[%c0_127, %c960], %170 {strides = array<i32>} : memref<2x3776xf32, #tpu.memory_space<vmem>>, vector<2x64xf32>,
    %c0_128 = arith.constant 0 : index
    %c16 = arith.constant 16 : index
    %c0_129 = arith.constant 0 : index
    %172 = vector.load %arg9[%c0_128, %c16, %c0_129] : memref<2x59x64xf32, #tpu.memory_space<vmem>>, vector<2x1x64xf32>
    %173 = vector.shape_cast %172 : vector<2x1x64xf32> to vector<2x64xf32>
    %c0_130 = arith.constant 0 : index
    %c1024 = arith.constant 1024 : index
    %174 = vector.load %arg10[%c0_130, %c1024] : memref<2x3776xf32, #tpu.memory_space<vmem>>, vector<2x64xf32>
    tpu.vector_store %arg10[%c0_130, %c1024], %173 {strides = array<i32>} : memref<2x3776xf32, #tpu.memory_space<vmem>>, vector<2x64xf32>,
    %c0_131 = arith.constant 0 : index
    %c17 = arith.constant 17 : index
    %c0_132 = arith.constant 0 : index
    %175 = vector.load %arg9[%c0_131, %c17, %c0_132] : memref<2x59x64xf32, #tpu.memory_space<vmem>>, vector<2x1x64xf32>
    %176 = vector.shape_cast %175 : vector<2x1x64xf32> to vector<2x64xf32>
    %c0_133 = arith.constant 0 : index
    %c1088 = arith.constant 1088 : index
    %177 = vector.load %arg10[%c0_133, %c1088] : memref<2x3776xf32, #tpu.memory_space<vmem>>, vector<2x64xf32>
    tpu.vector_store %arg10[%c0_133, %c1088], %176 {strides = array<i32>} : memref<2x3776xf32, #tpu.memory_space<vmem>>, vector<2x64xf32>,
    %c0_134 = arith.constant 0 : index
    %c18 = arith.constant 18 : index
    %c0_135 = arith.constant 0 : index
    %178 = vector.load %arg9[%c0_134, %c18, %c0_135] : memref<2x59x64xf32, #tpu.memory_space<vmem>>, vector<2x1x64xf32>
    %179 = vector.shape_cast %178 : vector<2x1x64xf32> to vector<2x64xf32>
    %c0_136 = arith.constant 0 : index
    %c1152 = arith.constant 1152 : index
    %180 = vector.load %arg10[%c0_136, %c1152] : memref<2x3776xf32, #tpu.memory_space<vmem>>, vector<2x64xf32>
    tpu.vector_store %arg10[%c0_136, %c1152], %179 {strides = array<i32>} : memref<2x3776xf32, #tpu.memory_space<vmem>>, vector<2x64xf32>,
    %c0_137 = arith.constant 0 : index
    %c19 = arith.constant 19 : index
    %c0_138 = arith.constant 0 : index
    %181 = vector.load %arg9[%c0_137, %c19, %c0_138] : memref<2x59x64xf32, #tpu.memory_space<vmem>>, vector<2x1x64xf32>
    %182 = vector.shape_cast %181 : vector<2x1x64xf32> to vector<2x64xf32>
    %c0_139 = arith.constant 0 : index
    %c1216 = arith.constant 1216 : index
    %183 = vector.load %arg10[%c0_139, %c1216] : memref<2x3776xf32, #tpu.memory_space<vmem>>, vector<2x64xf32>
    tpu.vector_store %arg10[%c0_139, %c1216], %182 {strides = array<i32>} : memref<2x3776xf32, #tpu.memory_space<vmem>>, vector<2x64xf32>,
    %c0_140 = arith.constant 0 : index
    %c20 = arith.constant 20 : index
    %c0_141 = arith.constant 0 : index
    %184 = vector.load %arg9[%c0_140, %c20, %c0_141] : memref<2x59x64xf32, #tpu.memory_space<vmem>>, vector<2x1x64xf32>
    %185 = vector.shape_cast %184 : vector<2x1x64xf32> to vector<2x64xf32>
    %c0_142 = arith.constant 0 : index
    %c1280 = arith.constant 1280 : index
    %186 = vector.load %arg10[%c0_142, %c1280] : memref<2x3776xf32, #tpu.memory_space<vmem>>, vector<2x64xf32>
    tpu.vector_store %arg10[%c0_142, %c1280], %185 {strides = array<i32>} : memref<2x3776xf32, #tpu.memory_space<vmem>>, vector<2x64xf32>,
    %c0_143 = arith.constant 0 : index
    %c21 = arith.constant 21 : index
    %c0_144 = arith.constant 0 : index
    %187 = vector.load %arg9[%c0_143, %c21, %c0_144] : memref<2x59x64xf32, #tpu.memory_space<vmem>>, vector<2x1x64xf32>
    %188 = vector.shape_cast %187 : vector<2x1x64xf32> to vector<2x64xf32>
    %c0_145 = arith.constant 0 : index
    %c1344 = arith.constant 1344 : index
    %189 = vector.load %arg10[%c0_145, %c1344] : memref<2x3776xf32, #tpu.memory_space<vmem>>, vector<2x64xf32>
    tpu.vector_store %arg10[%c0_145, %c1344], %188 {strides = array<i32>} : memref<2x3776xf32, #tpu.memory_space<vmem>>, vector<2x64xf32>,
    %c0_146 = arith.constant 0 : index
    %c22 = arith.constant 22 : index
    %c0_147 = arith.constant 0 : index
    %190 = vector.load %arg9[%c0_146, %c22, %c0_147] : memref<2x59x64xf32, #tpu.memory_space<vmem>>, vector<2x1x64xf32>
    %191 = vector.shape_cast %190 : vector<2x1x64xf32> to vector<2x64xf32>
    %c0_148 = arith.constant 0 : index
    %c1408 = arith.constant 1408 : index
    %192 = vector.load %arg10[%c0_148, %c1408] : memref<2x3776xf32, #tpu.memory_space<vmem>>, vector<2x64xf32>
    tpu.vector_store %arg10[%c0_148, %c1408], %191 {strides = array<i32>} : memref<2x3776xf32, #tpu.memory_space<vmem>>, vector<2x64xf32>,
    %c0_149 = arith.constant 0 : index
    %c23 = arith.constant 23 : index
    %c0_150 = arith.constant 0 : index
    %193 = vector.load %arg9[%c0_149, %c23, %c0_150] : memref<2x59x64xf32, #tpu.memory_space<vmem>>, vector<2x1x64xf32>
    %194 = vector.shape_cast %193 : vector<2x1x64xf32> to vector<2x64xf32>
    %c0_151 = arith.constant 0 : index
    %c1472 = arith.constant 1472 : index
    %195 = vector.load %arg10[%c0_151, %c1472] : memref<2x3776xf32, #tpu.memory_space<vmem>>, vector<2x64xf32>
    tpu.vector_store %arg10[%c0_151, %c1472], %194 {strides = array<i32>} : memref<2x3776xf32, #tpu.memory_space<vmem>>, vector<2x64xf32>,
    %c0_152 = arith.constant 0 : index
    %c24 = arith.constant 24 : index
    %c0_153 = arith.constant 0 : index
    %196 = vector.load %arg9[%c0_152, %c24, %c0_153] : memref<2x59x64xf32, #tpu.memory_space<vmem>>, vector<2x1x64xf32>
    %197 = vector.shape_cast %196 : vector<2x1x64xf32> to vector<2x64xf32>
    %c0_154 = arith.constant 0 : index
    %c1536 = arith.constant 1536 : index
    %198 = vector.load %arg10[%c0_154, %c1536] : memref<2x3776xf32, #tpu.memory_space<vmem>>, vector<2x64xf32>
    tpu.vector_store %arg10[%c0_154, %c1536], %197 {strides = array<i32>} : memref<2x3776xf32, #tpu.memory_space<vmem>>, vector<2x64xf32>,
    %c0_155 = arith.constant 0 : index
    %c25 = arith.constant 25 : index
    %c0_156 = arith.constant 0 : index
    %199 = vector.load %arg9[%c0_155, %c25, %c0_156] : memref<2x59x64xf32, #tpu.memory_space<vmem>>, vector<2x1x64xf32>
    %200 = vector.shape_cast %199 : vector<2x1x64xf32> to vector<2x64xf32>
    %c0_157 = arith.constant 0 : index
    %c1600 = arith.constant 1600 : index
    %201 = vector.load %arg10[%c0_157, %c1600] : memref<2x3776xf32, #tpu.memory_space<vmem>>, vector<2x64xf32>
    tpu.vector_store %arg10[%c0_157, %c1600], %200 {strides = array<i32>} : memref<2x3776xf32, #tpu.memory_space<vmem>>, vector<2x64xf32>,
    %c0_158 = arith.constant 0 : index
    %c26 = arith.constant 26 : index
    %c0_159 = arith.constant 0 : index
    %202 = vector.load %arg9[%c0_158, %c26, %c0_159] : memref<2x59x64xf32, #tpu.memory_space<vmem>>, vector<2x1x64xf32>
    %203 = vector.shape_cast %202 : vector<2x1x64xf32> to vector<2x64xf32>
    %c0_160 = arith.constant 0 : index
    %c1664 = arith.constant 1664 : index
    %204 = vector.load %arg10[%c0_160, %c1664] : memref<2x3776xf32, #tpu.memory_space<vmem>>, vector<2x64xf32>
    tpu.vector_store %arg10[%c0_160, %c1664], %203 {strides = array<i32>} : memref<2x3776xf32, #tpu.memory_space<vmem>>, vector<2x64xf32>,
    %c0_161 = arith.constant 0 : index
    %c27 = arith.constant 27 : index
    %c0_162 = arith.constant 0 : index
    %205 = vector.load %arg9[%c0_161, %c27, %c0_162] : memref<2x59x64xf32, #tpu.memory_space<vmem>>, vector<2x1x64xf32>
    %206 = vector.shape_cast %205 : vector<2x1x64xf32> to vector<2x64xf32>
    %c0_163 = arith.constant 0 : index
    %c1728 = arith.constant 1728 : index
    %207 = vector.load %arg10[%c0_163, %c1728] : memref<2x3776xf32, #tpu.memory_space<vmem>>, vector<2x64xf32>
    tpu.vector_store %arg10[%c0_163, %c1728], %206 {strides = array<i32>} : memref<2x3776xf32, #tpu.memory_space<vmem>>, vector<2x64xf32>,
    %c0_164 = arith.constant 0 : index
    %c28 = arith.constant 28 : index
    %c0_165 = arith.constant 0 : index
    %208 = vector.load %arg9[%c0_164, %c28, %c0_165] : memref<2x59x64xf32, #tpu.memory_space<vmem>>, vector<2x1x64xf32>
    %209 = vector.shape_cast %208 : vector<2x1x64xf32> to vector<2x64xf32>
    %c0_166 = arith.constant 0 : index
    %c1792 = arith.constant 1792 : index
    %210 = vector.load %arg10[%c0_166, %c1792] : memref<2x3776xf32, #tpu.memory_space<vmem>>, vector<2x64xf32>
    tpu.vector_store %arg10[%c0_166, %c1792], %209 {strides = array<i32>} : memref<2x3776xf32, #tpu.memory_space<vmem>>, vector<2x64xf32>,
    %c0_167 = arith.constant 0 : index
    %c29 = arith.constant 29 : index
    %c0_168 = arith.constant 0 : index
    %211 = vector.load %arg9[%c0_167, %c29, %c0_168] : memref<2x59x64xf32, #tpu.memory_space<vmem>>, vector<2x1x64xf32>
    %212 = vector.shape_cast %211 : vector<2x1x64xf32> to vector<2x64xf32>
    %c0_169 = arith.constant 0 : index
    %c1856 = arith.constant 1856 : index
    %213 = vector.load %arg10[%c0_169, %c1856] : memref<2x3776xf32, #tpu.memory_space<vmem>>, vector<2x64xf32>
    tpu.vector_store %arg10[%c0_169, %c1856], %212 {strides = array<i32>} : memref<2x3776xf32, #tpu.memory_space<vmem>>, vector<2x64xf32>,
    %c0_170 = arith.constant 0 : index
    %c30 = arith.constant 30 : index
    %c0_171 = arith.constant 0 : index
    %214 = vector.load %arg9[%c0_170, %c30, %c0_171] : memref<2x59x64xf32, #tpu.memory_space<vmem>>, vector<2x1x64xf32>
    %215 = vector.shape_cast %214 : vector<2x1x64xf32> to vector<2x64xf32>
    %c0_172 = arith.constant 0 : index
    %c1920 = arith.constant 1920 : index
    %216 = vector.load %arg10[%c0_172, %c1920] : memref<2x3776xf32, #tpu.memory_space<vmem>>, vector<2x64xf32>
    tpu.vector_store %arg10[%c0_172, %c1920], %215 {strides = array<i32>} : memref<2x3776xf32, #tpu.memory_space<vmem>>, vector<2x64xf32>,
    %c0_173 = arith.constant 0 : index
    %c31 = arith.constant 31 : index
    %c0_174 = arith.constant 0 : index
    %217 = vector.load %arg9[%c0_173, %c31, %c0_174] : memref<2x59x64xf32, #tpu.memory_space<vmem>>, vector<2x1x64xf32>
    %218 = vector.shape_cast %217 : vector<2x1x64xf32> to vector<2x64xf32>
    %c0_175 = arith.constant 0 : index
    %c1984 = arith.constant 1984 : index
    %219 = vector.load %arg10[%c0_175, %c1984] : memref<2x3776xf32, #tpu.memory_space<vmem>>, vector<2x64xf32>
    tpu.vector_store %arg10[%c0_175, %c1984], %218 {strides = array<i32>} : memref<2x3776xf32, #tpu.memory_space<vmem>>, vector<2x64xf32>,
    %c0_176 = arith.constant 0 : index
    %c32 = arith.constant 32 : index
    %c0_177 = arith.constant 0 : index
    %220 = vector.load %arg9[%c0_176, %c32, %c0_177] : memref<2x59x64xf32, #tpu.memory_space<vmem>>, vector<2x1x64xf32>
    %221 = vector.shape_cast %220 : vector<2x1x64xf32> to vector<2x64xf32>
    %c0_178 = arith.constant 0 : index
    %c2048 = arith.constant 2048 : index
    %222 = vector.load %arg10[%c0_178, %c2048] : memref<2x3776xf32, #tpu.memory_space<vmem>>, vector<2x64xf32>
    tpu.vector_store %arg10[%c0_178, %c2048], %221 {strides = array<i32>} : memref<2x3776xf32, #tpu.memory_space<vmem>>, vector<2x64xf32>,
    %c0_179 = arith.constant 0 : index
    %c33 = arith.constant 33 : index
    %c0_180 = arith.constant 0 : index
    %223 = vector.load %arg9[%c0_179, %c33, %c0_180] : memref<2x59x64xf32, #tpu.memory_space<vmem>>, vector<2x1x64xf32>
    %224 = vector.shape_cast %223 : vector<2x1x64xf32> to vector<2x64xf32>
    %c0_181 = arith.constant 0 : index
    %c2112 = arith.constant 2112 : index
    %225 = vector.load %arg10[%c0_181, %c2112] : memref<2x3776xf32, #tpu.memory_space<vmem>>, vector<2x64xf32>
    tpu.vector_store %arg10[%c0_181, %c2112], %224 {strides = array<i32>} : memref<2x3776xf32, #tpu.memory_space<vmem>>, vector<2x64xf32>,
    %c0_182 = arith.constant 0 : index
    %c34 = arith.constant 34 : index
    %c0_183 = arith.constant 0 : index
    %226 = vector.load %arg9[%c0_182, %c34, %c0_183] : memref<2x59x64xf32, #tpu.memory_space<vmem>>, vector<2x1x64xf32>
    %227 = vector.shape_cast %226 : vector<2x1x64xf32> to vector<2x64xf32>
    %c0_184 = arith.constant 0 : index
    %c2176 = arith.constant 2176 : index
    %228 = vector.load %arg10[%c0_184, %c2176] : memref<2x3776xf32, #tpu.memory_space<vmem>>, vector<2x64xf32>
    tpu.vector_store %arg10[%c0_184, %c2176], %227 {strides = array<i32>} : memref<2x3776xf32, #tpu.memory_space<vmem>>, vector<2x64xf32>,
    %c0_185 = arith.constant 0 : index
    %c35 = arith.constant 35 : index
    %c0_186 = arith.constant 0 : index
    %229 = vector.load %arg9[%c0_185, %c35, %c0_186] : memref<2x59x64xf32, #tpu.memory_space<vmem>>, vector<2x1x64xf32>
    %230 = vector.shape_cast %229 : vector<2x1x64xf32> to vector<2x64xf32>
    %c0_187 = arith.constant 0 : index
    %c2240 = arith.constant 2240 : index
    %231 = vector.load %arg10[%c0_187, %c2240] : memref<2x3776xf32, #tpu.memory_space<vmem>>, vector<2x64xf32>
    tpu.vector_store %arg10[%c0_187, %c2240], %230 {strides = array<i32>} : memref<2x3776xf32, #tpu.memory_space<vmem>>, vector<2x64xf32>,
    %c0_188 = arith.constant 0 : index
    %c36 = arith.constant 36 : index
    %c0_189 = arith.constant 0 : index
    %232 = vector.load %arg9[%c0_188, %c36, %c0_189] : memref<2x59x64xf32, #tpu.memory_space<vmem>>, vector<2x1x64xf32>
    %233 = vector.shape_cast %232 : vector<2x1x64xf32> to vector<2x64xf32>
    %c0_190 = arith.constant 0 : index
    %c2304 = arith.constant 2304 : index
    %234 = vector.load %arg10[%c0_190, %c2304] : memref<2x3776xf32, #tpu.memory_space<vmem>>, vector<2x64xf32>
    tpu.vector_store %arg10[%c0_190, %c2304], %233 {strides = array<i32>} : memref<2x3776xf32, #tpu.memory_space<vmem>>, vector<2x64xf32>,
    %c0_191 = arith.constant 0 : index
    %c37 = arith.constant 37 : index
    %c0_192 = arith.constant 0 : index
    %235 = vector.load %arg9[%c0_191, %c37, %c0_192] : memref<2x59x64xf32, #tpu.memory_space<vmem>>, vector<2x1x64xf32>
    %236 = vector.shape_cast %235 : vector<2x1x64xf32> to vector<2x64xf32>
    %c0_193 = arith.constant 0 : index
    %c2368 = arith.constant 2368 : index
    %237 = vector.load %arg10[%c0_193, %c2368] : memref<2x3776xf32, #tpu.memory_space<vmem>>, vector<2x64xf32>
    tpu.vector_store %arg10[%c0_193, %c2368], %236 {strides = array<i32>} : memref<2x3776xf32, #tpu.memory_space<vmem>>, vector<2x64xf32>,
    %c0_194 = arith.constant 0 : index
    %c38 = arith.constant 38 : index
    %c0_195 = arith.constant 0 : index
    %238 = vector.load %arg9[%c0_194, %c38, %c0_195] : memref<2x59x64xf32, #tpu.memory_space<vmem>>, vector<2x1x64xf32>
    %239 = vector.shape_cast %238 : vector<2x1x64xf32> to vector<2x64xf32>
    %c0_196 = arith.constant 0 : index
    %c2432 = arith.constant 2432 : index
    %240 = vector.load %arg10[%c0_196, %c2432] : memref<2x3776xf32, #tpu.memory_space<vmem>>, vector<2x64xf32>
    tpu.vector_store %arg10[%c0_196, %c2432], %239 {strides = array<i32>} : memref<2x3776xf32, #tpu.memory_space<vmem>>, vector<2x64xf32>,
    %c0_197 = arith.constant 0 : index
    %c39 = arith.constant 39 : index
    %c0_198 = arith.constant 0 : index
    %241 = vector.load %arg9[%c0_197, %c39, %c0_198] : memref<2x59x64xf32, #tpu.memory_space<vmem>>, vector<2x1x64xf32>
    %242 = vector.shape_cast %241 : vector<2x1x64xf32> to vector<2x64xf32>
    %c0_199 = arith.constant 0 : index
    %c2496 = arith.constant 2496 : index
    %243 = vector.load %arg10[%c0_199, %c2496] : memref<2x3776xf32, #tpu.memory_space<vmem>>, vector<2x64xf32>
    tpu.vector_store %arg10[%c0_199, %c2496], %242 {strides = array<i32>} : memref<2x3776xf32, #tpu.memory_space<vmem>>, vector<2x64xf32>,
    %c0_200 = arith.constant 0 : index
    %c40 = arith.constant 40 : index
    %c0_201 = arith.constant 0 : index
    %244 = vector.load %arg9[%c0_200, %c40, %c0_201] : memref<2x59x64xf32, #tpu.memory_space<vmem>>, vector<2x1x64xf32>
    %245 = vector.shape_cast %244 : vector<2x1x64xf32> to vector<2x64xf32>
    %c0_202 = arith.constant 0 : index
    %c2560 = arith.constant 2560 : index
    %246 = vector.load %arg10[%c0_202, %c2560] : memref<2x3776xf32, #tpu.memory_space<vmem>>, vector<2x64xf32>
    tpu.vector_store %arg10[%c0_202, %c2560], %245 {strides = array<i32>} : memref<2x3776xf32, #tpu.memory_space<vmem>>, vector<2x64xf32>,
    %c0_203 = arith.constant 0 : index
    %c41 = arith.constant 41 : index
    %c0_204 = arith.constant 0 : index
    %247 = vector.load %arg9[%c0_203, %c41, %c0_204] : memref<2x59x64xf32, #tpu.memory_space<vmem>>, vector<2x1x64xf32>
    %248 = vector.shape_cast %247 : vector<2x1x64xf32> to vector<2x64xf32>
    %c0_205 = arith.constant 0 : index
    %c2624 = arith.constant 2624 : index
    %249 = vector.load %arg10[%c0_205, %c2624] : memref<2x3776xf32, #tpu.memory_space<vmem>>, vector<2x64xf32>
    tpu.vector_store %arg10[%c0_205, %c2624], %248 {strides = array<i32>} : memref<2x3776xf32, #tpu.memory_space<vmem>>, vector<2x64xf32>,
    %c0_206 = arith.constant 0 : index
    %c42 = arith.constant 42 : index
    %c0_207 = arith.constant 0 : index
    %250 = vector.load %arg9[%c0_206, %c42, %c0_207] : memref<2x59x64xf32, #tpu.memory_space<vmem>>, vector<2x1x64xf32>
    %251 = vector.shape_cast %250 : vector<2x1x64xf32> to vector<2x64xf32>
    %c0_208 = arith.constant 0 : index
    %c2688 = arith.constant 2688 : index
    %252 = vector.load %arg10[%c0_208, %c2688] : memref<2x3776xf32, #tpu.memory_space<vmem>>, vector<2x64xf32>
    tpu.vector_store %arg10[%c0_208, %c2688], %251 {strides = array<i32>} : memref<2x3776xf32, #tpu.memory_space<vmem>>, vector<2x64xf32>,
    %c0_209 = arith.constant 0 : index
    %c43 = arith.constant 43 : index
    %c0_210 = arith.constant 0 : index
    %253 = vector.load %arg9[%c0_209, %c43, %c0_210] : memref<2x59x64xf32, #tpu.memory_space<vmem>>, vector<2x1x64xf32>
    %254 = vector.shape_cast %253 : vector<2x1x64xf32> to vector<2x64xf32>
    %c0_211 = arith.constant 0 : index
    %c2752 = arith.constant 2752 : index
    %255 = vector.load %arg10[%c0_211, %c2752] : memref<2x3776xf32, #tpu.memory_space<vmem>>, vector<2x64xf32>
    tpu.vector_store %arg10[%c0_211, %c2752], %254 {strides = array<i32>} : memref<2x3776xf32, #tpu.memory_space<vmem>>, vector<2x64xf32>,
    %c0_212 = arith.constant 0 : index
    %c44 = arith.constant 44 : index
    %c0_213 = arith.constant 0 : index
    %256 = vector.load %arg9[%c0_212, %c44, %c0_213] : memref<2x59x64xf32, #tpu.memory_space<vmem>>, vector<2x1x64xf32>
    %257 = vector.shape_cast %256 : vector<2x1x64xf32> to vector<2x64xf32>
    %c0_214 = arith.constant 0 : index
    %c2816 = arith.constant 2816 : index
    %258 = vector.load %arg10[%c0_214, %c2816] : memref<2x3776xf32, #tpu.memory_space<vmem>>, vector<2x64xf32>
    tpu.vector_store %arg10[%c0_214, %c2816], %257 {strides = array<i32>} : memref<2x3776xf32, #tpu.memory_space<vmem>>, vector<2x64xf32>,
    %c0_215 = arith.constant 0 : index
    %c45 = arith.constant 45 : index
    %c0_216 = arith.constant 0 : index
    %259 = vector.load %arg9[%c0_215, %c45, %c0_216] : memref<2x59x64xf32, #tpu.memory_space<vmem>>, vector<2x1x64xf32>
    %260 = vector.shape_cast %259 : vector<2x1x64xf32> to vector<2x64xf32>
    %c0_217 = arith.constant 0 : index
    %c2880 = arith.constant 2880 : index
    %261 = vector.load %arg10[%c0_217, %c2880] : memref<2x3776xf32, #tpu.memory_space<vmem>>, vector<2x64xf32>
    tpu.vector_store %arg10[%c0_217, %c2880], %260 {strides = array<i32>} : memref<2x3776xf32, #tpu.memory_space<vmem>>, vector<2x64xf32>,
    %c0_218 = arith.constant 0 : index
    %c46 = arith.constant 46 : index
    %c0_219 = arith.constant 0 : index
    %262 = vector.load %arg9[%c0_218, %c46, %c0_219] : memref<2x59x64xf32, #tpu.memory_space<vmem>>, vector<2x1x64xf32>
    %263 = vector.shape_cast %262 : vector<2x1x64xf32> to vector<2x64xf32>
    %c0_220 = arith.constant 0 : index
    %c2944 = arith.constant 2944 : index
    %264 = vector.load %arg10[%c0_220, %c2944] : memref<2x3776xf32, #tpu.memory_space<vmem>>, vector<2x64xf32>
    tpu.vector_store %arg10[%c0_220, %c2944], %263 {strides = array<i32>} : memref<2x3776xf32, #tpu.memory_space<vmem>>, vector<2x64xf32>,
    %c0_221 = arith.constant 0 : index
    %c47 = arith.constant 47 : index
    %c0_222 = arith.constant 0 : index
    %265 = vector.load %arg9[%c0_221, %c47, %c0_222] : memref<2x59x64xf32, #tpu.memory_space<vmem>>, vector<2x1x64xf32>
    %266 = vector.shape_cast %265 : vector<2x1x64xf32> to vector<2x64xf32>
    %c0_223 = arith.constant 0 : index
    %c3008 = arith.constant 3008 : index
    %267 = vector.load %arg10[%c0_223, %c3008] : memref<2x3776xf32, #tpu.memory_space<vmem>>, vector<2x64xf32>
    tpu.vector_store %arg10[%c0_223, %c3008], %266 {strides = array<i32>} : memref<2x3776xf32, #tpu.memory_space<vmem>>, vector<2x64xf32>,
    %c0_224 = arith.constant 0 : index
    %c48 = arith.constant 48 : index
    %c0_225 = arith.constant 0 : index
    %268 = vector.load %arg9[%c0_224, %c48, %c0_225] : memref<2x59x64xf32, #tpu.memory_space<vmem>>, vector<2x1x64xf32>
    %269 = vector.shape_cast %268 : vector<2x1x64xf32> to vector<2x64xf32>
    %c0_226 = arith.constant 0 : index
    %c3072 = arith.constant 3072 : index
    %270 = vector.load %arg10[%c0_226, %c3072] : memref<2x3776xf32, #tpu.memory_space<vmem>>, vector<2x64xf32>
    tpu.vector_store %arg10[%c0_226, %c3072], %269 {strides = array<i32>} : memref<2x3776xf32, #tpu.memory_space<vmem>>, vector<2x64xf32>,
    %c0_227 = arith.constant 0 : index
    %c49 = arith.constant 49 : index
    %c0_228 = arith.constant 0 : index
    %271 = vector.load %arg9[%c0_227, %c49, %c0_228] : memref<2x59x64xf32, #tpu.memory_space<vmem>>, vector<2x1x64xf32>
    %272 = vector.shape_cast %271 : vector<2x1x64xf32> to vector<2x64xf32>
    %c0_229 = arith.constant 0 : index
    %c3136 = arith.constant 3136 : index
    %273 = vector.load %arg10[%c0_229, %c3136] : memref<2x3776xf32, #tpu.memory_space<vmem>>, vector<2x64xf32>
    tpu.vector_store %arg10[%c0_229, %c3136], %272 {strides = array<i32>} : memref<2x3776xf32, #tpu.memory_space<vmem>>, vector<2x64xf32>,
    %c0_230 = arith.constant 0 : index
    %c50 = arith.constant 50 : index
    %c0_231 = arith.constant 0 : index
    %274 = vector.load %arg9[%c0_230, %c50, %c0_231] : memref<2x59x64xf32, #tpu.memory_space<vmem>>, vector<2x1x64xf32>
    %275 = vector.shape_cast %274 : vector<2x1x64xf32> to vector<2x64xf32>
    %c0_232 = arith.constant 0 : index
    %c3200 = arith.constant 3200 : index
    %276 = vector.load %arg10[%c0_232, %c3200] : memref<2x3776xf32, #tpu.memory_space<vmem>>, vector<2x64xf32>
    tpu.vector_store %arg10[%c0_232, %c3200], %275 {strides = array<i32>} : memref<2x3776xf32, #tpu.memory_space<vmem>>, vector<2x64xf32>,
    %c0_233 = arith.constant 0 : index
    %c51 = arith.constant 51 : index
    %c0_234 = arith.constant 0 : index
    %277 = vector.load %arg9[%c0_233, %c51, %c0_234] : memref<2x59x64xf32, #tpu.memory_space<vmem>>, vector<2x1x64xf32>
    %278 = vector.shape_cast %277 : vector<2x1x64xf32> to vector<2x64xf32>
    %c0_235 = arith.constant 0 : index
    %c3264 = arith.constant 3264 : index
    %279 = vector.load %arg10[%c0_235, %c3264] : memref<2x3776xf32, #tpu.memory_space<vmem>>, vector<2x64xf32>
    tpu.vector_store %arg10[%c0_235, %c3264], %278 {strides = array<i32>} : memref<2x3776xf32, #tpu.memory_space<vmem>>, vector<2x64xf32>,
    %c0_236 = arith.constant 0 : index
    %c52 = arith.constant 52 : index
    %c0_237 = arith.constant 0 : index
    %280 = vector.load %arg9[%c0_236, %c52, %c0_237] : memref<2x59x64xf32, #tpu.memory_space<vmem>>, vector<2x1x64xf32>
    %281 = vector.shape_cast %280 : vector<2x1x64xf32> to vector<2x64xf32>
    %c0_238 = arith.constant 0 : index
    %c3328 = arith.constant 3328 : index
    %282 = vector.load %arg10[%c0_238, %c3328] : memref<2x3776xf32, #tpu.memory_space<vmem>>, vector<2x64xf32>
    tpu.vector_store %arg10[%c0_238, %c3328], %281 {strides = array<i32>} : memref<2x3776xf32, #tpu.memory_space<vmem>>, vector<2x64xf32>,
    %c0_239 = arith.constant 0 : index
    %c53 = arith.constant 53 : index
    %c0_240 = arith.constant 0 : index
    %283 = vector.load %arg9[%c0_239, %c53, %c0_240] : memref<2x59x64xf32, #tpu.memory_space<vmem>>, vector<2x1x64xf32>
    %284 = vector.shape_cast %283 : vector<2x1x64xf32> to vector<2x64xf32>
    %c0_241 = arith.constant 0 : index
    %c3392 = arith.constant 3392 : index
    %285 = vector.load %arg10[%c0_241, %c3392] : memref<2x3776xf32, #tpu.memory_space<vmem>>, vector<2x64xf32>
    tpu.vector_store %arg10[%c0_241, %c3392], %284 {strides = array<i32>} : memref<2x3776xf32, #tpu.memory_space<vmem>>, vector<2x64xf32>,
    %c0_242 = arith.constant 0 : index
    %c54 = arith.constant 54 : index
    %c0_243 = arith.constant 0 : index
    %286 = vector.load %arg9[%c0_242, %c54, %c0_243] : memref<2x59x64xf32, #tpu.memory_space<vmem>>, vector<2x1x64xf32>
    %287 = vector.shape_cast %286 : vector<2x1x64xf32> to vector<2x64xf32>
    %c0_244 = arith.constant 0 : index
    %c3456 = arith.constant 3456 : index
    %288 = vector.load %arg10[%c0_244, %c3456] : memref<2x3776xf32, #tpu.memory_space<vmem>>, vector<2x64xf32>
    tpu.vector_store %arg10[%c0_244, %c3456], %287 {strides = array<i32>} : memref<2x3776xf32, #tpu.memory_space<vmem>>, vector<2x64xf32>,
    %c0_245 = arith.constant 0 : index
    %c55 = arith.constant 55 : index
    %c0_246 = arith.constant 0 : index
    %289 = vector.load %arg9[%c0_245, %c55, %c0_246] : memref<2x59x64xf32, #tpu.memory_space<vmem>>, vector<2x1x64xf32>
    %290 = vector.shape_cast %289 : vector<2x1x64xf32> to vector<2x64xf32>
    %c0_247 = arith.constant 0 : index
    %c3520 = arith.constant 3520 : index
    %291 = vector.load %arg10[%c0_247, %c3520] : memref<2x3776xf32, #tpu.memory_space<vmem>>, vector<2x64xf32>
    tpu.vector_store %arg10[%c0_247, %c3520], %290 {strides = array<i32>} : memref<2x3776xf32, #tpu.memory_space<vmem>>, vector<2x64xf32>,
    %c0_248 = arith.constant 0 : index
    %c56 = arith.constant 56 : index
    %c0_249 = arith.constant 0 : index
    %292 = vector.load %arg9[%c0_248, %c56, %c0_249] : memref<2x59x64xf32, #tpu.memory_space<vmem>>, vector<2x1x64xf32>
    %293 = vector.shape_cast %292 : vector<2x1x64xf32> to vector<2x64xf32>
    %c0_250 = arith.constant 0 : index
    %c3584 = arith.constant 3584 : index
    %294 = vector.load %arg10[%c0_250, %c3584] : memref<2x3776xf32, #tpu.memory_space<vmem>>, vector<2x64xf32>
    tpu.vector_store %arg10[%c0_250, %c3584], %293 {strides = array<i32>} : memref<2x3776xf32, #tpu.memory_space<vmem>>, vector<2x64xf32>,
    %c0_251 = arith.constant 0 : index
    %c57 = arith.constant 57 : index
    %c0_252 = arith.constant 0 : index
    %295 = vector.load %arg9[%c0_251, %c57, %c0_252] : memref<2x59x64xf32, #tpu.memory_space<vmem>>, vector<2x1x64xf32>
    %296 = vector.shape_cast %295 : vector<2x1x64xf32> to vector<2x64xf32>
    %c0_253 = arith.constant 0 : index
    %c3648 = arith.constant 3648 : index
    %297 = vector.load %arg10[%c0_253, %c3648] : memref<2x3776xf32, #tpu.memory_space<vmem>>, vector<2x64xf32>
    tpu.vector_store %arg10[%c0_253, %c3648], %296 {strides = array<i32>} : memref<2x3776xf32, #tpu.memory_space<vmem>>, vector<2x64xf32>,
    %c0_254 = arith.constant 0 : index
    %c58 = arith.constant 58 : index
    %c0_255 = arith.constant 0 : index
    %298 = vector.load %arg9[%c0_254, %c58, %c0_255] : memref<2x59x64xf32, #tpu.memory_space<vmem>>, vector<2x1x64xf32>
    %299 = vector.shape_cast %298 : vector<2x1x64xf32> to vector<2x64xf32>
    %c0_256 = arith.constant 0 : index
    %c3712 = arith.constant 3712 : index
    %300 = vector.load %arg10[%c0_256, %c3712] : memref<2x3776xf32, #tpu.memory_space<vmem>>, vector<2x64xf32>
    tpu.vector_store %arg10[%c0_256, %c3712], %299 {strides = array<i32>} : memref<2x3776xf32, #tpu.memory_space<vmem>>, vector<2x64xf32>,
    %c0_257 = arith.constant 0 : index
    %c0_258 = arith.constant 0 : index
    %301 = vector.load %arg10[%c0_257, %c0_258] : memref<2x3776xf32, #tpu.memory_space<vmem>>, vector<2x3776xf32>
    %302 = arith.truncf %301 : vector<2x3776xf32> to vector<2x3776xbf16>
    %c0_259 = arith.constant 0 : index
    %c0_260 = arith.constant 0 : index
    %303 = vector.load %arg6[%c0_259, %c0_260] : memref<3776x512xbf16, #tpu.memory_space<vmem>>, vector<3776x512xbf16>
    %cst_261 = arith.constant dense<0.000000e+00> : vector<2x512xf32>
    %304 = tpu.matmul %302, %303, %cst_261 {dimension_numbers = #tpu.dot_dimension_numbers<[1], [0], [0], [1], [0, 0, 1, 1], [], []>} : vector<2x3776xbf16>, vector<3776x512xbf16>, vector<2x512xf32> -> vector<2x512xf32>
    %c0_262 = arith.constant 0 : index
    %c0_263 = arith.constant 0 : index
    %305 = vector.load %arg7[%c0_262, %c0_263] : memref<1x512xf32, #tpu.memory_space<vmem>>, vector<1x512xf32>
    %306 = vector.broadcast %305 : vector<1x512xf32> to vector<2x512xf32>
    %307 = arith.addf %304, %306 : vector<2x512xf32>
    %cst_264 = arith.constant 0.000000e+00 : f32
    %308 = vector.broadcast %cst_264 : f32 to vector<2x512xf32>
    %309 = arith.maximumf %307, %308 : vector<2x512xf32>
    %c0_265 = arith.constant 0 : index
    %c0_266 = arith.constant 0 : index
    %310 = vector.load %arg8[%c0_265, %c0_266] : memref<2x512xf32, #tpu.memory_space<vmem>>, vector<2x512xf32>
    tpu.vector_store %arg8[%c0_265, %c0_266], %309 {strides = array<i32>} : memref<2x512xf32, #tpu.memory_space<vmem>>, vector<2x512xf32>,
    return
  }
  func.func @transform_0(%arg0: i32) -> (i32, i32, i32, i32) {
    %c0_i32 = arith.constant 0 : i32
    %c0_i32_0 = arith.constant 0 : i32
    %c0_i32_1 = arith.constant 0 : i32
    %c0_i32_2 = arith.constant 0 : i32
    %c0_i32_3 = arith.constant 0 : i32
    return %c0_i32, %c0_i32_0, %c0_i32_1, %c0_i32_2 : i32, i32, i32, i32
  }
  func.func @transform_1(%arg0: i32) -> (i32, i32, i32) {
    %c0_i32 = arith.constant 0 : i32
    %c0_i32_0 = arith.constant 0 : i32
    %c0_i32_1 = arith.constant 0 : i32
    %c0_i32_2 = arith.constant 0 : i32
    return %c0_i32, %c0_i32_0, %c0_i32_1 : i32, i32, i32
  }
  func.func @transform_2(%arg0: i32) -> (i32, i32) {
    %c0_i32 = arith.constant 0 : i32
    %c0_i32_0 = arith.constant 0 : i32
    %c0_i32_1 = arith.constant 0 : i32
    return %c0_i32, %c0_i32_0 : i32, i32
  }
  func.func @transform_3(%arg0: i32) -> (i32, i32, i32) {
    %c0_i32 = arith.constant 0 : i32
    %c0_i32_0 = arith.constant 0 : i32
    %c0_i32_1 = arith.constant 0 : i32
    %c0_i32_2 = arith.constant 0 : i32
    return %c0_i32, %c0_i32_0, %c0_i32_1 : i32, i32, i32
  }
  func.func @transform_4(%arg0: i32) -> (i32, i32) {
    %c0_i32 = arith.constant 0 : i32
    %c0_i32_0 = arith.constant 0 : i32
    %c0_i32_1 = arith.constant 0 : i32
    return %c0_i32, %c0_i32_0 : i32, i32
  }
  func.func @transform_5(%arg0: i32) -> (i32, i32) {
    %c0_i32 = arith.constant 0 : i32
    %c0_i32_0 = arith.constant 0 : i32
    %c0_i32_1 = arith.constant 0 : i32
    return %c0_i32, %c0_i32_0 : i32, i32
  }
  func.func @transform_6(%arg0: i32) -> (i32, i32) {
    %c0_i32 = arith.constant 0 : i32
    %c0_i32_0 = arith.constant 0 : i32
    %c0_i32_1 = arith.constant 0 : i32
    return %c0_i32, %c0_i32_0 : i32, i32
  }
  func.func @transform_7(%arg0: i32) -> (i32, i32) {
    %c0_i32 = arith.constant 0 : i32
    %c0_i32_0 = arith.constant 0 : i32
    %c0_i32_1 = arith.constant 0 : i32
    return %c0_i32, %c0_i32_0 : i32, i32
  }
}

</mosaic_0001>

<llo_original>
// kernel: actor_cnn_forward.1
$region0: #{actor_cnn_forward.1}
  #allocation0 [shape = 'u32[]', space=smem, size = 0x4, offset = 0x4, fixed_abs, tag = 'smem constant byte address 0x4 - core index']
  #allocation1 [shape = 'u32[144,128]{1,0:T(1,128)}', space=vmem, size = 0x12000, scoped, tag = 'internal scratch']
  #allocation2 [shape = 'f32[2,59,64]{2,1,0:T(8,128)}', space=vmem, size = 0x10000, scoped, tag = 'scratch operand']
  #allocation3 [shape = 'f32[2,3776]{1,0:T(2,128)}', space=vmem, size = 0x7800, scoped, tag = 'scratch operand']
  %s0 = inlined_call_operand.vmem [shape: f32[5,2,60,1], index: 0, kind: input, shape index: {}]
  %s1 = inlined_call_operand.hbm [shape: f32[3,1,64], index: 1, kind: input, shape index: {}]
  %s2 = inlined_call_operand.hbm [shape: f32[1,64], index: 2, kind: input, shape index: {}]
  %s3 = inlined_call_operand.hbm [shape: f32[3,64,64], index: 3, kind: input, shape index: {}]
  %s4 = inlined_call_operand.hbm [shape: f32[1,64], index: 4, kind: input, shape index: {}]
  %s5 = inlined_call_operand.hbm [shape: bf16[3776,512], index: 5, kind: input, shape index: {}]
  %s6 = inlined_call_operand.hbm [shape: f32[1,512], index: 6, kind: input, shape index: {}]
  %s7 = inlined_call_operand.hbm [shape: f32[2,512], index: 7, kind: output, shape index: {}]
  %s8 = sld [smem:[#allocation0]]
  $region62: #{actor_cnn_forward.1} parent=0
    _
  %s10 = ssub.s32 1, %s8
  %s11 = scalar_select 0, %s10, %s8
  $region1: #{actor_cnn_forward.1} parent=0
    #allocation4 [shape = 'u8[1536]{0}', space=vmem, size = 0x800, scoped, tag = 'input window, operand 1, single buffered']
    #allocation5 [shape = 's32[1]{0}', space=sflag, size = 0x4, scoped, tag = 'scoped memory for actor_cnn_forward.1']
    #allocation6 [shape = 's32[1]{0}', space=sflag, size = 0x4, scoped, tag = 'scoped memory for actor_cnn_forward.1']
    #allocation7 [shape = 'u8[512]{0}', space=vmem, size = 0x400, scoped, tag = 'input window, operand 2, single buffered']
    #allocation8 [shape = 's32[1]{0}', space=sflag, size = 0x4, scoped, tag = 'scoped memory for actor_cnn_forward.1']
    #allocation9 [shape = 'u8[98304]{0}', space=vmem, size = 0x18000, scoped, tag = 'input window, operand 3, single buffered']
    #allocation10 [shape = 'u8[512]{0}', space=vmem, size = 0x400, scoped, tag = 'input window, operand 4, single buffered']
    #allocation11 [shape = 's32[1]{0}', space=sflag, size = 0x4, scoped, tag = 'scoped memory for actor_cnn_forward.1']
    #allocation12 [shape = 'u8[3866624]{0}', space=vmem, size = 0x3b0000, scoped, tag = 'input window, operand 5, single buffered']
    #allocation13 [shape = 'u8[2048]{0}', space=vmem, size = 0x800, scoped, tag = 'input window, operand 6, single buffered']
    #allocation14 [shape = 's32[1]{0}', space=sflag, size = 0x4, scoped, tag = 'scoped memory for actor_cnn_forward.1']
    #allocation15 [shape = 'u8[4096]{0}', space=vmem, size = 0x1000, scoped, tag = 'output window, operand 0, single buffered']
    %12 = vsyncpa [#allocation5], 0
    %13 = vsyncpa [#allocation8], 0
    %14 = vsyncpa [#allocation11], 0
    %15 = vsyncpa [#allocation14], 0
    %16 = vsyncpa [#allocation6], 0
    // Predicated region
    $region2: #{actor_cnn_forward.1} parent=1 // pred_check
      _
    $region3: #{actor_cnn_forward.1} parent=1 // pred_check_branch
      %18 = sbr.rel (0) target = $region5
    $region4: #{actor_cnn_forward.1} parent=1 // pred_region
      _
    $region5: #{actor_cnn_forward.1} parent=1 // pred_fallthru
      _
    // Predicated region
    $region6: #{actor_cnn_forward.1} parent=1 // pred_check
      _
    $region7: #{actor_cnn_forward.1} parent=1 // pred_check_branch
      %20 = sbr.rel (0) target = $region9
    $region8: #{actor_cnn_forward.1} parent=1 // pred_region
      %s22 = ssub.s32 48, 48
      %23 = vsyncadd [#allocation5], %s22
      %s24 = sshll.u32 [#allocation4], 4
      %s25 = int_to_ptr.vmem [resolvable:$true] %s24
      %30 = dma.hbm_to_vmem [thread:$0]  %s1, 48, %s25, [#allocation5], 16, 16, 1
    $region9: #{actor_cnn_forward.1} parent=1 // pred_fallthru
      _
    // Predicated region
    $region10: #{actor_cnn_forward.1} parent=1 // pred_check
      _
    $region11: #{actor_cnn_forward.1} parent=1 // pred_check_branch
      %32 = sbr.rel (0) target = $region13
    $region12: #{actor_cnn_forward.1} parent=1 // pred_region
      %s34 = ssub.s32 16, 16
      %35 = vsyncadd [#allocation8], %s34
      %s37 = sshll.u32 [#allocation7], 4
      %s38 = int_to_ptr.vmem [resolvable:$true] %s37
      %40 = dma.hbm_to_vmem [thread:$0]  %s2, 16, %s38, [#allocation8]
    $region13: #{actor_cnn_forward.1} parent=1 // pred_fallthru
      _
    // Predicated region
    $region14: #{actor_cnn_forward.1} parent=1 // pred_check
      _
    $region15: #{actor_cnn_forward.1} parent=1 // pred_check_branch
      %42 = sbr.rel (0) target = $region17
    $region16: #{actor_cnn_forward.1} parent=1 // pred_region
      %s44 = ssub.s32 3072, 3072
      %45 = vsyncadd [#allocation8], %s44
      %s46 = sshll.u32 [#allocation9], 4
      %s47 = int_to_ptr.vmem [resolvable:$true] %s46
      %52 = dma.hbm_to_vmem [thread:$0]  %s3, 3072, %s47, [#allocation8], 128, 128, 8
    $region17: #{actor_cnn_forward.1} parent=1 // pred_fallthru
      _
    // Predicated region
    $region18: #{actor_cnn_forward.1} parent=1 // pred_check
      _
    $region19: #{actor_cnn_forward.1} parent=1 // pred_check_branch
      %54 = sbr.rel (0) target = $region21
    $region20: #{actor_cnn_forward.1} parent=1 // pred_region
      %s56 = ssub.s32 16, 16
      %57 = vsyncadd [#allocation11], %s56
      %s59 = sshll.u32 [#allocation10], 4
      %s60 = int_to_ptr.vmem [resolvable:$true] %s59
      %62 = dma.hbm_to_vmem [thread:$0]  %s4, 16, %s60, [#allocation11]
    $region21: #{actor_cnn_forward.1} parent=1 // pred_fallthru
      _
    // Predicated region
    $region22: #{actor_cnn_forward.1} parent=1 // pred_check
      _
    $region23: #{actor_cnn_forward.1} parent=1 // pred_check_branch
      %64 = sbr.rel (0) target = $region25
    $region24: #{actor_cnn_forward.1} parent=1 // pred_region
      %s66 = ssub.s32 120832, 120832
      %67 = vsyncadd [#allocation11], %s66
      %s68 = sshll.u32 [#allocation12], 4
      %s69 = int_to_ptr.vmem [resolvable:$true] %s68
      %74 = dma.hbm_to_vmem [thread:$0]  %s5, 120832, %s69, [#allocation11], 256, 256, 16
    $region25: #{actor_cnn_forward.1} parent=1 // pred_fallthru
      _
    // Predicated region
    $region26: #{actor_cnn_forward.1} parent=1 // pred_check
      _
    $region27: #{actor_cnn_forward.1} parent=1 // pred_check_branch
      %76 = sbr.rel (0) target = $region29
    $region28: #{actor_cnn_forward.1} parent=1 // pred_region
      %s78 = ssub.s32 64, 64
      %79 = vsyncadd [#allocation14], %s78
      %s81 = sshll.u32 [#allocation13], 4
      %s82 = int_to_ptr.vmem [resolvable:$true] %s81
      %84 = dma.hbm_to_vmem [thread:$0]  %s6, 64, %s82, [#allocation14]
    $region29: #{actor_cnn_forward.1} parent=1 // pred_fallthru
      _
    // Predicated region
    $region30: #{actor_cnn_forward.1} parent=1 // pred_check
      _
    $region31: #{actor_cnn_forward.1} parent=1 // pred_check_branch
      %86 = sbr.rel (0) target = $region33
    $region32: #{actor_cnn_forward.1} parent=1 // pred_region
      %87 = dma.done [#allocation5], 48
    $region33: #{actor_cnn_forward.1} parent=1 // pred_fallthru
      _
    // Predicated region
    $region34: #{actor_cnn_forward.1} parent=1 // pred_check
      _
    $region35: #{actor_cnn_forward.1} parent=1 // pred_check_branch
      %89 = sbr.rel (0) target = $region37
    $region36: #{actor_cnn_forward.1} parent=1 // pred_region
      %90 = dma.done [#allocation8], 16
    $region37: #{actor_cnn_forward.1} parent=1 // pred_fallthru
      _
    // Predicated region
    $region38: #{actor_cnn_forward.1} parent=1 // pred_check
      _
    $region39: #{actor_cnn_forward.1} parent=1 // pred_check_branch
      %92 = sbr.rel (0) target = $region41
    $region40: #{actor_cnn_forward.1} parent=1 // pred_region
      %93 = dma.done [#allocation8], 3072
    $region41: #{actor_cnn_forward.1} parent=1 // pred_fallthru
      _
    // Predicated region
    $region42: #{actor_cnn_forward.1} parent=1 // pred_check
      _
    $region43: #{actor_cnn_forward.1} parent=1 // pred_check_branch
      %95 = sbr.rel (0) target = $region45
    $region44: #{actor_cnn_forward.1} parent=1 // pred_region
      %96 = dma.done [#allocation11], 16
    $region45: #{actor_cnn_forward.1} parent=1 // pred_fallthru
      _
    // Predicated region
    $region46: #{actor_cnn_forward.1} parent=1 // pred_check
      _
    $region47: #{actor_cnn_forward.1} parent=1 // pred_check_branch
      %98 = sbr.rel (0) target = $region49
    $region48: #{actor_cnn_forward.1} parent=1 // pred_region
      %99 = dma.done [#allocation11], 120832
    $region49: #{actor_cnn_forward.1} parent=1 // pred_fallthru
      _
    // Predicated region
    $region50: #{actor_cnn_forward.1} parent=1 // pred_check
      _
    $region51: #{actor_cnn_forward.1} parent=1 // pred_check_branch
      %101 = sbr.rel (0) target = $region53
    $region52: #{actor_cnn_forward.1} parent=1 // pred_region
      %102 = dma.done [#allocation14], 64
    $region53: #{actor_cnn_forward.1} parent=1 // pred_fallthru
      _
    %v104 = vld [vmem:[#allocation7] sm:$0x1]
    %v105 = vld [vmem:[#allocation10] sm:$0x1]
    %v106 = vld [vmem:[#allocation4] sm:$0x1]
    %s107 = scalar_lea.vmem [#allocation4], 1
    %v108 = vld [vmem:[%s107] sm:$0x1]
    %s109 = scalar_lea.vmem [#allocation4], 2
    %v110 = vld [vmem:[%s109] sm:$0x1]
    %v111 = vld [vmem:[#allocation9] sm:$0xff]
    %v112 = vld [vmem:[#allocation9 + $0x8] sm:$0xff]
    %v113 = vld [vmem:[#allocation9 + $0x10] sm:$0xff]
    %v114 = vld [vmem:[#allocation9 + $0x18] sm:$0xff]
    %v115 = vld [vmem:[#allocation9 + $0x20] sm:$0xff]
    %v116 = vld [vmem:[#allocation9 + $0x28] sm:$0xff]
    %v117 = vld [vmem:[#allocation9 + $0x30] sm:$0xff]
    %v118 = vld [vmem:[#allocation9 + $0x38] sm:$0xff]
    %s119 = scalar_lea.vmem [#allocation9], 64
    %v120 = vld [vmem:[%s119] sm:$0xff]
    %v121 = vld [vmem:[%s119 + $0x8] sm:$0xff]
    %v122 = vld [vmem:[%s119 + $0x10] sm:$0xff]
    %v123 = vld [vmem:[%s119 + $0x18] sm:$0xff]
    %v124 = vld [vmem:[%s119 + $0x20] sm:$0xff]
    %v125 = vld [vmem:[%s119 + $0x28] sm:$0xff]
    %v126 = vld [vmem:[%s119 + $0x30] sm:$0xff]
    %v127 = vld [vmem:[%s119 + $0x38] sm:$0xff]
    %s128 = scalar_lea.vmem [#allocation9], 128
    %v129 = vld [vmem:[%s128] sm:$0xff]
    %v130 = vld [vmem:[%s128 + $0x8] sm:$0xff]
    %v131 = vld [vmem:[%s128 + $0x10] sm:$0xff]
    %v132 = vld [vmem:[%s128 + $0x18] sm:$0xff]
    %v133 = vld [vmem:[%s128 + $0x20] sm:$0xff]
    %v134 = vld [vmem:[%s128 + $0x28] sm:$0xff]
    %v135 = vld [vmem:[%s128 + $0x30] sm:$0xff]
    %v136 = vld [vmem:[%s128 + $0x38] sm:$0xff]
    %v137 = vld [vmem:[%s0] sm:$0xff]
    %v138 = vld [vmem:[%s0 + $0x8] sm:$0xff]
    %v139 = vld [vmem:[%s0 + $0x10] sm:$0xff]
    %v140 = vld [vmem:[%s0 + $0x18] sm:$0xff]
    %v141 = vld [vmem:[%s0 + $0x20] sm:$0xff]
    %v142 = vld [vmem:[%s0 + $0x28] sm:$0xff]
    %v143 = vld [vmem:[%s0 + $0x30] sm:$0xff]
    %v144 = vld [vmem:[%s0 + $0x38] sm:$0xf]
    %s145 = scalar_lea.vmem %s0, 128
    %v146 = vld [vmem:[%s145] sm:$0xff]
    %v147 = vld [vmem:[%s145 + $0x8] sm:$0xff]
    %v148 = vld [vmem:[%s145 + $0x10] sm:$0xff]
    %v149 = vld [vmem:[%s145 + $0x18] sm:$0xff]
    %v150 = vld [vmem:[%s145 + $0x20] sm:$0xff]
    %v151 = vld [vmem:[%s145 + $0x28] sm:$0xff]
    %v152 = vld [vmem:[%s145 + $0x30] sm:$0xff]
    %v153 = vld [vmem:[%s145 + $0x38] sm:$0xf]
    %s154 = scalar_lea.vmem %s0, 256
    %v155 = vld [vmem:[%s154] sm:$0xff]
    %v156 = vld [vmem:[%s154 + $0x8] sm:$0xff]
    %v157 = vld [vmem:[%s154 + $0x10] sm:$0xff]
    %v158 = vld [vmem:[%s154 + $0x18] sm:$0xff]
    %v159 = vld [vmem:[%s154 + $0x20] sm:$0xff]
    %v160 = vld [vmem:[%s154 + $0x28] sm:$0xff]
    %v161 = vld [vmem:[%s154 + $0x30] sm:$0xff]
    %v162 = vld [vmem:[%s154 + $0x38] sm:$0xf]
    %s163 = scalar_lea.vmem %s0, 384
    %v164 = vld [vmem:[%s163] sm:$0xff]
    %v165 = vld [vmem:[%s163 + $0x8] sm:$0xff]
    %v166 = vld [vmem:[%s163 + $0x10] sm:$0xff]
    %v167 = vld [vmem:[%s163 + $0x18] sm:$0xff]
    %v168 = vld [vmem:[%s163 + $0x20] sm:$0xff]
    %v169 = vld [vmem:[%s163 + $0x28] sm:$0xff]
    %v170 = vld [vmem:[%s163 + $0x30] sm:$0xff]
    %v171 = vld [vmem:[%s163 + $0x38] sm:$0xf]
    %s172 = scalar_lea.vmem %s0, 512
    %v173 = vld [vmem:[%s172] sm:$0xff]
    %v174 = vld [vmem:[%s172 + $0x8] sm:$0xff]
    %v175 = vld [vmem:[%s172 + $0x10] sm:$0xff]
    %v176 = vld [vmem:[%s172 + $0x18] sm:$0xff]
    %v177 = vld [vmem:[%s172 + $0x20] sm:$0xff]
    %v178 = vld [vmem:[%s172 + $0x28] sm:$0xff]
    %v179 = vld [vmem:[%s172 + $0x30] sm:$0xff]
    %v180 = vld [vmem:[%s172 + $0x38] sm:$0xf]
    %182 = vset.pattern.permute.xlu0 0
    %183 = vperm.xlu0 %182, %v137
    %v184 = vpop.permute.xlu0 %183
    %187 = vset.pattern.permute.xlu0 0
    %188 = vperm.xlu0 %187, %v138
    %v189 = vpop.permute.xlu0 %188
    %192 = vset.pattern.permute.xlu0 0
    %193 = vperm.xlu0 %192, %v139
    %v194 = vpop.permute.xlu0 %193
    %197 = vset.pattern.permute.xlu0 0
    %198 = vperm.xlu0 %197, %v140
    %v199 = vpop.permute.xlu0 %198
    %202 = vset.pattern.permute.xlu0 0
    %203 = vperm.xlu0 %202, %v141
    %v204 = vpop.permute.xlu0 %203
    %207 = vset.pattern.permute.xlu0 0
    %208 = vperm.xlu0 %207, %v142
    %v209 = vpop.permute.xlu0 %208
    %212 = vset.pattern.permute.xlu0 0
    %213 = vperm.xlu0 %212, %v143
    %v214 = vpop.permute.xlu0 %213
    %217 = vset.pattern.permute.xlu0 0
    %218 = vperm.xlu0 %217, %v144
    %v219 = vpop.permute.xlu0 %218
    %v222 = vlaneseq
    %v223 = vshrl.u32 %v222, 7
    %v224 = vsub.s32 0, %v223
    %v225 = vrot.slane %v106, %v224
    %v227 = vmul.f32 %v184, %v225
    %v228 = vmul.f32 %v189, %v225
    %v229 = vmul.f32 %v194, %v225
    %v230 = vmul.f32 %v199, %v225
    %v231 = vmul.f32 %v204, %v225
    %v232 = vmul.f32 %v209, %v225
    %v233 = vmul.f32 %v214, %v225
    %v234 = vmul.f32 %v219, %v225
    %236 = vset.pattern.permute.xlu0 0
    %237 = vperm.xlu0 %236, %v146
    %v238 = vpop.permute.xlu0 %237
    %241 = vset.pattern.permute.xlu0 0
    %242 = vperm.xlu0 %241, %v147
    %v243 = vpop.permute.xlu0 %242
    %246 = vset.pattern.permute.xlu0 0
    %247 = vperm.xlu0 %246, %v148
    %v248 = vpop.permute.xlu0 %247
    %251 = vset.pattern.permute.xlu0 0
    %252 = vperm.xlu0 %251, %v149
    %v253 = vpop.permute.xlu0 %252
    %256 = vset.pattern.permute.xlu0 0
    %257 = vperm.xlu0 %256, %v150
    %v258 = vpop.permute.xlu0 %257
    %261 = vset.pattern.permute.xlu0 0
    %262 = vperm.xlu0 %261, %v151
    %v263 = vpop.permute.xlu0 %262
    %266 = vset.pattern.permute.xlu0 0
    %267 = vperm.xlu0 %266, %v152
    %v268 = vpop.permute.xlu0 %267
    %271 = vset.pattern.permute.xlu0 0
    %272 = vperm.xlu0 %271, %v153
    %v273 = vpop.permute.xlu0 %272
    %v276 = vlaneseq
    %v277 = vshrl.u32 %v276, 7
    %v278 = vsub.s32 0, %v277
    %v279 = vrot.slane %v108, %v278
    %v281 = vmul.f32 %v238, %v279
    %v282 = vmul.f32 %v243, %v279
    %v283 = vmul.f32 %v248, %v279
    %v284 = vmul.f32 %v253, %v279
    %v285 = vmul.f32 %v258, %v279
    %v286 = vmul.f32 %v263, %v279
    %v287 = vmul.f32 %v268, %v279
    %v288 = vmul.f32 %v273, %v279
    %v289 = vadd.f32 %v227, %v281
    %v290 = vadd.f32 %v228, %v282
    %v291 = vadd.f32 %v229, %v283
    %v292 = vadd.f32 %v230, %v284
    %v293 = vadd.f32 %v231, %v285
    %v294 = vadd.f32 %v232, %v286
    %v295 = vadd.f32 %v233, %v287
    %v296 = vadd.f32 %v234, %v288
    %298 = vset.pattern.permute.xlu0 0
    %299 = vperm.xlu0 %298, %v155
    %v300 = vpop.permute.xlu0 %299
    %303 = vset.pattern.permute.xlu0 0
    %304 = vperm.xlu0 %303, %v156
    %v305 = vpop.permute.xlu0 %304
    %308 = vset.pattern.permute.xlu0 0
    %309 = vperm.xlu0 %308, %v157
    %v310 = vpop.permute.xlu0 %309
    %313 = vset.pattern.permute.xlu0 0
    %314 = vperm.xlu0 %313, %v158
    %v315 = vpop.permute.xlu0 %314
    %318 = vset.pattern.permute.xlu0 0
    %319 = vperm.xlu0 %318, %v159
    %v320 = vpop.permute.xlu0 %319
    %323 = vset.pattern.permute.xlu0 0
    %324 = vperm.xlu0 %323, %v160
    %v325 = vpop.permute.xlu0 %324
    %328 = vset.pattern.permute.xlu0 0
    %329 = vperm.xlu0 %328, %v161
    %v330 = vpop.permute.xlu0 %329
    %333 = vset.pattern.permute.xlu0 0
    %334 = vperm.xlu0 %333, %v162
    %v335 = vpop.permute.xlu0 %334
    %v338 = vlaneseq
    %v339 = vshrl.u32 %v338, 7
    %v340 = vsub.s32 0, %v339
    %v341 = vrot.slane %v110, %v340
    %v343 = vmul.f32 %v300, %v341
    %v344 = vmul.f32 %v305, %v341
    %v345 = vmul.f32 %v310, %v341
    %v346 = vmul.f32 %v315, %v341
    %v347 = vmul.f32 %v320, %v341
    %v348 = vmul.f32 %v325, %v341
    %v349 = vmul.f32 %v330, %v341
    %v350 = vmul.f32 %v335, %v341
    %v351 = vadd.f32 %v289, %v343
    %v352 = vadd.f32 %v290, %v344
    %v353 = vadd.f32 %v291, %v345
    %v354 = vadd.f32 %v292, %v346
    %v355 = vadd.f32 %v293, %v347
    %v356 = vadd.f32 %v294, %v348
    %v357 = vadd.f32 %v295, %v349
    %v358 = vadd.f32 %v296, %v350
    %v360 = vlaneseq
    %v361 = vshrl.u32 %v360, 7
    %v362 = vsub.s32 0, %v361
    %v363 = vrot.slane %v104, %v362
    %v365 = vadd.f32 %v351, %v363
    %v366 = vadd.f32 %v352, %v363
    %v367 = vadd.f32 %v353, %v363
    %v368 = vadd.f32 %v354, %v363
    %v369 = vadd.f32 %v355, %v363
    %v370 = vadd.f32 %v356, %v363
    %v371 = vadd.f32 %v357, %v363
    %v372 = vadd.f32 %v358, %v363
    %v373 = vmax.f32 %v365, 0.0
    %v374 = vmax.f32 %v366, 0.0
    %v375 = vmax.f32 %v367, 0.0
    %v376 = vmax.f32 %v368, 0.0
    %v377 = vmax.f32 %v369, 0.0
    %v378 = vmax.f32 %v370, 0.0
    %v379 = vmax.f32 %v371, 0.0
    %v380 = vmax.f32 %v372, 0.0
    %v381 = vmul.f32 %v300, %v225
    %v382 = vmul.f32 %v305, %v225
    %v383 = vmul.f32 %v310, %v225
    %v384 = vmul.f32 %v315, %v225
    %v385 = vmul.f32 %v320, %v225
    %v386 = vmul.f32 %v325, %v225
    %v387 = vmul.f32 %v330, %v225
    %v388 = vmul.f32 %v335, %v225
    %390 = vset.pattern.permute.xlu0 0
    %391 = vperm.xlu0 %390, %v164
    %v392 = vpop.permute.xlu0 %391
    %395 = vset.pattern.permute.xlu0 0
    %396 = vperm.xlu0 %395, %v165
    %v397 = vpop.permute.xlu0 %396
    %400 = vset.pattern.permute.xlu0 0
    %401 = vperm.xlu0 %400, %v166
    %v402 = vpop.permute.xlu0 %401
    %405 = vset.pattern.permute.xlu0 0
    %406 = vperm.xlu0 %405, %v167
    %v407 = vpop.permute.xlu0 %406
    %410 = vset.pattern.permute.xlu0 0
    %411 = vperm.xlu0 %410, %v168
    %v412 = vpop.permute.xlu0 %411
    %415 = vset.pattern.permute.xlu0 0
    %416 = vperm.xlu0 %415, %v169
    %v417 = vpop.permute.xlu0 %416
    %420 = vset.pattern.permute.xlu0 0
    %421 = vperm.xlu0 %420, %v170
    %v422 = vpop.permute.xlu0 %421
    %425 = vset.pattern.permute.xlu0 0
    %426 = vperm.xlu0 %425, %v171
    %v427 = vpop.permute.xlu0 %426
    %v429 = vmul.f32 %v392, %v279
    %v430 = vmul.f32 %v397, %v279
    %v431 = vmul.f32 %v402, %v279
    %v432 = vmul.f32 %v407, %v279
    %v433 = vmul.f32 %v412, %v279
    %v434 = vmul.f32 %v417, %v279
    %v435 = vmul.f32 %v422, %v279
    %v436 = vmul.f32 %v427, %v279
    %v437 = vadd.f32 %v381, %v429
    %v438 = vadd.f32 %v382, %v430
    %v439 = vadd.f32 %v383, %v431
    %v440 = vadd.f32 %v384, %v432
    %v441 = vadd.f32 %v385, %v433
    %v442 = vadd.f32 %v386, %v434
    %v443 = vadd.f32 %v387, %v435
    %v444 = vadd.f32 %v388, %v436
    %446 = vset.pattern.permute.xlu0 0
    %447 = vperm.xlu0 %446, %v173
    %v448 = vpop.permute.xlu0 %447
    %451 = vset.pattern.permute.xlu0 0
    %452 = vperm.xlu0 %451, %v174
    %v453 = vpop.permute.xlu0 %452
    %456 = vset.pattern.permute.xlu0 0
    %457 = vperm.xlu0 %456, %v175
    %v458 = vpop.permute.xlu0 %457
    %461 = vset.pattern.permute.xlu0 0
    %462 = vperm.xlu0 %461, %v176
    %v463 = vpop.permute.xlu0 %462
    %466 = vset.pattern.permute.xlu0 0
    %467 = vperm.xlu0 %466, %v177
    %v468 = vpop.permute.xlu0 %467
    %471 = vset.pattern.permute.xlu0 0
    %472 = vperm.xlu0 %471, %v178
    %v473 = vpop.permute.xlu0 %472
    %476 = vset.pattern.permute.xlu0 0
    %477 = vperm.xlu0 %476, %v179
    %v478 = vpop.permute.xlu0 %477
    %481 = vset.pattern.permute.xlu0 0
    %482 = vperm.xlu0 %481, %v180
    %v483 = vpop.permute.xlu0 %482
    %v485 = vmul.f32 %v448, %v341
    %v486 = vmul.f32 %v453, %v341
    %v487 = vmul.f32 %v458, %v341
    %v488 = vmul.f32 %v463, %v341
    %v489 = vmul.f32 %v468, %v341
    %v490 = vmul.f32 %v473, %v341
    %v491 = vmul.f32 %v478, %v341
    %v492 = vmul.f32 %v483, %v341
    %v493 = vadd.f32 %v437, %v485
    %v494 = vadd.f32 %v438, %v486
    %v495 = vadd.f32 %v439, %v487
    %v496 = vadd.f32 %v440, %v488
    %v497 = vadd.f32 %v441, %v489
    %v498 = vadd.f32 %v442, %v490
    %v499 = vadd.f32 %v443, %v491
    %v500 = vadd.f32 %v444, %v492
    %v501 = vadd.f32 %v493, %v363
    %v502 = vadd.f32 %v494, %v363
    %v503 = vadd.f32 %v495, %v363
    %v504 = vadd.f32 %v496, %v363
    %v505 = vadd.f32 %v497, %v363
    %v506 = vadd.f32 %v498, %v363
    %v507 = vadd.f32 %v499, %v363
    %v508 = vadd.f32 %v500, %v363
    %v509 = vmax.f32 %v501, 0.0
    %v510 = vmax.f32 %v502, 0.0
    %v511 = vmax.f32 %v503, 0.0
    %v512 = vmax.f32 %v504, 0.0
    %v513 = vmax.f32 %v505, 0.0
    %v514 = vmax.f32 %v506, 0.0
    %v515 = vmax.f32 %v507, 0.0
    %v516 = vmax.f32 %v508, 0.0
    %vm517 = vcmask 523264
    %v519 = vsel %vm517, %v373, 0
    %v522 = vsel %vm517, %v374, 0
    %v525 = vsel %vm517, %v375, 0
    %v528 = vsel %vm517, %v376, 0
    %v531 = vsel %vm517, %v377, 0
    %v534 = vsel %vm517, %v378, 0
    %v537 = vsel %vm517, %v379, 0
    %v540 = vsel %vm517, %v380, 0
    %542 = vmatprep.subr.mxu0 0.0
    %543 = vmatpush1.msra.mxu0 %v111
    %544 = vmatprep.subr.mxu0 0.0
    %545 = vmatpush1.msra.mxu0 %v112
    %546 = vmatprep.subr.mxu0 0.0
    %547 = vmatpush1.msra.mxu0 %v113
    %548 = vmatprep.subr.mxu0 0.0
    %549 = vmatpush1.msra.mxu0 %v114
    %550 = vmatprep.subr.mxu0 0.0
    %551 = vmatpush1.msra.mxu0 %v115
    %552 = vmatprep.subr.mxu0 0.0
    %553 = vmatpush1.msra.mxu0 %v116
    %554 = vmatprep.subr.mxu0 0.0
    %555 = vmatpush1.msra.mxu0 %v117
    %556 = vmatprep.subr.mxu0 0.0
    %557 = vmatpush1.msra.mxu0 %v118
    %558 = vmatprep.subr.mxu0 0.0
    %559 = vmatpush1.msra.mxu0 0.0
    %560 = vmatprep.subr.mxu0 0.0
    %561 = vmatpush1.msra.mxu0 0.0
    %562 = vmatprep.subr.mxu0 0.0
    %563 = vmatpush1.msra.mxu0 0.0
    %564 = vmatprep.subr.mxu0 0.0
    %565 = vmatpush1.msra.mxu0 0.0
    %566 = vmatprep.subr.mxu0 0.0
    %567 = vmatpush1.msra.mxu0 0.0
    %568 = vmatprep.subr.mxu0 0.0
    %569 = vmatpush1.msra.mxu0 0.0
    %570 = vmatprep.subr.mxu0 0.0
    %571 = vmatpush1.msra.mxu0 0.0
    %572 = vmatprep.subr.mxu0 0.0
    %573 = vmatpush1.msra.mxu0 0.0
    %574 = vmatprep.subr.mxu0 0.0
    %575 = vmatpush1.msra.mxu0 0.0
    %576 = vmatprep.subr.mxu0 0.0
    %577 = vmatpush1.msra.mxu0 0.0
    %578 = vmatprep.subr.mxu0 0.0
    %579 = vmatpush1.msra.mxu0 0.0
    %580 = vmatprep.subr.mxu0 0.0
    %581 = vmatpush1.msra.mxu0 0.0
    %582 = vmatprep.subr.mxu0 0.0
    %583 = vmatpush1.msra.mxu0 0.0
    %584 = vmatprep.subr.mxu0 0.0
    %585 = vmatpush1.msra.mxu0 0.0
    %586 = vmatprep.subr.mxu0 0.0
    %587 = vmatpush1.msra.mxu0 0.0
    %588 = vmatprep.subr.mxu0 0.0
    %589 = vmatpush1.msra.mxu0 0.0
    %590 = vmatprep.subr.mxu0 0.0
    %591 = vmatpush1.msra.mxu0 0.0
    %592 = vmatprep.subr.mxu0 0.0
    %593 = vmatpush1.msra.mxu0 0.0
    %594 = vmatprep.subr.mxu0 0.0
    %595 = vmatpush1.msra.mxu0 0.0
    %596 = vmatprep.subr.mxu0 0.0
    %597 = vmatpush1.msra.mxu0 0.0
    %598 = vmatprep.subr.mxu0 0.0
    %599 = vmatpush1.msra.mxu0 0.0
    %600 = vmatprep.subr.mxu0 0.0
    %601 = vmatpush1.msra.mxu0 0.0
    %602 = vmatprep.subr.mxu0 0.0
    %603 = vmatpush1.msra.mxu0 0.0
    %604 = vmatprep.subr.mxu0 0.0
    %605 = vmatpush1.msra.mxu0 0.0
    %606 = vmatprep.mubr.f32.mxu0 0.0
    %607 = vmatmul.mubr.f32.gmra.mrb[0].mxu0 %v519
    %v608 = vpop.f32.mrb[0].mxu0
    %v609 = vadd.f32 0.0, %v608
    %v610 = vpop.f32.mrb[0].mxu0
    %611 = vmatprep.mubr.f32.mxu0 0.0
    %612 = vmatmul.mubr.f32.gmra.mrb[0].mxu0 %v522
    %v613 = vpop.f32.mrb[0].mxu0
    %v614 = vadd.f32 0.0, %v613
    %v615 = vpop.f32.mrb[0].mxu0
    %616 = vmatprep.mubr.f32.mxu0 0.0
    %617 = vmatmul.mubr.f32.gmra.mrb[0].mxu0 %v525
    %v618 = vpop.f32.mrb[0].mxu0
    %v619 = vadd.f32 0.0, %v618
    %v620 = vpop.f32.mrb[0].mxu0
    %621 = vmatprep.mubr.f32.mxu0 0.0
    %622 = vmatmul.mubr.f32.gmra.mrb[0].mxu0 %v528
    %v623 = vpop.f32.mrb[0].mxu0
    %v624 = vadd.f32 0.0, %v623
    %v625 = vpop.f32.mrb[0].mxu0
    %626 = vmatprep.mubr.f32.mxu0 0.0
    %627 = vmatmul.mubr.f32.gmra.mrb[0].mxu0 %v531
    %v628 = vpop.f32.mrb[0].mxu0
    %v629 = vadd.f32 0.0, %v628
    %v630 = vpop.f32.mrb[0].mxu0
    %631 = vmatprep.mubr.f32.mxu0 0.0
    %632 = vmatmul.mubr.f32.gmra.mrb[0].mxu0 %v534
    %v633 = vpop.f32.mrb[0].mxu0
    %v634 = vadd.f32 0.0, %v633
    %v635 = vpop.f32.mrb[0].mxu0
    %636 = vmatprep.mubr.f32.mxu0 0.0
    %637 = vmatmul.mubr.f32.gmra.mrb[0].mxu0 %v537
    %v638 = vpop.f32.mrb[0].mxu0
    %v639 = vadd.f32 0.0, %v638
    %v640 = vpop.f32.mrb[0].mxu0
    %641 = vmatprep.mubr.f32.mxu0 0.0
    %642 = vmatmul.mubr.f32.gmra.mrb[0].mxu0 %v540
    %v643 = vpop.f32.mrb[0].mxu0
    %v644 = vadd.f32 0.0, %v643
    %v645 = vpop.f32.mrb[0].mxu0
    %646 = vdwg.mxu0
    %v648 = vsel %vm517, %v509, 0
    %v651 = vsel %vm517, %v510, 0
    %v654 = vsel %vm517, %v511, 0
    %v657 = vsel %vm517, %v512, 0
    %v660 = vsel %vm517, %v513, 0
    %v663 = vsel %vm517, %v514, 0
    %v666 = vsel %vm517, %v515, 0
    %v669 = vsel %vm517, %v516, 0
    %671 = vmatprep.subr.mxu0 0.0
    %672 = vmatpush1.msra.mxu0 %v120
    %673 = vmatprep.subr.mxu0 0.0
    %674 = vmatpush1.msra.mxu0 %v121
    %675 = vmatprep.subr.mxu0 0.0
    %676 = vmatpush1.msra.mxu0 %v122
    %677 = vmatprep.subr.mxu0 0.0
    %678 = vmatpush1.msra.mxu0 %v123
    %679 = vmatprep.subr.mxu0 0.0
    %680 = vmatpush1.msra.mxu0 %v124
    %681 = vmatprep.subr.mxu0 0.0
    %682 = vmatpush1.msra.mxu0 %v125
    %683 = vmatprep.subr.mxu0 0.0
    %684 = vmatpush1.msra.mxu0 %v126
    %685 = vmatprep.subr.mxu0 0.0
    %686 = vmatpush1.msra.mxu0 %v127
    %687 = vmatprep.subr.mxu0 0.0
    %688 = vmatpush1.msra.mxu0 0.0
    %689 = vmatprep.subr.mxu0 0.0
    %690 = vmatpush1.msra.mxu0 0.0
    %691 = vmatprep.subr.mxu0 0.0
    %692 = vmatpush1.msra.mxu0 0.0
    %693 = vmatprep.subr.mxu0 0.0
    %694 = vmatpush1.msra.mxu0 0.0
    %695 = vmatprep.subr.mxu0 0.0
    %696 = vmatpush1.msra.mxu0 0.0
    %697 = vmatprep.subr.mxu0 0.0
    %698 = vmatpush1.msra.mxu0 0.0
    %699 = vmatprep.subr.mxu0 0.0
    %700 = vmatpush1.msra.mxu0 0.0
    %701 = vmatprep.subr.mxu0 0.0
    %702 = vmatpush1.msra.mxu0 0.0
    %703 = vmatprep.subr.mxu0 0.0
    %704 = vmatpush1.msra.mxu0 0.0
    %705 = vmatprep.subr.mxu0 0.0
    %706 = vmatpush1.msra.mxu0 0.0
    %707 = vmatprep.subr.mxu0 0.0
    %708 = vmatpush1.msra.mxu0 0.0
    %709 = vmatprep.subr.mxu0 0.0
    %710 = vmatpush1.msra.mxu0 0.0
    %711 = vmatprep.subr.mxu0 0.0
    %712 = vmatpush1.msra.mxu0 0.0
    %713 = vmatprep.subr.mxu0 0.0
    %714 = vmatpush1.msra.mxu0 0.0
    %715 = vmatprep.subr.mxu0 0.0
    %716 = vmatpush1.msra.mxu0 0.0
    %717 = vmatprep.subr.mxu0 0.0
    %718 = vmatpush1.msra.mxu0 0.0
    %719 = vmatprep.subr.mxu0 0.0
    %720 = vmatpush1.msra.mxu0 0.0
    %721 = vmatprep.subr.mxu0 0.0
    %722 = vmatpush1.msra.mxu0 0.0
    %723 = vmatprep.subr.mxu0 0.0
    %724 = vmatpush1.msra.mxu0 0.0
    %725 = vmatprep.subr.mxu0 0.0
    %726 = vmatpush1.msra.mxu0 0.0
    %727 = vmatprep.subr.mxu0 0.0
    %728 = vmatpush1.msra.mxu0 0.0
    %729 = vmatprep.subr.mxu0 0.0
    %730 = vmatpush1.msra.mxu0 0.0
    %731 = vmatprep.subr.mxu0 0.0
    %732 = vmatpush1.msra.mxu0 0.0
    %733 = vmatprep.subr.mxu0 0.0
    %734 = vmatpush1.msra.mxu0 0.0
    %735 = vmatprep.mubr.f32.mxu0 0.0
    %736 = vmatmul.mubr.f32.gmra.mrb[0].mxu0 %v648
    %v737 = vpop.f32.mrb[0].mxu0
    %v738 = vadd.f32 0.0, %v737
    %v739 = vpop.f32.mrb[0].mxu0
    %740 = vmatprep.mubr.f32.mxu0 0.0
    %741 = vmatmul.mubr.f32.gmra.mrb[0].mxu0 %v651
    %v742 = vpop.f32.mrb[0].mxu0
    %v743 = vadd.f32 0.0, %v742
    %v744 = vpop.f32.mrb[0].mxu0
    %745 = vmatprep.mubr.f32.mxu0 0.0
    %746 = vmatmul.mubr.f32.gmra.mrb[0].mxu0 %v654
    %v747 = vpop.f32.mrb[0].mxu0
    %v748 = vadd.f32 0.0, %v747
    %v749 = vpop.f32.mrb[0].mxu0
    %750 = vmatprep.mubr.f32.mxu0 0.0
    %751 = vmatmul.mubr.f32.gmra.mrb[0].mxu0 %v657
    %v752 = vpop.f32.mrb[0].mxu0
    %v753 = vadd.f32 0.0, %v752
    %v754 = vpop.f32.mrb[0].mxu0
    %755 = vmatprep.mubr.f32.mxu0 0.0
    %756 = vmatmul.mubr.f32.gmra.mrb[0].mxu0 %v660
    %v757 = vpop.f32.mrb[0].mxu0
    %v758 = vadd.f32 0.0, %v757
    %v759 = vpop.f32.mrb[0].mxu0
    %760 = vmatprep.mubr.f32.mxu0 0.0
    %761 = vmatmul.mubr.f32.gmra.mrb[0].mxu0 %v663
    %v762 = vpop.f32.mrb[0].mxu0
    %v763 = vadd.f32 0.0, %v762
    %v764 = vpop.f32.mrb[0].mxu0
    %765 = vmatprep.mubr.f32.mxu0 0.0
    %766 = vmatmul.mubr.f32.gmra.mrb[0].mxu0 %v666
    %v767 = vpop.f32.mrb[0].mxu0
    %v768 = vadd.f32 0.0, %v767
    %v769 = vpop.f32.mrb[0].mxu0
    %770 = vmatprep.mubr.f32.mxu0 0.0
    %771 = vmatmul.mubr.f32.gmra.mrb[0].mxu0 %v669
    %v772 = vpop.f32.mrb[0].mxu0
    %v773 = vadd.f32 0.0, %v772
    %v774 = vpop.f32.mrb[0].mxu0
    %775 = vdwg.mxu0
    %v776 = vadd.f32 %v609, %v738
    %v777 = vadd.f32 %v614, %v743
    %v778 = vadd.f32 %v619, %v748
    %v779 = vadd.f32 %v624, %v753
    %v780 = vadd.f32 %v629, %v758
    %v781 = vadd.f32 %v634, %v763
    %v782 = vadd.f32 %v639, %v768
    %v783 = vadd.f32 %v644, %v773
    %784 = vmatprep.subr.mxu0 0.0
    %785 = vmatpush1.msra.mxu0 %v129
    %786 = vmatprep.subr.mxu0 0.0
    %787 = vmatpush1.msra.mxu0 %v130
    %788 = vmatprep.subr.mxu0 0.0
    %789 = vmatpush1.msra.mxu0 %v131
    %790 = vmatprep.subr.mxu0 0.0
    %791 = vmatpush1.msra.mxu0 %v132
    %792 = vmatprep.subr.mxu0 0.0
    %793 = vmatpush1.msra.mxu0 %v133
    %794 = vmatprep.subr.mxu0 0.0
    %795 = vmatpush1.msra.mxu0 %v134
    %796 = vmatprep.subr.mxu0 0.0
    %797 = vmatpush1.msra.mxu0 %v135
    %798 = vmatprep.subr.mxu0 0.0
    %799 = vmatpush1.msra.mxu0 %v136
    %800 = vmatprep.subr.mxu0 0.0
    %801 = vmatpush1.msra.mxu0 0.0
    %802 = vmatprep.subr.mxu0 0.0
    %803 = vmatpush1.msra.mxu0 0.0
    %804 = vmatprep.subr.mxu0 0.0
    %805 = vmatpush1.msra.mxu0 0.0
    %806 = vmatprep.subr.mxu0 0.0
    %807 = vmatpush1.msra.mxu0 0.0
    %808 = vmatprep.subr.mxu0 0.0
    %809 = vmatpush1.msra.mxu0 0.0
    %810 = vmatprep.subr.mxu0 0.0
    %811 = vmatpush1.msra.mxu0 0.0
    %812 = vmatprep.subr.mxu0 0.0
    %813 = vmatpush1.msra.mxu0 0.0
    %814 = vmatprep.subr.mxu0 0.0
    %815 = vmatpush1.msra.mxu0 0.0
    %816 = vmatprep.subr.mxu0 0.0
    %817 = vmatpush1.msra.mxu0 0.0
    %818 = vmatprep.subr.mxu0 0.0
    %819 = vmatpush1.msra.mxu0 0.0
    %820 = vmatprep.subr.mxu0 0.0
    %821 = vmatpush1.msra.mxu0 0.0
    %822 = vmatprep.subr.mxu0 0.0
    %823 = vmatpush1.msra.mxu0 0.0
    %824 = vmatprep.subr.mxu0 0.0
    %825 = vmatpush1.msra.mxu0 0.0
    %826 = vmatprep.subr.mxu0 0.0
    %827 = vmatpush1.msra.mxu0 0.0
    %828 = vmatprep.subr.mxu0 0.0
    %829 = vmatpush1.msra.mxu0 0.0
    %830 = vmatprep.subr.mxu0 0.0
    %831 = vmatpush1.msra.mxu0 0.0
    %832 = vmatprep.subr.mxu0 0.0
    %833 = vmatpush1.msra.mxu0 0.0
    %834 = vmatprep.subr.mxu0 0.0
    %835 = vmatpush1.msra.mxu0 0.0
    %836 = vmatprep.subr.mxu0 0.0
    %837 = vmatpush1.msra.mxu0 0.0
    %838 = vmatprep.subr.mxu0 0.0
    %839 = vmatpush1.msra.mxu0 0.0
    %840 = vmatprep.subr.mxu0 0.0
    %841 = vmatpush1.msra.mxu0 0.0
    %842 = vmatprep.subr.mxu0 0.0
    %843 = vmatpush1.msra.mxu0 0.0
    %844 = vmatprep.subr.mxu0 0.0
    %845 = vmatpush1.msra.mxu0 0.0
    %846 = vmatprep.subr.mxu0 0.0
    %847 = vmatpush1.msra.mxu0 0.0
    %848 = vmatprep.mubr.f32.mxu0 0.0
    %849 = vmatmul.mubr.f32.gmra.mrb[0].mxu0 %v519
    %v850 = vpop.f32.mrb[0].mxu0
    %v851 = vadd.f32 0.0, %v850
    %v852 = vpop.f32.mrb[0].mxu0
    %853 = vmatprep.mubr.f32.mxu0 0.0
    %854 = vmatmul.mubr.f32.gmra.mrb[0].mxu0 %v522
    %v855 = vpop.f32.mrb[0].mxu0
    %v856 = vadd.f32 0.0, %v855
    %v857 = vpop.f32.mrb[0].mxu0
    %858 = vmatprep.mubr.f32.mxu0 0.0
    %859 = vmatmul.mubr.f32.gmra.mrb[0].mxu0 %v525
    %v860 = vpop.f32.mrb[0].mxu0
    %v861 = vadd.f32 0.0, %v860
    %v862 = vpop.f32.mrb[0].mxu0
    %863 = vmatprep.mubr.f32.mxu0 0.0
    %864 = vmatmul.mubr.f32.gmra.mrb[0].mxu0 %v528
    %v865 = vpop.f32.mrb[0].mxu0
    %v866 = vadd.f32 0.0, %v865
    %v867 = vpop.f32.mrb[0].mxu0
    %868 = vmatprep.mubr.f32.mxu0 0.0
    %869 = vmatmul.mubr.f32.gmra.mrb[0].mxu0 %v531
    %v870 = vpop.f32.mrb[0].mxu0
    %v871 = vadd.f32 0.0, %v870
    %v872 = vpop.f32.mrb[0].mxu0
    %873 = vmatprep.mubr.f32.mxu0 0.0
    %874 = vmatmul.mubr.f32.gmra.mrb[0].mxu0 %v534
    %v875 = vpop.f32.mrb[0].mxu0
    %v876 = vadd.f32 0.0, %v875
    %v877 = vpop.f32.mrb[0].mxu0
    %878 = vmatprep.mubr.f32.mxu0 0.0
    %879 = vmatmul.mubr.f32.gmra.mrb[0].mxu0 %v537
    %v880 = vpop.f32.mrb[0].mxu0
    %v881 = vadd.f32 0.0, %v880
    %v882 = vpop.f32.mrb[0].mxu0
    %883 = vmatprep.mubr.f32.mxu0 0.0
    %884 = vmatmul.mubr.f32.gmra.mrb[0].mxu0 %v540
    %v885 = vpop.f32.mrb[0].mxu0
    %v886 = vadd.f32 0.0, %v885
    %v887 = vpop.f32.mrb[0].mxu0
    %888 = vdwg.mxu0
    %vm897 = vcmask 1046528
    %v898 = vrot.slane %v851, 1
    %v899 = vrot.slane %v856, 1
    %v900 = vsel %vm897, %v898, %v899
    %v901 = vrot.slane %v861, 1
    %v902 = vsel %vm897, %v899, %v901
    %v903 = vrot.slane %v866, 1
    %v904 = vsel %vm897, %v901, %v903
    %v905 = vrot.slane %v871, 1
    %v906 = vsel %vm897, %v903, %v905
    %v907 = vrot.slane %v876, 1
    %v908 = vsel %vm897, %v905, %v907
    %v909 = vrot.slane %v881, 1
    %v910 = vsel %vm897, %v907, %v909
    %v911 = vrot.slane %v886, 1
    %v912 = vsel %vm897, %v909, %v911
    %v921 = vadd.f32 %v776, %v900
    %v922 = vadd.f32 %v777, %v902
    %v923 = vadd.f32 %v778, %v904
    %v924 = vadd.f32 %v779, %v906
    %v925 = vadd.f32 %v780, %v908
    %v926 = vadd.f32 %v781, %v910
    %v927 = vadd.f32 %v782, %v912
    %v928 = vadd.f32 %v783, %v911
    %v930 = vlaneseq
    %v931 = vshrl.u32 %v930, 7
    %v932 = vsub.s32 0, %v931
    %v933 = vrot.slane %v105, %v932
    %v935 = vadd.f32 %v921, %v933
    %v936 = vadd.f32 %v922, %v933
    %v937 = vadd.f32 %v923, %v933
    %v938 = vadd.f32 %v924, %v933
    %v939 = vadd.f32 %v925, %v933
    %v940 = vadd.f32 %v926, %v933
    %v941 = vadd.f32 %v927, %v933
    %v942 = vadd.f32 %v928, %v933
    %v943 = vmax.f32 %v935, 0.0
    %v944 = vmax.f32 %v936, 0.0
    %v945 = vmax.f32 %v937, 0.0
    %v946 = vmax.f32 %v938, 0.0
    %v947 = vmax.f32 %v939, 0.0
    %v948 = vmax.f32 %v940, 0.0
    %v949 = vmax.f32 %v941, 0.0
    %v950 = vmax.f32 %v942, 0.0
    %951 = vst.msk [vmem:[#allocation2] sm:$0xff] %vm517, %v943
    %952 = vst.msk [vmem:[#allocation2 + $0x8] sm:$0xff] %vm517, %v944
    %953 = vst.msk [vmem:[#allocation2 + $0x10] sm:$0xff] %vm517, %v945
    %954 = vst.msk [vmem:[#allocation2 + $0x18] sm:$0xff] %vm517, %v946
    %955 = vst.msk [vmem:[#allocation2 + $0x20] sm:$0xff] %vm517, %v947
    %956 = vst.msk [vmem:[#allocation2 + $0x28] sm:$0xff] %vm517, %v948
    %957 = vst.msk [vmem:[#allocation2 + $0x30] sm:$0xff] %vm517, %v949
    %vm958 = vcmask 518144
    %959 = vst.msk [vmem:[#allocation2 + $0x38] sm:$0x7] %vm958, %v950
    %s960 = scalar_lea.vmem %s0, 64
    %v961 = vld [vmem:[%s960] sm:$0xff]
    %v962 = vld [vmem:[%s960 + $0x8] sm:$0xff]
    %v963 = vld [vmem:[%s960 + $0x10] sm:$0xff]
    %v964 = vld [vmem:[%s960 + $0x18] sm:$0xff]
    %v965 = vld [vmem:[%s960 + $0x20] sm:$0xff]
    %v966 = vld [vmem:[%s960 + $0x28] sm:$0xff]
    %v967 = vld [vmem:[%s960 + $0x30] sm:$0xff]
    %v968 = vld [vmem:[%s960 + $0x38] sm:$0xf]
    %s969 = scalar_lea.vmem %s0, 192
    %v970 = vld [vmem:[%s969] sm:$0xff]
    %v971 = vld [vmem:[%s969 + $0x8] sm:$0xff]
    %v972 = vld [vmem:[%s969 + $0x10] sm:$0xff]
    %v973 = vld [vmem:[%s969 + $0x18] sm:$0xff]
    %v974 = vld [vmem:[%s969 + $0x20] sm:$0xff]
    %v975 = vld [vmem:[%s969 + $0x28] sm:$0xff]
    %v976 = vld [vmem:[%s969 + $0x30] sm:$0xff]
    %v977 = vld [vmem:[%s969 + $0x38] sm:$0xf]
    %s978 = scalar_lea.vmem %s0, 320
    %v979 = vld [vmem:[%s978] sm:$0xff]
    %v980 = vld [vmem:[%s978 + $0x8] sm:$0xff]
    %v981 = vld [vmem:[%s978 + $0x10] sm:$0xff]
    %v982 = vld [vmem:[%s978 + $0x18] sm:$0xff]
    %v983 = vld [vmem:[%s978 + $0x20] sm:$0xff]
    %v984 = vld [vmem:[%s978 + $0x28] sm:$0xff]
    %v985 = vld [vmem:[%s978 + $0x30] sm:$0xff]
    %v986 = vld [vmem:[%s978 + $0x38] sm:$0xf]
    %s987 = scalar_lea.vmem %s0, 448
    %v988 = vld [vmem:[%s987] sm:$0xff]
    %v989 = vld [vmem:[%s987 + $0x8] sm:$0xff]
    %v990 = vld [vmem:[%s987 + $0x10] sm:$0xff]
    %v991 = vld [vmem:[%s987 + $0x18] sm:$0xff]
    %v992 = vld [vmem:[%s987 + $0x20] sm:$0xff]
    %v993 = vld [vmem:[%s987 + $0x28] sm:$0xff]
    %v994 = vld [vmem:[%s987 + $0x30] sm:$0xff]
    %v995 = vld [vmem:[%s987 + $0x38] sm:$0xf]
    %s996 = scalar_lea.vmem %s0, 576
    %v997 = vld [vmem:[%s996] sm:$0xff]
    %v998 = vld [vmem:[%s996 + $0x8] sm:$0xff]
    %v999 = vld [vmem:[%s996 + $0x10] sm:$0xff]
    %v1000 = vld [vmem:[%s996 + $0x18] sm:$0xff]
    %v1001 = vld [vmem:[%s996 + $0x20] sm:$0xff]
    %v1002 = vld [vmem:[%s996 + $0x28] sm:$0xff]
    %v1003 = vld [vmem:[%s996 + $0x30] sm:$0xff]
    %v1004 = vld [vmem:[%s996 + $0x38] sm:$0xf]
    %1006 = vset.pattern.permute.xlu0 0
    %1007 = vperm.xlu0 %1006, %v961
    %v1008 = vpop.permute.xlu0 %1007
    %1011 = vset.pattern.permute.xlu0 0
    %1012 = vperm.xlu0 %1011, %v962
    %v1013 = vpop.permute.xlu0 %1012
    %1016 = vset.pattern.permute.xlu0 0
    %1017 = vperm.xlu0 %1016, %v963
    %v1018 = vpop.permute.xlu0 %1017
    %1021 = vset.pattern.permute.xlu0 0
    %1022 = vperm.xlu0 %1021, %v964
    %v1023 = vpop.permute.xlu0 %1022
    %1026 = vset.pattern.permute.xlu0 0
    %1027 = vperm.xlu0 %1026, %v965
    %v1028 = vpop.permute.xlu0 %1027
    %1031 = vset.pattern.permute.xlu0 0
    %1032 = vperm.xlu0 %1031, %v966
    %v1033 = vpop.permute.xlu0 %1032
    %1036 = vset.pattern.permute.xlu0 0
    %1037 = vperm.xlu0 %1036, %v967
    %v1038 = vpop.permute.xlu0 %1037
    %1041 = vset.pattern.permute.xlu0 0
    %1042 = vperm.xlu0 %1041, %v968
    %v1043 = vpop.permute.xlu0 %1042
    %v1045 = vmul.f32 %v1008, %v225
    %v1046 = vmul.f32 %v1013, %v225
    %v1047 = vmul.f32 %v1018, %v225
    %v1048 = vmul.f32 %v1023, %v225
    %v1049 = vmul.f32 %v1028, %v225
    %v1050 = vmul.f32 %v1033, %v225
    %v1051 = vmul.f32 %v1038, %v225
    %v1052 = vmul.f32 %v1043, %v225
    %1054 = vset.pattern.permute.xlu0 0
    %1055 = vperm.xlu0 %1054, %v970
    %v1056 = vpop.permute.xlu0 %1055
    %1059 = vset.pattern.permute.xlu0 0
    %1060 = vperm.xlu0 %1059, %v971
    %v1061 = vpop.permute.xlu0 %1060
    %1064 = vset.pattern.permute.xlu0 0
    %1065 = vperm.xlu0 %1064, %v972
    %v1066 = vpop.permute.xlu0 %1065
    %1069 = vset.pattern.permute.xlu0 0
    %1070 = vperm.xlu0 %1069, %v973
    %v1071 = vpop.permute.xlu0 %1070
    %1074 = vset.pattern.permute.xlu0 0
    %1075 = vperm.xlu0 %1074, %v974
    %v1076 = vpop.permute.xlu0 %1075
    %1079 = vset.pattern.permute.xlu0 0
    %1080 = vperm.xlu0 %1079, %v975
    %v1081 = vpop.permute.xlu0 %1080
    %1084 = vset.pattern.permute.xlu0 0
    %1085 = vperm.xlu0 %1084, %v976
    %v1086 = vpop.permute.xlu0 %1085
    %1089 = vset.pattern.permute.xlu0 0
    %1090 = vperm.xlu0 %1089, %v977
    %v1091 = vpop.permute.xlu0 %1090
    %v1093 = vmul.f32 %v1056, %v279
    %v1094 = vmul.f32 %v1061, %v279
    %v1095 = vmul.f32 %v1066, %v279
    %v1096 = vmul.f32 %v1071, %v279
    %v1097 = vmul.f32 %v1076, %v279
    %v1098 = vmul.f32 %v1081, %v279
    %v1099 = vmul.f32 %v1086, %v279
    %v1100 = vmul.f32 %v1091, %v279
    %v1101 = vadd.f32 %v1045, %v1093
    %v1102 = vadd.f32 %v1046, %v1094
    %v1103 = vadd.f32 %v1047, %v1095
    %v1104 = vadd.f32 %v1048, %v1096
    %v1105 = vadd.f32 %v1049, %v1097
    %v1106 = vadd.f32 %v1050, %v1098
    %v1107 = vadd.f32 %v1051, %v1099
    %v1108 = vadd.f32 %v1052, %v1100
    %1110 = vset.pattern.permute.xlu0 0
    %1111 = vperm.xlu0 %1110, %v979
    %v1112 = vpop.permute.xlu0 %1111
    %1115 = vset.pattern.permute.xlu0 0
    %1116 = vperm.xlu0 %1115, %v980
    %v1117 = vpop.permute.xlu0 %1116
    %1120 = vset.pattern.permute.xlu0 0
    %1121 = vperm.xlu0 %1120, %v981
    %v1122 = vpop.permute.xlu0 %1121
    %1125 = vset.pattern.permute.xlu0 0
    %1126 = vperm.xlu0 %1125, %v982
    %v1127 = vpop.permute.xlu0 %1126
    %1130 = vset.pattern.permute.xlu0 0
    %1131 = vperm.xlu0 %1130, %v983
    %v1132 = vpop.permute.xlu0 %1131
    %1135 = vset.pattern.permute.xlu0 0
    %1136 = vperm.xlu0 %1135, %v984
    %v1137 = vpop.permute.xlu0 %1136
    %1140 = vset.pattern.permute.xlu0 0
    %1141 = vperm.xlu0 %1140, %v985
    %v1142 = vpop.permute.xlu0 %1141
    %1145 = vset.pattern.permute.xlu0 0
    %1146 = vperm.xlu0 %1145, %v986
    %v1147 = vpop.permute.xlu0 %1146
    %v1149 = vmul.f32 %v1112, %v341
    %v1150 = vmul.f32 %v1117, %v341
    %v1151 = vmul.f32 %v1122, %v341
    %v1152 = vmul.f32 %v1127, %v341
    %v1153 = vmul.f32 %v1132, %v341
    %v1154 = vmul.f32 %v1137, %v341
    %v1155 = vmul.f32 %v1142, %v341
    %v1156 = vmul.f32 %v1147, %v341
    %v1157 = vadd.f32 %v1101, %v1149
    %v1158 = vadd.f32 %v1102, %v1150
    %v1159 = vadd.f32 %v1103, %v1151
    %v1160 = vadd.f32 %v1104, %v1152
    %v1161 = vadd.f32 %v1105, %v1153
    %v1162 = vadd.f32 %v1106, %v1154
    %v1163 = vadd.f32 %v1107, %v1155
    %v1164 = vadd.f32 %v1108, %v1156
    %v1165 = vadd.f32 %v1157, %v363
    %v1166 = vadd.f32 %v1158, %v363
    %v1167 = vadd.f32 %v1159, %v363
    %v1168 = vadd.f32 %v1160, %v363
    %v1169 = vadd.f32 %v1161, %v363
    %v1170 = vadd.f32 %v1162, %v363
    %v1171 = vadd.f32 %v1163, %v363
    %v1172 = vadd.f32 %v1164, %v363
    %v1173 = vmax.f32 %v1165, 0.0
    %v1174 = vmax.f32 %v1166, 0.0
    %v1175 = vmax.f32 %v1167, 0.0
    %v1176 = vmax.f32 %v1168, 0.0
    %v1177 = vmax.f32 %v1169, 0.0
    %v1178 = vmax.f32 %v1170, 0.0
    %v1179 = vmax.f32 %v1171, 0.0
    %v1180 = vmax.f32 %v1172, 0.0
    %v1181 = vmul.f32 %v1112, %v225
    %v1182 = vmul.f32 %v1117, %v225
    %v1183 = vmul.f32 %v1122, %v225
    %v1184 = vmul.f32 %v1127, %v225
    %v1185 = vmul.f32 %v1132, %v225
    %v1186 = vmul.f32 %v1137, %v225
    %v1187 = vmul.f32 %v1142, %v225
    %v1188 = vmul.f32 %v1147, %v225
    %1190 = vset.pattern.permute.xlu0 0
    %1191 = vperm.xlu0 %1190, %v988
    %v1192 = vpop.permute.xlu0 %1191
    %1195 = vset.pattern.permute.xlu0 0
    %1196 = vperm.xlu0 %1195, %v989
    %v1197 = vpop.permute.xlu0 %1196
    %1200 = vset.pattern.permute.xlu0 0
    %1201 = vperm.xlu0 %1200, %v990
    %v1202 = vpop.permute.xlu0 %1201
    %1205 = vset.pattern.permute.xlu0 0
    %1206 = vperm.xlu0 %1205, %v991
    %v1207 = vpop.permute.xlu0 %1206
    %1210 = vset.pattern.permute.xlu0 0
    %1211 = vperm.xlu0 %1210, %v992
    %v1212 = vpop.permute.xlu0 %1211
    %1215 = vset.pattern.permute.xlu0 0
    %1216 = vperm.xlu0 %1215, %v993
    %v1217 = vpop.permute.xlu0 %1216
    %1220 = vset.pattern.permute.xlu0 0
    %1221 = vperm.xlu0 %1220, %v994
    %v1222 = vpop.permute.xlu0 %1221
    %1225 = vset.pattern.permute.xlu0 0
    %1226 = vperm.xlu0 %1225, %v995
    %v1227 = vpop.permute.xlu0 %1226
    %v1229 = vmul.f32 %v1192, %v279
    %v1230 = vmul.f32 %v1197, %v279
    %v1231 = vmul.f32 %v1202, %v279
    %v1232 = vmul.f32 %v1207, %v279
    %v1233 = vmul.f32 %v1212, %v279
    %v1234 = vmul.f32 %v1217, %v279
    %v1235 = vmul.f32 %v1222, %v279
    %v1236 = vmul.f32 %v1227, %v279
    %v1237 = vadd.f32 %v1181, %v1229
    %v1238 = vadd.f32 %v1182, %v1230
    %v1239 = vadd.f32 %v1183, %v1231
    %v1240 = vadd.f32 %v1184, %v1232
    %v1241 = vadd.f32 %v1185, %v1233
    %v1242 = vadd.f32 %v1186, %v1234
    %v1243 = vadd.f32 %v1187, %v1235
    %v1244 = vadd.f32 %v1188, %v1236
    %1246 = vset.pattern.permute.xlu0 0
    %1247 = vperm.xlu0 %1246, %v997
    %v1248 = vpop.permute.xlu0 %1247
    %1251 = vset.pattern.permute.xlu0 0
    %1252 = vperm.xlu0 %1251, %v998
    %v1253 = vpop.permute.xlu0 %1252
    %1256 = vset.pattern.permute.xlu0 0
    %1257 = vperm.xlu0 %1256, %v999
    %v1258 = vpop.permute.xlu0 %1257
    %1261 = vset.pattern.permute.xlu0 0
    %1262 = vperm.xlu0 %1261, %v1000
    %v1263 = vpop.permute.xlu0 %1262
    %1266 = vset.pattern.permute.xlu0 0
    %1267 = vperm.xlu0 %1266, %v1001
    %v1268 = vpop.permute.xlu0 %1267
    %1271 = vset.pattern.permute.xlu0 0
    %1272 = vperm.xlu0 %1271, %v1002
    %v1273 = vpop.permute.xlu0 %1272
    %1276 = vset.pattern.permute.xlu0 0
    %1277 = vperm.xlu0 %1276, %v1003
    %v1278 = vpop.permute.xlu0 %1277
    %1281 = vset.pattern.permute.xlu0 0
    %1282 = vperm.xlu0 %1281, %v1004
    %v1283 = vpop.permute.xlu0 %1282
    %v1285 = vmul.f32 %v1248, %v341
    %v1286 = vmul.f32 %v1253, %v341
    %v1287 = vmul.f32 %v1258, %v341
    %v1288 = vmul.f32 %v1263, %v341
    %v1289 = vmul.f32 %v1268, %v341
    %v1290 = vmul.f32 %v1273, %v341
    %v1291 = vmul.f32 %v1278, %v341
    %v1292 = vmul.f32 %v1283, %v341
    %v1293 = vadd.f32 %v1237, %v1285
    %v1294 = vadd.f32 %v1238, %v1286
    %v1295 = vadd.f32 %v1239, %v1287
    %v1296 = vadd.f32 %v1240, %v1288
    %v1297 = vadd.f32 %v1241, %v1289
    %v1298 = vadd.f32 %v1242, %v1290
    %v1299 = vadd.f32 %v1243, %v1291
    %v1300 = vadd.f32 %v1244, %v1292
    %v1301 = vadd.f32 %v1293, %v363
    %v1302 = vadd.f32 %v1294, %v363
    %v1303 = vadd.f32 %v1295, %v363
    %v1304 = vadd.f32 %v1296, %v363
    %v1305 = vadd.f32 %v1297, %v363
    %v1306 = vadd.f32 %v1298, %v363
    %v1307 = vadd.f32 %v1299, %v363
    %v1308 = vadd.f32 %v1300, %v363
    %v1309 = vmax.f32 %v1301, 0.0
    %v1310 = vmax.f32 %v1302, 0.0
    %v1311 = vmax.f32 %v1303, 0.0
    %v1312 = vmax.f32 %v1304, 0.0
    %v1313 = vmax.f32 %v1305, 0.0
    %v1314 = vmax.f32 %v1306, 0.0
    %v1315 = vmax.f32 %v1307, 0.0
    %v1316 = vmax.f32 %v1308, 0.0
    %v1318 = vsel %vm517, %v1173, 0
    %v1321 = vsel %vm517, %v1174, 0
    %v1324 = vsel %vm517, %v1175, 0
    %v1327 = vsel %vm517, %v1176, 0
    %v1330 = vsel %vm517, %v1177, 0
    %v1333 = vsel %vm517, %v1178, 0
    %v1336 = vsel %vm517, %v1179, 0
    %v1339 = vsel %vm517, %v1180, 0
    %1341 = vmatprep.subr.mxu0 0.0
    %1342 = vmatpush1.msra.mxu0 %v111
    %1343 = vmatprep.subr.mxu0 0.0
    %1344 = vmatpush1.msra.mxu0 %v112
    %1345 = vmatprep.subr.mxu0 0.0
    %1346 = vmatpush1.msra.mxu0 %v113
    %1347 = vmatprep.subr.mxu0 0.0
    %1348 = vmatpush1.msra.mxu0 %v114
    %1349 = vmatprep.subr.mxu0 0.0
    %1350 = vmatpush1.msra.mxu0 %v115
    %1351 = vmatprep.subr.mxu0 0.0
    %1352 = vmatpush1.msra.mxu0 %v116
    %1353 = vmatprep.subr.mxu0 0.0
    %1354 = vmatpush1.msra.mxu0 %v117
    %1355 = vmatprep.subr.mxu0 0.0
    %1356 = vmatpush1.msra.mxu0 %v118
    %1357 = vmatprep.subr.mxu0 0.0
    %1358 = vmatpush1.msra.mxu0 0.0
    %1359 = vmatprep.subr.mxu0 0.0
    %1360 = vmatpush1.msra.mxu0 0.0
    %1361 = vmatprep.subr.mxu0 0.0
    %1362 = vmatpush1.msra.mxu0 0.0
    %1363 = vmatprep.subr.mxu0 0.0
    %1364 = vmatpush1.msra.mxu0 0.0
    %1365 = vmatprep.subr.mxu0 0.0
    %1366 = vmatpush1.msra.mxu0 0.0
    %1367 = vmatprep.subr.mxu0 0.0
    %1368 = vmatpush1.msra.mxu0 0.0
    %1369 = vmatprep.subr.mxu0 0.0
    %1370 = vmatpush1.msra.mxu0 0.0
    %1371 = vmatprep.subr.mxu0 0.0
    %1372 = vmatpush1.msra.mxu0 0.0
    %1373 = vmatprep.subr.mxu0 0.0
    %1374 = vmatpush1.msra.mxu0 0.0
    %1375 = vmatprep.subr.mxu0 0.0
    %1376 = vmatpush1.msra.mxu0 0.0
    %1377 = vmatprep.subr.mxu0 0.0
    %1378 = vmatpush1.msra.mxu0 0.0
    %1379 = vmatprep.subr.mxu0 0.0
    %1380 = vmatpush1.msra.mxu0 0.0
    %1381 = vmatprep.subr.mxu0 0.0
    %1382 = vmatpush1.msra.mxu0 0.0
    %1383 = vmatprep.subr.mxu0 0.0
    %1384 = vmatpush1.msra.mxu0 0.0
    %1385 = vmatprep.subr.mxu0 0.0
    %1386 = vmatpush1.msra.mxu0 0.0
    %1387 = vmatprep.subr.mxu0 0.0
    %1388 = vmatpush1.msra.mxu0 0.0
    %1389 = vmatprep.subr.mxu0 0.0
    %1390 = vmatpush1.msra.mxu0 0.0
    %1391 = vmatprep.subr.mxu0 0.0
    %1392 = vmatpush1.msra.mxu0 0.0
    %1393 = vmatprep.subr.mxu0 0.0
    %1394 = vmatpush1.msra.mxu0 0.0
    %1395 = vmatprep.subr.mxu0 0.0
    %1396 = vmatpush1.msra.mxu0 0.0
    %1397 = vmatprep.subr.mxu0 0.0
    %1398 = vmatpush1.msra.mxu0 0.0
    %1399 = vmatprep.subr.mxu0 0.0
    %1400 = vmatpush1.msra.mxu0 0.0
    %1401 = vmatprep.subr.mxu0 0.0
    %1402 = vmatpush1.msra.mxu0 0.0
    %1403 = vmatprep.subr.mxu0 0.0
    %1404 = vmatpush1.msra.mxu0 0.0
    %1405 = vmatprep.mubr.f32.mxu0 0.0
    %1406 = vmatmul.mubr.f32.gmra.mrb[0].mxu0 %v1318
    %v1407 = vpop.f32.mrb[0].mxu0
    %v1408 = vadd.f32 0.0, %v1407
    %v1409 = vpop.f32.mrb[0].mxu0
    %1410 = vmatprep.mubr.f32.mxu0 0.0
    %1411 = vmatmul.mubr.f32.gmra.mrb[0].mxu0 %v1321
    %v1412 = vpop.f32.mrb[0].mxu0
    %v1413 = vadd.f32 0.0, %v1412
    %v1414 = vpop.f32.mrb[0].mxu0
    %1415 = vmatprep.mubr.f32.mxu0 0.0
    %1416 = vmatmul.mubr.f32.gmra.mrb[0].mxu0 %v1324
    %v1417 = vpop.f32.mrb[0].mxu0
    %v1418 = vadd.f32 0.0, %v1417
    %v1419 = vpop.f32.mrb[0].mxu0
    %1420 = vmatprep.mubr.f32.mxu0 0.0
    %1421 = vmatmul.mubr.f32.gmra.mrb[0].mxu0 %v1327
    %v1422 = vpop.f32.mrb[0].mxu0
    %v1423 = vadd.f32 0.0, %v1422
    %v1424 = vpop.f32.mrb[0].mxu0
    %1425 = vmatprep.mubr.f32.mxu0 0.0
    %1426 = vmatmul.mubr.f32.gmra.mrb[0].mxu0 %v1330
    %v1427 = vpop.f32.mrb[0].mxu0
    %v1428 = vadd.f32 0.0, %v1427
    %v1429 = vpop.f32.mrb[0].mxu0
    %1430 = vmatprep.mubr.f32.mxu0 0.0
    %1431 = vmatmul.mubr.f32.gmra.mrb[0].mxu0 %v1333
    %v1432 = vpop.f32.mrb[0].mxu0
    %v1433 = vadd.f32 0.0, %v1432
    %v1434 = vpop.f32.mrb[0].mxu0
    %1435 = vmatprep.mubr.f32.mxu0 0.0
    %1436 = vmatmul.mubr.f32.gmra.mrb[0].mxu0 %v1336
    %v1437 = vpop.f32.mrb[0].mxu0
    %v1438 = vadd.f32 0.0, %v1437
    %v1439 = vpop.f32.mrb[0].mxu0
    %1440 = vmatprep.mubr.f32.mxu0 0.0
    %1441 = vmatmul.mubr.f32.gmra.mrb[0].mxu0 %v1339
    %v1442 = vpop.f32.mrb[0].mxu0
    %v1443 = vadd.f32 0.0, %v1442
    %v1444 = vpop.f32.mrb[0].mxu0
    %1445 = vdwg.mxu0
    %v1447 = vsel %vm517, %v1309, 0
    %v1450 = vsel %vm517, %v1310, 0
    %v1453 = vsel %vm517, %v1311, 0
    %v1456 = vsel %vm517, %v1312, 0
    %v1459 = vsel %vm517, %v1313, 0
    %v1462 = vsel %vm517, %v1314, 0
    %v1465 = vsel %vm517, %v1315, 0
    %v1468 = vsel %vm517, %v1316, 0
    %1470 = vmatprep.subr.mxu0 0.0
    %1471 = vmatpush1.msra.mxu0 %v120
    %1472 = vmatprep.subr.mxu0 0.0
    %1473 = vmatpush1.msra.mxu0 %v121
    %1474 = vmatprep.subr.mxu0 0.0
    %1475 = vmatpush1.msra.mxu0 %v122
    %1476 = vmatprep.subr.mxu0 0.0
    %1477 = vmatpush1.msra.mxu0 %v123
    %1478 = vmatprep.subr.mxu0 0.0
    %1479 = vmatpush1.msra.mxu0 %v124
    %1480 = vmatprep.subr.mxu0 0.0
    %1481 = vmatpush1.msra.mxu0 %v125
    %1482 = vmatprep.subr.mxu0 0.0
    %1483 = vmatpush1.msra.mxu0 %v126
    %1484 = vmatprep.subr.mxu0 0.0
    %1485 = vmatpush1.msra.mxu0 %v127
    %1486 = vmatprep.subr.mxu0 0.0
    %1487 = vmatpush1.msra.mxu0 0.0
    %1488 = vmatprep.subr.mxu0 0.0
    %1489 = vmatpush1.msra.mxu0 0.0
    %1490 = vmatprep.subr.mxu0 0.0
    %1491 = vmatpush1.msra.mxu0 0.0
    %1492 = vmatprep.subr.mxu0 0.0
    %1493 = vmatpush1.msra.mxu0 0.0
    %1494 = vmatprep.subr.mxu0 0.0
    %1495 = vmatpush1.msra.mxu0 0.0
    %1496 = vmatprep.subr.mxu0 0.0
    %1497 = vmatpush1.msra.mxu0 0.0
    %1498 = vmatprep.subr.mxu0 0.0
    %1499 = vmatpush1.msra.mxu0 0.0
    %1500 = vmatprep.subr.mxu0 0.0
    %1501 = vmatpush1.msra.mxu0 0.0
    %1502 = vmatprep.subr.mxu0 0.0
    %1503 = vmatpush1.msra.mxu0 0.0
    %1504 = vmatprep.subr.mxu0 0.0
    %1505 = vmatpush1.msra.mxu0 0.0
    %1506 = vmatprep.subr.mxu0 0.0
    %1507 = vmatpush1.msra.mxu0 0.0
    %1508 = vmatprep.subr.mxu0 0.0
    %1509 = vmatpush1.msra.mxu0 0.0
    %1510 = vmatprep.subr.mxu0 0.0
    %1511 = vmatpush1.msra.mxu0 0.0
    %1512 = vmatprep.subr.mxu0 0.0
    %1513 = vmatpush1.msra.mxu0 0.0
    %1514 = vmatprep.subr.mxu0 0.0
    %1515 = vmatpush1.msra.mxu0 0.0
    %1516 = vmatprep.subr.mxu0 0.0
    %1517 = vmatpush1.msra.mxu0 0.0
    %1518 = vmatprep.subr.mxu0 0.0
    %1519 = vmatpush1.msra.mxu0 0.0
    %1520 = vmatprep.subr.mxu0 0.0
    %1521 = vmatpush1.msra.mxu0 0.0
    %1522 = vmatprep.subr.mxu0 0.0
    %1523 = vmatpush1.msra.mxu0 0.0
    %1524 = vmatprep.subr.mxu0 0.0
    %1525 = vmatpush1.msra.mxu0 0.0
    %1526 = vmatprep.subr.mxu0 0.0
    %1527 = vmatpush1.msra.mxu0 0.0
    %1528 = vmatprep.subr.mxu0 0.0
    %1529 = vmatpush1.msra.mxu0 0.0
    %1530 = vmatprep.subr.mxu0 0.0
    %1531 = vmatpush1.msra.mxu0 0.0
    %1532 = vmatprep.subr.mxu0 0.0
    %1533 = vmatpush1.msra.mxu0 0.0
    %1534 = vmatprep.mubr.f32.mxu0 0.0
    %1535 = vmatmul.mubr.f32.gmra.mrb[0].mxu0 %v1447
    %v1536 = vpop.f32.mrb[0].mxu0
    %v1537 = vadd.f32 0.0, %v1536
    %v1538 = vpop.f32.mrb[0].mxu0
    %1539 = vmatprep.mubr.f32.mxu0 0.0
    %1540 = vmatmul.mubr.f32.gmra.mrb[0].mxu0 %v1450
    %v1541 = vpop.f32.mrb[0].mxu0
    %v1542 = vadd.f32 0.0, %v1541
    %v1543 = vpop.f32.mrb[0].mxu0
    %1544 = vmatprep.mubr.f32.mxu0 0.0
    %1545 = vmatmul.mubr.f32.gmra.mrb[0].mxu0 %v1453
    %v1546 = vpop.f32.mrb[0].mxu0
    %v1547 = vadd.f32 0.0, %v1546
    %v1548 = vpop.f32.mrb[0].mxu0
    %1549 = vmatprep.mubr.f32.mxu0 0.0
    %1550 = vmatmul.mubr.f32.gmra.mrb[0].mxu0 %v1456
    %v1551 = vpop.f32.mrb[0].mxu0
    %v1552 = vadd.f32 0.0, %v1551
    %v1553 = vpop.f32.mrb[0].mxu0
    %1554 = vmatprep.mubr.f32.mxu0 0.0
    %1555 = vmatmul.mubr.f32.gmra.mrb[0].mxu0 %v1459
    %v1556 = vpop.f32.mrb[0].mxu0
    %v1557 = vadd.f32 0.0, %v1556
    %v1558 = vpop.f32.mrb[0].mxu0
    %1559 = vmatprep.mubr.f32.mxu0 0.0
    %1560 = vmatmul.mubr.f32.gmra.mrb[0].mxu0 %v1462
    %v1561 = vpop.f32.mrb[0].mxu0
    %v1562 = vadd.f32 0.0, %v1561
    %v1563 = vpop.f32.mrb[0].mxu0
    %1564 = vmatprep.mubr.f32.mxu0 0.0
    %1565 = vmatmul.mubr.f32.gmra.mrb[0].mxu0 %v1465
    %v1566 = vpop.f32.mrb[0].mxu0
    %v1567 = vadd.f32 0.0, %v1566
    %v1568 = vpop.f32.mrb[0].mxu0
    %1569 = vmatprep.mubr.f32.mxu0 0.0
    %1570 = vmatmul.mubr.f32.gmra.mrb[0].mxu0 %v1468
    %v1571 = vpop.f32.mrb[0].mxu0
    %v1572 = vadd.f32 0.0, %v1571
    %v1573 = vpop.f32.mrb[0].mxu0
    %1574 = vdwg.mxu0
    %v1575 = vadd.f32 %v1408, %v1537
    %v1576 = vadd.f32 %v1413, %v1542
    %v1577 = vadd.f32 %v1418, %v1547
    %v1578 = vadd.f32 %v1423, %v1552
    %v1579 = vadd.f32 %v1428, %v1557
    %v1580 = vadd.f32 %v1433, %v1562
    %v1581 = vadd.f32 %v1438, %v1567
    %v1582 = vadd.f32 %v1443, %v1572
    %1583 = vmatprep.subr.mxu0 0.0
    %1584 = vmatpush1.msra.mxu0 %v129
    %1585 = vmatprep.subr.mxu0 0.0
    %1586 = vmatpush1.msra.mxu0 %v130
    %1587 = vmatprep.subr.mxu0 0.0
    %1588 = vmatpush1.msra.mxu0 %v131
    %1589 = vmatprep.subr.mxu0 0.0
    %1590 = vmatpush1.msra.mxu0 %v132
    %1591 = vmatprep.subr.mxu0 0.0
    %1592 = vmatpush1.msra.mxu0 %v133
    %1593 = vmatprep.subr.mxu0 0.0
    %1594 = vmatpush1.msra.mxu0 %v134
    %1595 = vmatprep.subr.mxu0 0.0
    %1596 = vmatpush1.msra.mxu0 %v135
    %1597 = vmatprep.subr.mxu0 0.0
    %1598 = vmatpush1.msra.mxu0 %v136
    %1599 = vmatprep.subr.mxu0 0.0
    %1600 = vmatpush1.msra.mxu0 0.0
    %1601 = vmatprep.subr.mxu0 0.0
    %1602 = vmatpush1.msra.mxu0 0.0
    %1603 = vmatprep.subr.mxu0 0.0
    %1604 = vmatpush1.msra.mxu0 0.0
    %1605 = vmatprep.subr.mxu0 0.0
    %1606 = vmatpush1.msra.mxu0 0.0
    %1607 = vmatprep.subr.mxu0 0.0
    %1608 = vmatpush1.msra.mxu0 0.0
    %1609 = vmatprep.subr.mxu0 0.0
    %1610 = vmatpush1.msra.mxu0 0.0
    %1611 = vmatprep.subr.mxu0 0.0
    %1612 = vmatpush1.msra.mxu0 0.0
    %1613 = vmatprep.subr.mxu0 0.0
    %1614 = vmatpush1.msra.mxu0 0.0
    %1615 = vmatprep.subr.mxu0 0.0
    %1616 = vmatpush1.msra.mxu0 0.0
    %1617 = vmatprep.subr.mxu0 0.0
    %1618 = vmatpush1.msra.mxu0 0.0
    %1619 = vmatprep.subr.mxu0 0.0
    %1620 = vmatpush1.msra.mxu0 0.0
    %1621 = vmatprep.subr.mxu0 0.0
    %1622 = vmatpush1.msra.mxu0 0.0
    %1623 = vmatprep.subr.mxu0 0.0
    %1624 = vmatpush1.msra.mxu0 0.0
    %1625 = vmatprep.subr.mxu0 0.0
    %1626 = vmatpush1.msra.mxu0 0.0
    %1627 = vmatprep.subr.mxu0 0.0
    %1628 = vmatpush1.msra.mxu0 0.0
    %1629 = vmatprep.subr.mxu0 0.0
    %1630 = vmatpush1.msra.mxu0 0.0
    %1631 = vmatprep.subr.mxu0 0.0
    %1632 = vmatpush1.msra.mxu0 0.0
    %1633 = vmatprep.subr.mxu0 0.0
    %1634 = vmatpush1.msra.mxu0 0.0
    %1635 = vmatprep.subr.mxu0 0.0
    %1636 = vmatpush1.msra.mxu0 0.0
    %1637 = vmatprep.subr.mxu0 0.0
    %1638 = vmatpush1.msra.mxu0 0.0
    %1639 = vmatprep.subr.mxu0 0.0
    %1640 = vmatpush1.msra.mxu0 0.0
    %1641 = vmatprep.subr.mxu0 0.0
    %1642 = vmatpush1.msra.mxu0 0.0
    %1643 = vmatprep.subr.mxu0 0.0
    %1644 = vmatpush1.msra.mxu0 0.0
    %1645 = vmatprep.subr.mxu0 0.0
    %1646 = vmatpush1.msra.mxu0 0.0
    %1647 = vmatprep.mubr.f32.mxu0 0.0
    %1648 = vmatmul.mubr.f32.gmra.mrb[0].mxu0 %v1318
    %v1649 = vpop.f32.mrb[0].mxu0
    %v1650 = vadd.f32 0.0, %v1649
    %v1651 = vpop.f32.mrb[0].mxu0
    %1652 = vmatprep.mubr.f32.mxu0 0.0
    %1653 = vmatmul.mubr.f32.gmra.mrb[0].mxu0 %v1321
    %v1654 = vpop.f32.mrb[0].mxu0
    %v1655 = vadd.f32 0.0, %v1654
    %v1656 = vpop.f32.mrb[0].mxu0
    %1657 = vmatprep.mubr.f32.mxu0 0.0
    %1658 = vmatmul.mubr.f32.gmra.mrb[0].mxu0 %v1324
    %v1659 = vpop.f32.mrb[0].mxu0
    %v1660 = vadd.f32 0.0, %v1659
    %v1661 = vpop.f32.mrb[0].mxu0
    %1662 = vmatprep.mubr.f32.mxu0 0.0
    %1663 = vmatmul.mubr.f32.gmra.mrb[0].mxu0 %v1327
    %v1664 = vpop.f32.mrb[0].mxu0
    %v1665 = vadd.f32 0.0, %v1664
    %v1666 = vpop.f32.mrb[0].mxu0
    %1667 = vmatprep.mubr.f32.mxu0 0.0
    %1668 = vmatmul.mubr.f32.gmra.mrb[0].mxu0 %v1330
    %v1669 = vpop.f32.mrb[0].mxu0
    %v1670 = vadd.f32 0.0, %v1669
    %v1671 = vpop.f32.mrb[0].mxu0
    %1672 = vmatprep.mubr.f32.mxu0 0.0
    %1673 = vmatmul.mubr.f32.gmra.mrb[0].mxu0 %v1333
    %v1674 = vpop.f32.mrb[0].mxu0
    %v1675 = vadd.f32 0.0, %v1674
    %v1676 = vpop.f32.mrb[0].mxu0
    %1677 = vmatprep.mubr.f32.mxu0 0.0
    %1678 = vmatmul.mubr.f32.gmra.mrb[0].mxu0 %v1336
    %v1679 = vpop.f32.mrb[0].mxu0
    %v1680 = vadd.f32 0.0, %v1679
    %v1681 = vpop.f32.mrb[0].mxu0
    %1682 = vmatprep.mubr.f32.mxu0 0.0
    %1683 = vmatmul.mubr.f32.gmra.mrb[0].mxu0 %v1339
    %v1684 = vpop.f32.mrb[0].mxu0
    %v1685 = vadd.f32 0.0, %v1684
    %v1686 = vpop.f32.mrb[0].mxu0
    %1687 = vdwg.mxu0
    %v1696 = vrot.slane %v1650, 1
    %v1697 = vrot.slane %v1655, 1
    %v1698 = vsel %vm897, %v1696, %v1697
    %v1699 = vrot.slane %v1660, 1
    %v1700 = vsel %vm897, %v1697, %v1699
    %v1701 = vrot.slane %v1665, 1
    %v1702 = vsel %vm897, %v1699, %v1701
    %v1703 = vrot.slane %v1670, 1
    %v1704 = vsel %vm897, %v1701, %v1703
    %v1705 = vrot.slane %v1675, 1
    %v1706 = vsel %vm897, %v1703, %v1705
    %v1707 = vrot.slane %v1680, 1
    %v1708 = vsel %vm897, %v1705, %v1707
    %v1709 = vrot.slane %v1685, 1
    %v1710 = vsel %vm897, %v1707, %v1709
    %v1719 = vadd.f32 %v1575, %v1698
    %v1720 = vadd.f32 %v1576, %v1700
    %v1721 = vadd.f32 %v1577, %v1702
    %v1722 = vadd.f32 %v1578, %v1704
    %v1723 = vadd.f32 %v1579, %v1706
    %v1724 = vadd.f32 %v1580, %v1708
    %v1725 = vadd.f32 %v1581, %v1710
    %v1726 = vadd.f32 %v1582, %v1709
    %v1727 = vadd.f32 %v1719, %v933
    %v1728 = vadd.f32 %v1720, %v933
    %v1729 = vadd.f32 %v1721, %v933
    %v1730 = vadd.f32 %v1722, %v933
    %v1731 = vadd.f32 %v1723, %v933
    %v1732 = vadd.f32 %v1724, %v933
    %v1733 = vadd.f32 %v1725, %v933
    %v1734 = vadd.f32 %v1726, %v933
    %v1735 = vmax.f32 %v1727, 0.0
    %v1736 = vmax.f32 %v1728, 0.0
    %v1737 = vmax.f32 %v1729, 0.0
    %v1738 = vmax.f32 %v1730, 0.0
    %v1739 = vmax.f32 %v1731, 0.0
    %v1740 = vmax.f32 %v1732, 0.0
    %v1741 = vmax.f32 %v1733, 0.0
    %v1742 = vmax.f32 %v1734, 0.0
    %s1743 = scalar_lea.vmem [#allocation2], 64
    %1744 = vst.msk [vmem:[%s1743] sm:$0xff] %vm517, %v1735
    %1745 = vst.msk [vmem:[%s1743 + $0x8] sm:$0xff] %vm517, %v1736
    %1746 = vst.msk [vmem:[%s1743 + $0x10] sm:$0xff] %vm517, %v1737
    %1747 = vst.msk [vmem:[%s1743 + $0x18] sm:$0xff] %vm517, %v1738
    %1748 = vst.msk [vmem:[%s1743 + $0x20] sm:$0xff] %vm517, %v1739
    %1749 = vst.msk [vmem:[%s1743 + $0x28] sm:$0xff] %vm517, %v1740
    %1750 = vst.msk [vmem:[%s1743 + $0x30] sm:$0xff] %vm517, %v1741
    %1751 = vst.msk [vmem:[%s1743 + $0x38] sm:$0x7] %vm958, %v1742
    %v1752 = vld [vmem:[#allocation2] sm:$0x1]
    %v1753 = vld [vmem:[#allocation2 + $0x40] sm:$0x1]
    %v1757 = vunpack.c.l.s4 1983009808
    %v1758 = vunpack.c.0.s8 %v1757
    %v1759 = vlaneseq
    %v1760 = vshrl.u32 %v1759, 7
    %v1761 = vsub.s32 %v1758, %v1760
    %v1762 = vrot.slane %v1752, %v1761
    %v1764 = vunpack.c.l.s4 1983009808
    %v1765 = vunpack.c.0.s8 %v1764
    %v1766 = vlaneseq
    %v1767 = vshrl.u32 %v1766, 7
    %v1768 = vsub.s32 %v1765, %v1767
    %v1769 = vrot.slane %v1753, %v1768
    %vm1770 = vcmask 1044484
    %v1771 = vsel %vm1770, %v1762, %v1762
    %vm1772 = vcmask 1046534
    %v1773 = vsel %vm1772, %v1762, %v1771
    %v1774 = vrot.slane %v1769, 7
    %vm1775 = vcmask 1041409
    %v1776 = vsel %vm1775, %v1774, %v1773
    %vm1777 = vcmask 1043459
    %v1778 = vsel %vm1777, %v1774, %v1776
    %vm1779 = vcmask 1045509
    %v1780 = vsel %vm1779, %v1774, %v1778
    %vm1781 = vcmask 1047559
    %v1782 = vsel %vm1781, %v1774, %v1780
    %vm1784 = vcmask 517120
    %1785 = vst.msk [vmem:[#allocation3] sm:$0x3] %vm1784, %v1782
    %v1786 = vld [vmem:[#allocation2 + $0x1] sm:$0x1]
    %v1787 = vld [vmem:[#allocation2 + $0x41] sm:$0x1]
    %v1791 = vunpack.c.l.s4 1983009808
    %v1792 = vunpack.c.0.s8 %v1791
    %v1793 = vlaneseq
    %v1794 = vshrl.u32 %v1793, 7
    %v1795 = vsub.s32 %v1792, %v1794
    %v1796 = vrot.slane %v1786, %v1795
    %v1798 = vunpack.c.l.s4 1983009808
    %v1799 = vunpack.c.0.s8 %v1798
    %v1800 = vlaneseq
    %v1801 = vshrl.u32 %v1800, 7
    %v1802 = vsub.s32 %v1799, %v1801
    %v1803 = vrot.slane %v1787, %v1802
    %v1804 = vsel %vm1770, %v1796, %v1796
    %v1805 = vsel %vm1772, %v1796, %v1804
    %v1806 = vrot.slane %v1803, 7
    %v1807 = vsel %vm1775, %v1806, %v1805
    %v1808 = vsel %vm1777, %v1806, %v1807
    %v1809 = vsel %vm1779, %v1806, %v1808
    %v1810 = vsel %vm1781, %v1806, %v1809
    %1811 = vrot.lane.b32.xlu0 %v1810, 64
    %v1812 = vpop.permute.xlu0 %1811
    %vm1814 = vcmask 1041920
    %1815 = vst.msk [vmem:[#allocation3] sm:$0x3] %vm1814, %v1812
    %v1816 = vld [vmem:[#allocation2 + $0x2] sm:$0x1]
    %v1817 = vld [vmem:[#allocation2 + $0x42] sm:$0x1]
    %v1821 = vunpack.c.l.s4 1983009808
    %v1822 = vunpack.c.0.s8 %v1821
    %v1823 = vlaneseq
    %v1824 = vshrl.u32 %v1823, 7
    %v1825 = vsub.s32 %v1822, %v1824
    %v1826 = vrot.slane %v1816, %v1825
    %v1828 = vunpack.c.l.s4 1983009808
    %v1829 = vunpack.c.0.s8 %v1828
    %v1830 = vlaneseq
    %v1831 = vshrl.u32 %v1830, 7
    %v1832 = vsub.s32 %v1829, %v1831
    %v1833 = vrot.slane %v1817, %v1832
    %v1834 = vsel %vm1770, %v1826, %v1826
    %v1835 = vsel %vm1772, %v1826, %v1834
    %v1836 = vrot.slane %v1833, 7
    %v1837 = vsel %vm1775, %v1836, %v1835
    %v1838 = vsel %vm1777, %v1836, %v1837
    %v1839 = vsel %vm1779, %v1836, %v1838
    %v1840 = vsel %vm1781, %v1836, %v1839
    %1842 = vst.msk [vmem:[#allocation3 + $0x2] sm:$0x3] %vm1784, %v1840
    %v1843 = vld [vmem:[#allocation2 + $0x3] sm:$0x1]
    %v1844 = vld [vmem:[#allocation2 + $0x43] sm:$0x1]
    %v1848 = vunpack.c.l.s4 1983009808
    %v1849 = vunpack.c.0.s8 %v1848
    %v1850 = vlaneseq
    %v1851 = vshrl.u32 %v1850, 7
    %v1852 = vsub.s32 %v1849, %v1851
    %v1853 = vrot.slane %v1843, %v1852
    %v1855 = vunpack.c.l.s4 1983009808
    %v1856 = vunpack.c.0.s8 %v1855
    %v1857 = vlaneseq
    %v1858 = vshrl.u32 %v1857, 7
    %v1859 = vsub.s32 %v1856, %v1858
    %v1860 = vrot.slane %v1844, %v1859
    %v1861 = vsel %vm1770, %v1853, %v1853
    %v1862 = vsel %vm1772, %v1853, %v1861
    %v1863 = vrot.slane %v1860, 7
    %v1864 = vsel %vm1775, %v1863, %v1862
    %v1865 = vsel %vm1777, %v1863, %v1864
    %v1866 = vsel %vm1779, %v1863, %v1865
    %v1867 = vsel %vm1781, %v1863, %v1866
    %1868 = vrot.lane.b32.xlu0 %v1867, 64
    %v1869 = vpop.permute.xlu0 %1868
    %1871 = vst.msk [vmem:[#allocation3 + $0x2] sm:$0x3] %vm1814, %v1869
    %v1872 = vld [vmem:[#allocation2 + $0x4] sm:$0x1]
    %v1873 = vld [vmem:[#allocation2 + $0x44] sm:$0x1]
    %v1877 = vunpack.c.l.s4 1983009808
    %v1878 = vunpack.c.0.s8 %v1877
    %v1879 = vlaneseq
    %v1880 = vshrl.u32 %v1879, 7
    %v1881 = vsub.s32 %v1878, %v1880
    %v1882 = vrot.slane %v1872, %v1881
    %v1884 = vunpack.c.l.s4 1983009808
    %v1885 = vunpack.c.0.s8 %v1884
    %v1886 = vlaneseq
    %v1887 = vshrl.u32 %v1886, 7
    %v1888 = vsub.s32 %v1885, %v1887
    %v1889 = vrot.slane %v1873, %v1888
    %v1890 = vsel %vm1770, %v1882, %v1882
    %v1891 = vsel %vm1772, %v1882, %v1890
    %v1892 = vrot.slane %v1889, 7
    %v1893 = vsel %vm1775, %v1892, %v1891
    %v1894 = vsel %vm1777, %v1892, %v1893
    %v1895 = vsel %vm1779, %v1892, %v1894
    %v1896 = vsel %vm1781, %v1892, %v1895
    %1898 = vst.msk [vmem:[#allocation3 + $0x4] sm:$0x3] %vm1784, %v1896
    %v1899 = vld [vmem:[#allocation2 + $0x5] sm:$0x1]
    %v1900 = vld [vmem:[#allocation2 + $0x45] sm:$0x1]
    %v1904 = vunpack.c.l.s4 1983009808
    %v1905 = vunpack.c.0.s8 %v1904
    %v1906 = vlaneseq
    %v1907 = vshrl.u32 %v1906, 7
    %v1908 = vsub.s32 %v1905, %v1907
    %v1909 = vrot.slane %v1899, %v1908
    %v1911 = vunpack.c.l.s4 1983009808
    %v1912 = vunpack.c.0.s8 %v1911
    %v1913 = vlaneseq
    %v1914 = vshrl.u32 %v1913, 7
    %v1915 = vsub.s32 %v1912, %v1914
    %v1916 = vrot.slane %v1900, %v1915
    %v1917 = vsel %vm1770, %v1909, %v1909
    %v1918 = vsel %vm1772, %v1909, %v1917
    %v1919 = vrot.slane %v1916, 7
    %v1920 = vsel %vm1775, %v1919, %v1918
    %v1921 = vsel %vm1777, %v1919, %v1920
    %v1922 = vsel %vm1779, %v1919, %v1921
    %v1923 = vsel %vm1781, %v1919, %v1922
    %1924 = vrot.lane.b32.xlu0 %v1923, 64
    %v1925 = vpop.permute.xlu0 %1924
    %1927 = vst.msk [vmem:[#allocation3 + $0x4] sm:$0x3] %vm1814, %v1925
    %v1928 = vld [vmem:[#allocation2 + $0x6] sm:$0x1]
    %v1929 = vld [vmem:[#allocation2 + $0x46] sm:$0x1]
    %v1933 = vunpack.c.l.s4 1983009808
    %v1934 = vunpack.c.0.s8 %v1933
    %v1935 = vlaneseq
    %v1936 = vshrl.u32 %v1935, 7
    %v1937 = vsub.s32 %v1934, %v1936
    %v1938 = vrot.slane %v1928, %v1937
    %v1940 = vunpack.c.l.s4 1983009808
    %v1941 = vunpack.c.0.s8 %v1940
    %v1942 = vlaneseq
    %v1943 = vshrl.u32 %v1942, 7
    %v1944 = vsub.s32 %v1941, %v1943
    %v1945 = vrot.slane %v1929, %v1944
    %v1946 = vsel %vm1770, %v1938, %v1938
    %v1947 = vsel %vm1772, %v1938, %v1946
    %v1948 = vrot.slane %v1945, 7
    %v1949 = vsel %vm1775, %v1948, %v1947
    %v1950 = vsel %vm1777, %v1948, %v1949
    %v1951 = vsel %vm1779, %v1948, %v1950
    %v1952 = vsel %vm1781, %v1948, %v1951
    %1954 = vst.msk [vmem:[#allocation3 + $0x6] sm:$0x3] %vm1784, %v1952
    %v1955 = vld [vmem:[#allocation2 + $0x7] sm:$0x1]
    %v1956 = vld [vmem:[#allocation2 + $0x47] sm:$0x1]
    %v1960 = vunpack.c.l.s4 1983009808
    %v1961 = vunpack.c.0.s8 %v1960
    %v1962 = vlaneseq
    %v1963 = vshrl.u32 %v1962, 7
    %v1964 = vsub.s32 %v1961, %v1963
    %v1965 = vrot.slane %v1955, %v1964
    %v1967 = vunpack.c.l.s4 1983009808
    %v1968 = vunpack.c.0.s8 %v1967
    %v1969 = vlaneseq
    %v1970 = vshrl.u32 %v1969, 7
    %v1971 = vsub.s32 %v1968, %v1970
    %v1972 = vrot.slane %v1956, %v1971
    %v1973 = vsel %vm1770, %v1965, %v1965
    %v1974 = vsel %vm1772, %v1965, %v1973
    %v1975 = vrot.slane %v1972, 7
    %v1976 = vsel %vm1775, %v1975, %v1974
    %v1977 = vsel %vm1777, %v1975, %v1976
    %v1978 = vsel %vm1779, %v1975, %v1977
    %v1979 = vsel %vm1781, %v1975, %v1978
    %1980 = vrot.lane.b32.xlu0 %v1979, 64
    %v1981 = vpop.permute.xlu0 %1980
    %1983 = vst.msk [vmem:[#allocation3 + $0x6] sm:$0x3] %vm1814, %v1981
    %v1984 = vld [vmem:[#allocation2 + $0x8] sm:$0x1]
    %v1985 = vld [vmem:[#allocation2 + $0x48] sm:$0x1]
    %v1989 = vunpack.c.l.s4 1983009808
    %v1990 = vunpack.c.0.s8 %v1989
    %v1991 = vlaneseq
    %v1992 = vshrl.u32 %v1991, 7
    %v1993 = vsub.s32 %v1990, %v1992
    %v1994 = vrot.slane %v1984, %v1993
    %v1996 = vunpack.c.l.s4 1983009808
    %v1997 = vunpack.c.0.s8 %v1996
    %v1998 = vlaneseq
    %v1999 = vshrl.u32 %v1998, 7
    %v2000 = vsub.s32 %v1997, %v1999
    %v2001 = vrot.slane %v1985, %v2000
    %v2002 = vsel %vm1770, %v1994, %v1994
    %v2003 = vsel %vm1772, %v1994, %v2002
    %v2004 = vrot.slane %v2001, 7
    %v2005 = vsel %vm1775, %v2004, %v2003
    %v2006 = vsel %vm1777, %v2004, %v2005
    %v2007 = vsel %vm1779, %v2004, %v2006
    %v2008 = vsel %vm1781, %v2004, %v2007
    %2010 = vst.msk [vmem:[#allocation3 + $0x8] sm:$0x3] %vm1784, %v2008
    %v2011 = vld [vmem:[#allocation2 + $0x9] sm:$0x1]
    %v2012 = vld [vmem:[#allocation2 + $0x49] sm:$0x1]
    %v2016 = vunpack.c.l.s4 1983009808
    %v2017 = vunpack.c.0.s8 %v2016
    %v2018 = vlaneseq
    %v2019 = vshrl.u32 %v2018, 7
    %v2020 = vsub.s32 %v2017, %v2019
    %v2021 = vrot.slane %v2011, %v2020
    %v2023 = vunpack.c.l.s4 1983009808
    %v2024 = vunpack.c.0.s8 %v2023
    %v2025 = vlaneseq
    %v2026 = vshrl.u32 %v2025, 7
    %v2027 = vsub.s32 %v2024, %v2026
    %v2028 = vrot.slane %v2012, %v2027
    %v2029 = vsel %vm1770, %v2021, %v2021
    %v2030 = vsel %vm1772, %v2021, %v2029
    %v2031 = vrot.slane %v2028, 7
    %v2032 = vsel %vm1775, %v2031, %v2030
    %v2033 = vsel %vm1777, %v2031, %v2032
    %v2034 = vsel %vm1779, %v2031, %v2033
    %v2035 = vsel %vm1781, %v2031, %v2034
    %2036 = vrot.lane.b32.xlu0 %v2035, 64
    %v2037 = vpop.permute.xlu0 %2036
    %2039 = vst.msk [vmem:[#allocation3 + $0x8] sm:$0x3] %vm1814, %v2037
    %v2040 = vld [vmem:[#allocation2 + $0xa] sm:$0x1]
    %v2041 = vld [vmem:[#allocation2 + $0x4a] sm:$0x1]
    %v2045 = vunpack.c.l.s4 1983009808
    %v2046 = vunpack.c.0.s8 %v2045
    %v2047 = vlaneseq
    %v2048 = vshrl.u32 %v2047, 7
    %v2049 = vsub.s32 %v2046, %v2048
    %v2050 = vrot.slane %v2040, %v2049
    %v2052 = vunpack.c.l.s4 1983009808
    %v2053 = vunpack.c.0.s8 %v2052
    %v2054 = vlaneseq
    %v2055 = vshrl.u32 %v2054, 7
    %v2056 = vsub.s32 %v2053, %v2055
    %v2057 = vrot.slane %v2041, %v2056
    %v2058 = vsel %vm1770, %v2050, %v2050
    %v2059 = vsel %vm1772, %v2050, %v2058
    %v2060 = vrot.slane %v2057, 7
    %v2061 = vsel %vm1775, %v2060, %v2059
    %v2062 = vsel %vm1777, %v2060, %v2061
    %v2063 = vsel %vm1779, %v2060, %v2062
    %v2064 = vsel %vm1781, %v2060, %v2063
    %2066 = vst.msk [vmem:[#allocation3 + $0xa] sm:$0x3] %vm1784, %v2064
    %v2067 = vld [vmem:[#allocation2 + $0xb] sm:$0x1]
    %v2068 = vld [vmem:[#allocation2 + $0x4b] sm:$0x1]
    %v2072 = vunpack.c.l.s4 1983009808
    %v2073 = vunpack.c.0.s8 %v2072
    %v2074 = vlaneseq
    %v2075 = vshrl.u32 %v2074, 7
    %v2076 = vsub.s32 %v2073, %v2075
    %v2077 = vrot.slane %v2067, %v2076
    %v2079 = vunpack.c.l.s4 1983009808
    %v2080 = vunpack.c.0.s8 %v2079
    %v2081 = vlaneseq
    %v2082 = vshrl.u32 %v2081, 7
    %v2083 = vsub.s32 %v2080, %v2082
    %v2084 = vrot.slane %v2068, %v2083
    %v2085 = vsel %vm1770, %v2077, %v2077
    %v2086 = vsel %vm1772, %v2077, %v2085
    %v2087 = vrot.slane %v2084, 7
    %v2088 = vsel %vm1775, %v2087, %v2086
    %v2089 = vsel %vm1777, %v2087, %v2088
    %v2090 = vsel %vm1779, %v2087, %v2089
    %v2091 = vsel %vm1781, %v2087, %v2090
    %2092 = vrot.lane.b32.xlu0 %v2091, 64
    %v2093 = vpop.permute.xlu0 %2092
    %2095 = vst.msk [vmem:[#allocation3 + $0xa] sm:$0x3] %vm1814, %v2093
    %v2096 = vld [vmem:[#allocation2 + $0xc] sm:$0x1]
    %v2097 = vld [vmem:[#allocation2 + $0x4c] sm:$0x1]
    %v2101 = vunpack.c.l.s4 1983009808
    %v2102 = vunpack.c.0.s8 %v2101
    %v2103 = vlaneseq
    %v2104 = vshrl.u32 %v2103, 7
    %v2105 = vsub.s32 %v2102, %v2104
    %v2106 = vrot.slane %v2096, %v2105
    %v2108 = vunpack.c.l.s4 1983009808
    %v2109 = vunpack.c.0.s8 %v2108
    %v2110 = vlaneseq
    %v2111 = vshrl.u32 %v2110, 7
    %v2112 = vsub.s32 %v2109, %v2111
    %v2113 = vrot.slane %v2097, %v2112
    %v2114 = vsel %vm1770, %v2106, %v2106
    %v2115 = vsel %vm1772, %v2106, %v2114
    %v2116 = vrot.slane %v2113, 7
    %v2117 = vsel %vm1775, %v2116, %v2115
    %v2118 = vsel %vm1777, %v2116, %v2117
    %v2119 = vsel %vm1779, %v2116, %v2118
    %v2120 = vsel %vm1781, %v2116, %v2119
    %2122 = vst.msk [vmem:[#allocation3 + $0xc] sm:$0x3] %vm1784, %v2120
    %v2123 = vld [vmem:[#allocation2 + $0xd] sm:$0x1]
    %v2124 = vld [vmem:[#allocation2 + $0x4d] sm:$0x1]
    %v2128 = vunpack.c.l.s4 1983009808
    %v2129 = vunpack.c.0.s8 %v2128
    %v2130 = vlaneseq
    %v2131 = vshrl.u32 %v2130, 7
    %v2132 = vsub.s32 %v2129, %v2131
    %v2133 = vrot.slane %v2123, %v2132
    %v2135 = vunpack.c.l.s4 1983009808
    %v2136 = vunpack.c.0.s8 %v2135
    %v2137 = vlaneseq
    %v2138 = vshrl.u32 %v2137, 7
    %v2139 = vsub.s32 %v2136, %v2138
    %v2140 = vrot.slane %v2124, %v2139
    %v2141 = vsel %vm1770, %v2133, %v2133
    %v2142 = vsel %vm1772, %v2133, %v2141
    %v2143 = vrot.slane %v2140, 7
    %v2144 = vsel %vm1775, %v2143, %v2142
    %v2145 = vsel %vm1777, %v2143, %v2144
    %v2146 = vsel %vm1779, %v2143, %v2145
    %v2147 = vsel %vm1781, %v2143, %v2146
    %2148 = vrot.lane.b32.xlu0 %v2147, 64
    %v2149 = vpop.permute.xlu0 %2148
    %2151 = vst.msk [vmem:[#allocation3 + $0xc] sm:$0x3] %vm1814, %v2149
    %v2152 = vld [vmem:[#allocation2 + $0xe] sm:$0x1]
    %v2153 = vld [vmem:[#allocation2 + $0x4e] sm:$0x1]
    %v2157 = vunpack.c.l.s4 1983009808
    %v2158 = vunpack.c.0.s8 %v2157
    %v2159 = vlaneseq
    %v2160 = vshrl.u32 %v2159, 7
    %v2161 = vsub.s32 %v2158, %v2160
    %v2162 = vrot.slane %v2152, %v2161
    %v2164 = vunpack.c.l.s4 1983009808
    %v2165 = vunpack.c.0.s8 %v2164
    %v2166 = vlaneseq
    %v2167 = vshrl.u32 %v2166, 7
    %v2168 = vsub.s32 %v2165, %v2167
    %v2169 = vrot.slane %v2153, %v2168
    %v2170 = vsel %vm1770, %v2162, %v2162
    %v2171 = vsel %vm1772, %v2162, %v2170
    %v2172 = vrot.slane %v2169, 7
    %v2173 = vsel %vm1775, %v2172, %v2171
    %v2174 = vsel %vm1777, %v2172, %v2173
    %v2175 = vsel %vm1779, %v2172, %v2174
    %v2176 = vsel %vm1781, %v2172, %v2175
    %2178 = vst.msk [vmem:[#allocation3 + $0xe] sm:$0x3] %vm1784, %v2176
    %v2179 = vld [vmem:[#allocation2 + $0xf] sm:$0x1]
    %v2180 = vld [vmem:[#allocation2 + $0x4f] sm:$0x1]
    %v2184 = vunpack.c.l.s4 1983009808
    %v2185 = vunpack.c.0.s8 %v2184
    %v2186 = vlaneseq
    %v2187 = vshrl.u32 %v2186, 7
    %v2188 = vsub.s32 %v2185, %v2187
    %v2189 = vrot.slane %v2179, %v2188
    %v2191 = vunpack.c.l.s4 1983009808
    %v2192 = vunpack.c.0.s8 %v2191
    %v2193 = vlaneseq
    %v2194 = vshrl.u32 %v2193, 7
    %v2195 = vsub.s32 %v2192, %v2194
    %v2196 = vrot.slane %v2180, %v2195
    %v2197 = vsel %vm1770, %v2189, %v2189
    %v2198 = vsel %vm1772, %v2189, %v2197
    %v2199 = vrot.slane %v2196, 7
    %v2200 = vsel %vm1775, %v2199, %v2198
    %v2201 = vsel %vm1777, %v2199, %v2200
    %v2202 = vsel %vm1779, %v2199, %v2201
    %v2203 = vsel %vm1781, %v2199, %v2202
    %2204 = vrot.lane.b32.xlu0 %v2203, 64
    %v2205 = vpop.permute.xlu0 %2204
    %2207 = vst.msk [vmem:[#allocation3 + $0xe] sm:$0x3] %vm1814, %v2205
    %v2208 = vld [vmem:[#allocation2 + $0x10] sm:$0x1]
    %v2209 = vld [vmem:[#allocation2 + $0x50] sm:$0x1]
    %v2213 = vunpack.c.l.s4 1983009808
    %v2214 = vunpack.c.0.s8 %v2213
    %v2215 = vlaneseq
    %v2216 = vshrl.u32 %v2215, 7
    %v2217 = vsub.s32 %v2214, %v2216
    %v2218 = vrot.slane %v2208, %v2217
    %v2220 = vunpack.c.l.s4 1983009808
    %v2221 = vunpack.c.0.s8 %v2220
    %v2222 = vlaneseq
    %v2223 = vshrl.u32 %v2222, 7
    %v2224 = vsub.s32 %v2221, %v2223
    %v2225 = vrot.slane %v2209, %v2224
    %v2226 = vsel %vm1770, %v2218, %v2218
    %v2227 = vsel %vm1772, %v2218, %v2226
    %v2228 = vrot.slane %v2225, 7
    %v2229 = vsel %vm1775, %v2228, %v2227
    %v2230 = vsel %vm1777, %v2228, %v2229
    %v2231 = vsel %vm1779, %v2228, %v2230
    %v2232 = vsel %vm1781, %v2228, %v2231
    %2234 = vst.msk [vmem:[#allocation3 + $0x10] sm:$0x3] %vm1784, %v2232
    %v2235 = vld [vmem:[#allocation2 + $0x11] sm:$0x1]
    %v2236 = vld [vmem:[#allocation2 + $0x51] sm:$0x1]
    %v2240 = vunpack.c.l.s4 1983009808
    %v2241 = vunpack.c.0.s8 %v2240
    %v2242 = vlaneseq
    %v2243 = vshrl.u32 %v2242, 7
    %v2244 = vsub.s32 %v2241, %v2243
    %v2245 = vrot.slane %v2235, %v2244
    %v2247 = vunpack.c.l.s4 1983009808
    %v2248 = vunpack.c.0.s8 %v2247
    %v2249 = vlaneseq
    %v2250 = vshrl.u32 %v2249, 7
    %v2251 = vsub.s32 %v2248, %v2250
    %v2252 = vrot.slane %v2236, %v2251
    %v2253 = vsel %vm1770, %v2245, %v2245
    %v2254 = vsel %vm1772, %v2245, %v2253
    %v2255 = vrot.slane %v2252, 7
    %v2256 = vsel %vm1775, %v2255, %v2254
    %v2257 = vsel %vm1777, %v2255, %v2256
    %v2258 = vsel %vm1779, %v2255, %v2257
    %v2259 = vsel %vm1781, %v2255, %v2258
    %2260 = vrot.lane.b32.xlu0 %v2259, 64
    %v2261 = vpop.permute.xlu0 %2260
    %2263 = vst.msk [vmem:[#allocation3 + $0x10] sm:$0x3] %vm1814, %v2261
    %v2264 = vld [vmem:[#allocation2 + $0x12] sm:$0x1]
    %v2265 = vld [vmem:[#allocation2 + $0x52] sm:$0x1]
    %v2269 = vunpack.c.l.s4 1983009808
    %v2270 = vunpack.c.0.s8 %v2269
    %v2271 = vlaneseq
    %v2272 = vshrl.u32 %v2271, 7
    %v2273 = vsub.s32 %v2270, %v2272
    %v2274 = vrot.slane %v2264, %v2273
    %v2276 = vunpack.c.l.s4 1983009808
    %v2277 = vunpack.c.0.s8 %v2276
    %v2278 = vlaneseq
    %v2279 = vshrl.u32 %v2278, 7
    %v2280 = vsub.s32 %v2277, %v2279
    %v2281 = vrot.slane %v2265, %v2280
    %v2282 = vsel %vm1770, %v2274, %v2274
    %v2283 = vsel %vm1772, %v2274, %v2282
    %v2284 = vrot.slane %v2281, 7
    %v2285 = vsel %vm1775, %v2284, %v2283
    %v2286 = vsel %vm1777, %v2284, %v2285
    %v2287 = vsel %vm1779, %v2284, %v2286
    %v2288 = vsel %vm1781, %v2284, %v2287
    %2290 = vst.msk [vmem:[#allocation3 + $0x12] sm:$0x3] %vm1784, %v2288
    %v2291 = vld [vmem:[#allocation2 + $0x13] sm:$0x1]
    %v2292 = vld [vmem:[#allocation2 + $0x53] sm:$0x1]
    %v2296 = vunpack.c.l.s4 1983009808
    %v2297 = vunpack.c.0.s8 %v2296
    %v2298 = vlaneseq
    %v2299 = vshrl.u32 %v2298, 7
    %v2300 = vsub.s32 %v2297, %v2299
    %v2301 = vrot.slane %v2291, %v2300
    %v2303 = vunpack.c.l.s4 1983009808
    %v2304 = vunpack.c.0.s8 %v2303
    %v2305 = vlaneseq
    %v2306 = vshrl.u32 %v2305, 7
    %v2307 = vsub.s32 %v2304, %v2306
    %v2308 = vrot.slane %v2292, %v2307
    %v2309 = vsel %vm1770, %v2301, %v2301
    %v2310 = vsel %vm1772, %v2301, %v2309
    %v2311 = vrot.slane %v2308, 7
    %v2312 = vsel %vm1775, %v2311, %v2310
    %v2313 = vsel %vm1777, %v2311, %v2312
    %v2314 = vsel %vm1779, %v2311, %v2313
    %v2315 = vsel %vm1781, %v2311, %v2314
    %2316 = vrot.lane.b32.xlu0 %v2315, 64
    %v2317 = vpop.permute.xlu0 %2316
    %2319 = vst.msk [vmem:[#allocation3 + $0x12] sm:$0x3] %vm1814, %v2317
    %v2320 = vld [vmem:[#allocation2 + $0x14] sm:$0x1]
    %v2321 = vld [vmem:[#allocation2 + $0x54] sm:$0x1]
    %v2325 = vunpack.c.l.s4 1983009808
    %v2326 = vunpack.c.0.s8 %v2325
    %v2327 = vlaneseq
    %v2328 = vshrl.u32 %v2327, 7
    %v2329 = vsub.s32 %v2326, %v2328
    %v2330 = vrot.slane %v2320, %v2329
    %v2332 = vunpack.c.l.s4 1983009808
    %v2333 = vunpack.c.0.s8 %v2332
    %v2334 = vlaneseq
    %v2335 = vshrl.u32 %v2334, 7
    %v2336 = vsub.s32 %v2333, %v2335
    %v2337 = vrot.slane %v2321, %v2336
    %v2338 = vsel %vm1770, %v2330, %v2330
    %v2339 = vsel %vm1772, %v2330, %v2338
    %v2340 = vrot.slane %v2337, 7
    %v2341 = vsel %vm1775, %v2340, %v2339
    %v2342 = vsel %vm1777, %v2340, %v2341
    %v2343 = vsel %vm1779, %v2340, %v2342
    %v2344 = vsel %vm1781, %v2340, %v2343
    %2346 = vst.msk [vmem:[#allocation3 + $0x14] sm:$0x3] %vm1784, %v2344
    %v2347 = vld [vmem:[#allocation2 + $0x15] sm:$0x1]
    %v2348 = vld [vmem:[#allocation2 + $0x55] sm:$0x1]
    %v2352 = vunpack.c.l.s4 1983009808
    %v2353 = vunpack.c.0.s8 %v2352
    %v2354 = vlaneseq
    %v2355 = vshrl.u32 %v2354, 7
    %v2356 = vsub.s32 %v2353, %v2355
    %v2357 = vrot.slane %v2347, %v2356
    %v2359 = vunpack.c.l.s4 1983009808
    %v2360 = vunpack.c.0.s8 %v2359
    %v2361 = vlaneseq
    %v2362 = vshrl.u32 %v2361, 7
    %v2363 = vsub.s32 %v2360, %v2362
    %v2364 = vrot.slane %v2348, %v2363
    %v2365 = vsel %vm1770, %v2357, %v2357
    %v2366 = vsel %vm1772, %v2357, %v2365
    %v2367 = vrot.slane %v2364, 7
    %v2368 = vsel %vm1775, %v2367, %v2366
    %v2369 = vsel %vm1777, %v2367, %v2368
    %v2370 = vsel %vm1779, %v2367, %v2369
    %v2371 = vsel %vm1781, %v2367, %v2370
    %2372 = vrot.lane.b32.xlu0 %v2371, 64
    %v2373 = vpop.permute.xlu0 %2372
    %2375 = vst.msk [vmem:[#allocation3 + $0x14] sm:$0x3] %vm1814, %v2373
    %v2376 = vld [vmem:[#allocation2 + $0x16] sm:$0x1]
    %v2377 = vld [vmem:[#allocation2 + $0x56] sm:$0x1]
    %v2381 = vunpack.c.l.s4 1983009808
    %v2382 = vunpack.c.0.s8 %v2381
    %v2383 = vlaneseq
    %v2384 = vshrl.u32 %v2383, 7
    %v2385 = vsub.s32 %v2382, %v2384
    %v2386 = vrot.slane %v2376, %v2385
    %v2388 = vunpack.c.l.s4 1983009808
    %v2389 = vunpack.c.0.s8 %v2388
    %v2390 = vlaneseq
    %v2391 = vshrl.u32 %v2390, 7
    %v2392 = vsub.s32 %v2389, %v2391
    %v2393 = vrot.slane %v2377, %v2392
    %v2394 = vsel %vm1770, %v2386, %v2386
    %v2395 = vsel %vm1772, %v2386, %v2394
    %v2396 = vrot.slane %v2393, 7
    %v2397 = vsel %vm1775, %v2396, %v2395
    %v2398 = vsel %vm1777, %v2396, %v2397
    %v2399 = vsel %vm1779, %v2396, %v2398
    %v2400 = vsel %vm1781, %v2396, %v2399
    %2402 = vst.msk [vmem:[#allocation3 + $0x16] sm:$0x3] %vm1784, %v2400
    %v2403 = vld [vmem:[#allocation2 + $0x17] sm:$0x1]
    %v2404 = vld [vmem:[#allocation2 + $0x57] sm:$0x1]
    %v2408 = vunpack.c.l.s4 1983009808
    %v2409 = vunpack.c.0.s8 %v2408
    %v2410 = vlaneseq
    %v2411 = vshrl.u32 %v2410, 7
    %v2412 = vsub.s32 %v2409, %v2411
    %v2413 = vrot.slane %v2403, %v2412
    %v2415 = vunpack.c.l.s4 1983009808
    %v2416 = vunpack.c.0.s8 %v2415
    %v2417 = vlaneseq
    %v2418 = vshrl.u32 %v2417, 7
    %v2419 = vsub.s32 %v2416, %v2418
    %v2420 = vrot.slane %v2404, %v2419
    %v2421 = vsel %vm1770, %v2413, %v2413
    %v2422 = vsel %vm1772, %v2413, %v2421
    %v2423 = vrot.slane %v2420, 7
    %v2424 = vsel %vm1775, %v2423, %v2422
    %v2425 = vsel %vm1777, %v2423, %v2424
    %v2426 = vsel %vm1779, %v2423, %v2425
    %v2427 = vsel %vm1781, %v2423, %v2426
    %2428 = vrot.lane.b32.xlu0 %v2427, 64
    %v2429 = vpop.permute.xlu0 %2428
    %2431 = vst.msk [vmem:[#allocation3 + $0x16] sm:$0x3] %vm1814, %v2429
    %v2432 = vld [vmem:[#allocation2 + $0x18] sm:$0x1]
    %v2433 = vld [vmem:[#allocation2 + $0x58] sm:$0x1]
    %v2437 = vunpack.c.l.s4 1983009808
    %v2438 = vunpack.c.0.s8 %v2437
    %v2439 = vlaneseq
    %v2440 = vshrl.u32 %v2439, 7
    %v2441 = vsub.s32 %v2438, %v2440
    %v2442 = vrot.slane %v2432, %v2441
    %v2444 = vunpack.c.l.s4 1983009808
    %v2445 = vunpack.c.0.s8 %v2444
    %v2446 = vlaneseq
    %v2447 = vshrl.u32 %v2446, 7
    %v2448 = vsub.s32 %v2445, %v2447
    %v2449 = vrot.slane %v2433, %v2448
    %v2450 = vsel %vm1770, %v2442, %v2442
    %v2451 = vsel %vm1772, %v2442, %v2450
    %v2452 = vrot.slane %v2449, 7
    %v2453 = vsel %vm1775, %v2452, %v2451
    %v2454 = vsel %vm1777, %v2452, %v2453
    %v2455 = vsel %vm1779, %v2452, %v2454
    %v2456 = vsel %vm1781, %v2452, %v2455
    %2458 = vst.msk [vmem:[#allocation3 + $0x18] sm:$0x3] %vm1784, %v2456
    %v2459 = vld [vmem:[#allocation2 + $0x19] sm:$0x1]
    %v2460 = vld [vmem:[#allocation2 + $0x59] sm:$0x1]
    %v2464 = vunpack.c.l.s4 1983009808
    %v2465 = vunpack.c.0.s8 %v2464
    %v2466 = vlaneseq
    %v2467 = vshrl.u32 %v2466, 7
    %v2468 = vsub.s32 %v2465, %v2467
    %v2469 = vrot.slane %v2459, %v2468
    %v2471 = vunpack.c.l.s4 1983009808
    %v2472 = vunpack.c.0.s8 %v2471
    %v2473 = vlaneseq
    %v2474 = vshrl.u32 %v2473, 7
    %v2475 = vsub.s32 %v2472, %v2474
    %v2476 = vrot.slane %v2460, %v2475
    %v2477 = vsel %vm1770, %v2469, %v2469
    %v2478 = vsel %vm1772, %v2469, %v2477
    %v2479 = vrot.slane %v2476, 7
    %v2480 = vsel %vm1775, %v2479, %v2478
    %v2481 = vsel %vm1777, %v2479, %v2480
    %v2482 = vsel %vm1779, %v2479, %v2481
    %v2483 = vsel %vm1781, %v2479, %v2482
    %2484 = vrot.lane.b32.xlu0 %v2483, 64
    %v2485 = vpop.permute.xlu0 %2484
    %2487 = vst.msk [vmem:[#allocation3 + $0x18] sm:$0x3] %vm1814, %v2485
    %v2488 = vld [vmem:[#allocation2 + $0x1a] sm:$0x1]
    %v2489 = vld [vmem:[#allocation2 + $0x5a] sm:$0x1]
    %v2493 = vunpack.c.l.s4 1983009808
    %v2494 = vunpack.c.0.s8 %v2493
    %v2495 = vlaneseq
    %v2496 = vshrl.u32 %v2495, 7
    %v2497 = vsub.s32 %v2494, %v2496
    %v2498 = vrot.slane %v2488, %v2497
    %v2500 = vunpack.c.l.s4 1983009808
    %v2501 = vunpack.c.0.s8 %v2500
    %v2502 = vlaneseq
    %v2503 = vshrl.u32 %v2502, 7
    %v2504 = vsub.s32 %v2501, %v2503
    %v2505 = vrot.slane %v2489, %v2504
    %v2506 = vsel %vm1770, %v2498, %v2498
    %v2507 = vsel %vm1772, %v2498, %v2506
    %v2508 = vrot.slane %v2505, 7
    %v2509 = vsel %vm1775, %v2508, %v2507
    %v2510 = vsel %vm1777, %v2508, %v2509
    %v2511 = vsel %vm1779, %v2508, %v2510
    %v2512 = vsel %vm1781, %v2508, %v2511
    %2514 = vst.msk [vmem:[#allocation3 + $0x1a] sm:$0x3] %vm1784, %v2512
    %v2515 = vld [vmem:[#allocation2 + $0x1b] sm:$0x1]
    %v2516 = vld [vmem:[#allocation2 + $0x5b] sm:$0x1]
    %v2520 = vunpack.c.l.s4 1983009808
    %v2521 = vunpack.c.0.s8 %v2520
    %v2522 = vlaneseq
    %v2523 = vshrl.u32 %v2522, 7
    %v2524 = vsub.s32 %v2521, %v2523
    %v2525 = vrot.slane %v2515, %v2524
    %v2527 = vunpack.c.l.s4 1983009808
    %v2528 = vunpack.c.0.s8 %v2527
    %v2529 = vlaneseq
    %v2530 = vshrl.u32 %v2529, 7
    %v2531 = vsub.s32 %v2528, %v2530
    %v2532 = vrot.slane %v2516, %v2531
    %v2533 = vsel %vm1770, %v2525, %v2525
    %v2534 = vsel %vm1772, %v2525, %v2533
    %v2535 = vrot.slane %v2532, 7
    %v2536 = vsel %vm1775, %v2535, %v2534
    %v2537 = vsel %vm1777, %v2535, %v2536
    %v2538 = vsel %vm1779, %v2535, %v2537
    %v2539 = vsel %vm1781, %v2535, %v2538
    %2540 = vrot.lane.b32.xlu0 %v2539, 64
    %v2541 = vpop.permute.xlu0 %2540
    %2543 = vst.msk [vmem:[#allocation3 + $0x1a] sm:$0x3] %vm1814, %v2541
    %v2544 = vld [vmem:[#allocation2 + $0x1c] sm:$0x1]
    %v2545 = vld [vmem:[#allocation2 + $0x5c] sm:$0x1]
    %v2549 = vunpack.c.l.s4 1983009808
    %v2550 = vunpack.c.0.s8 %v2549
    %v2551 = vlaneseq
    %v2552 = vshrl.u32 %v2551, 7
    %v2553 = vsub.s32 %v2550, %v2552
    %v2554 = vrot.slane %v2544, %v2553
    %v2556 = vunpack.c.l.s4 1983009808
    %v2557 = vunpack.c.0.s8 %v2556
    %v2558 = vlaneseq
    %v2559 = vshrl.u32 %v2558, 7
    %v2560 = vsub.s32 %v2557, %v2559
    %v2561 = vrot.slane %v2545, %v2560
    %v2562 = vsel %vm1770, %v2554, %v2554
    %v2563 = vsel %vm1772, %v2554, %v2562
    %v2564 = vrot.slane %v2561, 7
    %v2565 = vsel %vm1775, %v2564, %v2563
    %v2566 = vsel %vm1777, %v2564, %v2565
    %v2567 = vsel %vm1779, %v2564, %v2566
    %v2568 = vsel %vm1781, %v2564, %v2567
    %2570 = vst.msk [vmem:[#allocation3 + $0x1c] sm:$0x3] %vm1784, %v2568
    %v2571 = vld [vmem:[#allocation2 + $0x1d] sm:$0x1]
    %v2572 = vld [vmem:[#allocation2 + $0x5d] sm:$0x1]
    %v2576 = vunpack.c.l.s4 1983009808
    %v2577 = vunpack.c.0.s8 %v2576
    %v2578 = vlaneseq
    %v2579 = vshrl.u32 %v2578, 7
    %v2580 = vsub.s32 %v2577, %v2579
    %v2581 = vrot.slane %v2571, %v2580
    %v2583 = vunpack.c.l.s4 1983009808
    %v2584 = vunpack.c.0.s8 %v2583
    %v2585 = vlaneseq
    %v2586 = vshrl.u32 %v2585, 7
    %v2587 = vsub.s32 %v2584, %v2586
    %v2588 = vrot.slane %v2572, %v2587
    %v2589 = vsel %vm1770, %v2581, %v2581
    %v2590 = vsel %vm1772, %v2581, %v2589
    %v2591 = vrot.slane %v2588, 7
    %v2592 = vsel %vm1775, %v2591, %v2590
    %v2593 = vsel %vm1777, %v2591, %v2592
    %v2594 = vsel %vm1779, %v2591, %v2593
    %v2595 = vsel %vm1781, %v2591, %v2594
    %2596 = vrot.lane.b32.xlu0 %v2595, 64
    %v2597 = vpop.permute.xlu0 %2596
    %2599 = vst.msk [vmem:[#allocation3 + $0x1c] sm:$0x3] %vm1814, %v2597
    %v2600 = vld [vmem:[#allocation2 + $0x1e] sm:$0x1]
    %v2601 = vld [vmem:[#allocation2 + $0x5e] sm:$0x1]
    %v2605 = vunpack.c.l.s4 1983009808
    %v2606 = vunpack.c.0.s8 %v2605
    %v2607 = vlaneseq
    %v2608 = vshrl.u32 %v2607, 7
    %v2609 = vsub.s32 %v2606, %v2608
    %v2610 = vrot.slane %v2600, %v2609
    %v2612 = vunpack.c.l.s4 1983009808
    %v2613 = vunpack.c.0.s8 %v2612
    %v2614 = vlaneseq
    %v2615 = vshrl.u32 %v2614, 7
    %v2616 = vsub.s32 %v2613, %v2615
    %v2617 = vrot.slane %v2601, %v2616
    %v2618 = vsel %vm1770, %v2610, %v2610
    %v2619 = vsel %vm1772, %v2610, %v2618
    %v2620 = vrot.slane %v2617, 7
    %v2621 = vsel %vm1775, %v2620, %v2619
    %v2622 = vsel %vm1777, %v2620, %v2621
    %v2623 = vsel %vm1779, %v2620, %v2622
    %v2624 = vsel %vm1781, %v2620, %v2623
    %2626 = vst.msk [vmem:[#allocation3 + $0x1e] sm:$0x3] %vm1784, %v2624
    %v2627 = vld [vmem:[#allocation2 + $0x1f] sm:$0x1]
    %v2628 = vld [vmem:[#allocation2 + $0x5f] sm:$0x1]
    %v2632 = vunpack.c.l.s4 1983009808
    %v2633 = vunpack.c.0.s8 %v2632
    %v2634 = vlaneseq
    %v2635 = vshrl.u32 %v2634, 7
    %v2636 = vsub.s32 %v2633, %v2635
    %v2637 = vrot.slane %v2627, %v2636
    %v2639 = vunpack.c.l.s4 1983009808
    %v2640 = vunpack.c.0.s8 %v2639
    %v2641 = vlaneseq
    %v2642 = vshrl.u32 %v2641, 7
    %v2643 = vsub.s32 %v2640, %v2642
    %v2644 = vrot.slane %v2628, %v2643
    %v2645 = vsel %vm1770, %v2637, %v2637
    %v2646 = vsel %vm1772, %v2637, %v2645
    %v2647 = vrot.slane %v2644, 7
    %v2648 = vsel %vm1775, %v2647, %v2646
    %v2649 = vsel %vm1777, %v2647, %v2648
    %v2650 = vsel %vm1779, %v2647, %v2649
    %v2651 = vsel %vm1781, %v2647, %v2650
    %2652 = vrot.lane.b32.xlu0 %v2651, 64
    %v2653 = vpop.permute.xlu0 %2652
    %2655 = vst.msk [vmem:[#allocation3 + $0x1e] sm:$0x3] %vm1814, %v2653
    %v2656 = vld [vmem:[#allocation2 + $0x20] sm:$0x1]
    %v2657 = vld [vmem:[#allocation2 + $0x60] sm:$0x1]
    %v2661 = vunpack.c.l.s4 1983009808
    %v2662 = vunpack.c.0.s8 %v2661
    %v2663 = vlaneseq
    %v2664 = vshrl.u32 %v2663, 7
    %v2665 = vsub.s32 %v2662, %v2664
    %v2666 = vrot.slane %v2656, %v2665
    %v2668 = vunpack.c.l.s4 1983009808
    %v2669 = vunpack.c.0.s8 %v2668
    %v2670 = vlaneseq
    %v2671 = vshrl.u32 %v2670, 7
    %v2672 = vsub.s32 %v2669, %v2671
    %v2673 = vrot.slane %v2657, %v2672
    %v2674 = vsel %vm1770, %v2666, %v2666
    %v2675 = vsel %vm1772, %v2666, %v2674
    %v2676 = vrot.slane %v2673, 7
    %v2677 = vsel %vm1775, %v2676, %v2675
    %v2678 = vsel %vm1777, %v2676, %v2677
    %v2679 = vsel %vm1779, %v2676, %v2678
    %v2680 = vsel %vm1781, %v2676, %v2679
    %2682 = vst.msk [vmem:[#allocation3 + $0x20] sm:$0x3] %vm1784, %v2680
    %v2683 = vld [vmem:[#allocation2 + $0x21] sm:$0x1]
    %v2684 = vld [vmem:[#allocation2 + $0x61] sm:$0x1]
    %v2688 = vunpack.c.l.s4 1983009808
    %v2689 = vunpack.c.0.s8 %v2688
    %v2690 = vlaneseq
    %v2691 = vshrl.u32 %v2690, 7
    %v2692 = vsub.s32 %v2689, %v2691
    %v2693 = vrot.slane %v2683, %v2692
    %v2695 = vunpack.c.l.s4 1983009808
    %v2696 = vunpack.c.0.s8 %v2695
    %v2697 = vlaneseq
    %v2698 = vshrl.u32 %v2697, 7
    %v2699 = vsub.s32 %v2696, %v2698
    %v2700 = vrot.slane %v2684, %v2699
    %v2701 = vsel %vm1770, %v2693, %v2693
    %v2702 = vsel %vm1772, %v2693, %v2701
    %v2703 = vrot.slane %v2700, 7
    %v2704 = vsel %vm1775, %v2703, %v2702
    %v2705 = vsel %vm1777, %v2703, %v2704
    %v2706 = vsel %vm1779, %v2703, %v2705
    %v2707 = vsel %vm1781, %v2703, %v2706
    %2708 = vrot.lane.b32.xlu0 %v2707, 64
    %v2709 = vpop.permute.xlu0 %2708
    %2711 = vst.msk [vmem:[#allocation3 + $0x20] sm:$0x3] %vm1814, %v2709
    %v2712 = vld [vmem:[#allocation2 + $0x22] sm:$0x1]
    %v2713 = vld [vmem:[#allocation2 + $0x62] sm:$0x1]
    %v2717 = vunpack.c.l.s4 1983009808
    %v2718 = vunpack.c.0.s8 %v2717
    %v2719 = vlaneseq
    %v2720 = vshrl.u32 %v2719, 7
    %v2721 = vsub.s32 %v2718, %v2720
    %v2722 = vrot.slane %v2712, %v2721
    %v2724 = vunpack.c.l.s4 1983009808
    %v2725 = vunpack.c.0.s8 %v2724
    %v2726 = vlaneseq
    %v2727 = vshrl.u32 %v2726, 7
    %v2728 = vsub.s32 %v2725, %v2727
    %v2729 = vrot.slane %v2713, %v2728
    %v2730 = vsel %vm1770, %v2722, %v2722
    %v2731 = vsel %vm1772, %v2722, %v2730
    %v2732 = vrot.slane %v2729, 7
    %v2733 = vsel %vm1775, %v2732, %v2731
    %v2734 = vsel %vm1777, %v2732, %v2733
    %v2735 = vsel %vm1779, %v2732, %v2734
    %v2736 = vsel %vm1781, %v2732, %v2735
    %2738 = vst.msk [vmem:[#allocation3 + $0x22] sm:$0x3] %vm1784, %v2736
    %v2739 = vld [vmem:[#allocation2 + $0x23] sm:$0x1]
    %v2740 = vld [vmem:[#allocation2 + $0x63] sm:$0x1]
    %v2744 = vunpack.c.l.s4 1983009808
    %v2745 = vunpack.c.0.s8 %v2744
    %v2746 = vlaneseq
    %v2747 = vshrl.u32 %v2746, 7
    %v2748 = vsub.s32 %v2745, %v2747
    %v2749 = vrot.slane %v2739, %v2748
    %v2751 = vunpack.c.l.s4 1983009808
    %v2752 = vunpack.c.0.s8 %v2751
    %v2753 = vlaneseq
    %v2754 = vshrl.u32 %v2753, 7
    %v2755 = vsub.s32 %v2752, %v2754
    %v2756 = vrot.slane %v2740, %v2755
    %v2757 = vsel %vm1770, %v2749, %v2749
    %v2758 = vsel %vm1772, %v2749, %v2757
    %v2759 = vrot.slane %v2756, 7
    %v2760 = vsel %vm1775, %v2759, %v2758
    %v2761 = vsel %vm1777, %v2759, %v2760
    %v2762 = vsel %vm1779, %v2759, %v2761
    %v2763 = vsel %vm1781, %v2759, %v2762
    %2764 = vrot.lane.b32.xlu0 %v2763, 64
    %v2765 = vpop.permute.xlu0 %2764
    %2767 = vst.msk [vmem:[#allocation3 + $0x22] sm:$0x3] %vm1814, %v2765
    %v2768 = vld [vmem:[#allocation2 + $0x24] sm:$0x1]
    %v2769 = vld [vmem:[#allocation2 + $0x64] sm:$0x1]
    %v2773 = vunpack.c.l.s4 1983009808
    %v2774 = vunpack.c.0.s8 %v2773
    %v2775 = vlaneseq
    %v2776 = vshrl.u32 %v2775, 7
    %v2777 = vsub.s32 %v2774, %v2776
    %v2778 = vrot.slane %v2768, %v2777
    %v2780 = vunpack.c.l.s4 1983009808
    %v2781 = vunpack.c.0.s8 %v2780
    %v2782 = vlaneseq
    %v2783 = vshrl.u32 %v2782, 7
    %v2784 = vsub.s32 %v2781, %v2783
    %v2785 = vrot.slane %v2769, %v2784
    %v2786 = vsel %vm1770, %v2778, %v2778
    %v2787 = vsel %vm1772, %v2778, %v2786
    %v2788 = vrot.slane %v2785, 7
    %v2789 = vsel %vm1775, %v2788, %v2787
    %v2790 = vsel %vm1777, %v2788, %v2789
    %v2791 = vsel %vm1779, %v2788, %v2790
    %v2792 = vsel %vm1781, %v2788, %v2791
    %2794 = vst.msk [vmem:[#allocation3 + $0x24] sm:$0x3] %vm1784, %v2792
    %v2795 = vld [vmem:[#allocation2 + $0x25] sm:$0x1]
    %v2796 = vld [vmem:[#allocation2 + $0x65] sm:$0x1]
    %v2800 = vunpack.c.l.s4 1983009808
    %v2801 = vunpack.c.0.s8 %v2800
    %v2802 = vlaneseq
    %v2803 = vshrl.u32 %v2802, 7
    %v2804 = vsub.s32 %v2801, %v2803
    %v2805 = vrot.slane %v2795, %v2804
    %v2807 = vunpack.c.l.s4 1983009808
    %v2808 = vunpack.c.0.s8 %v2807
    %v2809 = vlaneseq
    %v2810 = vshrl.u32 %v2809, 7
    %v2811 = vsub.s32 %v2808, %v2810
    %v2812 = vrot.slane %v2796, %v2811
    %v2813 = vsel %vm1770, %v2805, %v2805
    %v2814 = vsel %vm1772, %v2805, %v2813
    %v2815 = vrot.slane %v2812, 7
    %v2816 = vsel %vm1775, %v2815, %v2814
    %v2817 = vsel %vm1777, %v2815, %v2816
    %v2818 = vsel %vm1779, %v2815, %v2817
    %v2819 = vsel %vm1781, %v2815, %v2818
    %2820 = vrot.lane.b32.xlu0 %v2819, 64
    %v2821 = vpop.permute.xlu0 %2820
    %2823 = vst.msk [vmem:[#allocation3 + $0x24] sm:$0x3] %vm1814, %v2821
    %v2824 = vld [vmem:[#allocation2 + $0x26] sm:$0x1]
    %v2825 = vld [vmem:[#allocation2 + $0x66] sm:$0x1]
    %v2829 = vunpack.c.l.s4 1983009808
    %v2830 = vunpack.c.0.s8 %v2829
    %v2831 = vlaneseq
    %v2832 = vshrl.u32 %v2831, 7
    %v2833 = vsub.s32 %v2830, %v2832
    %v2834 = vrot.slane %v2824, %v2833
    %v2836 = vunpack.c.l.s4 1983009808
    %v2837 = vunpack.c.0.s8 %v2836
    %v2838 = vlaneseq
    %v2839 = vshrl.u32 %v2838, 7
    %v2840 = vsub.s32 %v2837, %v2839
    %v2841 = vrot.slane %v2825, %v2840
    %v2842 = vsel %vm1770, %v2834, %v2834
    %v2843 = vsel %vm1772, %v2834, %v2842
    %v2844 = vrot.slane %v2841, 7
    %v2845 = vsel %vm1775, %v2844, %v2843
    %v2846 = vsel %vm1777, %v2844, %v2845
    %v2847 = vsel %vm1779, %v2844, %v2846
    %v2848 = vsel %vm1781, %v2844, %v2847
    %2850 = vst.msk [vmem:[#allocation3 + $0x26] sm:$0x3] %vm1784, %v2848
    %v2851 = vld [vmem:[#allocation2 + $0x27] sm:$0x1]
    %v2852 = vld [vmem:[#allocation2 + $0x67] sm:$0x1]
    %v2856 = vunpack.c.l.s4 1983009808
    %v2857 = vunpack.c.0.s8 %v2856
    %v2858 = vlaneseq
    %v2859 = vshrl.u32 %v2858, 7
    %v2860 = vsub.s32 %v2857, %v2859
    %v2861 = vrot.slane %v2851, %v2860
    %v2863 = vunpack.c.l.s4 1983009808
    %v2864 = vunpack.c.0.s8 %v2863
    %v2865 = vlaneseq
    %v2866 = vshrl.u32 %v2865, 7
    %v2867 = vsub.s32 %v2864, %v2866
    %v2868 = vrot.slane %v2852, %v2867
    %v2869 = vsel %vm1770, %v2861, %v2861
    %v2870 = vsel %vm1772, %v2861, %v2869
    %v2871 = vrot.slane %v2868, 7
    %v2872 = vsel %vm1775, %v2871, %v2870
    %v2873 = vsel %vm1777, %v2871, %v2872
    %v2874 = vsel %vm1779, %v2871, %v2873
    %v2875 = vsel %vm1781, %v2871, %v2874
    %2876 = vrot.lane.b32.xlu0 %v2875, 64
    %v2877 = vpop.permute.xlu0 %2876
    %2879 = vst.msk [vmem:[#allocation3 + $0x26] sm:$0x3] %vm1814, %v2877
    %v2880 = vld [vmem:[#allocation2 + $0x28] sm:$0x1]
    %v2881 = vld [vmem:[#allocation2 + $0x68] sm:$0x1]
    %v2885 = vunpack.c.l.s4 1983009808
    %v2886 = vunpack.c.0.s8 %v2885
    %v2887 = vlaneseq
    %v2888 = vshrl.u32 %v2887, 7
    %v2889 = vsub.s32 %v2886, %v2888
    %v2890 = vrot.slane %v2880, %v2889
    %v2892 = vunpack.c.l.s4 1983009808
    %v2893 = vunpack.c.0.s8 %v2892
    %v2894 = vlaneseq
    %v2895 = vshrl.u32 %v2894, 7
    %v2896 = vsub.s32 %v2893, %v2895
    %v2897 = vrot.slane %v2881, %v2896
    %v2898 = vsel %vm1770, %v2890, %v2890
    %v2899 = vsel %vm1772, %v2890, %v2898
    %v2900 = vrot.slane %v2897, 7
    %v2901 = vsel %vm1775, %v2900, %v2899
    %v2902 = vsel %vm1777, %v2900, %v2901
    %v2903 = vsel %vm1779, %v2900, %v2902
    %v2904 = vsel %vm1781, %v2900, %v2903
    %2906 = vst.msk [vmem:[#allocation3 + $0x28] sm:$0x3] %vm1784, %v2904
    %v2907 = vld [vmem:[#allocation2 + $0x29] sm:$0x1]
    %v2908 = vld [vmem:[#allocation2 + $0x69] sm:$0x1]
    %v2912 = vunpack.c.l.s4 1983009808
    %v2913 = vunpack.c.0.s8 %v2912
    %v2914 = vlaneseq
    %v2915 = vshrl.u32 %v2914, 7
    %v2916 = vsub.s32 %v2913, %v2915
    %v2917 = vrot.slane %v2907, %v2916
    %v2919 = vunpack.c.l.s4 1983009808
    %v2920 = vunpack.c.0.s8 %v2919
    %v2921 = vlaneseq
    %v2922 = vshrl.u32 %v2921, 7
    %v2923 = vsub.s32 %v2920, %v2922
    %v2924 = vrot.slane %v2908, %v2923
    %v2925 = vsel %vm1770, %v2917, %v2917
    %v2926 = vsel %vm1772, %v2917, %v2925
    %v2927 = vrot.slane %v2924, 7
    %v2928 = vsel %vm1775, %v2927, %v2926
    %v2929 = vsel %vm1777, %v2927, %v2928
    %v2930 = vsel %vm1779, %v2927, %v2929
    %v2931 = vsel %vm1781, %v2927, %v2930
    %2932 = vrot.lane.b32.xlu0 %v2931, 64
    %v2933 = vpop.permute.xlu0 %2932
    %2935 = vst.msk [vmem:[#allocation3 + $0x28] sm:$0x3] %vm1814, %v2933
    %v2936 = vld [vmem:[#allocation2 + $0x2a] sm:$0x1]
    %v2937 = vld [vmem:[#allocation2 + $0x6a] sm:$0x1]
    %v2941 = vunpack.c.l.s4 1983009808
    %v2942 = vunpack.c.0.s8 %v2941
    %v2943 = vlaneseq
    %v2944 = vshrl.u32 %v2943, 7
    %v2945 = vsub.s32 %v2942, %v2944
    %v2946 = vrot.slane %v2936, %v2945
    %v2948 = vunpack.c.l.s4 1983009808
    %v2949 = vunpack.c.0.s8 %v2948
    %v2950 = vlaneseq
    %v2951 = vshrl.u32 %v2950, 7
    %v2952 = vsub.s32 %v2949, %v2951
    %v2953 = vrot.slane %v2937, %v2952
    %v2954 = vsel %vm1770, %v2946, %v2946
    %v2955 = vsel %vm1772, %v2946, %v2954
    %v2956 = vrot.slane %v2953, 7
    %v2957 = vsel %vm1775, %v2956, %v2955
    %v2958 = vsel %vm1777, %v2956, %v2957
    %v2959 = vsel %vm1779, %v2956, %v2958
    %v2960 = vsel %vm1781, %v2956, %v2959
    %2962 = vst.msk [vmem:[#allocation3 + $0x2a] sm:$0x3] %vm1784, %v2960
    %v2963 = vld [vmem:[#allocation2 + $0x2b] sm:$0x1]
    %v2964 = vld [vmem:[#allocation2 + $0x6b] sm:$0x1]
    %v2968 = vunpack.c.l.s4 1983009808
    %v2969 = vunpack.c.0.s8 %v2968
    %v2970 = vlaneseq
    %v2971 = vshrl.u32 %v2970, 7
    %v2972 = vsub.s32 %v2969, %v2971
    %v2973 = vrot.slane %v2963, %v2972
    %v2975 = vunpack.c.l.s4 1983009808
    %v2976 = vunpack.c.0.s8 %v2975
    %v2977 = vlaneseq
    %v2978 = vshrl.u32 %v2977, 7
    %v2979 = vsub.s32 %v2976, %v2978
    %v2980 = vrot.slane %v2964, %v2979
    %v2981 = vsel %vm1770, %v2973, %v2973
    %v2982 = vsel %vm1772, %v2973, %v2981
    %v2983 = vrot.slane %v2980, 7
    %v2984 = vsel %vm1775, %v2983, %v2982
    %v2985 = vsel %vm1777, %v2983, %v2984
    %v2986 = vsel %vm1779, %v2983, %v2985
    %v2987 = vsel %vm1781, %v2983, %v2986
    %2988 = vrot.lane.b32.xlu0 %v2987, 64
    %v2989 = vpop.permute.xlu0 %2988
    %2991 = vst.msk [vmem:[#allocation3 + $0x2a] sm:$0x3] %vm1814, %v2989
    %v2992 = vld [vmem:[#allocation2 + $0x2c] sm:$0x1]
    %v2993 = vld [vmem:[#allocation2 + $0x6c] sm:$0x1]
    %v2997 = vunpack.c.l.s4 1983009808
    %v2998 = vunpack.c.0.s8 %v2997
    %v2999 = vlaneseq
    %v3000 = vshrl.u32 %v2999, 7
    %v3001 = vsub.s32 %v2998, %v3000
    %v3002 = vrot.slane %v2992, %v3001
    %v3004 = vunpack.c.l.s4 1983009808
    %v3005 = vunpack.c.0.s8 %v3004
    %v3006 = vlaneseq
    %v3007 = vshrl.u32 %v3006, 7
    %v3008 = vsub.s32 %v3005, %v3007
    %v3009 = vrot.slane %v2993, %v3008
    %v3010 = vsel %vm1770, %v3002, %v3002
    %v3011 = vsel %vm1772, %v3002, %v3010
    %v3012 = vrot.slane %v3009, 7
    %v3013 = vsel %vm1775, %v3012, %v3011
    %v3014 = vsel %vm1777, %v3012, %v3013
    %v3015 = vsel %vm1779, %v3012, %v3014
    %v3016 = vsel %vm1781, %v3012, %v3015
    %3018 = vst.msk [vmem:[#allocation3 + $0x2c] sm:$0x3] %vm1784, %v3016
    %v3019 = vld [vmem:[#allocation2 + $0x2d] sm:$0x1]
    %v3020 = vld [vmem:[#allocation2 + $0x6d] sm:$0x1]
    %v3024 = vunpack.c.l.s4 1983009808
    %v3025 = vunpack.c.0.s8 %v3024
    %v3026 = vlaneseq
    %v3027 = vshrl.u32 %v3026, 7
    %v3028 = vsub.s32 %v3025, %v3027
    %v3029 = vrot.slane %v3019, %v3028
    %v3031 = vunpack.c.l.s4 1983009808
    %v3032 = vunpack.c.0.s8 %v3031
    %v3033 = vlaneseq
    %v3034 = vshrl.u32 %v3033, 7
    %v3035 = vsub.s32 %v3032, %v3034
    %v3036 = vrot.slane %v3020, %v3035
    %v3037 = vsel %vm1770, %v3029, %v3029
    %v3038 = vsel %vm1772, %v3029, %v3037
    %v3039 = vrot.slane %v3036, 7
    %v3040 = vsel %vm1775, %v3039, %v3038
    %v3041 = vsel %vm1777, %v3039, %v3040
    %v3042 = vsel %vm1779, %v3039, %v3041
    %v3043 = vsel %vm1781, %v3039, %v3042
    %3044 = vrot.lane.b32.xlu0 %v3043, 64
    %v3045 = vpop.permute.xlu0 %3044
    %3047 = vst.msk [vmem:[#allocation3 + $0x2c] sm:$0x3] %vm1814, %v3045
    %v3048 = vld [vmem:[#allocation2 + $0x2e] sm:$0x1]
    %v3049 = vld [vmem:[#allocation2 + $0x6e] sm:$0x1]
    %v3053 = vunpack.c.l.s4 1983009808
    %v3054 = vunpack.c.0.s8 %v3053
    %v3055 = vlaneseq
    %v3056 = vshrl.u32 %v3055, 7
    %v3057 = vsub.s32 %v3054, %v3056
    %v3058 = vrot.slane %v3048, %v3057
    %v3060 = vunpack.c.l.s4 1983009808
    %v3061 = vunpack.c.0.s8 %v3060
    %v3062 = vlaneseq
    %v3063 = vshrl.u32 %v3062, 7
    %v3064 = vsub.s32 %v3061, %v3063
    %v3065 = vrot.slane %v3049, %v3064
    %v3066 = vsel %vm1770, %v3058, %v3058
    %v3067 = vsel %vm1772, %v3058, %v3066
    %v3068 = vrot.slane %v3065, 7
    %v3069 = vsel %vm1775, %v3068, %v3067
    %v3070 = vsel %vm1777, %v3068, %v3069
    %v3071 = vsel %vm1779, %v3068, %v3070
    %v3072 = vsel %vm1781, %v3068, %v3071
    %3074 = vst.msk [vmem:[#allocation3 + $0x2e] sm:$0x3] %vm1784, %v3072
    %v3075 = vld [vmem:[#allocation2 + $0x2f] sm:$0x1]
    %v3076 = vld [vmem:[#allocation2 + $0x6f] sm:$0x1]
    %v3080 = vunpack.c.l.s4 1983009808
    %v3081 = vunpack.c.0.s8 %v3080
    %v3082 = vlaneseq
    %v3083 = vshrl.u32 %v3082, 7
    %v3084 = vsub.s32 %v3081, %v3083
    %v3085 = vrot.slane %v3075, %v3084
    %v3087 = vunpack.c.l.s4 1983009808
    %v3088 = vunpack.c.0.s8 %v3087
    %v3089 = vlaneseq
    %v3090 = vshrl.u32 %v3089, 7
    %v3091 = vsub.s32 %v3088, %v3090
    %v3092 = vrot.slane %v3076, %v3091
    %v3093 = vsel %vm1770, %v3085, %v3085
    %v3094 = vsel %vm1772, %v3085, %v3093
    %v3095 = vrot.slane %v3092, 7
    %v3096 = vsel %vm1775, %v3095, %v3094
    %v3097 = vsel %vm1777, %v3095, %v3096
    %v3098 = vsel %vm1779, %v3095, %v3097
    %v3099 = vsel %vm1781, %v3095, %v3098
    %3100 = vrot.lane.b32.xlu0 %v3099, 64
    %v3101 = vpop.permute.xlu0 %3100
    %3103 = vst.msk [vmem:[#allocation3 + $0x2e] sm:$0x3] %vm1814, %v3101
    %v3104 = vld [vmem:[#allocation2 + $0x30] sm:$0x1]
    %v3105 = vld [vmem:[#allocation2 + $0x70] sm:$0x1]
    %v3109 = vunpack.c.l.s4 1983009808
    %v3110 = vunpack.c.0.s8 %v3109
    %v3111 = vlaneseq
    %v3112 = vshrl.u32 %v3111, 7
    %v3113 = vsub.s32 %v3110, %v3112
    %v3114 = vrot.slane %v3104, %v3113
    %v3116 = vunpack.c.l.s4 1983009808
    %v3117 = vunpack.c.0.s8 %v3116
    %v3118 = vlaneseq
    %v3119 = vshrl.u32 %v3118, 7
    %v3120 = vsub.s32 %v3117, %v3119
    %v3121 = vrot.slane %v3105, %v3120
    %v3122 = vsel %vm1770, %v3114, %v3114
    %v3123 = vsel %vm1772, %v3114, %v3122
    %v3124 = vrot.slane %v3121, 7
    %v3125 = vsel %vm1775, %v3124, %v3123
    %v3126 = vsel %vm1777, %v3124, %v3125
    %v3127 = vsel %vm1779, %v3124, %v3126
    %v3128 = vsel %vm1781, %v3124, %v3127
    %3130 = vst.msk [vmem:[#allocation3 + $0x30] sm:$0x3] %vm1784, %v3128
    %v3131 = vld [vmem:[#allocation2 + $0x31] sm:$0x1]
    %v3132 = vld [vmem:[#allocation2 + $0x71] sm:$0x1]
    %v3136 = vunpack.c.l.s4 1983009808
    %v3137 = vunpack.c.0.s8 %v3136
    %v3138 = vlaneseq
    %v3139 = vshrl.u32 %v3138, 7
    %v3140 = vsub.s32 %v3137, %v3139
    %v3141 = vrot.slane %v3131, %v3140
    %v3143 = vunpack.c.l.s4 1983009808
    %v3144 = vunpack.c.0.s8 %v3143
    %v3145 = vlaneseq
    %v3146 = vshrl.u32 %v3145, 7
    %v3147 = vsub.s32 %v3144, %v3146
    %v3148 = vrot.slane %v3132, %v3147
    %v3149 = vsel %vm1770, %v3141, %v3141
    %v3150 = vsel %vm1772, %v3141, %v3149
    %v3151 = vrot.slane %v3148, 7
    %v3152 = vsel %vm1775, %v3151, %v3150
    %v3153 = vsel %vm1777, %v3151, %v3152
    %v3154 = vsel %vm1779, %v3151, %v3153
    %v3155 = vsel %vm1781, %v3151, %v3154
    %3156 = vrot.lane.b32.xlu0 %v3155, 64
    %v3157 = vpop.permute.xlu0 %3156
    %3159 = vst.msk [vmem:[#allocation3 + $0x30] sm:$0x3] %vm1814, %v3157
    %v3160 = vld [vmem:[#allocation2 + $0x32] sm:$0x1]
    %v3161 = vld [vmem:[#allocation2 + $0x72] sm:$0x1]
    %v3165 = vunpack.c.l.s4 1983009808
    %v3166 = vunpack.c.0.s8 %v3165
    %v3167 = vlaneseq
    %v3168 = vshrl.u32 %v3167, 7
    %v3169 = vsub.s32 %v3166, %v3168
    %v3170 = vrot.slane %v3160, %v3169
    %v3172 = vunpack.c.l.s4 1983009808
    %v3173 = vunpack.c.0.s8 %v3172
    %v3174 = vlaneseq
    %v3175 = vshrl.u32 %v3174, 7
    %v3176 = vsub.s32 %v3173, %v3175
    %v3177 = vrot.slane %v3161, %v3176
    %v3178 = vsel %vm1770, %v3170, %v3170
    %v3179 = vsel %vm1772, %v3170, %v3178
    %v3180 = vrot.slane %v3177, 7
    %v3181 = vsel %vm1775, %v3180, %v3179
    %v3182 = vsel %vm1777, %v3180, %v3181
    %v3183 = vsel %vm1779, %v3180, %v3182
    %v3184 = vsel %vm1781, %v3180, %v3183
    %3186 = vst.msk [vmem:[#allocation3 + $0x32] sm:$0x3] %vm1784, %v3184
    %v3187 = vld [vmem:[#allocation2 + $0x33] sm:$0x1]
    %v3188 = vld [vmem:[#allocation2 + $0x73] sm:$0x1]
    %v3192 = vunpack.c.l.s4 1983009808
    %v3193 = vunpack.c.0.s8 %v3192
    %v3194 = vlaneseq
    %v3195 = vshrl.u32 %v3194, 7
    %v3196 = vsub.s32 %v3193, %v3195
    %v3197 = vrot.slane %v3187, %v3196
    %v3199 = vunpack.c.l.s4 1983009808
    %v3200 = vunpack.c.0.s8 %v3199
    %v3201 = vlaneseq
    %v3202 = vshrl.u32 %v3201, 7
    %v3203 = vsub.s32 %v3200, %v3202
    %v3204 = vrot.slane %v3188, %v3203
    %v3205 = vsel %vm1770, %v3197, %v3197
    %v3206 = vsel %vm1772, %v3197, %v3205
    %v3207 = vrot.slane %v3204, 7
    %v3208 = vsel %vm1775, %v3207, %v3206
    %v3209 = vsel %vm1777, %v3207, %v3208
    %v3210 = vsel %vm1779, %v3207, %v3209
    %v3211 = vsel %vm1781, %v3207, %v3210
    %3212 = vrot.lane.b32.xlu0 %v3211, 64
    %v3213 = vpop.permute.xlu0 %3212
    %3215 = vst.msk [vmem:[#allocation3 + $0x32] sm:$0x3] %vm1814, %v3213
    %v3216 = vld [vmem:[#allocation2 + $0x34] sm:$0x1]
    %v3217 = vld [vmem:[#allocation2 + $0x74] sm:$0x1]
    %v3221 = vunpack.c.l.s4 1983009808
    %v3222 = vunpack.c.0.s8 %v3221
    %v3223 = vlaneseq
    %v3224 = vshrl.u32 %v3223, 7
    %v3225 = vsub.s32 %v3222, %v3224
    %v3226 = vrot.slane %v3216, %v3225
    %v3228 = vunpack.c.l.s4 1983009808
    %v3229 = vunpack.c.0.s8 %v3228
    %v3230 = vlaneseq
    %v3231 = vshrl.u32 %v3230, 7
    %v3232 = vsub.s32 %v3229, %v3231
    %v3233 = vrot.slane %v3217, %v3232
    %v3234 = vsel %vm1770, %v3226, %v3226
    %v3235 = vsel %vm1772, %v3226, %v3234
    %v3236 = vrot.slane %v3233, 7
    %v3237 = vsel %vm1775, %v3236, %v3235
    %v3238 = vsel %vm1777, %v3236, %v3237
    %v3239 = vsel %vm1779, %v3236, %v3238
    %v3240 = vsel %vm1781, %v3236, %v3239
    %3242 = vst.msk [vmem:[#allocation3 + $0x34] sm:$0x3] %vm1784, %v3240
    %v3243 = vld [vmem:[#allocation2 + $0x35] sm:$0x1]
    %v3244 = vld [vmem:[#allocation2 + $0x75] sm:$0x1]
    %v3248 = vunpack.c.l.s4 1983009808
    %v3249 = vunpack.c.0.s8 %v3248
    %v3250 = vlaneseq
    %v3251 = vshrl.u32 %v3250, 7
    %v3252 = vsub.s32 %v3249, %v3251
    %v3253 = vrot.slane %v3243, %v3252
    %v3255 = vunpack.c.l.s4 1983009808
    %v3256 = vunpack.c.0.s8 %v3255
    %v3257 = vlaneseq
    %v3258 = vshrl.u32 %v3257, 7
    %v3259 = vsub.s32 %v3256, %v3258
    %v3260 = vrot.slane %v3244, %v3259
    %v3261 = vsel %vm1770, %v3253, %v3253
    %v3262 = vsel %vm1772, %v3253, %v3261
    %v3263 = vrot.slane %v3260, 7
    %v3264 = vsel %vm1775, %v3263, %v3262
    %v3265 = vsel %vm1777, %v3263, %v3264
    %v3266 = vsel %vm1779, %v3263, %v3265
    %v3267 = vsel %vm1781, %v3263, %v3266
    %3268 = vrot.lane.b32.xlu0 %v3267, 64
    %v3269 = vpop.permute.xlu0 %3268
    %3271 = vst.msk [vmem:[#allocation3 + $0x34] sm:$0x3] %vm1814, %v3269
    %v3272 = vld [vmem:[#allocation2 + $0x36] sm:$0x1]
    %v3273 = vld [vmem:[#allocation2 + $0x76] sm:$0x1]
    %v3277 = vunpack.c.l.s4 1983009808
    %v3278 = vunpack.c.0.s8 %v3277
    %v3279 = vlaneseq
    %v3280 = vshrl.u32 %v3279, 7
    %v3281 = vsub.s32 %v3278, %v3280
    %v3282 = vrot.slane %v3272, %v3281
    %v3284 = vunpack.c.l.s4 1983009808
    %v3285 = vunpack.c.0.s8 %v3284
    %v3286 = vlaneseq
    %v3287 = vshrl.u32 %v3286, 7
    %v3288 = vsub.s32 %v3285, %v3287
    %v3289 = vrot.slane %v3273, %v3288
    %v3290 = vsel %vm1770, %v3282, %v3282
    %v3291 = vsel %vm1772, %v3282, %v3290
    %v3292 = vrot.slane %v3289, 7
    %v3293 = vsel %vm1775, %v3292, %v3291
    %v3294 = vsel %vm1777, %v3292, %v3293
    %v3295 = vsel %vm1779, %v3292, %v3294
    %v3296 = vsel %vm1781, %v3292, %v3295
    %3298 = vst.msk [vmem:[#allocation3 + $0x36] sm:$0x3] %vm1784, %v3296
    %v3299 = vld [vmem:[#allocation2 + $0x37] sm:$0x1]
    %v3300 = vld [vmem:[#allocation2 + $0x77] sm:$0x1]
    %v3304 = vunpack.c.l.s4 1983009808
    %v3305 = vunpack.c.0.s8 %v3304
    %v3306 = vlaneseq
    %v3307 = vshrl.u32 %v3306, 7
    %v3308 = vsub.s32 %v3305, %v3307
    %v3309 = vrot.slane %v3299, %v3308
    %v3311 = vunpack.c.l.s4 1983009808
    %v3312 = vunpack.c.0.s8 %v3311
    %v3313 = vlaneseq
    %v3314 = vshrl.u32 %v3313, 7
    %v3315 = vsub.s32 %v3312, %v3314
    %v3316 = vrot.slane %v3300, %v3315
    %v3317 = vsel %vm1770, %v3309, %v3309
    %v3318 = vsel %vm1772, %v3309, %v3317
    %v3319 = vrot.slane %v3316, 7
    %v3320 = vsel %vm1775, %v3319, %v3318
    %v3321 = vsel %vm1777, %v3319, %v3320
    %v3322 = vsel %vm1779, %v3319, %v3321
    %v3323 = vsel %vm1781, %v3319, %v3322
    %3324 = vrot.lane.b32.xlu0 %v3323, 64
    %v3325 = vpop.permute.xlu0 %3324
    %3327 = vst.msk [vmem:[#allocation3 + $0x36] sm:$0x3] %vm1814, %v3325
    %v3328 = vld [vmem:[#allocation2 + $0x38] sm:$0x1]
    %v3329 = vld [vmem:[#allocation2 + $0x78] sm:$0x1]
    %v3333 = vunpack.c.l.s4 1983009808
    %v3334 = vunpack.c.0.s8 %v3333
    %v3335 = vlaneseq
    %v3336 = vshrl.u32 %v3335, 7
    %v3337 = vsub.s32 %v3334, %v3336
    %v3338 = vrot.slane %v3328, %v3337
    %v3340 = vunpack.c.l.s4 1983009808
    %v3341 = vunpack.c.0.s8 %v3340
    %v3342 = vlaneseq
    %v3343 = vshrl.u32 %v3342, 7
    %v3344 = vsub.s32 %v3341, %v3343
    %v3345 = vrot.slane %v3329, %v3344
    %v3346 = vsel %vm1770, %v3338, %v3338
    %v3347 = vsel %vm1772, %v3338, %v3346
    %v3348 = vrot.slane %v3345, 7
    %v3349 = vsel %vm1775, %v3348, %v3347
    %v3350 = vsel %vm1777, %v3348, %v3349
    %v3351 = vsel %vm1779, %v3348, %v3350
    %v3352 = vsel %vm1781, %v3348, %v3351
    %3354 = vst.msk [vmem:[#allocation3 + $0x38] sm:$0x3] %vm1784, %v3352
    %v3355 = vld [vmem:[#allocation2 + $0x39] sm:$0x1]
    %v3356 = vld [vmem:[#allocation2 + $0x79] sm:$0x1]
    %v3360 = vunpack.c.l.s4 1983009808
    %v3361 = vunpack.c.0.s8 %v3360
    %v3362 = vlaneseq
    %v3363 = vshrl.u32 %v3362, 7
    %v3364 = vsub.s32 %v3361, %v3363
    %v3365 = vrot.slane %v3355, %v3364
    %v3367 = vunpack.c.l.s4 1983009808
    %v3368 = vunpack.c.0.s8 %v3367
    %v3369 = vlaneseq
    %v3370 = vshrl.u32 %v3369, 7
    %v3371 = vsub.s32 %v3368, %v3370
    %v3372 = vrot.slane %v3356, %v3371
    %v3373 = vsel %vm1770, %v3365, %v3365
    %v3374 = vsel %vm1772, %v3365, %v3373
    %v3375 = vrot.slane %v3372, 7
    %v3376 = vsel %vm1775, %v3375, %v3374
    %v3377 = vsel %vm1777, %v3375, %v3376
    %v3378 = vsel %vm1779, %v3375, %v3377
    %v3379 = vsel %vm1781, %v3375, %v3378
    %3380 = vrot.lane.b32.xlu0 %v3379, 64
    %v3381 = vpop.permute.xlu0 %3380
    %3383 = vst.msk [vmem:[#allocation3 + $0x38] sm:$0x3] %vm1814, %v3381
    %v3384 = vld [vmem:[#allocation2 + $0x3a] sm:$0x1]
    %v3385 = vld [vmem:[#allocation2 + $0x7a] sm:$0x1]
    %v3389 = vunpack.c.l.s4 1983009808
    %v3390 = vunpack.c.0.s8 %v3389
    %v3391 = vlaneseq
    %v3392 = vshrl.u32 %v3391, 7
    %v3393 = vsub.s32 %v3390, %v3392
    %v3394 = vrot.slane %v3384, %v3393
    %v3396 = vunpack.c.l.s4 1983009808
    %v3397 = vunpack.c.0.s8 %v3396
    %v3398 = vlaneseq
    %v3399 = vshrl.u32 %v3398, 7
    %v3400 = vsub.s32 %v3397, %v3399
    %v3401 = vrot.slane %v3385, %v3400
    %v3402 = vsel %vm1770, %v3394, %v3394
    %v3403 = vsel %vm1772, %v3394, %v3402
    %v3404 = vrot.slane %v3401, 7
    %v3405 = vsel %vm1775, %v3404, %v3403
    %v3406 = vsel %vm1777, %v3404, %v3405
    %v3407 = vsel %vm1779, %v3404, %v3406
    %v3408 = vsel %vm1781, %v3404, %v3407
    %3410 = vst.msk [vmem:[#allocation3 + $0x3a] sm:$0x3] %vm1784, %v3408
    %v3411 = vld [vmem:[#allocation3] sm:$0xff]
    %v3412 = vld [vmem:[#allocation3 + $0x8] sm:$0xff]
    %v3413 = vld [vmem:[#allocation3 + $0x10] sm:$0xff]
    %v3414 = vld [vmem:[#allocation3 + $0x18] sm:$0xff]
    %v3415 = vld [vmem:[#allocation3 + $0x20] sm:$0xff]
    %v3416 = vld [vmem:[#allocation3 + $0x28] sm:$0xff]
    %v3417 = vld [vmem:[#allocation3 + $0x30] sm:$0xff]
    %v3418 = vld [vmem:[#allocation3 + $0x38] sm:$0xf]
    %v3427 = vcombine.high %v3411, %v3411
    %v3429 = vunpack.c.l.s4 1983009808
    %v3430 = vunpack.c.0.s8 %v3429
    %v3431 = vlaneseq
    %v3432 = vshrl.u32 %v3431, 7
    %v3433 = vsub.s32 %v3430, %v3432
    %v3434 = vrot.slane %v3411, %v3433
    %v3436 = vunpack.c.l.s4 1983009808
    %v3437 = vunpack.c.0.s8 %v3436
    %v3438 = vlaneseq
    %v3439 = vshrl.u32 %v3438, 7
    %v3440 = vsub.s32 %v3437, %v3439
    %v3441 = vrot.slane %v3427, %v3440
    %v3442 = vcombine.high %v3434, %v3434
    %v3443 = vcombine.high %v3441, %v3441
    %v3444 = vcombine.high %v3412, %v3412
    %v3446 = vunpack.c.l.s4 1983009808
    %v3447 = vunpack.c.0.s8 %v3446
    %v3448 = vlaneseq
    %v3449 = vshrl.u32 %v3448, 7
    %v3450 = vsub.s32 %v3447, %v3449
    %v3451 = vrot.slane %v3412, %v3450
    %v3453 = vunpack.c.l.s4 1983009808
    %v3454 = vunpack.c.0.s8 %v3453
    %v3455 = vlaneseq
    %v3456 = vshrl.u32 %v3455, 7
    %v3457 = vsub.s32 %v3454, %v3456
    %v3458 = vrot.slane %v3444, %v3457
    %v3459 = vcombine.high %v3451, %v3451
    %v3460 = vcombine.high %v3458, %v3458
    %v3461 = vcombine.high %v3413, %v3413
    %v3463 = vunpack.c.l.s4 1983009808
    %v3464 = vunpack.c.0.s8 %v3463
    %v3465 = vlaneseq
    %v3466 = vshrl.u32 %v3465, 7
    %v3467 = vsub.s32 %v3464, %v3466
    %v3468 = vrot.slane %v3413, %v3467
    %v3470 = vunpack.c.l.s4 1983009808
    %v3471 = vunpack.c.0.s8 %v3470
    %v3472 = vlaneseq
    %v3473 = vshrl.u32 %v3472, 7
    %v3474 = vsub.s32 %v3471, %v3473
    %v3475 = vrot.slane %v3461, %v3474
    %v3476 = vcombine.high %v3468, %v3468
    %v3477 = vcombine.high %v3475, %v3475
    %v3478 = vcombine.high %v3414, %v3414
    %v3480 = vunpack.c.l.s4 1983009808
    %v3481 = vunpack.c.0.s8 %v3480
    %v3482 = vlaneseq
    %v3483 = vshrl.u32 %v3482, 7
    %v3484 = vsub.s32 %v3481, %v3483
    %v3485 = vrot.slane %v3414, %v3484
    %v3487 = vunpack.c.l.s4 1983009808
    %v3488 = vunpack.c.0.s8 %v3487
    %v3489 = vlaneseq
    %v3490 = vshrl.u32 %v3489, 7
    %v3491 = vsub.s32 %v3488, %v3490
    %v3492 = vrot.slane %v3478, %v3491
    %v3493 = vcombine.high %v3485, %v3485
    %v3494 = vcombine.high %v3492, %v3492
    %v3495 = vcombine.high %v3415, %v3415
    %v3497 = vunpack.c.l.s4 1983009808
    %v3498 = vunpack.c.0.s8 %v3497
    %v3499 = vlaneseq
    %v3500 = vshrl.u32 %v3499, 7
    %v3501 = vsub.s32 %v3498, %v3500
    %v3502 = vrot.slane %v3415, %v3501
    %v3504 = vunpack.c.l.s4 1983009808
    %v3505 = vunpack.c.0.s8 %v3504
    %v3506 = vlaneseq
    %v3507 = vshrl.u32 %v3506, 7
    %v3508 = vsub.s32 %v3505, %v3507
    %v3509 = vrot.slane %v3495, %v3508
    %v3510 = vcombine.high %v3502, %v3502
    %v3511 = vcombine.high %v3509, %v3509
    %v3512 = vcombine.high %v3416, %v3416
    %v3514 = vunpack.c.l.s4 1983009808
    %v3515 = vunpack.c.0.s8 %v3514
    %v3516 = vlaneseq
    %v3517 = vshrl.u32 %v3516, 7
    %v3518 = vsub.s32 %v3515, %v3517
    %v3519 = vrot.slane %v3416, %v3518
    %v3521 = vunpack.c.l.s4 1983009808
    %v3522 = vunpack.c.0.s8 %v3521
    %v3523 = vlaneseq
    %v3524 = vshrl.u32 %v3523, 7
    %v3525 = vsub.s32 %v3522, %v3524
    %v3526 = vrot.slane %v3512, %v3525
    %v3527 = vcombine.high %v3519, %v3519
    %v3528 = vcombine.high %v3526, %v3526
    %v3529 = vcombine.high %v3417, %v3417
    %v3531 = vunpack.c.l.s4 1983009808
    %v3532 = vunpack.c.0.s8 %v3531
    %v3533 = vlaneseq
    %v3534 = vshrl.u32 %v3533, 7
    %v3535 = vsub.s32 %v3532, %v3534
    %v3536 = vrot.slane %v3417, %v3535
    %v3538 = vunpack.c.l.s4 1983009808
    %v3539 = vunpack.c.0.s8 %v3538
    %v3540 = vlaneseq
    %v3541 = vshrl.u32 %v3540, 7
    %v3542 = vsub.s32 %v3539, %v3541
    %v3543 = vrot.slane %v3529, %v3542
    %v3544 = vcombine.high %v3536, %v3536
    %v3545 = vcombine.high %v3543, %v3543
    %v3547 = vunpack.c.l.s4 1983009808
    %v3548 = vunpack.c.0.s8 %v3547
    %v3549 = vlaneseq
    %v3550 = vshrl.u32 %v3549, 7
    %v3551 = vsub.s32 %v3548, %v3550
    %v3552 = vrot.slane %v3418, %v3551
    %v3553 = vcombine.high %v3552, %v3552
    %v3584 = vpack.c.bf16 %v3434, %v3434
    %v3585 = vpack.c.bf16 %v3442, %v3442
    %v3586 = vpack.c.bf16 %v3441, %v3441
    %v3587 = vpack.c.bf16 %v3443, %v3443
    %v3588 = vpack.c.bf16 %v3451, %v3451
    %v3589 = vpack.c.bf16 %v3459, %v3459
    %v3590 = vpack.c.bf16 %v3458, %v3458
    %v3591 = vpack.c.bf16 %v3460, %v3460
    %v3592 = vpack.c.bf16 %v3468, %v3468
    %v3593 = vpack.c.bf16 %v3476, %v3476
    %v3594 = vpack.c.bf16 %v3475, %v3475
    %v3595 = vpack.c.bf16 %v3477, %v3477
    %v3596 = vpack.c.bf16 %v3485, %v3485
    %v3597 = vpack.c.bf16 %v3493, %v3493
    %v3598 = vpack.c.bf16 %v3492, %v3492
    %v3599 = vpack.c.bf16 %v3494, %v3494
    %v3600 = vpack.c.bf16 %v3502, %v3502
    %v3601 = vpack.c.bf16 %v3510, %v3510
    %v3602 = vpack.c.bf16 %v3509, %v3509
    %v3603 = vpack.c.bf16 %v3511, %v3511
    %v3604 = vpack.c.bf16 %v3519, %v3519
    %v3605 = vpack.c.bf16 %v3527, %v3527
    %v3606 = vpack.c.bf16 %v3526, %v3526
    %v3607 = vpack.c.bf16 %v3528, %v3528
    %v3608 = vpack.c.bf16 %v3536, %v3536
    %v3609 = vpack.c.bf16 %v3544, %v3544
    %v3610 = vpack.c.bf16 %v3543, %v3543
    %v3611 = vpack.c.bf16 %v3545, %v3545
    %v3612 = vpack.c.bf16 %v3552, %v3552
    %v3613 = vpack.c.bf16 %v3553, %v3553
    %v3614 = vld [vmem:[#allocation12] sm:$0xff]
    %v3615 = vld [vmem:[#allocation12 + $0x8] sm:$0xff]
    %v3616 = vld [vmem:[#allocation12 + $0x10] sm:$0xff]
    %v3617 = vld [vmem:[#allocation12 + $0x18] sm:$0xff]
    %v3618 = vld [vmem:[#allocation12 + $0x20] sm:$0xff]
    %v3619 = vld [vmem:[#allocation12 + $0x28] sm:$0xff]
    %v3620 = vld [vmem:[#allocation12 + $0x30] sm:$0xff]
    %v3621 = vld [vmem:[#allocation12 + $0x38] sm:$0xff]
    %v3622 = vld [vmem:[#allocation12 + $0x40] sm:$0xff]
    %v3623 = vld [vmem:[#allocation12 + $0x48] sm:$0xff]
    %v3624 = vld [vmem:[#allocation12 + $0x50] sm:$0xff]
    %v3625 = vld [vmem:[#allocation12 + $0x58] sm:$0xff]
    %v3626 = vld [vmem:[#allocation12 + $0x60] sm:$0xff]
    %v3627 = vld [vmem:[#allocation12 + $0x68] sm:$0xff]
    %v3628 = vld [vmem:[#allocation12 + $0x70] sm:$0xff]
    %v3629 = vld [vmem:[#allocation12 + $0x78] sm:$0xff]
    %v3630 = vld [vmem:[#allocation12 + $0x80] sm:$0xff]
    %v3631 = vld [vmem:[#allocation12 + $0x88] sm:$0xff]
    %v3632 = vld [vmem:[#allocation12 + $0x90] sm:$0xff]
    %v3633 = vld [vmem:[#allocation12 + $0x98] sm:$0xff]
    %v3634 = vld [vmem:[#allocation12 + $0xa0] sm:$0xff]
    %v3635 = vld [vmem:[#allocation12 + $0xa8] sm:$0xff]
    %v3636 = vld [vmem:[#allocation12 + $0xb0] sm:$0xff]
    %v3637 = vld [vmem:[#allocation12 + $0xb8] sm:$0xff]
    %v3638 = vld [vmem:[#allocation12 + $0xc0] sm:$0xff]
    %v3639 = vld [vmem:[#allocation12 + $0xc8] sm:$0xff]
    %v3640 = vld [vmem:[#allocation12 + $0xd0] sm:$0xff]
    %v3641 = vld [vmem:[#allocation12 + $0xd8] sm:$0xff]
    %v3642 = vld [vmem:[#allocation12 + $0xe0] sm:$0xff]
    %v3643 = vld [vmem:[#allocation12 + $0xe8] sm:$0xff]
    %v3644 = vld [vmem:[#allocation12 + $0xf0] sm:$0xff]
    %v3645 = vld [vmem:[#allocation12 + $0xf8] sm:$0xff]
    %v3646 = vld [vmem:[#allocation12 + $0x100] sm:$0xff]
    %v3647 = vld [vmem:[#allocation12 + $0x108] sm:$0xff]
    %v3648 = vld [vmem:[#allocation12 + $0x110] sm:$0xff]
    %v3649 = vld [vmem:[#allocation12 + $0x118] sm:$0xff]
    %v3650 = vld [vmem:[#allocation12 + $0x120] sm:$0xff]
    %v3651 = vld [vmem:[#allocation12 + $0x128] sm:$0xff]
    %v3652 = vld [vmem:[#allocation12 + $0x130] sm:$0xff]
    %v3653 = vld [vmem:[#allocation12 + $0x138] sm:$0xff]
    %v3654 = vld [vmem:[#allocation12 + $0x140] sm:$0xff]
    %v3655 = vld [vmem:[#allocation12 + $0x148] sm:$0xff]
    %v3656 = vld [vmem:[#allocation12 + $0x150] sm:$0xff]
    %v3657 = vld [vmem:[#allocation12 + $0x158] sm:$0xff]
    %v3658 = vld [vmem:[#allocation12 + $0x160] sm:$0xff]
    %v3659 = vld [vmem:[#allocation12 + $0x168] sm:$0xff]
    %v3660 = vld [vmem:[#allocation12 + $0x170] sm:$0xff]
    %v3661 = vld [vmem:[#allocation12 + $0x178] sm:$0xff]
    %v3662 = vld [vmem:[#allocation12 + $0x180] sm:$0xff]
    %v3663 = vld [vmem:[#allocation12 + $0x188] sm:$0xff]
    %v3664 = vld [vmem:[#allocation12 + $0x190] sm:$0xff]
    %v3665 = vld [vmem:[#allocation12 + $0x198] sm:$0xff]
    %v3666 = vld [vmem:[#allocation12 + $0x1a0] sm:$0xff]
    %v3667 = vld [vmem:[#allocation12 + $0x1a8] sm:$0xff]
    %v3668 = vld [vmem:[#allocation12 + $0x1b0] sm:$0xff]
    %v3669 = vld [vmem:[#allocation12 + $0x1b8] sm:$0xff]
    %v3670 = vld [vmem:[#allocation12 + $0x1c0] sm:$0xff]
    %v3671 = vld [vmem:[#allocation12 + $0x1c8] sm:$0xff]
    %v3672 = vld [vmem:[#allocation12 + $0x1d0] sm:$0xff]
    %v3673 = vld [vmem:[#allocation12 + $0x1d8] sm:$0xff]
    %v3674 = vld [vmem:[#allocation12 + $0x1e0] sm:$0xff]
    %v3675 = vld [vmem:[#allocation12 + $0x1e8] sm:$0xff]
    %v3676 = vld [vmem:[#allocation12 + $0x1f0] sm:$0xff]
    %v3677 = vld [vmem:[#allocation12 + $0x1f8] sm:$0xff]
    %v3678 = vld [vmem:[#allocation12 + $0x200] sm:$0xff]
    %v3679 = vld [vmem:[#allocation12 + $0x208] sm:$0xff]
    %v3680 = vld [vmem:[#allocation12 + $0x210] sm:$0xff]
    %v3681 = vld [vmem:[#allocation12 + $0x218] sm:$0xff]
    %v3682 = vld [vmem:[#allocation12 + $0x220] sm:$0xff]
    %v3683 = vld [vmem:[#allocation12 + $0x228] sm:$0xff]
    %v3684 = vld [vmem:[#allocation12 + $0x230] sm:$0xff]
    %v3685 = vld [vmem:[#allocation12 + $0x238] sm:$0xff]
    %v3686 = vld [vmem:[#allocation12 + $0x240] sm:$0xff]
    %v3687 = vld [vmem:[#allocation12 + $0x248] sm:$0xff]
    %v3688 = vld [vmem:[#allocation12 + $0x250] sm:$0xff]
    %v3689 = vld [vmem:[#allocation12 + $0x258] sm:$0xff]
    %v3690 = vld [vmem:[#allocation12 + $0x260] sm:$0xff]
    %v3691 = vld [vmem:[#allocation12 + $0x268] sm:$0xff]
    %v3692 = vld [vmem:[#allocation12 + $0x270] sm:$0xff]
    %v3693 = vld [vmem:[#allocation12 + $0x278] sm:$0xff]
    %v3694 = vld [vmem:[#allocation12 + $0x280] sm:$0xff]
    %v3695 = vld [vmem:[#allocation12 + $0x288] sm:$0xff]
    %v3696 = vld [vmem:[#allocation12 + $0x290] sm:$0xff]
    %v3697 = vld [vmem:[#allocation12 + $0x298] sm:$0xff]
    %v3698 = vld [vmem:[#allocation12 + $0x2a0] sm:$0xff]
    %v3699 = vld [vmem:[#allocation12 + $0x2a8] sm:$0xff]
    %v3700 = vld [vmem:[#allocation12 + $0x2b0] sm:$0xff]
    %v3701 = vld [vmem:[#allocation12 + $0x2b8] sm:$0xff]
    %v3702 = vld [vmem:[#allocation12 + $0x2c0] sm:$0xff]
    %v3703 = vld [vmem:[#allocation12 + $0x2c8] sm:$0xff]
    %v3704 = vld [vmem:[#allocation12 + $0x2d0] sm:$0xff]
    %v3705 = vld [vmem:[#allocation12 + $0x2d8] sm:$0xff]
    %v3706 = vld [vmem:[#allocation12 + $0x2e0] sm:$0xff]
    %v3707 = vld [vmem:[#allocation12 + $0x2e8] sm:$0xff]
    %v3708 = vld [vmem:[#allocation12 + $0x2f0] sm:$0xff]
    %v3709 = vld [vmem:[#allocation12 + $0x2f8] sm:$0xff]
    %v3710 = vld [vmem:[#allocation12 + $0x300] sm:$0xff]
    %v3711 = vld [vmem:[#allocation12 + $0x308] sm:$0xff]
    %v3712 = vld [vmem:[#allocation12 + $0x310] sm:$0xff]
    %v3713 = vld [vmem:[#allocation12 + $0x318] sm:$0xff]
    %v3714 = vld [vmem:[#allocation12 + $0x320] sm:$0xff]
    %v3715 = vld [vmem:[#allocation12 + $0x328] sm:$0xff]
    %v3716 = vld [vmem:[#allocation12 + $0x330] sm:$0xff]
    %v3717 = vld [vmem:[#allocation12 + $0x338] sm:$0xff]
    %v3718 = vld [vmem:[#allocation12 + $0x340] sm:$0xff]
    %v3719 = vld [vmem:[#allocation12 + $0x348] sm:$0xff]
    %v3720 = vld [vmem:[#allocation12 + $0x350] sm:$0xff]
    %v3721 = vld [vmem:[#allocation12 + $0x358] sm:$0xff]
    %v3722 = vld [vmem:[#allocation12 + $0x360] sm:$0xff]
    %v3723 = vld [vmem:[#allocation12 + $0x368] sm:$0xff]
    %v3724 = vld [vmem:[#allocation12 + $0x370] sm:$0xff]
    %v3725 = vld [vmem:[#allocation12 + $0x378] sm:$0xff]
    %v3726 = vld [vmem:[#allocation12 + $0x380] sm:$0xff]
    %v3727 = vld [vmem:[#allocation12 + $0x388] sm:$0xff]
    %v3728 = vld [vmem:[#allocation12 + $0x390] sm:$0xff]
    %v3729 = vld [vmem:[#allocation12 + $0x398] sm:$0xff]
    %v3730 = vld [vmem:[#allocation12 + $0x3a0] sm:$0xff]
    %v3731 = vld [vmem:[#allocation12 + $0x3a8] sm:$0xff]
    %v3732 = vld [vmem:[#allocation12 + $0x3b0] sm:$0xff]
    %v3733 = vld [vmem:[#allocation12 + $0x3b8] sm:$0xff]
    %v3734 = vld [vmem:[#allocation12 + $0x3c0] sm:$0xff]
    %v3735 = vld [vmem:[#allocation12 + $0x3c8] sm:$0xff]
    %v3736 = vld [vmem:[#allocation12 + $0x3d0] sm:$0xff]
    %v3737 = vld [vmem:[#allocation12 + $0x3d8] sm:$0xff]
    %v3738 = vld [vmem:[#allocation12 + $0x3e0] sm:$0xff]
    %v3739 = vld [vmem:[#allocation12 + $0x3e8] sm:$0xff]
    %v3740 = vld [vmem:[#allocation12 + $0x3f0] sm:$0xff]
    %v3741 = vld [vmem:[#allocation12 + $0x3f8] sm:$0xff]
    %v3742 = vld [vmem:[#allocation12 + $0x400] sm:$0xff]
    %v3743 = vld [vmem:[#allocation12 + $0x408] sm:$0xff]
    %v3744 = vld [vmem:[#allocation12 + $0x410] sm:$0xff]
    %v3745 = vld [vmem:[#allocation12 + $0x418] sm:$0xff]
    %v3746 = vld [vmem:[#allocation12 + $0x420] sm:$0xff]
    %v3747 = vld [vmem:[#allocation12 + $0x428] sm:$0xff]
    %v3748 = vld [vmem:[#allocation12 + $0x430] sm:$0xff]
    %v3749 = vld [vmem:[#allocation12 + $0x438] sm:$0xff]
    %v3750 = vld [vmem:[#allocation12 + $0x440] sm:$0xff]
    %v3751 = vld [vmem:[#allocation12 + $0x448] sm:$0xff]
    %v3752 = vld [vmem:[#allocation12 + $0x450] sm:$0xff]
    %v3753 = vld [vmem:[#allocation12 + $0x458] sm:$0xff]
    %v3754 = vld [vmem:[#allocation12 + $0x460] sm:$0xff]
    %v3755 = vld [vmem:[#allocation12 + $0x468] sm:$0xff]
    %v3756 = vld [vmem:[#allocation12 + $0x470] sm:$0xff]
    %v3757 = vld [vmem:[#allocation12 + $0x478] sm:$0xff]
    %v3758 = vld [vmem:[#allocation12 + $0x480] sm:$0xff]
    %v3759 = vld [vmem:[#allocation12 + $0x488] sm:$0xff]
    %v3760 = vld [vmem:[#allocation12 + $0x490] sm:$0xff]
    %v3761 = vld [vmem:[#allocation12 + $0x498] sm:$0xff]
    %v3762 = vld [vmem:[#allocation12 + $0x4a0] sm:$0xff]
    %v3763 = vld [vmem:[#allocation12 + $0x4a8] sm:$0xff]
    %v3764 = vld [vmem:[#allocation12 + $0x4b0] sm:$0xff]
    %v3765 = vld [vmem:[#allocation12 + $0x4b8] sm:$0xff]
    %v3766 = vld [vmem:[#allocation12 + $0x4c0] sm:$0xff]
    %v3767 = vld [vmem:[#allocation12 + $0x4c8] sm:$0xff]
    %v3768 = vld [vmem:[#allocation12 + $0x4d0] sm:$0xff]
    %v3769 = vld [vmem:[#allocation12 + $0x4d8] sm:$0xff]
    %v3770 = vld [vmem:[#allocation12 + $0x4e0] sm:$0xff]
    %v3771 = vld [vmem:[#allocation12 + $0x4e8] sm:$0xff]
    %v3772 = vld [vmem:[#allocation12 + $0x4f0] sm:$0xff]
    %v3773 = vld [vmem:[#allocation12 + $0x4f8] sm:$0xff]
    %v3774 = vld [vmem:[#allocation12 + $0x500] sm:$0xff]
    %v3775 = vld [vmem:[#allocation12 + $0x508] sm:$0xff]
    %v3776 = vld [vmem:[#allocation12 + $0x510] sm:$0xff]
    %v3777 = vld [vmem:[#allocation12 + $0x518] sm:$0xff]
    %v3778 = vld [vmem:[#allocation12 + $0x520] sm:$0xff]
    %v3779 = vld [vmem:[#allocation12 + $0x528] sm:$0xff]
    %v3780 = vld [vmem:[#allocation12 + $0x530] sm:$0xff]
    %v3781 = vld [vmem:[#allocation12 + $0x538] sm:$0xff]
    %v3782 = vld [vmem:[#allocation12 + $0x540] sm:$0xff]
    %v3783 = vld [vmem:[#allocation12 + $0x548] sm:$0xff]
    %v3784 = vld [vmem:[#allocation12 + $0x550] sm:$0xff]
    %v3785 = vld [vmem:[#allocation12 + $0x558] sm:$0xff]
    %v3786 = vld [vmem:[#allocation12 + $0x560] sm:$0xff]
    %v3787 = vld [vmem:[#allocation12 + $0x568] sm:$0xff]
    %v3788 = vld [vmem:[#allocation12 + $0x570] sm:$0xff]
    %v3789 = vld [vmem:[#allocation12 + $0x578] sm:$0xff]
    %v3790 = vld [vmem:[#allocation12 + $0x580] sm:$0xff]
    %v3791 = vld [vmem:[#allocation12 + $0x588] sm:$0xff]
    %v3792 = vld [vmem:[#allocation12 + $0x590] sm:$0xff]
    %v3793 = vld [vmem:[#allocation12 + $0x598] sm:$0xff]
    %v3794 = vld [vmem:[#allocation12 + $0x5a0] sm:$0xff]
    %v3795 = vld [vmem:[#allocation12 + $0x5a8] sm:$0xff]
    %v3796 = vld [vmem:[#allocation12 + $0x5b0] sm:$0xff]
    %v3797 = vld [vmem:[#allocation12 + $0x5b8] sm:$0xff]
    %v3798 = vld [vmem:[#allocation12 + $0x5c0] sm:$0xff]
    %v3799 = vld [vmem:[#allocation12 + $0x5c8] sm:$0xff]
    %v3800 = vld [vmem:[#allocation12 + $0x5d0] sm:$0xff]
    %v3801 = vld [vmem:[#allocation12 + $0x5d8] sm:$0xff]
    %v3802 = vld [vmem:[#allocation12 + $0x5e0] sm:$0xff]
    %v3803 = vld [vmem:[#allocation12 + $0x5e8] sm:$0xff]
    %v3804 = vld [vmem:[#allocation12 + $0x5f0] sm:$0xff]
    %v3805 = vld [vmem:[#allocation12 + $0x5f8] sm:$0xff]
    %v3806 = vld [vmem:[#allocation12 + $0x600] sm:$0xff]
    %v3807 = vld [vmem:[#allocation12 + $0x608] sm:$0xff]
    %v3808 = vld [vmem:[#allocation12 + $0x610] sm:$0xff]
    %v3809 = vld [vmem:[#allocation12 + $0x618] sm:$0xff]
    %v3810 = vld [vmem:[#allocation12 + $0x620] sm:$0xff]
    %v3811 = vld [vmem:[#allocation12 + $0x628] sm:$0xff]
    %v3812 = vld [vmem:[#allocation12 + $0x630] sm:$0xff]
    %v3813 = vld [vmem:[#allocation12 + $0x638] sm:$0xff]
    %v3814 = vld [vmem:[#allocation12 + $0x640] sm:$0xff]
    %v3815 = vld [vmem:[#allocation12 + $0x648] sm:$0xff]
    %v3816 = vld [vmem:[#allocation12 + $0x650] sm:$0xff]
    %v3817 = vld [vmem:[#allocation12 + $0x658] sm:$0xff]
    %v3818 = vld [vmem:[#allocation12 + $0x660] sm:$0xff]
    %v3819 = vld [vmem:[#allocation12 + $0x668] sm:$0xff]
    %v3820 = vld [vmem:[#allocation12 + $0x670] sm:$0xff]
    %v3821 = vld [vmem:[#allocation12 + $0x678] sm:$0xff]
    %v3822 = vld [vmem:[#allocation12 + $0x680] sm:$0xff]
    %v3823 = vld [vmem:[#allocation12 + $0x688] sm:$0xff]
    %v3824 = vld [vmem:[#allocation12 + $0x690] sm:$0xff]
    %v3825 = vld [vmem:[#allocation12 + $0x698] sm:$0xff]
    %v3826 = vld [vmem:[#allocation12 + $0x6a0] sm:$0xff]
    %v3827 = vld [vmem:[#allocation12 + $0x6a8] sm:$0xff]
    %v3828 = vld [vmem:[#allocation12 + $0x6b0] sm:$0xff]
    %v3829 = vld [vmem:[#allocation12 + $0x6b8] sm:$0xff]
    %v3830 = vld [vmem:[#allocation12 + $0x6c0] sm:$0xff]
    %v3831 = vld [vmem:[#allocation12 + $0x6c8] sm:$0xff]
    %v3832 = vld [vmem:[#allocation12 + $0x6d0] sm:$0xff]
    %v3833 = vld [vmem:[#allocation12 + $0x6d8] sm:$0xff]
    %v3834 = vld [vmem:[#allocation12 + $0x6e0] sm:$0xff]
    %v3835 = vld [vmem:[#allocation12 + $0x6e8] sm:$0xff]
    %v3836 = vld [vmem:[#allocation12 + $0x6f0] sm:$0xff]
    %v3837 = vld [vmem:[#allocation12 + $0x6f8] sm:$0xff]
    %v3838 = vld [vmem:[#allocation12 + $0x700] sm:$0xff]
    %v3839 = vld [vmem:[#allocation12 + $0x708] sm:$0xff]
    %v3840 = vld [vmem:[#allocation12 + $0x710] sm:$0xff]
    %v3841 = vld [vmem:[#allocation12 + $0x718] sm:$0xff]
    %v3842 = vld [vmem:[#allocation12 + $0x720] sm:$0xff]
    %v3843 = vld [vmem:[#allocation12 + $0x728] sm:$0xff]
    %v3844 = vld [vmem:[#allocation12 + $0x730] sm:$0xff]
    %v3845 = vld [vmem:[#allocation12 + $0x738] sm:$0xff]
    %v3846 = vld [vmem:[#allocation12 + $0x740] sm:$0xff]
    %v3847 = vld [vmem:[#allocation12 + $0x748] sm:$0xff]
    %v3848 = vld [vmem:[#allocation12 + $0x750] sm:$0xff]
    %v3849 = vld [vmem:[#allocation12 + $0x758] sm:$0xff]
    %v3850 = vld [vmem:[#allocation12 + $0x760] sm:$0xff]
    %v3851 = vld [vmem:[#allocation12 + $0x768] sm:$0xff]
    %v3852 = vld [vmem:[#allocation12 + $0x770] sm:$0xff]
    %v3853 = vld [vmem:[#allocation12 + $0x778] sm:$0xff]
    %v3854 = vld [vmem:[#allocation12 + $0x780] sm:$0xff]
    %v3855 = vld [vmem:[#allocation12 + $0x788] sm:$0xff]
    %v3856 = vld [vmem:[#allocation12 + $0x790] sm:$0xff]
    %v3857 = vld [vmem:[#allocation12 + $0x798] sm:$0xff]
    %v3858 = vld [vmem:[#allocation12 + $0x7a0] sm:$0xff]
    %v3859 = vld [vmem:[#allocation12 + $0x7a8] sm:$0xff]
    %v3860 = vld [vmem:[#allocation12 + $0x7b0] sm:$0xff]
    %v3861 = vld [vmem:[#allocation12 + $0x7b8] sm:$0xff]
    %v3862 = vld [vmem:[#allocation12 + $0x7c0] sm:$0xff]
    %v3863 = vld [vmem:[#allocation12 + $0x7c8] sm:$0xff]
    %v3864 = vld [vmem:[#allocation12 + $0x7d0] sm:$0xff]
    %v3865 = vld [vmem:[#allocation12 + $0x7d8] sm:$0xff]
    %v3866 = vld [vmem:[#allocation12 + $0x7e0] sm:$0xff]
    %v3867 = vld [vmem:[#allocation12 + $0x7e8] sm:$0xff]
    %v3868 = vld [vmem:[#allocation12 + $0x7f0] sm:$0xff]
    %v3869 = vld [vmem:[#allocation12 + $0x7f8] sm:$0xff]
    %v3870 = vld [vmem:[#allocation12 + $0x800] sm:$0xff]
    %v3871 = vld [vmem:[#allocation12 + $0x808] sm:$0xff]
    %v3872 = vld [vmem:[#allocation12 + $0x810] sm:$0xff]
    %v3873 = vld [vmem:[#allocation12 + $0x818] sm:$0xff]
    %v3874 = vld [vmem:[#allocation12 + $0x820] sm:$0xff]
    %v3875 = vld [vmem:[#allocation12 + $0x828] sm:$0xff]
    %v3876 = vld [vmem:[#allocation12 + $0x830] sm:$0xff]
    %v3877 = vld [vmem:[#allocation12 + $0x838] sm:$0xff]
    %v3878 = vld [vmem:[#allocation12 + $0x840] sm:$0xff]
    %v3879 = vld [vmem:[#allocation12 + $0x848] sm:$0xff]
    %v3880 = vld [vmem:[#allocation12 + $0x850] sm:$0xff]
    %v3881 = vld [vmem:[#allocation12 + $0x858] sm:$0xff]
    %v3882 = vld [vmem:[#allocation12 + $0x860] sm:$0xff]
    %v3883 = vld [vmem:[#allocation12 + $0x868] sm:$0xff]
    %v3884 = vld [vmem:[#allocation12 + $0x870] sm:$0xff]
    %v3885 = vld [vmem:[#allocation12 + $0x878] sm:$0xff]
    %v3886 = vld [vmem:[#allocation12 + $0x880] sm:$0xff]
    %v3887 = vld [vmem:[#allocation12 + $0x888] sm:$0xff]
    %v3888 = vld [vmem:[#allocation12 + $0x890] sm:$0xff]
    %v3889 = vld [vmem:[#allocation12 + $0x898] sm:$0xff]
    %v3890 = vld [vmem:[#allocation12 + $0x8a0] sm:$0xff]
    %v3891 = vld [vmem:[#allocation12 + $0x8a8] sm:$0xff]
    %v3892 = vld [vmem:[#allocation12 + $0x8b0] sm:$0xff]
    %v3893 = vld [vmem:[#allocation12 + $0x8b8] sm:$0xff]
    %v3894 = vld [vmem:[#allocation12 + $0x8c0] sm:$0xff]
    %v3895 = vld [vmem:[#allocation12 + $0x8c8] sm:$0xff]
    %v3896 = vld [vmem:[#allocation12 + $0x8d0] sm:$0xff]
    %v3897 = vld [vmem:[#allocation12 + $0x8d8] sm:$0xff]
    %v3898 = vld [vmem:[#allocation12 + $0x8e0] sm:$0xff]
    %v3899 = vld [vmem:[#allocation12 + $0x8e8] sm:$0xff]
    %v3900 = vld [vmem:[#allocation12 + $0x8f0] sm:$0xff]
    %v3901 = vld [vmem:[#allocation12 + $0x8f8] sm:$0xff]
    %v3902 = vld [vmem:[#allocation12 + $0x900] sm:$0xff]
    %v3903 = vld [vmem:[#allocation12 + $0x908] sm:$0xff]
    %v3904 = vld [vmem:[#allocation12 + $0x910] sm:$0xff]
    %v3905 = vld [vmem:[#allocation12 + $0x918] sm:$0xff]
    %v3906 = vld [vmem:[#allocation12 + $0x920] sm:$0xff]
    %v3907 = vld [vmem:[#allocation12 + $0x928] sm:$0xff]
    %v3908 = vld [vmem:[#allocation12 + $0x930] sm:$0xff]
    %v3909 = vld [vmem:[#allocation12 + $0x938] sm:$0xff]
    %v3910 = vld [vmem:[#allocation12 + $0x940] sm:$0xff]
    %v3911 = vld [vmem:[#allocation12 + $0x948] sm:$0xff]
    %v3912 = vld [vmem:[#allocation12 + $0x950] sm:$0xff]
    %v3913 = vld [vmem:[#allocation12 + $0x958] sm:$0xff]
    %v3914 = vld [vmem:[#allocation12 + $0x960] sm:$0xff]
    %v3915 = vld [vmem:[#allocation12 + $0x968] sm:$0xff]
    %v3916 = vld [vmem:[#allocation12 + $0x970] sm:$0xff]
    %v3917 = vld [vmem:[#allocation12 + $0x978] sm:$0xff]
    %v3918 = vld [vmem:[#allocation12 + $0x980] sm:$0xff]
    %v3919 = vld [vmem:[#allocation12 + $0x988] sm:$0xff]
    %v3920 = vld [vmem:[#allocation12 + $0x990] sm:$0xff]
    %v3921 = vld [vmem:[#allocation12 + $0x998] sm:$0xff]
    %v3922 = vld [vmem:[#allocation12 + $0x9a0] sm:$0xff]
    %v3923 = vld [vmem:[#allocation12 + $0x9a8] sm:$0xff]
    %v3924 = vld [vmem:[#allocation12 + $0x9b0] sm:$0xff]
    %v3925 = vld [vmem:[#allocation12 + $0x9b8] sm:$0xff]
    %v3926 = vld [vmem:[#allocation12 + $0x9c0] sm:$0xff]
    %v3927 = vld [vmem:[#allocation12 + $0x9c8] sm:$0xff]
    %v3928 = vld [vmem:[#allocation12 + $0x9d0] sm:$0xff]
    %v3929 = vld [vmem:[#allocation12 + $0x9d8] sm:$0xff]
    %v3930 = vld [vmem:[#allocation12 + $0x9e0] sm:$0xff]
    %v3931 = vld [vmem:[#allocation12 + $0x9e8] sm:$0xff]
    %v3932 = vld [vmem:[#allocation12 + $0x9f0] sm:$0xff]
    %v3933 = vld [vmem:[#allocation12 + $0x9f8] sm:$0xff]
    %v3934 = vld [vmem:[#allocation12 + $0xa00] sm:$0xff]
    %v3935 = vld [vmem:[#allocation12 + $0xa08] sm:$0xff]
    %v3936 = vld [vmem:[#allocation12 + $0xa10] sm:$0xff]
    %v3937 = vld [vmem:[#allocation12 + $0xa18] sm:$0xff]
    %v3938 = vld [vmem:[#allocation12 + $0xa20] sm:$0xff]
    %v3939 = vld [vmem:[#allocation12 + $0xa28] sm:$0xff]
    %v3940 = vld [vmem:[#allocation12 + $0xa30] sm:$0xff]
    %v3941 = vld [vmem:[#allocation12 + $0xa38] sm:$0xff]
    %v3942 = vld [vmem:[#allocation12 + $0xa40] sm:$0xff]
    %v3943 = vld [vmem:[#allocation12 + $0xa48] sm:$0xff]
    %v3944 = vld [vmem:[#allocation12 + $0xa50] sm:$0xff]
    %v3945 = vld [vmem:[#allocation12 + $0xa58] sm:$0xff]
    %v3946 = vld [vmem:[#allocation12 + $0xa60] sm:$0xff]
    %v3947 = vld [vmem:[#allocation12 + $0xa68] sm:$0xff]
    %v3948 = vld [vmem:[#allocation12 + $0xa70] sm:$0xff]
    %v3949 = vld [vmem:[#allocation12 + $0xa78] sm:$0xff]
    %v3950 = vld [vmem:[#allocation12 + $0xa80] sm:$0xff]
    %v3951 = vld [vmem:[#allocation12 + $0xa88] sm:$0xff]
    %v3952 = vld [vmem:[#allocation12 + $0xa90] sm:$0xff]
    %v3953 = vld [vmem:[#allocation12 + $0xa98] sm:$0xff]
    %v3954 = vld [vmem:[#allocation12 + $0xaa0] sm:$0xff]
    %v3955 = vld [vmem:[#allocation12 + $0xaa8] sm:$0xff]
    %v3956 = vld [vmem:[#allocation12 + $0xab0] sm:$0xff]
    %v3957 = vld [vmem:[#allocation12 + $0xab8] sm:$0xff]
    %v3958 = vld [vmem:[#allocation12 + $0xac0] sm:$0xff]
    %v3959 = vld [vmem:[#allocation12 + $0xac8] sm:$0xff]
    %v3960 = vld [vmem:[#allocation12 + $0xad0] sm:$0xff]
    %v3961 = vld [vmem:[#allocation12 + $0xad8] sm:$0xff]
    %v3962 = vld [vmem:[#allocation12 + $0xae0] sm:$0xff]
    %v3963 = vld [vmem:[#allocation12 + $0xae8] sm:$0xff]
    %v3964 = vld [vmem:[#allocation12 + $0xaf0] sm:$0xff]
    %v3965 = vld [vmem:[#allocation12 + $0xaf8] sm:$0xff]
    %v3966 = vld [vmem:[#allocation12 + $0xb00] sm:$0xff]
    %v3967 = vld [vmem:[#allocation12 + $0xb08] sm:$0xff]
    %v3968 = vld [vmem:[#allocation12 + $0xb10] sm:$0xff]
    %v3969 = vld [vmem:[#allocation12 + $0xb18] sm:$0xff]
    %v3970 = vld [vmem:[#allocation12 + $0xb20] sm:$0xff]
    %v3971 = vld [vmem:[#allocation12 + $0xb28] sm:$0xff]
    %v3972 = vld [vmem:[#allocation12 + $0xb30] sm:$0xff]
    %v3973 = vld [vmem:[#allocation12 + $0xb38] sm:$0xff]
    %v3974 = vld [vmem:[#allocation12 + $0xb40] sm:$0xff]
    %v3975 = vld [vmem:[#allocation12 + $0xb48] sm:$0xff]
    %v3976 = vld [vmem:[#allocation12 + $0xb50] sm:$0xff]
    %v3977 = vld [vmem:[#allocation12 + $0xb58] sm:$0xff]
    %v3978 = vld [vmem:[#allocation12 + $0xb60] sm:$0xff]
    %v3979 = vld [vmem:[#allocation12 + $0xb68] sm:$0xff]
    %v3980 = vld [vmem:[#allocation12 + $0xb70] sm:$0xff]
    %v3981 = vld [vmem:[#allocation12 + $0xb78] sm:$0xff]
    %v3982 = vld [vmem:[#allocation12 + $0xb80] sm:$0xff]
    %v3983 = vld [vmem:[#allocation12 + $0xb88] sm:$0xff]
    %v3984 = vld [vmem:[#allocation12 + $0xb90] sm:$0xff]
    %v3985 = vld [vmem:[#allocation12 + $0xb98] sm:$0xff]
    %v3986 = vld [vmem:[#allocation12 + $0xba0] sm:$0xff]
    %v3987 = vld [vmem:[#allocation12 + $0xba8] sm:$0xff]
    %v3988 = vld [vmem:[#allocation12 + $0xbb0] sm:$0xff]
    %v3989 = vld [vmem:[#allocation12 + $0xbb8] sm:$0xff]
    %v3990 = vld [vmem:[#allocation12 + $0xbc0] sm:$0xff]
    %v3991 = vld [vmem:[#allocation12 + $0xbc8] sm:$0xff]
    %v3992 = vld [vmem:[#allocation12 + $0xbd0] sm:$0xff]
    %v3993 = vld [vmem:[#allocation12 + $0xbd8] sm:$0xff]
    %v3994 = vld [vmem:[#allocation12 + $0xbe0] sm:$0xff]
    %v3995 = vld [vmem:[#allocation12 + $0xbe8] sm:$0xff]
    %v3996 = vld [vmem:[#allocation12 + $0xbf0] sm:$0xff]
    %v3997 = vld [vmem:[#allocation12 + $0xbf8] sm:$0xff]
    %v3998 = vld [vmem:[#allocation12 + $0xc00] sm:$0xff]
    %v3999 = vld [vmem:[#allocation12 + $0xc08] sm:$0xff]
    %v4000 = vld [vmem:[#allocation12 + $0xc10] sm:$0xff]
    %v4001 = vld [vmem:[#allocation12 + $0xc18] sm:$0xff]
    %v4002 = vld [vmem:[#allocation12 + $0xc20] sm:$0xff]
    %v4003 = vld [vmem:[#allocation12 + $0xc28] sm:$0xff]
    %v4004 = vld [vmem:[#allocation12 + $0xc30] sm:$0xff]
    %v4005 = vld [vmem:[#allocation12 + $0xc38] sm:$0xff]
    %v4006 = vld [vmem:[#allocation12 + $0xc40] sm:$0xff]
    %v4007 = vld [vmem:[#allocation12 + $0xc48] sm:$0xff]
    %v4008 = vld [vmem:[#allocation12 + $0xc50] sm:$0xff]
    %v4009 = vld [vmem:[#allocation12 + $0xc58] sm:$0xff]
    %v4010 = vld [vmem:[#allocation12 + $0xc60] sm:$0xff]
    %v4011 = vld [vmem:[#allocation12 + $0xc68] sm:$0xff]
    %v4012 = vld [vmem:[#allocation12 + $0xc70] sm:$0xff]
    %v4013 = vld [vmem:[#allocation12 + $0xc78] sm:$0xff]
    %v4014 = vld [vmem:[#allocation12 + $0xc80] sm:$0xff]
    %v4015 = vld [vmem:[#allocation12 + $0xc88] sm:$0xff]
    %v4016 = vld [vmem:[#allocation12 + $0xc90] sm:$0xff]
    %v4017 = vld [vmem:[#allocation12 + $0xc98] sm:$0xff]
    %v4018 = vld [vmem:[#allocation12 + $0xca0] sm:$0xff]
    %v4019 = vld [vmem:[#allocation12 + $0xca8] sm:$0xff]
    %v4020 = vld [vmem:[#allocation12 + $0xcb0] sm:$0xff]
    %v4021 = vld [vmem:[#allocation12 + $0xcb8] sm:$0xff]
    %v4022 = vld [vmem:[#allocation12 + $0xcc0] sm:$0xff]
    %v4023 = vld [vmem:[#allocation12 + $0xcc8] sm:$0xff]
    %v4024 = vld [vmem:[#allocation12 + $0xcd0] sm:$0xff]
    %v4025 = vld [vmem:[#allocation12 + $0xcd8] sm:$0xff]
    %v4026 = vld [vmem:[#allocation12 + $0xce0] sm:$0xff]
    %v4027 = vld [vmem:[#allocation12 + $0xce8] sm:$0xff]
    %v4028 = vld [vmem:[#allocation12 + $0xcf0] sm:$0xff]
    %v4029 = vld [vmem:[#allocation12 + $0xcf8] sm:$0xff]
    %v4030 = vld [vmem:[#allocation12 + $0xd00] sm:$0xff]
    %v4031 = vld [vmem:[#allocation12 + $0xd08] sm:$0xff]
    %v4032 = vld [vmem:[#allocation12 + $0xd10] sm:$0xff]
    %v4033 = vld [vmem:[#allocation12 + $0xd18] sm:$0xff]
    %v4034 = vld [vmem:[#allocation12 + $0xd20] sm:$0xff]
    %v4035 = vld [vmem:[#allocation12 + $0xd28] sm:$0xff]
    %v4036 = vld [vmem:[#allocation12 + $0xd30] sm:$0xff]
    %v4037 = vld [vmem:[#allocation12 + $0xd38] sm:$0xff]
    %v4038 = vld [vmem:[#allocation12 + $0xd40] sm:$0xff]
    %v4039 = vld [vmem:[#allocation12 + $0xd48] sm:$0xff]
    %v4040 = vld [vmem:[#allocation12 + $0xd50] sm:$0xff]
    %v4041 = vld [vmem:[#allocation12 + $0xd58] sm:$0xff]
    %v4042 = vld [vmem:[#allocation12 + $0xd60] sm:$0xff]
    %v4043 = vld [vmem:[#allocation12 + $0xd68] sm:$0xff]
    %v4044 = vld [vmem:[#allocation12 + $0xd70] sm:$0xff]
    %v4045 = vld [vmem:[#allocation12 + $0xd78] sm:$0xff]
    %v4046 = vld [vmem:[#allocation12 + $0xd80] sm:$0xff]
    %v4047 = vld [vmem:[#allocation12 + $0xd88] sm:$0xff]
    %v4048 = vld [vmem:[#allocation12 + $0xd90] sm:$0xff]
    %v4049 = vld [vmem:[#allocation12 + $0xd98] sm:$0xff]
    %v4050 = vld [vmem:[#allocation12 + $0xda0] sm:$0xff]
    %v4051 = vld [vmem:[#allocation12 + $0xda8] sm:$0xff]
    %v4052 = vld [vmem:[#allocation12 + $0xdb0] sm:$0xff]
    %v4053 = vld [vmem:[#allocation12 + $0xdb8] sm:$0xff]
    %v4054 = vld [vmem:[#allocation12 + $0xdc0] sm:$0xff]
    %v4055 = vld [vmem:[#allocation12 + $0xdc8] sm:$0xff]
    %v4056 = vld [vmem:[#allocation12 + $0xdd0] sm:$0xff]
    %v4057 = vld [vmem:[#allocation12 + $0xdd8] sm:$0xff]
    %v4058 = vld [vmem:[#allocation12 + $0xde0] sm:$0xff]
    %v4059 = vld [vmem:[#allocation12 + $0xde8] sm:$0xff]
    %v4060 = vld [vmem:[#allocation12 + $0xdf0] sm:$0xff]
    %v4061 = vld [vmem:[#allocation12 + $0xdf8] sm:$0xff]
    %v4062 = vld [vmem:[#allocation12 + $0xe00] sm:$0xff]
    %v4063 = vld [vmem:[#allocation12 + $0xe08] sm:$0xff]
    %v4064 = vld [vmem:[#allocation12 + $0xe10] sm:$0xff]
    %v4065 = vld [vmem:[#allocation12 + $0xe18] sm:$0xff]
    %v4066 = vld [vmem:[#allocation12 + $0xe20] sm:$0xff]
    %v4067 = vld [vmem:[#allocation12 + $0xe28] sm:$0xff]
    %v4068 = vld [vmem:[#allocation12 + $0xe30] sm:$0xff]
    %v4069 = vld [vmem:[#allocation12 + $0xe38] sm:$0xff]
    %v4070 = vld [vmem:[#allocation12 + $0xe40] sm:$0xff]
    %v4071 = vld [vmem:[#allocation12 + $0xe48] sm:$0xff]
    %v4072 = vld [vmem:[#allocation12 + $0xe50] sm:$0xff]
    %v4073 = vld [vmem:[#allocation12 + $0xe58] sm:$0xff]
    %v4074 = vld [vmem:[#allocation12 + $0xe60] sm:$0xff]
    %v4075 = vld [vmem:[#allocation12 + $0xe68] sm:$0xff]
    %v4076 = vld [vmem:[#allocation12 + $0xe70] sm:$0xff]
    %v4077 = vld [vmem:[#allocation12 + $0xe78] sm:$0xff]
    %v4078 = vld [vmem:[#allocation12 + $0xe80] sm:$0xff]
    %v4079 = vld [vmem:[#allocation12 + $0xe88] sm:$0xff]
    %v4080 = vld [vmem:[#allocation12 + $0xe90] sm:$0xff]
    %v4081 = vld [vmem:[#allocation12 + $0xe98] sm:$0xff]
    %v4082 = vld [vmem:[#allocation12 + $0xea0] sm:$0xff]
    %v4083 = vld [vmem:[#allocation12 + $0xea8] sm:$0xff]
    %v4084 = vld [vmem:[#allocation12 + $0xeb0] sm:$0xff]
    %v4085 = vld [vmem:[#allocation12 + $0xeb8] sm:$0xff]
    %v4086 = vld [vmem:[#allocation12 + $0xec0] sm:$0xff]
    %v4087 = vld [vmem:[#allocation12 + $0xec8] sm:$0xff]
    %v4088 = vld [vmem:[#allocation12 + $0xed0] sm:$0xff]
    %v4089 = vld [vmem:[#allocation12 + $0xed8] sm:$0xff]
    %v4090 = vld [vmem:[#allocation12 + $0xee0] sm:$0xff]
    %v4091 = vld [vmem:[#allocation12 + $0xee8] sm:$0xff]
    %v4092 = vld [vmem:[#allocation12 + $0xef0] sm:$0xff]
    %v4093 = vld [vmem:[#allocation12 + $0xef8] sm:$0xff]
    %v4094 = vld [vmem:[#allocation12 + $0xf00] sm:$0xff]
    %v4095 = vld [vmem:[#allocation12 + $0xf08] sm:$0xff]
    %v4096 = vld [vmem:[#allocation12 + $0xf10] sm:$0xff]
    %v4097 = vld [vmem:[#allocation12 + $0xf18] sm:$0xff]
    %v4098 = vld [vmem:[#allocation12 + $0xf20] sm:$0xff]
    %v4099 = vld [vmem:[#allocation12 + $0xf28] sm:$0xff]
    %v4100 = vld [vmem:[#allocation12 + $0xf30] sm:$0xff]
    %v4101 = vld [vmem:[#allocation12 + $0xf38] sm:$0xff]
    %v4102 = vld [vmem:[#allocation12 + $0xf40] sm:$0xff]
    %v4103 = vld [vmem:[#allocation12 + $0xf48] sm:$0xff]
    %v4104 = vld [vmem:[#allocation12 + $0xf50] sm:$0xff]
    %v4105 = vld [vmem:[#allocation12 + $0xf58] sm:$0xff]
    %v4106 = vld [vmem:[#allocation12 + $0xf60] sm:$0xff]
    %v4107 = vld [vmem:[#allocation12 + $0xf68] sm:$0xff]
    %v4108 = vld [vmem:[#allocation12 + $0xf70] sm:$0xff]
    %v4109 = vld [vmem:[#allocation12 + $0xf78] sm:$0xff]
    %v4110 = vld [vmem:[#allocation12 + $0xf80] sm:$0xff]
    %v4111 = vld [vmem:[#allocation12 + $0xf88] sm:$0xff]
    %v4112 = vld [vmem:[#allocation12 + $0xf90] sm:$0xff]
    %v4113 = vld [vmem:[#allocation12 + $0xf98] sm:$0xff]
    %v4114 = vld [vmem:[#allocation12 + $0xfa0] sm:$0xff]
    %v4115 = vld [vmem:[#allocation12 + $0xfa8] sm:$0xff]
    %v4116 = vld [vmem:[#allocation12 + $0xfb0] sm:$0xff]
    %v4117 = vld [vmem:[#allocation12 + $0xfb8] sm:$0xff]
    %v4118 = vld [vmem:[#allocation12 + $0xfc0] sm:$0xff]
    %v4119 = vld [vmem:[#allocation12 + $0xfc8] sm:$0xff]
    %v4120 = vld [vmem:[#allocation12 + $0xfd0] sm:$0xff]
    %v4121 = vld [vmem:[#allocation12 + $0xfd8] sm:$0xff]
    %v4122 = vld [vmem:[#allocation12 + $0xfe0] sm:$0xff]
    %v4123 = vld [vmem:[#allocation12 + $0xfe8] sm:$0xff]
    %v4124 = vld [vmem:[#allocation12 + $0xff0] sm:$0xff]
    %v4125 = vld [vmem:[#allocation12 + $0xff8] sm:$0xff]
    %v4126 = vld [vmem:[#allocation12 + $0x1000] sm:$0xff]
    %v4127 = vld [vmem:[#allocation12 + $0x1008] sm:$0xff]
    %v4128 = vld [vmem:[#allocation12 + $0x1010] sm:$0xff]
    %v4129 = vld [vmem:[#allocation12 + $0x1018] sm:$0xff]
    %v4130 = vld [vmem:[#allocation12 + $0x1020] sm:$0xff]
    %v4131 = vld [vmem:[#allocation12 + $0x1028] sm:$0xff]
    %v4132 = vld [vmem:[#allocation12 + $0x1030] sm:$0xff]
    %v4133 = vld [vmem:[#allocation12 + $0x1038] sm:$0xff]
    %v4134 = vld [vmem:[#allocation12 + $0x1040] sm:$0xff]
    %v4135 = vld [vmem:[#allocation12 + $0x1048] sm:$0xff]
    %v4136 = vld [vmem:[#allocation12 + $0x1050] sm:$0xff]
    %v4137 = vld [vmem:[#allocation12 + $0x1058] sm:$0xff]
    %v4138 = vld [vmem:[#allocation12 + $0x1060] sm:$0xff]
    %v4139 = vld [vmem:[#allocation12 + $0x1068] sm:$0xff]
    %v4140 = vld [vmem:[#allocation12 + $0x1070] sm:$0xff]
    %v4141 = vld [vmem:[#allocation12 + $0x1078] sm:$0xff]
    %v4142 = vld [vmem:[#allocation12 + $0x1080] sm:$0xff]
    %v4143 = vld [vmem:[#allocation12 + $0x1088] sm:$0xff]
    %v4144 = vld [vmem:[#allocation12 + $0x1090] sm:$0xff]
    %v4145 = vld [vmem:[#allocation12 + $0x1098] sm:$0xff]
    %v4146 = vld [vmem:[#allocation12 + $0x10a0] sm:$0xff]
    %v4147 = vld [vmem:[#allocation12 + $0x10a8] sm:$0xff]
    %v4148 = vld [vmem:[#allocation12 + $0x10b0] sm:$0xff]
    %v4149 = vld [vmem:[#allocation12 + $0x10b8] sm:$0xff]
    %v4150 = vld [vmem:[#allocation12 + $0x10c0] sm:$0xff]
    %v4151 = vld [vmem:[#allocation12 + $0x10c8] sm:$0xff]
    %v4152 = vld [vmem:[#allocation12 + $0x10d0] sm:$0xff]
    %v4153 = vld [vmem:[#allocation12 + $0x10d8] sm:$0xff]
    %v4154 = vld [vmem:[#allocation12 + $0x10e0] sm:$0xff]
    %v4155 = vld [vmem:[#allocation12 + $0x10e8] sm:$0xff]
    %v4156 = vld [vmem:[#allocation12 + $0x10f0] sm:$0xff]
    %v4157 = vld [vmem:[#allocation12 + $0x10f8] sm:$0xff]
    %v4158 = vld [vmem:[#allocation12 + $0x1100] sm:$0xff]
    %v4159 = vld [vmem:[#allocation12 + $0x1108] sm:$0xff]
    %v4160 = vld [vmem:[#allocation12 + $0x1110] sm:$0xff]
    %v4161 = vld [vmem:[#allocation12 + $0x1118] sm:$0xff]
    %v4162 = vld [vmem:[#allocation12 + $0x1120] sm:$0xff]
    %v4163 = vld [vmem:[#allocation12 + $0x1128] sm:$0xff]
    %v4164 = vld [vmem:[#allocation12 + $0x1130] sm:$0xff]
    %v4165 = vld [vmem:[#allocation12 + $0x1138] sm:$0xff]
    %v4166 = vld [vmem:[#allocation12 + $0x1140] sm:$0xff]
    %v4167 = vld [vmem:[#allocation12 + $0x1148] sm:$0xff]
    %v4168 = vld [vmem:[#allocation12 + $0x1150] sm:$0xff]
    %v4169 = vld [vmem:[#allocation12 + $0x1158] sm:$0xff]
    %v4170 = vld [vmem:[#allocation12 + $0x1160] sm:$0xff]
    %v4171 = vld [vmem:[#allocation12 + $0x1168] sm:$0xff]
    %v4172 = vld [vmem:[#allocation12 + $0x1170] sm:$0xff]
    %v4173 = vld [vmem:[#allocation12 + $0x1178] sm:$0xff]
    %v4174 = vld [vmem:[#allocation12 + $0x1180] sm:$0xff]
    %v4175 = vld [vmem:[#allocation12 + $0x1188] sm:$0xff]
    %v4176 = vld [vmem:[#allocation12 + $0x1190] sm:$0xff]
    %v4177 = vld [vmem:[#allocation12 + $0x1198] sm:$0xff]
    %v4178 = vld [vmem:[#allocation12 + $0x11a0] sm:$0xff]
    %v4179 = vld [vmem:[#allocation12 + $0x11a8] sm:$0xff]
    %v4180 = vld [vmem:[#allocation12 + $0x11b0] sm:$0xff]
    %v4181 = vld [vmem:[#allocation12 + $0x11b8] sm:$0xff]
    %v4182 = vld [vmem:[#allocation12 + $0x11c0] sm:$0xff]
    %v4183 = vld [vmem:[#allocation12 + $0x11c8] sm:$0xff]
    %v4184 = vld [vmem:[#allocation12 + $0x11d0] sm:$0xff]
    %v4185 = vld [vmem:[#allocation12 + $0x11d8] sm:$0xff]
    %v4186 = vld [vmem:[#allocation12 + $0x11e0] sm:$0xff]
    %v4187 = vld [vmem:[#allocation12 + $0x11e8] sm:$0xff]
    %v4188 = vld [vmem:[#allocation12 + $0x11f0] sm:$0xff]
    %v4189 = vld [vmem:[#allocation12 + $0x11f8] sm:$0xff]
    %v4190 = vld [vmem:[#allocation12 + $0x1200] sm:$0xff]
    %v4191 = vld [vmem:[#allocation12 + $0x1208] sm:$0xff]
    %v4192 = vld [vmem:[#allocation12 + $0x1210] sm:$0xff]
    %v4193 = vld [vmem:[#allocation12 + $0x1218] sm:$0xff]
    %v4194 = vld [vmem:[#allocation12 + $0x1220] sm:$0xff]
    %v4195 = vld [vmem:[#allocation12 + $0x1228] sm:$0xff]
    %v4196 = vld [vmem:[#allocation12 + $0x1230] sm:$0xff]
    %v4197 = vld [vmem:[#allocation12 + $0x1238] sm:$0xff]
    %v4198 = vld [vmem:[#allocation12 + $0x1240] sm:$0xff]
    %v4199 = vld [vmem:[#allocation12 + $0x1248] sm:$0xff]
    %v4200 = vld [vmem:[#allocation12 + $0x1250] sm:$0xff]
    %v4201 = vld [vmem:[#allocation12 + $0x1258] sm:$0xff]
    %v4202 = vld [vmem:[#allocation12 + $0x1260] sm:$0xff]
    %v4203 = vld [vmem:[#allocation12 + $0x1268] sm:$0xff]
    %v4204 = vld [vmem:[#allocation12 + $0x1270] sm:$0xff]
    %v4205 = vld [vmem:[#allocation12 + $0x1278] sm:$0xff]
    %v4206 = vld [vmem:[#allocation12 + $0x1280] sm:$0xff]
    %v4207 = vld [vmem:[#allocation12 + $0x1288] sm:$0xff]
    %v4208 = vld [vmem:[#allocation12 + $0x1290] sm:$0xff]
    %v4209 = vld [vmem:[#allocation12 + $0x1298] sm:$0xff]
    %v4210 = vld [vmem:[#allocation12 + $0x12a0] sm:$0xff]
    %v4211 = vld [vmem:[#allocation12 + $0x12a8] sm:$0xff]
    %v4212 = vld [vmem:[#allocation12 + $0x12b0] sm:$0xff]
    %v4213 = vld [vmem:[#allocation12 + $0x12b8] sm:$0xff]
    %v4214 = vld [vmem:[#allocation12 + $0x12c0] sm:$0xff]
    %v4215 = vld [vmem:[#allocation12 + $0x12c8] sm:$0xff]
    %v4216 = vld [vmem:[#allocation12 + $0x12d0] sm:$0xff]
    %v4217 = vld [vmem:[#allocation12 + $0x12d8] sm:$0xff]
    %v4218 = vld [vmem:[#allocation12 + $0x12e0] sm:$0xff]
    %v4219 = vld [vmem:[#allocation12 + $0x12e8] sm:$0xff]
    %v4220 = vld [vmem:[#allocation12 + $0x12f0] sm:$0xff]
    %v4221 = vld [vmem:[#allocation12 + $0x12f8] sm:$0xff]
    %v4222 = vld [vmem:[#allocation12 + $0x1300] sm:$0xff]
    %v4223 = vld [vmem:[#allocation12 + $0x1308] sm:$0xff]
    %v4224 = vld [vmem:[#allocation12 + $0x1310] sm:$0xff]
    %v4225 = vld [vmem:[#allocation12 + $0x1318] sm:$0xff]
    %v4226 = vld [vmem:[#allocation12 + $0x1320] sm:$0xff]
    %v4227 = vld [vmem:[#allocation12 + $0x1328] sm:$0xff]
    %v4228 = vld [vmem:[#allocation12 + $0x1330] sm:$0xff]
    %v4229 = vld [vmem:[#allocation12 + $0x1338] sm:$0xff]
    %v4230 = vld [vmem:[#allocation12 + $0x1340] sm:$0xff]
    %v4231 = vld [vmem:[#allocation12 + $0x1348] sm:$0xff]
    %v4232 = vld [vmem:[#allocation12 + $0x1350] sm:$0xff]
    %v4233 = vld [vmem:[#allocation12 + $0x1358] sm:$0xff]
    %v4234 = vld [vmem:[#allocation12 + $0x1360] sm:$0xff]
    %v4235 = vld [vmem:[#allocation12 + $0x1368] sm:$0xff]
    %v4236 = vld [vmem:[#allocation12 + $0x1370] sm:$0xff]
    %v4237 = vld [vmem:[#allocation12 + $0x1378] sm:$0xff]
    %v4238 = vld [vmem:[#allocation12 + $0x1380] sm:$0xff]
    %v4239 = vld [vmem:[#allocation12 + $0x1388] sm:$0xff]
    %v4240 = vld [vmem:[#allocation12 + $0x1390] sm:$0xff]
    %v4241 = vld [vmem:[#allocation12 + $0x1398] sm:$0xff]
    %v4242 = vld [vmem:[#allocation12 + $0x13a0] sm:$0xff]
    %v4243 = vld [vmem:[#allocation12 + $0x13a8] sm:$0xff]
    %v4244 = vld [vmem:[#allocation12 + $0x13b0] sm:$0xff]
    %v4245 = vld [vmem:[#allocation12 + $0x13b8] sm:$0xff]
    %v4246 = vld [vmem:[#allocation12 + $0x13c0] sm:$0xff]
    %v4247 = vld [vmem:[#allocation12 + $0x13c8] sm:$0xff]
    %v4248 = vld [vmem:[#allocation12 + $0x13d0] sm:$0xff]
    %v4249 = vld [vmem:[#allocation12 + $0x13d8] sm:$0xff]
    %v4250 = vld [vmem:[#allocation12 + $0x13e0] sm:$0xff]
    %v4251 = vld [vmem:[#allocation12 + $0x13e8] sm:$0xff]
    %v4252 = vld [vmem:[#allocation12 + $0x13f0] sm:$0xff]
    %v4253 = vld [vmem:[#allocation12 + $0x13f8] sm:$0xff]
    %v4254 = vld [vmem:[#allocation12 + $0x1400] sm:$0xff]
    %v4255 = vld [vmem:[#allocation12 + $0x1408] sm:$0xff]
    %v4256 = vld [vmem:[#allocation12 + $0x1410] sm:$0xff]
    %v4257 = vld [vmem:[#allocation12 + $0x1418] sm:$0xff]
    %v4258 = vld [vmem:[#allocation12 + $0x1420] sm:$0xff]
    %v4259 = vld [vmem:[#allocation12 + $0x1428] sm:$0xff]
    %v4260 = vld [vmem:[#allocation12 + $0x1430] sm:$0xff]
    %v4261 = vld [vmem:[#allocation12 + $0x1438] sm:$0xff]
    %v4262 = vld [vmem:[#allocation12 + $0x1440] sm:$0xff]
    %v4263 = vld [vmem:[#allocation12 + $0x1448] sm:$0xff]
    %v4264 = vld [vmem:[#allocation12 + $0x1450] sm:$0xff]
    %v4265 = vld [vmem:[#allocation12 + $0x1458] sm:$0xff]
    %v4266 = vld [vmem:[#allocation12 + $0x1460] sm:$0xff]
    %v4267 = vld [vmem:[#allocation12 + $0x1468] sm:$0xff]
    %v4268 = vld [vmem:[#allocation12 + $0x1470] sm:$0xff]
    %v4269 = vld [vmem:[#allocation12 + $0x1478] sm:$0xff]
    %v4270 = vld [vmem:[#allocation12 + $0x1480] sm:$0xff]
    %v4271 = vld [vmem:[#allocation12 + $0x1488] sm:$0xff]
    %v4272 = vld [vmem:[#allocation12 + $0x1490] sm:$0xff]
    %v4273 = vld [vmem:[#allocation12 + $0x1498] sm:$0xff]
    %v4274 = vld [vmem:[#allocation12 + $0x14a0] sm:$0xff]
    %v4275 = vld [vmem:[#allocation12 + $0x14a8] sm:$0xff]
    %v4276 = vld [vmem:[#allocation12 + $0x14b0] sm:$0xff]
    %v4277 = vld [vmem:[#allocation12 + $0x14b8] sm:$0xff]
    %v4278 = vld [vmem:[#allocation12 + $0x14c0] sm:$0xff]
    %v4279 = vld [vmem:[#allocation12 + $0x14c8] sm:$0xff]
    %v4280 = vld [vmem:[#allocation12 + $0x14d0] sm:$0xff]
    %v4281 = vld [vmem:[#allocation12 + $0x14d8] sm:$0xff]
    %v4282 = vld [vmem:[#allocation12 + $0x14e0] sm:$0xff]
    %v4283 = vld [vmem:[#allocation12 + $0x14e8] sm:$0xff]
    %v4284 = vld [vmem:[#allocation12 + $0x14f0] sm:$0xff]
    %v4285 = vld [vmem:[#allocation12 + $0x14f8] sm:$0xff]
    %v4286 = vld [vmem:[#allocation12 + $0x1500] sm:$0xff]
    %v4287 = vld [vmem:[#allocation12 + $0x1508] sm:$0xff]
    %v4288 = vld [vmem:[#allocation12 + $0x1510] sm:$0xff]
    %v4289 = vld [vmem:[#allocation12 + $0x1518] sm:$0xff]
    %v4290 = vld [vmem:[#allocation12 + $0x1520] sm:$0xff]
    %v4291 = vld [vmem:[#allocation12 + $0x1528] sm:$0xff]
    %v4292 = vld [vmem:[#allocation12 + $0x1530] sm:$0xff]
    %v4293 = vld [vmem:[#allocation12 + $0x1538] sm:$0xff]
    %v4294 = vld [vmem:[#allocation12 + $0x1540] sm:$0xff]
    %v4295 = vld [vmem:[#allocation12 + $0x1548] sm:$0xff]
    %v4296 = vld [vmem:[#allocation12 + $0x1550] sm:$0xff]
    %v4297 = vld [vmem:[#allocation12 + $0x1558] sm:$0xff]
    %v4298 = vld [vmem:[#allocation12 + $0x1560] sm:$0xff]
    %v4299 = vld [vmem:[#allocation12 + $0x1568] sm:$0xff]
    %v4300 = vld [vmem:[#allocation12 + $0x1570] sm:$0xff]
    %v4301 = vld [vmem:[#allocation12 + $0x1578] sm:$0xff]
    %v4302 = vld [vmem:[#allocation12 + $0x1580] sm:$0xff]
    %v4303 = vld [vmem:[#allocation12 + $0x1588] sm:$0xff]
    %v4304 = vld [vmem:[#allocation12 + $0x1590] sm:$0xff]
    %v4305 = vld [vmem:[#allocation12 + $0x1598] sm:$0xff]
    %v4306 = vld [vmem:[#allocation12 + $0x15a0] sm:$0xff]
    %v4307 = vld [vmem:[#allocation12 + $0x15a8] sm:$0xff]
    %v4308 = vld [vmem:[#allocation12 + $0x15b0] sm:$0xff]
    %v4309 = vld [vmem:[#allocation12 + $0x15b8] sm:$0xff]
    %v4310 = vld [vmem:[#allocation12 + $0x15c0] sm:$0xff]
    %v4311 = vld [vmem:[#allocation12 + $0x15c8] sm:$0xff]
    %v4312 = vld [vmem:[#allocation12 + $0x15d0] sm:$0xff]
    %v4313 = vld [vmem:[#allocation12 + $0x15d8] sm:$0xff]
    %v4314 = vld [vmem:[#allocation12 + $0x15e0] sm:$0xff]
    %v4315 = vld [vmem:[#allocation12 + $0x15e8] sm:$0xff]
    %v4316 = vld [vmem:[#allocation12 + $0x15f0] sm:$0xff]
    %v4317 = vld [vmem:[#allocation12 + $0x15f8] sm:$0xff]
    %v4318 = vld [vmem:[#allocation12 + $0x1600] sm:$0xff]
    %v4319 = vld [vmem:[#allocation12 + $0x1608] sm:$0xff]
    %v4320 = vld [vmem:[#allocation12 + $0x1610] sm:$0xff]
    %v4321 = vld [vmem:[#allocation12 + $0x1618] sm:$0xff]
    %v4322 = vld [vmem:[#allocation12 + $0x1620] sm:$0xff]
    %v4323 = vld [vmem:[#allocation12 + $0x1628] sm:$0xff]
    %v4324 = vld [vmem:[#allocation12 + $0x1630] sm:$0xff]
    %v4325 = vld [vmem:[#allocation12 + $0x1638] sm:$0xff]
    %v4326 = vld [vmem:[#allocation12 + $0x1640] sm:$0xff]
    %v4327 = vld [vmem:[#allocation12 + $0x1648] sm:$0xff]
    %v4328 = vld [vmem:[#allocation12 + $0x1650] sm:$0xff]
    %v4329 = vld [vmem:[#allocation12 + $0x1658] sm:$0xff]
    %v4330 = vld [vmem:[#allocation12 + $0x1660] sm:$0xff]
    %v4331 = vld [vmem:[#allocation12 + $0x1668] sm:$0xff]
    %v4332 = vld [vmem:[#allocation12 + $0x1670] sm:$0xff]
    %v4333 = vld [vmem:[#allocation12 + $0x1678] sm:$0xff]
    %v4334 = vld [vmem:[#allocation12 + $0x1680] sm:$0xff]
    %v4335 = vld [vmem:[#allocation12 + $0x1688] sm:$0xff]
    %v4336 = vld [vmem:[#allocation12 + $0x1690] sm:$0xff]
    %v4337 = vld [vmem:[#allocation12 + $0x1698] sm:$0xff]
    %v4338 = vld [vmem:[#allocation12 + $0x16a0] sm:$0xff]
    %v4339 = vld [vmem:[#allocation12 + $0x16a8] sm:$0xff]
    %v4340 = vld [vmem:[#allocation12 + $0x16b0] sm:$0xff]
    %v4341 = vld [vmem:[#allocation12 + $0x16b8] sm:$0xff]
    %v4342 = vld [vmem:[#allocation12 + $0x16c0] sm:$0xff]
    %v4343 = vld [vmem:[#allocation12 + $0x16c8] sm:$0xff]
    %v4344 = vld [vmem:[#allocation12 + $0x16d0] sm:$0xff]
    %v4345 = vld [vmem:[#allocation12 + $0x16d8] sm:$0xff]
    %v4346 = vld [vmem:[#allocation12 + $0x16e0] sm:$0xff]
    %v4347 = vld [vmem:[#allocation12 + $0x16e8] sm:$0xff]
    %v4348 = vld [vmem:[#allocation12 + $0x16f0] sm:$0xff]
    %v4349 = vld [vmem:[#allocation12 + $0x16f8] sm:$0xff]
    %v4350 = vld [vmem:[#allocation12 + $0x1700] sm:$0xff]
    %v4351 = vld [vmem:[#allocation12 + $0x1708] sm:$0xff]
    %v4352 = vld [vmem:[#allocation12 + $0x1710] sm:$0xff]
    %v4353 = vld [vmem:[#allocation12 + $0x1718] sm:$0xff]
    %v4354 = vld [vmem:[#allocation12 + $0x1720] sm:$0xff]
    %v4355 = vld [vmem:[#allocation12 + $0x1728] sm:$0xff]
    %v4356 = vld [vmem:[#allocation12 + $0x1730] sm:$0xff]
    %v4357 = vld [vmem:[#allocation12 + $0x1738] sm:$0xff]
    %v4358 = vld [vmem:[#allocation12 + $0x1740] sm:$0xff]
    %v4359 = vld [vmem:[#allocation12 + $0x1748] sm:$0xff]
    %v4360 = vld [vmem:[#allocation12 + $0x1750] sm:$0xff]
    %v4361 = vld [vmem:[#allocation12 + $0x1758] sm:$0xff]
    %v4362 = vld [vmem:[#allocation12 + $0x1760] sm:$0xff]
    %v4363 = vld [vmem:[#allocation12 + $0x1768] sm:$0xff]
    %v4364 = vld [vmem:[#allocation12 + $0x1770] sm:$0xff]
    %v4365 = vld [vmem:[#allocation12 + $0x1778] sm:$0xff]
    %v4366 = vld [vmem:[#allocation12 + $0x1780] sm:$0xff]
    %v4367 = vld [vmem:[#allocation12 + $0x1788] sm:$0xff]
    %v4368 = vld [vmem:[#allocation12 + $0x1790] sm:$0xff]
    %v4369 = vld [vmem:[#allocation12 + $0x1798] sm:$0xff]
    %v4370 = vld [vmem:[#allocation12 + $0x17a0] sm:$0xff]
    %v4371 = vld [vmem:[#allocation12 + $0x17a8] sm:$0xff]
    %v4372 = vld [vmem:[#allocation12 + $0x17b0] sm:$0xff]
    %v4373 = vld [vmem:[#allocation12 + $0x17b8] sm:$0xff]
    %v4374 = vld [vmem:[#allocation12 + $0x17c0] sm:$0xff]
    %v4375 = vld [vmem:[#allocation12 + $0x17c8] sm:$0xff]
    %v4376 = vld [vmem:[#allocation12 + $0x17d0] sm:$0xff]
    %v4377 = vld [vmem:[#allocation12 + $0x17d8] sm:$0xff]
    %v4378 = vld [vmem:[#allocation12 + $0x17e0] sm:$0xff]
    %v4379 = vld [vmem:[#allocation12 + $0x17e8] sm:$0xff]
    %v4380 = vld [vmem:[#allocation12 + $0x17f0] sm:$0xff]
    %v4381 = vld [vmem:[#allocation12 + $0x17f8] sm:$0xff]
    %v4382 = vld [vmem:[#allocation12 + $0x1800] sm:$0xff]
    %v4383 = vld [vmem:[#allocation12 + $0x1808] sm:$0xff]
    %v4384 = vld [vmem:[#allocation12 + $0x1810] sm:$0xff]
    %v4385 = vld [vmem:[#allocation12 + $0x1818] sm:$0xff]
    %v4386 = vld [vmem:[#allocation12 + $0x1820] sm:$0xff]
    %v4387 = vld [vmem:[#allocation12 + $0x1828] sm:$0xff]
    %v4388 = vld [vmem:[#allocation12 + $0x1830] sm:$0xff]
    %v4389 = vld [vmem:[#allocation12 + $0x1838] sm:$0xff]
    %v4390 = vld [vmem:[#allocation12 + $0x1840] sm:$0xff]
    %v4391 = vld [vmem:[#allocation12 + $0x1848] sm:$0xff]
    %v4392 = vld [vmem:[#allocation12 + $0x1850] sm:$0xff]
    %v4393 = vld [vmem:[#allocation12 + $0x1858] sm:$0xff]
    %v4394 = vld [vmem:[#allocation12 + $0x1860] sm:$0xff]
    %v4395 = vld [vmem:[#allocation12 + $0x1868] sm:$0xff]
    %v4396 = vld [vmem:[#allocation12 + $0x1870] sm:$0xff]
    %v4397 = vld [vmem:[#allocation12 + $0x1878] sm:$0xff]
    %v4398 = vld [vmem:[#allocation12 + $0x1880] sm:$0xff]
    %v4399 = vld [vmem:[#allocation12 + $0x1888] sm:$0xff]
    %v4400 = vld [vmem:[#allocation12 + $0x1890] sm:$0xff]
    %v4401 = vld [vmem:[#allocation12 + $0x1898] sm:$0xff]
    %v4402 = vld [vmem:[#allocation12 + $0x18a0] sm:$0xff]
    %v4403 = vld [vmem:[#allocation12 + $0x18a8] sm:$0xff]
    %v4404 = vld [vmem:[#allocation12 + $0x18b0] sm:$0xff]
    %v4405 = vld [vmem:[#allocation12 + $0x18b8] sm:$0xff]
    %v4406 = vld [vmem:[#allocation12 + $0x18c0] sm:$0xff]
    %v4407 = vld [vmem:[#allocation12 + $0x18c8] sm:$0xff]
    %v4408 = vld [vmem:[#allocation12 + $0x18d0] sm:$0xff]
    %v4409 = vld [vmem:[#allocation12 + $0x18d8] sm:$0xff]
    %v4410 = vld [vmem:[#allocation12 + $0x18e0] sm:$0xff]
    %v4411 = vld [vmem:[#allocation12 + $0x18e8] sm:$0xff]
    %v4412 = vld [vmem:[#allocation12 + $0x18f0] sm:$0xff]
    %v4413 = vld [vmem:[#allocation12 + $0x18f8] sm:$0xff]
    %v4414 = vld [vmem:[#allocation12 + $0x1900] sm:$0xff]
    %v4415 = vld [vmem:[#allocation12 + $0x1908] sm:$0xff]
    %v4416 = vld [vmem:[#allocation12 + $0x1910] sm:$0xff]
    %v4417 = vld [vmem:[#allocation12 + $0x1918] sm:$0xff]
    %v4418 = vld [vmem:[#allocation12 + $0x1920] sm:$0xff]
    %v4419 = vld [vmem:[#allocation12 + $0x1928] sm:$0xff]
    %v4420 = vld [vmem:[#allocation12 + $0x1930] sm:$0xff]
    %v4421 = vld [vmem:[#allocation12 + $0x1938] sm:$0xff]
    %v4422 = vld [vmem:[#allocation12 + $0x1940] sm:$0xff]
    %v4423 = vld [vmem:[#allocation12 + $0x1948] sm:$0xff]
    %v4424 = vld [vmem:[#allocation12 + $0x1950] sm:$0xff]
    %v4425 = vld [vmem:[#allocation12 + $0x1958] sm:$0xff]
    %v4426 = vld [vmem:[#allocation12 + $0x1960] sm:$0xff]
    %v4427 = vld [vmem:[#allocation12 + $0x1968] sm:$0xff]
    %v4428 = vld [vmem:[#allocation12 + $0x1970] sm:$0xff]
    %v4429 = vld [vmem:[#allocation12 + $0x1978] sm:$0xff]
    %v4430 = vld [vmem:[#allocation12 + $0x1980] sm:$0xff]
    %v4431 = vld [vmem:[#allocation12 + $0x1988] sm:$0xff]
    %v4432 = vld [vmem:[#allocation12 + $0x1990] sm:$0xff]
    %v4433 = vld [vmem:[#allocation12 + $0x1998] sm:$0xff]
    %v4434 = vld [vmem:[#allocation12 + $0x19a0] sm:$0xff]
    %v4435 = vld [vmem:[#allocation12 + $0x19a8] sm:$0xff]
    %v4436 = vld [vmem:[#allocation12 + $0x19b0] sm:$0xff]
    %v4437 = vld [vmem:[#allocation12 + $0x19b8] sm:$0xff]
    %v4438 = vld [vmem:[#allocation12 + $0x19c0] sm:$0xff]
    %v4439 = vld [vmem:[#allocation12 + $0x19c8] sm:$0xff]
    %v4440 = vld [vmem:[#allocation12 + $0x19d0] sm:$0xff]
    %v4441 = vld [vmem:[#allocation12 + $0x19d8] sm:$0xff]
    %v4442 = vld [vmem:[#allocation12 + $0x19e0] sm:$0xff]
    %v4443 = vld [vmem:[#allocation12 + $0x19e8] sm:$0xff]
    %v4444 = vld [vmem:[#allocation12 + $0x19f0] sm:$0xff]
    %v4445 = vld [vmem:[#allocation12 + $0x19f8] sm:$0xff]
    %v4446 = vld [vmem:[#allocation12 + $0x1a00] sm:$0xff]
    %v4447 = vld [vmem:[#allocation12 + $0x1a08] sm:$0xff]
    %v4448 = vld [vmem:[#allocation12 + $0x1a10] sm:$0xff]
    %v4449 = vld [vmem:[#allocation12 + $0x1a18] sm:$0xff]
    %v4450 = vld [vmem:[#allocation12 + $0x1a20] sm:$0xff]
    %v4451 = vld [vmem:[#allocation12 + $0x1a28] sm:$0xff]
    %v4452 = vld [vmem:[#allocation12 + $0x1a30] sm:$0xff]
    %v4453 = vld [vmem:[#allocation12 + $0x1a38] sm:$0xff]
    %v4454 = vld [vmem:[#allocation12 + $0x1a40] sm:$0xff]
    %v4455 = vld [vmem:[#allocation12 + $0x1a48] sm:$0xff]
    %v4456 = vld [vmem:[#allocation12 + $0x1a50] sm:$0xff]
    %v4457 = vld [vmem:[#allocation12 + $0x1a58] sm:$0xff]
    %v4458 = vld [vmem:[#allocation12 + $0x1a60] sm:$0xff]
    %v4459 = vld [vmem:[#allocation12 + $0x1a68] sm:$0xff]
    %v4460 = vld [vmem:[#allocation12 + $0x1a70] sm:$0xff]
    %v4461 = vld [vmem:[#allocation12 + $0x1a78] sm:$0xff]
    %v4462 = vld [vmem:[#allocation12 + $0x1a80] sm:$0xff]
    %v4463 = vld [vmem:[#allocation12 + $0x1a88] sm:$0xff]
    %v4464 = vld [vmem:[#allocation12 + $0x1a90] sm:$0xff]
    %v4465 = vld [vmem:[#allocation12 + $0x1a98] sm:$0xff]
    %v4466 = vld [vmem:[#allocation12 + $0x1aa0] sm:$0xff]
    %v4467 = vld [vmem:[#allocation12 + $0x1aa8] sm:$0xff]
    %v4468 = vld [vmem:[#allocation12 + $0x1ab0] sm:$0xff]
    %v4469 = vld [vmem:[#allocation12 + $0x1ab8] sm:$0xff]
    %v4470 = vld [vmem:[#allocation12 + $0x1ac0] sm:$0xff]
    %v4471 = vld [vmem:[#allocation12 + $0x1ac8] sm:$0xff]
    %v4472 = vld [vmem:[#allocation12 + $0x1ad0] sm:$0xff]
    %v4473 = vld [vmem:[#allocation12 + $0x1ad8] sm:$0xff]
    %v4474 = vld [vmem:[#allocation12 + $0x1ae0] sm:$0xff]
    %v4475 = vld [vmem:[#allocation12 + $0x1ae8] sm:$0xff]
    %v4476 = vld [vmem:[#allocation12 + $0x1af0] sm:$0xff]
    %v4477 = vld [vmem:[#allocation12 + $0x1af8] sm:$0xff]
    %v4478 = vld [vmem:[#allocation12 + $0x1b00] sm:$0xff]
    %v4479 = vld [vmem:[#allocation12 + $0x1b08] sm:$0xff]
    %v4480 = vld [vmem:[#allocation12 + $0x1b10] sm:$0xff]
    %v4481 = vld [vmem:[#allocation12 + $0x1b18] sm:$0xff]
    %v4482 = vld [vmem:[#allocation12 + $0x1b20] sm:$0xff]
    %v4483 = vld [vmem:[#allocation12 + $0x1b28] sm:$0xff]
    %v4484 = vld [vmem:[#allocation12 + $0x1b30] sm:$0xff]
    %v4485 = vld [vmem:[#allocation12 + $0x1b38] sm:$0xff]
    %v4486 = vld [vmem:[#allocation12 + $0x1b40] sm:$0xff]
    %v4487 = vld [vmem:[#allocation12 + $0x1b48] sm:$0xff]
    %v4488 = vld [vmem:[#allocation12 + $0x1b50] sm:$0xff]
    %v4489 = vld [vmem:[#allocation12 + $0x1b58] sm:$0xff]
    %v4490 = vld [vmem:[#allocation12 + $0x1b60] sm:$0xff]
    %v4491 = vld [vmem:[#allocation12 + $0x1b68] sm:$0xff]
    %v4492 = vld [vmem:[#allocation12 + $0x1b70] sm:$0xff]
    %v4493 = vld [vmem:[#allocation12 + $0x1b78] sm:$0xff]
    %v4494 = vld [vmem:[#allocation12 + $0x1b80] sm:$0xff]
    %v4495 = vld [vmem:[#allocation12 + $0x1b88] sm:$0xff]
    %v4496 = vld [vmem:[#allocation12 + $0x1b90] sm:$0xff]
    %v4497 = vld [vmem:[#allocation12 + $0x1b98] sm:$0xff]
    %v4498 = vld [vmem:[#allocation12 + $0x1ba0] sm:$0xff]
    %v4499 = vld [vmem:[#allocation12 + $0x1ba8] sm:$0xff]
    %v4500 = vld [vmem:[#allocation12 + $0x1bb0] sm:$0xff]
    %v4501 = vld [vmem:[#allocation12 + $0x1bb8] sm:$0xff]
    %v4502 = vld [vmem:[#allocation12 + $0x1bc0] sm:$0xff]
    %v4503 = vld [vmem:[#allocation12 + $0x1bc8] sm:$0xff]
    %v4504 = vld [vmem:[#allocation12 + $0x1bd0] sm:$0xff]
    %v4505 = vld [vmem:[#allocation12 + $0x1bd8] sm:$0xff]
    %v4506 = vld [vmem:[#allocation12 + $0x1be0] sm:$0xff]
    %v4507 = vld [vmem:[#allocation12 + $0x1be8] sm:$0xff]
    %v4508 = vld [vmem:[#allocation12 + $0x1bf0] sm:$0xff]
    %v4509 = vld [vmem:[#allocation12 + $0x1bf8] sm:$0xff]
    %v4510 = vld [vmem:[#allocation12 + $0x1c00] sm:$0xff]
    %v4511 = vld [vmem:[#allocation12 + $0x1c08] sm:$0xff]
    %v4512 = vld [vmem:[#allocation12 + $0x1c10] sm:$0xff]
    %v4513 = vld [vmem:[#allocation12 + $0x1c18] sm:$0xff]
    %v4514 = vld [vmem:[#allocation12 + $0x1c20] sm:$0xff]
    %v4515 = vld [vmem:[#allocation12 + $0x1c28] sm:$0xff]
    %v4516 = vld [vmem:[#allocation12 + $0x1c30] sm:$0xff]
    %v4517 = vld [vmem:[#allocation12 + $0x1c38] sm:$0xff]
    %v4518 = vld [vmem:[#allocation12 + $0x1c40] sm:$0xff]
    %v4519 = vld [vmem:[#allocation12 + $0x1c48] sm:$0xff]
    %v4520 = vld [vmem:[#allocation12 + $0x1c50] sm:$0xff]
    %v4521 = vld [vmem:[#allocation12 + $0x1c58] sm:$0xff]
    %v4522 = vld [vmem:[#allocation12 + $0x1c60] sm:$0xff]
    %v4523 = vld [vmem:[#allocation12 + $0x1c68] sm:$0xff]
    %v4524 = vld [vmem:[#allocation12 + $0x1c70] sm:$0xff]
    %v4525 = vld [vmem:[#allocation12 + $0x1c78] sm:$0xff]
    %v4526 = vld [vmem:[#allocation12 + $0x1c80] sm:$0xff]
    %v4527 = vld [vmem:[#allocation12 + $0x1c88] sm:$0xff]
    %v4528 = vld [vmem:[#allocation12 + $0x1c90] sm:$0xff]
    %v4529 = vld [vmem:[#allocation12 + $0x1c98] sm:$0xff]
    %v4530 = vld [vmem:[#allocation12 + $0x1ca0] sm:$0xff]
    %v4531 = vld [vmem:[#allocation12 + $0x1ca8] sm:$0xff]
    %v4532 = vld [vmem:[#allocation12 + $0x1cb0] sm:$0xff]
    %v4533 = vld [vmem:[#allocation12 + $0x1cb8] sm:$0xff]
    %v4534 = vld [vmem:[#allocation12 + $0x1cc0] sm:$0xff]
    %v4535 = vld [vmem:[#allocation12 + $0x1cc8] sm:$0xff]
    %v4536 = vld [vmem:[#allocation12 + $0x1cd0] sm:$0xff]
    %v4537 = vld [vmem:[#allocation12 + $0x1cd8] sm:$0xff]
    %v4538 = vld [vmem:[#allocation12 + $0x1ce0] sm:$0xff]
    %v4539 = vld [vmem:[#allocation12 + $0x1ce8] sm:$0xff]
    %v4540 = vld [vmem:[#allocation12 + $0x1cf0] sm:$0xff]
    %v4541 = vld [vmem:[#allocation12 + $0x1cf8] sm:$0xff]
    %v4542 = vld [vmem:[#allocation12 + $0x1d00] sm:$0xff]
    %v4543 = vld [vmem:[#allocation12 + $0x1d08] sm:$0xff]
    %v4544 = vld [vmem:[#allocation12 + $0x1d10] sm:$0xff]
    %v4545 = vld [vmem:[#allocation12 + $0x1d18] sm:$0xff]
    %v4546 = vld [vmem:[#allocation12 + $0x1d20] sm:$0xff]
    %v4547 = vld [vmem:[#allocation12 + $0x1d28] sm:$0xff]
    %v4548 = vld [vmem:[#allocation12 + $0x1d30] sm:$0xff]
    %v4549 = vld [vmem:[#allocation12 + $0x1d38] sm:$0xff]
    %v4550 = vld [vmem:[#allocation12 + $0x1d40] sm:$0xff]
    %v4551 = vld [vmem:[#allocation12 + $0x1d48] sm:$0xff]
    %v4552 = vld [vmem:[#allocation12 + $0x1d50] sm:$0xff]
    %v4553 = vld [vmem:[#allocation12 + $0x1d58] sm:$0xff]
    %v4554 = vld [vmem:[#allocation12 + $0x1d60] sm:$0xff]
    %v4555 = vld [vmem:[#allocation12 + $0x1d68] sm:$0xff]
    %v4556 = vld [vmem:[#allocation12 + $0x1d70] sm:$0xff]
    %v4557 = vld [vmem:[#allocation12 + $0x1d78] sm:$0xff]
    %v4558 = vld [vmem:[#allocation13] sm:$0xf]
    %v4560 = vlaneseq
    %v4561 = vshrl.u32 %v4560, 7
    %v4562 = vsub.s32 0, %v4561
    %v4563 = vrot.slane %v4558, %v4562
    %v4564 = vlaneseq
    %v4565 = vshrl.u32 %v4564, 7
    %v4566 = vsub.s32 1, %v4565
    %v4567 = vrot.slane %v4558, %v4566
    %v4568 = vlaneseq
    %v4569 = vshrl.u32 %v4568, 7
    %v4570 = vsub.s32 2, %v4569
    %v4571 = vrot.slane %v4558, %v4570
    %v4572 = vlaneseq
    %v4573 = vshrl.u32 %v4572, 7
    %v4574 = vsub.s32 3, %v4573
    %v4575 = vrot.slane %v4558, %v4574
    %v5524 = vunpack.c.l.b16 %v3614
    %v5525 = vunpack.c.h.b16 %v3614
    %v5526 = vunpack.c.l.b16 %v3615
    %v5527 = vunpack.c.h.b16 %v3615
    %v5528 = vunpack.c.l.b16 %v3616
    %v5529 = vunpack.c.h.b16 %v3616
    %v5530 = vunpack.c.l.b16 %v3617
    %v5531 = vunpack.c.h.b16 %v3617
    %v5532 = vunpack.c.l.b16 %v3618
    %v5533 = vunpack.c.h.b16 %v3618
    %v5534 = vunpack.c.l.b16 %v3619
    %v5535 = vunpack.c.h.b16 %v3619
    %v5536 = vunpack.c.l.b16 %v3620
    %v5537 = vunpack.c.h.b16 %v3620
    %v5538 = vunpack.c.l.b16 %v3621
    %v5539 = vunpack.c.h.b16 %v3621
    %v5540 = vunpack.c.l.b16 %v3622
    %v5541 = vunpack.c.h.b16 %v3622
    %v5542 = vunpack.c.l.b16 %v3623
    %v5543 = vunpack.c.h.b16 %v3623
    %v5544 = vunpack.c.l.b16 %v3624
    %v5545 = vunpack.c.h.b16 %v3624
    %v5546 = vunpack.c.l.b16 %v3625
    %v5547 = vunpack.c.h.b16 %v3625
    %v5548 = vunpack.c.l.b16 %v3626
    %v5549 = vunpack.c.h.b16 %v3626
    %v5550 = vunpack.c.l.b16 %v3627
    %v5551 = vunpack.c.h.b16 %v3627
    %v5552 = vunpack.c.l.b16 %v3628
    %v5553 = vunpack.c.h.b16 %v3628
    %v5554 = vunpack.c.l.b16 %v3629
    %v5555 = vunpack.c.h.b16 %v3629
    %v5556 = vunpack.c.l.b16 %v3630
    %v5557 = vunpack.c.h.b16 %v3630
    %v5558 = vunpack.c.l.b16 %v3631
    %v5559 = vunpack.c.h.b16 %v3631
    %v5560 = vunpack.c.l.b16 %v3632
    %v5561 = vunpack.c.h.b16 %v3632
    %v5562 = vunpack.c.l.b16 %v3633
    %v5563 = vunpack.c.h.b16 %v3633
    %v5564 = vunpack.c.l.b16 %v3634
    %v5565 = vunpack.c.h.b16 %v3634
    %v5566 = vunpack.c.l.b16 %v3635
    %v5567 = vunpack.c.h.b16 %v3635
    %v5568 = vunpack.c.l.b16 %v3636
    %v5569 = vunpack.c.h.b16 %v3636
    %v5570 = vunpack.c.l.b16 %v3637
    %v5571 = vunpack.c.h.b16 %v3637
    %v5572 = vunpack.c.l.b16 %v3638
    %v5573 = vunpack.c.h.b16 %v3638
    %v5574 = vunpack.c.l.b16 %v3639
    %v5575 = vunpack.c.h.b16 %v3639
    %v5576 = vunpack.c.l.b16 %v3640
    %v5577 = vunpack.c.h.b16 %v3640
    %v5578 = vunpack.c.l.b16 %v3641
    %v5579 = vunpack.c.h.b16 %v3641
    %v5580 = vunpack.c.l.b16 %v3642
    %v5581 = vunpack.c.h.b16 %v3642
    %v5582 = vunpack.c.l.b16 %v3643
    %v5583 = vunpack.c.h.b16 %v3643
    %v5584 = vunpack.c.l.b16 %v3644
    %v5585 = vunpack.c.h.b16 %v3644
    %v5586 = vunpack.c.l.b16 %v3645
    %v5587 = vunpack.c.h.b16 %v3645
    %v5588 = vunpack.c.l.b16 %v3646
    %v5589 = vunpack.c.h.b16 %v3646
    %v5590 = vunpack.c.l.b16 %v3647
    %v5591 = vunpack.c.h.b16 %v3647
    %v5592 = vunpack.c.l.b16 %v3648
    %v5593 = vunpack.c.h.b16 %v3648
    %v5594 = vunpack.c.l.b16 %v3649
    %v5595 = vunpack.c.h.b16 %v3649
    %v5596 = vunpack.c.l.b16 %v3650
    %v5597 = vunpack.c.h.b16 %v3650
    %v5598 = vunpack.c.l.b16 %v3651
    %v5599 = vunpack.c.h.b16 %v3651
    %v5600 = vunpack.c.l.b16 %v3652
    %v5601 = vunpack.c.h.b16 %v3652
    %v5602 = vunpack.c.l.b16 %v3653
    %v5603 = vunpack.c.h.b16 %v3653
    %v5604 = vunpack.c.l.b16 %v3654
    %v5605 = vunpack.c.h.b16 %v3654
    %v5606 = vunpack.c.l.b16 %v3655
    %v5607 = vunpack.c.h.b16 %v3655
    %v5608 = vunpack.c.l.b16 %v3656
    %v5609 = vunpack.c.h.b16 %v3656
    %v5610 = vunpack.c.l.b16 %v3657
    %v5611 = vunpack.c.h.b16 %v3657
    %v5612 = vunpack.c.l.b16 %v3658
    %v5613 = vunpack.c.h.b16 %v3658
    %v5614 = vunpack.c.l.b16 %v3659
    %v5615 = vunpack.c.h.b16 %v3659
    %v5616 = vunpack.c.l.b16 %v3660
    %v5617 = vunpack.c.h.b16 %v3660
    %v5618 = vunpack.c.l.b16 %v3661
    %v5619 = vunpack.c.h.b16 %v3661
    %v5620 = vunpack.c.l.b16 %v3662
    %v5621 = vunpack.c.h.b16 %v3662
    %v5622 = vunpack.c.l.b16 %v3663
    %v5623 = vunpack.c.h.b16 %v3663
    %v5624 = vunpack.c.l.b16 %v3664
    %v5625 = vunpack.c.h.b16 %v3664
    %v5626 = vunpack.c.l.b16 %v3665
    %v5627 = vunpack.c.h.b16 %v3665
    %v5628 = vunpack.c.l.b16 %v3666
    %v5629 = vunpack.c.h.b16 %v3666
    %v5630 = vunpack.c.l.b16 %v3667
    %v5631 = vunpack.c.h.b16 %v3667
    %v5632 = vunpack.c.l.b16 %v3668
    %v5633 = vunpack.c.h.b16 %v3668
    %v5634 = vunpack.c.l.b16 %v3669
    %v5635 = vunpack.c.h.b16 %v3669
    %v5636 = vunpack.c.l.b16 %v3670
    %v5637 = vunpack.c.h.b16 %v3670
    %v5638 = vunpack.c.l.b16 %v3671
    %v5639 = vunpack.c.h.b16 %v3671
    %v5640 = vunpack.c.l.b16 %v3672
    %v5641 = vunpack.c.h.b16 %v3672
    %v5642 = vunpack.c.l.b16 %v3673
    %v5643 = vunpack.c.h.b16 %v3673
    %v5644 = vunpack.c.l.b16 %v3674
    %v5645 = vunpack.c.h.b16 %v3674
    %v5646 = vunpack.c.l.b16 %v3675
    %v5647 = vunpack.c.h.b16 %v3675
    %v5648 = vunpack.c.l.b16 %v3676
    %v5649 = vunpack.c.h.b16 %v3676
    %v5650 = vunpack.c.l.b16 %v3677
    %v5651 = vunpack.c.h.b16 %v3677
    %v5652 = vunpack.c.l.b16 %v3678
    %v5653 = vunpack.c.h.b16 %v3678
    %v5654 = vunpack.c.l.b16 %v3679
    %v5655 = vunpack.c.h.b16 %v3679
    %v5656 = vunpack.c.l.b16 %v3680
    %v5657 = vunpack.c.h.b16 %v3680
    %v5658 = vunpack.c.l.b16 %v3681
    %v5659 = vunpack.c.h.b16 %v3681
    %v5660 = vunpack.c.l.b16 %v3682
    %v5661 = vunpack.c.h.b16 %v3682
    %v5662 = vunpack.c.l.b16 %v3683
    %v5663 = vunpack.c.h.b16 %v3683
    %v5664 = vunpack.c.l.b16 %v3684
    %v5665 = vunpack.c.h.b16 %v3684
    %v5666 = vunpack.c.l.b16 %v3685
    %v5667 = vunpack.c.h.b16 %v3685
    %v5668 = vunpack.c.l.b16 %v3686
    %v5669 = vunpack.c.h.b16 %v3686
    %v5670 = vunpack.c.l.b16 %v3687
    %v5671 = vunpack.c.h.b16 %v3687
    %v5672 = vunpack.c.l.b16 %v3688
    %v5673 = vunpack.c.h.b16 %v3688
    %v5674 = vunpack.c.l.b16 %v3689
    %v5675 = vunpack.c.h.b16 %v3689
    %v5676 = vunpack.c.l.b16 %v3690
    %v5677 = vunpack.c.h.b16 %v3690
    %v5678 = vunpack.c.l.b16 %v3691
    %v5679 = vunpack.c.h.b16 %v3691
    %v5680 = vunpack.c.l.b16 %v3692
    %v5681 = vunpack.c.h.b16 %v3692
    %v5682 = vunpack.c.l.b16 %v3693
    %v5683 = vunpack.c.h.b16 %v3693
    %v5684 = vunpack.c.l.b16 %v3694
    %v5685 = vunpack.c.h.b16 %v3694
    %v5686 = vunpack.c.l.b16 %v3695
    %v5687 = vunpack.c.h.b16 %v3695
    %v5688 = vunpack.c.l.b16 %v3696
    %v5689 = vunpack.c.h.b16 %v3696
    %v5690 = vunpack.c.l.b16 %v3697
    %v5691 = vunpack.c.h.b16 %v3697
    %v5692 = vunpack.c.l.b16 %v3698
    %v5693 = vunpack.c.h.b16 %v3698
    %v5694 = vunpack.c.l.b16 %v3699
    %v5695 = vunpack.c.h.b16 %v3699
    %v5696 = vunpack.c.l.b16 %v3700
    %v5697 = vunpack.c.h.b16 %v3700
    %v5698 = vunpack.c.l.b16 %v3701
    %v5699 = vunpack.c.h.b16 %v3701
    %v5700 = vunpack.c.l.b16 %v3702
    %v5701 = vunpack.c.h.b16 %v3702
    %v5702 = vunpack.c.l.b16 %v3703
    %v5703 = vunpack.c.h.b16 %v3703
    %v5704 = vunpack.c.l.b16 %v3704
    %v5705 = vunpack.c.h.b16 %v3704
    %v5706 = vunpack.c.l.b16 %v3705
    %v5707 = vunpack.c.h.b16 %v3705
    %v5708 = vunpack.c.l.b16 %v3706
    %v5709 = vunpack.c.h.b16 %v3706
    %v5710 = vunpack.c.l.b16 %v3707
    %v5711 = vunpack.c.h.b16 %v3707
    %v5712 = vunpack.c.l.b16 %v3708
    %v5713 = vunpack.c.h.b16 %v3708
    %v5714 = vunpack.c.l.b16 %v3709
    %v5715 = vunpack.c.h.b16 %v3709
    %v5716 = vunpack.c.l.b16 %v3710
    %v5717 = vunpack.c.h.b16 %v3710
    %v5718 = vunpack.c.l.b16 %v3711
    %v5719 = vunpack.c.h.b16 %v3711
    %v5720 = vunpack.c.l.b16 %v3712
    %v5721 = vunpack.c.h.b16 %v3712
    %v5722 = vunpack.c.l.b16 %v3713
    %v5723 = vunpack.c.h.b16 %v3713
    %v5724 = vunpack.c.l.b16 %v3714
    %v5725 = vunpack.c.h.b16 %v3714
    %v5726 = vunpack.c.l.b16 %v3715
    %v5727 = vunpack.c.h.b16 %v3715
    %v5728 = vunpack.c.l.b16 %v3716
    %v5729 = vunpack.c.h.b16 %v3716
    %v5730 = vunpack.c.l.b16 %v3717
    %v5731 = vunpack.c.h.b16 %v3717
    %v5732 = vunpack.c.l.b16 %v3718
    %v5733 = vunpack.c.h.b16 %v3718
    %v5734 = vunpack.c.l.b16 %v3719
    %v5735 = vunpack.c.h.b16 %v3719
    %v5736 = vunpack.c.l.b16 %v3720
    %v5737 = vunpack.c.h.b16 %v3720
    %v5738 = vunpack.c.l.b16 %v3721
    %v5739 = vunpack.c.h.b16 %v3721
    %v5740 = vunpack.c.l.b16 %v3722
    %v5741 = vunpack.c.h.b16 %v3722
    %v5742 = vunpack.c.l.b16 %v3723
    %v5743 = vunpack.c.h.b16 %v3723
    %v5744 = vunpack.c.l.b16 %v3724
    %v5745 = vunpack.c.h.b16 %v3724
    %v5746 = vunpack.c.l.b16 %v3725
    %v5747 = vunpack.c.h.b16 %v3725
    %v5748 = vunpack.c.l.b16 %v3726
    %v5749 = vunpack.c.h.b16 %v3726
    %v5750 = vunpack.c.l.b16 %v3727
    %v5751 = vunpack.c.h.b16 %v3727
    %v5752 = vunpack.c.l.b16 %v3728
    %v5753 = vunpack.c.h.b16 %v3728
    %v5754 = vunpack.c.l.b16 %v3729
    %v5755 = vunpack.c.h.b16 %v3729
    %v5756 = vunpack.c.l.b16 %v3730
    %v5757 = vunpack.c.h.b16 %v3730
    %v5758 = vunpack.c.l.b16 %v3731
    %v5759 = vunpack.c.h.b16 %v3731
    %v5760 = vunpack.c.l.b16 %v3732
    %v5761 = vunpack.c.h.b16 %v3732
    %v5762 = vunpack.c.l.b16 %v3733
    %v5763 = vunpack.c.h.b16 %v3733
    %v5764 = vunpack.c.l.b16 %v3734
    %v5765 = vunpack.c.h.b16 %v3734
    %v5766 = vunpack.c.l.b16 %v3735
    %v5767 = vunpack.c.h.b16 %v3735
    %v5768 = vunpack.c.l.b16 %v3736
    %v5769 = vunpack.c.h.b16 %v3736
    %v5770 = vunpack.c.l.b16 %v3737
    %v5771 = vunpack.c.h.b16 %v3737
    %v5772 = vunpack.c.l.b16 %v3738
    %v5773 = vunpack.c.h.b16 %v3738
    %v5774 = vunpack.c.l.b16 %v3739
    %v5775 = vunpack.c.h.b16 %v3739
    %v5776 = vunpack.c.l.b16 %v3740
    %v5777 = vunpack.c.h.b16 %v3740
    %v5778 = vunpack.c.l.b16 %v3741
    %v5779 = vunpack.c.h.b16 %v3741
    %v5780 = vunpack.c.l.b16 %v3742
    %v5781 = vunpack.c.h.b16 %v3742
    %v5782 = vunpack.c.l.b16 %v3743
    %v5783 = vunpack.c.h.b16 %v3743
    %v5784 = vunpack.c.l.b16 %v3744
    %v5785 = vunpack.c.h.b16 %v3744
    %v5786 = vunpack.c.l.b16 %v3745
    %v5787 = vunpack.c.h.b16 %v3745
    %v5788 = vunpack.c.l.b16 %v3746
    %v5789 = vunpack.c.h.b16 %v3746
    %v5790 = vunpack.c.l.b16 %v3747
    %v5791 = vunpack.c.h.b16 %v3747
    %v5792 = vunpack.c.l.b16 %v3748
    %v5793 = vunpack.c.h.b16 %v3748
    %v5794 = vunpack.c.l.b16 %v3749
    %v5795 = vunpack.c.h.b16 %v3749
    %v5796 = vunpack.c.l.b16 %v3750
    %v5797 = vunpack.c.h.b16 %v3750
    %v5798 = vunpack.c.l.b16 %v3751
    %v5799 = vunpack.c.h.b16 %v3751
    %v5800 = vunpack.c.l.b16 %v3752
    %v5801 = vunpack.c.h.b16 %v3752
    %v5802 = vunpack.c.l.b16 %v3753
    %v5803 = vunpack.c.h.b16 %v3753
    %v5804 = vunpack.c.l.b16 %v3754
    %v5805 = vunpack.c.h.b16 %v3754
    %v5806 = vunpack.c.l.b16 %v3755
    %v5807 = vunpack.c.h.b16 %v3755
    %v5808 = vunpack.c.l.b16 %v3756
    %v5809 = vunpack.c.h.b16 %v3756
    %v5810 = vunpack.c.l.b16 %v3757
    %v5811 = vunpack.c.h.b16 %v3757
    %v5812 = vunpack.c.l.b16 %v3758
    %v5813 = vunpack.c.h.b16 %v3758
    %v5814 = vunpack.c.l.b16 %v3759
    %v5815 = vunpack.c.h.b16 %v3759
    %v5816 = vunpack.c.l.b16 %v3760
    %v5817 = vunpack.c.h.b16 %v3760
    %v5818 = vunpack.c.l.b16 %v3761
    %v5819 = vunpack.c.h.b16 %v3761
    %v5820 = vunpack.c.l.b16 %v3762
    %v5821 = vunpack.c.h.b16 %v3762
    %v5822 = vunpack.c.l.b16 %v3763
    %v5823 = vunpack.c.h.b16 %v3763
    %v5824 = vunpack.c.l.b16 %v3764
    %v5825 = vunpack.c.h.b16 %v3764
    %v5826 = vunpack.c.l.b16 %v3765
    %v5827 = vunpack.c.h.b16 %v3765
    %v5828 = vunpack.c.l.b16 %v3766
    %v5829 = vunpack.c.h.b16 %v3766
    %v5830 = vunpack.c.l.b16 %v3767
    %v5831 = vunpack.c.h.b16 %v3767
    %v5832 = vunpack.c.l.b16 %v3768
    %v5833 = vunpack.c.h.b16 %v3768
    %v5834 = vunpack.c.l.b16 %v3769
    %v5835 = vunpack.c.h.b16 %v3769
    %v5836 = vunpack.c.l.b16 %v3770
    %v5837 = vunpack.c.h.b16 %v3770
    %v5838 = vunpack.c.l.b16 %v3771
    %v5839 = vunpack.c.h.b16 %v3771
    %v5840 = vunpack.c.l.b16 %v3772
    %v5841 = vunpack.c.h.b16 %v3772
    %v5842 = vunpack.c.l.b16 %v3773
    %v5843 = vunpack.c.h.b16 %v3773
    %v5844 = vunpack.c.l.b16 %v3774
    %v5845 = vunpack.c.h.b16 %v3774
    %v5846 = vunpack.c.l.b16 %v3775
    %v5847 = vunpack.c.h.b16 %v3775
    %v5848 = vunpack.c.l.b16 %v3776
    %v5849 = vunpack.c.h.b16 %v3776
    %v5850 = vunpack.c.l.b16 %v3777
    %v5851 = vunpack.c.h.b16 %v3777
    %v5852 = vunpack.c.l.b16 %v3778
    %v5853 = vunpack.c.h.b16 %v3778
    %v5854 = vunpack.c.l.b16 %v3779
    %v5855 = vunpack.c.h.b16 %v3779
    %v5856 = vunpack.c.l.b16 %v3780
    %v5857 = vunpack.c.h.b16 %v3780
    %v5858 = vunpack.c.l.b16 %v3781
    %v5859 = vunpack.c.h.b16 %v3781
    %v5860 = vunpack.c.l.b16 %v3782
    %v5861 = vunpack.c.h.b16 %v3782
    %v5862 = vunpack.c.l.b16 %v3783
    %v5863 = vunpack.c.h.b16 %v3783
    %v5864 = vunpack.c.l.b16 %v3784
    %v5865 = vunpack.c.h.b16 %v3784
    %v5866 = vunpack.c.l.b16 %v3785
    %v5867 = vunpack.c.h.b16 %v3785
    %v5868 = vunpack.c.l.b16 %v3786
    %v5869 = vunpack.c.h.b16 %v3786
    %v5870 = vunpack.c.l.b16 %v3787
    %v5871 = vunpack.c.h.b16 %v3787
    %v5872 = vunpack.c.l.b16 %v3788
    %v5873 = vunpack.c.h.b16 %v3788
    %v5874 = vunpack.c.l.b16 %v3789
    %v5875 = vunpack.c.h.b16 %v3789
    %v5876 = vunpack.c.l.b16 %v3790
    %v5877 = vunpack.c.h.b16 %v3790
    %v5878 = vunpack.c.l.b16 %v3791
    %v5879 = vunpack.c.h.b16 %v3791
    %v5880 = vunpack.c.l.b16 %v3792
    %v5881 = vunpack.c.h.b16 %v3792
    %v5882 = vunpack.c.l.b16 %v3793
    %v5883 = vunpack.c.h.b16 %v3793
    %v5884 = vunpack.c.l.b16 %v3794
    %v5885 = vunpack.c.h.b16 %v3794
    %v5886 = vunpack.c.l.b16 %v3795
    %v5887 = vunpack.c.h.b16 %v3795
    %v5888 = vunpack.c.l.b16 %v3796
    %v5889 = vunpack.c.h.b16 %v3796
    %v5890 = vunpack.c.l.b16 %v3797
    %v5891 = vunpack.c.h.b16 %v3797
    %v5892 = vunpack.c.l.b16 %v3798
    %v5893 = vunpack.c.h.b16 %v3798
    %v5894 = vunpack.c.l.b16 %v3799
    %v5895 = vunpack.c.h.b16 %v3799
    %v5896 = vunpack.c.l.b16 %v3800
    %v5897 = vunpack.c.h.b16 %v3800
    %v5898 = vunpack.c.l.b16 %v3801
    %v5899 = vunpack.c.h.b16 %v3801
    %v5900 = vunpack.c.l.b16 %v3802
    %v5901 = vunpack.c.h.b16 %v3802
    %v5902 = vunpack.c.l.b16 %v3803
    %v5903 = vunpack.c.h.b16 %v3803
    %v5904 = vunpack.c.l.b16 %v3804
    %v5905 = vunpack.c.h.b16 %v3804
    %v5906 = vunpack.c.l.b16 %v3805
    %v5907 = vunpack.c.h.b16 %v3805
    %v5908 = vunpack.c.l.b16 %v3806
    %v5909 = vunpack.c.h.b16 %v3806
    %v5910 = vunpack.c.l.b16 %v3807
    %v5911 = vunpack.c.h.b16 %v3807
    %v5912 = vunpack.c.l.b16 %v3808
    %v5913 = vunpack.c.h.b16 %v3808
    %v5914 = vunpack.c.l.b16 %v3809
    %v5915 = vunpack.c.h.b16 %v3809
    %v5916 = vunpack.c.l.b16 %v3810
    %v5917 = vunpack.c.h.b16 %v3810
    %v5918 = vunpack.c.l.b16 %v3811
    %v5919 = vunpack.c.h.b16 %v3811
    %v5920 = vunpack.c.l.b16 %v3812
    %v5921 = vunpack.c.h.b16 %v3812
    %v5922 = vunpack.c.l.b16 %v3813
    %v5923 = vunpack.c.h.b16 %v3813
    %v5924 = vunpack.c.l.b16 %v3814
    %v5925 = vunpack.c.h.b16 %v3814
    %v5926 = vunpack.c.l.b16 %v3815
    %v5927 = vunpack.c.h.b16 %v3815
    %v5928 = vunpack.c.l.b16 %v3816
    %v5929 = vunpack.c.h.b16 %v3816
    %v5930 = vunpack.c.l.b16 %v3817
    %v5931 = vunpack.c.h.b16 %v3817
    %v5932 = vunpack.c.l.b16 %v3818
    %v5933 = vunpack.c.h.b16 %v3818
    %v5934 = vunpack.c.l.b16 %v3819
    %v5935 = vunpack.c.h.b16 %v3819
    %v5936 = vunpack.c.l.b16 %v3820
    %v5937 = vunpack.c.h.b16 %v3820
    %v5938 = vunpack.c.l.b16 %v3821
    %v5939 = vunpack.c.h.b16 %v3821
    %v5940 = vunpack.c.l.b16 %v3822
    %v5941 = vunpack.c.h.b16 %v3822
    %v5942 = vunpack.c.l.b16 %v3823
    %v5943 = vunpack.c.h.b16 %v3823
    %v5944 = vunpack.c.l.b16 %v3824
    %v5945 = vunpack.c.h.b16 %v3824
    %v5946 = vunpack.c.l.b16 %v3825
    %v5947 = vunpack.c.h.b16 %v3825
    %v5948 = vunpack.c.l.b16 %v3826
    %v5949 = vunpack.c.h.b16 %v3826
    %v5950 = vunpack.c.l.b16 %v3827
    %v5951 = vunpack.c.h.b16 %v3827
    %v5952 = vunpack.c.l.b16 %v3828
    %v5953 = vunpack.c.h.b16 %v3828
    %v5954 = vunpack.c.l.b16 %v3829
    %v5955 = vunpack.c.h.b16 %v3829
    %v5956 = vunpack.c.l.b16 %v3830
    %v5957 = vunpack.c.h.b16 %v3830
    %v5958 = vunpack.c.l.b16 %v3831
    %v5959 = vunpack.c.h.b16 %v3831
    %v5960 = vunpack.c.l.b16 %v3832
    %v5961 = vunpack.c.h.b16 %v3832
    %v5962 = vunpack.c.l.b16 %v3833
    %v5963 = vunpack.c.h.b16 %v3833
    %v5964 = vunpack.c.l.b16 %v3834
    %v5965 = vunpack.c.h.b16 %v3834
    %v5966 = vunpack.c.l.b16 %v3835
    %v5967 = vunpack.c.h.b16 %v3835
    %v5968 = vunpack.c.l.b16 %v3836
    %v5969 = vunpack.c.h.b16 %v3836
    %v5970 = vunpack.c.l.b16 %v3837
    %v5971 = vunpack.c.h.b16 %v3837
    %v5972 = vunpack.c.l.b16 %v3838
    %v5973 = vunpack.c.h.b16 %v3838
    %v5974 = vunpack.c.l.b16 %v3839
    %v5975 = vunpack.c.h.b16 %v3839
    %v5976 = vunpack.c.l.b16 %v3840
    %v5977 = vunpack.c.h.b16 %v3840
    %v5978 = vunpack.c.l.b16 %v3841
    %v5979 = vunpack.c.h.b16 %v3841
    %v5980 = vunpack.c.l.b16 %v3842
    %v5981 = vunpack.c.h.b16 %v3842
    %v5982 = vunpack.c.l.b16 %v3843
    %v5983 = vunpack.c.h.b16 %v3843
    %v5984 = vunpack.c.l.b16 %v3844
    %v5985 = vunpack.c.h.b16 %v3844
    %v5986 = vunpack.c.l.b16 %v3845
    %v5987 = vunpack.c.h.b16 %v3845
    %v5988 = vunpack.c.l.b16 %v3846
    %v5989 = vunpack.c.h.b16 %v3846
    %v5990 = vunpack.c.l.b16 %v3847
    %v5991 = vunpack.c.h.b16 %v3847
    %v5992 = vunpack.c.l.b16 %v3848
    %v5993 = vunpack.c.h.b16 %v3848
    %v5994 = vunpack.c.l.b16 %v3849
    %v5995 = vunpack.c.h.b16 %v3849
    %v5996 = vunpack.c.l.b16 %v3850
    %v5997 = vunpack.c.h.b16 %v3850
    %v5998 = vunpack.c.l.b16 %v3851
    %v5999 = vunpack.c.h.b16 %v3851
    %v6000 = vunpack.c.l.b16 %v3852
    %v6001 = vunpack.c.h.b16 %v3852
    %v6002 = vunpack.c.l.b16 %v3853
    %v6003 = vunpack.c.h.b16 %v3853
    %v6004 = vunpack.c.l.b16 %v3854
    %v6005 = vunpack.c.h.b16 %v3854
    %v6006 = vunpack.c.l.b16 %v3855
    %v6007 = vunpack.c.h.b16 %v3855
    %v6008 = vunpack.c.l.b16 %v3856
    %v6009 = vunpack.c.h.b16 %v3856
    %v6010 = vunpack.c.l.b16 %v3857
    %v6011 = vunpack.c.h.b16 %v3857
    %v6012 = vunpack.c.l.b16 %v3858
    %v6013 = vunpack.c.h.b16 %v3858
    %v6014 = vunpack.c.l.b16 %v3859
    %v6015 = vunpack.c.h.b16 %v3859
    %v6016 = vunpack.c.l.b16 %v3860
    %v6017 = vunpack.c.h.b16 %v3860
    %v6018 = vunpack.c.l.b16 %v3861
    %v6019 = vunpack.c.h.b16 %v3861
    %v6020 = vunpack.c.l.b16 %v3862
    %v6021 = vunpack.c.h.b16 %v3862
    %v6022 = vunpack.c.l.b16 %v3863
    %v6023 = vunpack.c.h.b16 %v3863
    %v6024 = vunpack.c.l.b16 %v3864
    %v6025 = vunpack.c.h.b16 %v3864
    %v6026 = vunpack.c.l.b16 %v3865
    %v6027 = vunpack.c.h.b16 %v3865
    %v6028 = vunpack.c.l.b16 %v3866
    %v6029 = vunpack.c.h.b16 %v3866
    %v6030 = vunpack.c.l.b16 %v3867
    %v6031 = vunpack.c.h.b16 %v3867
    %v6032 = vunpack.c.l.b16 %v3868
    %v6033 = vunpack.c.h.b16 %v3868
    %v6034 = vunpack.c.l.b16 %v3869
    %v6035 = vunpack.c.h.b16 %v3869
    %v6036 = vunpack.c.l.b16 %v3870
    %v6037 = vunpack.c.h.b16 %v3870
    %v6038 = vunpack.c.l.b16 %v3871
    %v6039 = vunpack.c.h.b16 %v3871
    %v6040 = vunpack.c.l.b16 %v3872
    %v6041 = vunpack.c.h.b16 %v3872
    %v6042 = vunpack.c.l.b16 %v3873
    %v6043 = vunpack.c.h.b16 %v3873
    %v6044 = vunpack.c.l.b16 %v3874
    %v6045 = vunpack.c.h.b16 %v3874
    %v6046 = vunpack.c.l.b16 %v3875
    %v6047 = vunpack.c.h.b16 %v3875
    %v6048 = vunpack.c.l.b16 %v3876
    %v6049 = vunpack.c.h.b16 %v3876
    %v6050 = vunpack.c.l.b16 %v3877
    %v6051 = vunpack.c.h.b16 %v3877
    %v6052 = vunpack.c.l.b16 %v3878
    %v6053 = vunpack.c.h.b16 %v3878
    %v6054 = vunpack.c.l.b16 %v3879
    %v6055 = vunpack.c.h.b16 %v3879
    %v6056 = vunpack.c.l.b16 %v3880
    %v6057 = vunpack.c.h.b16 %v3880
    %v6058 = vunpack.c.l.b16 %v3881
    %v6059 = vunpack.c.h.b16 %v3881
    %v6060 = vunpack.c.l.b16 %v3882
    %v6061 = vunpack.c.h.b16 %v3882
    %v6062 = vunpack.c.l.b16 %v3883
    %v6063 = vunpack.c.h.b16 %v3883
    %v6064 = vunpack.c.l.b16 %v3884
    %v6065 = vunpack.c.h.b16 %v3884
    %v6066 = vunpack.c.l.b16 %v3885
    %v6067 = vunpack.c.h.b16 %v3885
    %v6068 = vunpack.c.l.b16 %v3886
    %v6069 = vunpack.c.h.b16 %v3886
    %v6070 = vunpack.c.l.b16 %v3887
    %v6071 = vunpack.c.h.b16 %v3887
    %v6072 = vunpack.c.l.b16 %v3888
    %v6073 = vunpack.c.h.b16 %v3888
    %v6074 = vunpack.c.l.b16 %v3889
    %v6075 = vunpack.c.h.b16 %v3889
    %v6076 = vunpack.c.l.b16 %v3890
    %v6077 = vunpack.c.h.b16 %v3890
    %v6078 = vunpack.c.l.b16 %v3891
    %v6079 = vunpack.c.h.b16 %v3891
    %v6080 = vunpack.c.l.b16 %v3892
    %v6081 = vunpack.c.h.b16 %v3892
    %v6082 = vunpack.c.l.b16 %v3893
    %v6083 = vunpack.c.h.b16 %v3893
    %v6084 = vunpack.c.l.b16 %v3894
    %v6085 = vunpack.c.h.b16 %v3894
    %v6086 = vunpack.c.l.b16 %v3895
    %v6087 = vunpack.c.h.b16 %v3895
    %v6088 = vunpack.c.l.b16 %v3896
    %v6089 = vunpack.c.h.b16 %v3896
    %v6090 = vunpack.c.l.b16 %v3897
    %v6091 = vunpack.c.h.b16 %v3897
    %v6092 = vunpack.c.l.b16 %v3898
    %v6093 = vunpack.c.h.b16 %v3898
    %v6094 = vunpack.c.l.b16 %v3899
    %v6095 = vunpack.c.h.b16 %v3899
    %v6096 = vunpack.c.l.b16 %v3900
    %v6097 = vunpack.c.h.b16 %v3900
    %v6098 = vunpack.c.l.b16 %v3901
    %v6099 = vunpack.c.h.b16 %v3901
    %v6100 = vunpack.c.l.b16 %v3902
    %v6101 = vunpack.c.h.b16 %v3902
    %v6102 = vunpack.c.l.b16 %v3903
    %v6103 = vunpack.c.h.b16 %v3903
    %v6104 = vunpack.c.l.b16 %v3904
    %v6105 = vunpack.c.h.b16 %v3904
    %v6106 = vunpack.c.l.b16 %v3905
    %v6107 = vunpack.c.h.b16 %v3905
    %v6108 = vunpack.c.l.b16 %v3906
    %v6109 = vunpack.c.h.b16 %v3906
    %v6110 = vunpack.c.l.b16 %v3907
    %v6111 = vunpack.c.h.b16 %v3907
    %v6112 = vunpack.c.l.b16 %v3908
    %v6113 = vunpack.c.h.b16 %v3908
    %v6114 = vunpack.c.l.b16 %v3909
    %v6115 = vunpack.c.h.b16 %v3909
    %v6116 = vunpack.c.l.b16 %v3910
    %v6117 = vunpack.c.h.b16 %v3910
    %v6118 = vunpack.c.l.b16 %v3911
    %v6119 = vunpack.c.h.b16 %v3911
    %v6120 = vunpack.c.l.b16 %v3912
    %v6121 = vunpack.c.h.b16 %v3912
    %v6122 = vunpack.c.l.b16 %v3913
    %v6123 = vunpack.c.h.b16 %v3913
    %v6124 = vunpack.c.l.b16 %v3914
    %v6125 = vunpack.c.h.b16 %v3914
    %v6126 = vunpack.c.l.b16 %v3915
    %v6127 = vunpack.c.h.b16 %v3915
    %v6128 = vunpack.c.l.b16 %v3916
    %v6129 = vunpack.c.h.b16 %v3916
    %v6130 = vunpack.c.l.b16 %v3917
    %v6131 = vunpack.c.h.b16 %v3917
    %v6132 = vunpack.c.l.b16 %v3918
    %v6133 = vunpack.c.h.b16 %v3918
    %v6134 = vunpack.c.l.b16 %v3919
    %v6135 = vunpack.c.h.b16 %v3919
    %v6136 = vunpack.c.l.b16 %v3920
    %v6137 = vunpack.c.h.b16 %v3920
    %v6138 = vunpack.c.l.b16 %v3921
    %v6139 = vunpack.c.h.b16 %v3921
    %v6140 = vunpack.c.l.b16 %v3922
    %v6141 = vunpack.c.h.b16 %v3922
    %v6142 = vunpack.c.l.b16 %v3923
    %v6143 = vunpack.c.h.b16 %v3923
    %v6144 = vunpack.c.l.b16 %v3924
    %v6145 = vunpack.c.h.b16 %v3924
    %v6146 = vunpack.c.l.b16 %v3925
    %v6147 = vunpack.c.h.b16 %v3925
    %v6148 = vunpack.c.l.b16 %v3926
    %v6149 = vunpack.c.h.b16 %v3926
    %v6150 = vunpack.c.l.b16 %v3927
    %v6151 = vunpack.c.h.b16 %v3927
    %v6152 = vunpack.c.l.b16 %v3928
    %v6153 = vunpack.c.h.b16 %v3928
    %v6154 = vunpack.c.l.b16 %v3929
    %v6155 = vunpack.c.h.b16 %v3929
    %v6156 = vunpack.c.l.b16 %v3930
    %v6157 = vunpack.c.h.b16 %v3930
    %v6158 = vunpack.c.l.b16 %v3931
    %v6159 = vunpack.c.h.b16 %v3931
    %v6160 = vunpack.c.l.b16 %v3932
    %v6161 = vunpack.c.h.b16 %v3932
    %v6162 = vunpack.c.l.b16 %v3933
    %v6163 = vunpack.c.h.b16 %v3933
    %v6164 = vunpack.c.l.b16 %v3934
    %v6165 = vunpack.c.h.b16 %v3934
    %v6166 = vunpack.c.l.b16 %v3935
    %v6167 = vunpack.c.h.b16 %v3935
    %v6168 = vunpack.c.l.b16 %v3936
    %v6169 = vunpack.c.h.b16 %v3936
    %v6170 = vunpack.c.l.b16 %v3937
    %v6171 = vunpack.c.h.b16 %v3937
    %v6172 = vunpack.c.l.b16 %v3938
    %v6173 = vunpack.c.h.b16 %v3938
    %v6174 = vunpack.c.l.b16 %v3939
    %v6175 = vunpack.c.h.b16 %v3939
    %v6176 = vunpack.c.l.b16 %v3940
    %v6177 = vunpack.c.h.b16 %v3940
    %v6178 = vunpack.c.l.b16 %v3941
    %v6179 = vunpack.c.h.b16 %v3941
    %v6180 = vunpack.c.l.b16 %v3942
    %v6181 = vunpack.c.h.b16 %v3942
    %v6182 = vunpack.c.l.b16 %v3943
    %v6183 = vunpack.c.h.b16 %v3943
    %v6184 = vunpack.c.l.b16 %v3944
    %v6185 = vunpack.c.h.b16 %v3944
    %v6186 = vunpack.c.l.b16 %v3945
    %v6187 = vunpack.c.h.b16 %v3945
    %v6188 = vunpack.c.l.b16 %v3946
    %v6189 = vunpack.c.h.b16 %v3946
    %v6190 = vunpack.c.l.b16 %v3947
    %v6191 = vunpack.c.h.b16 %v3947
    %v6192 = vunpack.c.l.b16 %v3948
    %v6193 = vunpack.c.h.b16 %v3948
    %v6194 = vunpack.c.l.b16 %v3949
    %v6195 = vunpack.c.h.b16 %v3949
    %v6196 = vunpack.c.l.b16 %v3950
    %v6197 = vunpack.c.h.b16 %v3950
    %v6198 = vunpack.c.l.b16 %v3951
    %v6199 = vunpack.c.h.b16 %v3951
    %v6200 = vunpack.c.l.b16 %v3952
    %v6201 = vunpack.c.h.b16 %v3952
    %v6202 = vunpack.c.l.b16 %v3953
    %v6203 = vunpack.c.h.b16 %v3953
    %v6204 = vunpack.c.l.b16 %v3954
    %v6205 = vunpack.c.h.b16 %v3954
    %v6206 = vunpack.c.l.b16 %v3955
    %v6207 = vunpack.c.h.b16 %v3955
    %v6208 = vunpack.c.l.b16 %v3956
    %v6209 = vunpack.c.h.b16 %v3956
    %v6210 = vunpack.c.l.b16 %v3957
    %v6211 = vunpack.c.h.b16 %v3957
    %v6212 = vunpack.c.l.b16 %v3958
    %v6213 = vunpack.c.h.b16 %v3958
    %v6214 = vunpack.c.l.b16 %v3959
    %v6215 = vunpack.c.h.b16 %v3959
    %v6216 = vunpack.c.l.b16 %v3960
    %v6217 = vunpack.c.h.b16 %v3960
    %v6218 = vunpack.c.l.b16 %v3961
    %v6219 = vunpack.c.h.b16 %v3961
    %v6220 = vunpack.c.l.b16 %v3962
    %v6221 = vunpack.c.h.b16 %v3962
    %v6222 = vunpack.c.l.b16 %v3963
    %v6223 = vunpack.c.h.b16 %v3963
    %v6224 = vunpack.c.l.b16 %v3964
    %v6225 = vunpack.c.h.b16 %v3964
    %v6226 = vunpack.c.l.b16 %v3965
    %v6227 = vunpack.c.h.b16 %v3965
    %v6228 = vunpack.c.l.b16 %v3966
    %v6229 = vunpack.c.h.b16 %v3966
    %v6230 = vunpack.c.l.b16 %v3967
    %v6231 = vunpack.c.h.b16 %v3967
    %v6232 = vunpack.c.l.b16 %v3968
    %v6233 = vunpack.c.h.b16 %v3968
    %v6234 = vunpack.c.l.b16 %v3969
    %v6235 = vunpack.c.h.b16 %v3969
    %v6236 = vunpack.c.l.b16 %v3970
    %v6237 = vunpack.c.h.b16 %v3970
    %v6238 = vunpack.c.l.b16 %v3971
    %v6239 = vunpack.c.h.b16 %v3971
    %v6240 = vunpack.c.l.b16 %v3972
    %v6241 = vunpack.c.h.b16 %v3972
    %v6242 = vunpack.c.l.b16 %v3973
    %v6243 = vunpack.c.h.b16 %v3973
    %v6244 = vunpack.c.l.b16 %v3974
    %v6245 = vunpack.c.h.b16 %v3974
    %v6246 = vunpack.c.l.b16 %v3975
    %v6247 = vunpack.c.h.b16 %v3975
    %v6248 = vunpack.c.l.b16 %v3976
    %v6249 = vunpack.c.h.b16 %v3976
    %v6250 = vunpack.c.l.b16 %v3977
    %v6251 = vunpack.c.h.b16 %v3977
    %v6252 = vunpack.c.l.b16 %v3978
    %v6253 = vunpack.c.h.b16 %v3978
    %v6254 = vunpack.c.l.b16 %v3979
    %v6255 = vunpack.c.h.b16 %v3979
    %v6256 = vunpack.c.l.b16 %v3980
    %v6257 = vunpack.c.h.b16 %v3980
    %v6258 = vunpack.c.l.b16 %v3981
    %v6259 = vunpack.c.h.b16 %v3981
    %v6260 = vunpack.c.l.b16 %v3982
    %v6261 = vunpack.c.h.b16 %v3982
    %v6262 = vunpack.c.l.b16 %v3983
    %v6263 = vunpack.c.h.b16 %v3983
    %v6264 = vunpack.c.l.b16 %v3984
    %v6265 = vunpack.c.h.b16 %v3984
    %v6266 = vunpack.c.l.b16 %v3985
    %v6267 = vunpack.c.h.b16 %v3985
    %v6268 = vunpack.c.l.b16 %v3986
    %v6269 = vunpack.c.h.b16 %v3986
    %v6270 = vunpack.c.l.b16 %v3987
    %v6271 = vunpack.c.h.b16 %v3987
    %v6272 = vunpack.c.l.b16 %v3988
    %v6273 = vunpack.c.h.b16 %v3988
    %v6274 = vunpack.c.l.b16 %v3989
    %v6275 = vunpack.c.h.b16 %v3989
    %v6276 = vunpack.c.l.b16 %v3990
    %v6277 = vunpack.c.h.b16 %v3990
    %v6278 = vunpack.c.l.b16 %v3991
    %v6279 = vunpack.c.h.b16 %v3991
    %v6280 = vunpack.c.l.b16 %v3992
    %v6281 = vunpack.c.h.b16 %v3992
    %v6282 = vunpack.c.l.b16 %v3993
    %v6283 = vunpack.c.h.b16 %v3993
    %v6284 = vunpack.c.l.b16 %v3994
    %v6285 = vunpack.c.h.b16 %v3994
    %v6286 = vunpack.c.l.b16 %v3995
    %v6287 = vunpack.c.h.b16 %v3995
    %v6288 = vunpack.c.l.b16 %v3996
    %v6289 = vunpack.c.h.b16 %v3996
    %v6290 = vunpack.c.l.b16 %v3997
    %v6291 = vunpack.c.h.b16 %v3997
    %v6292 = vunpack.c.l.b16 %v3998
    %v6293 = vunpack.c.h.b16 %v3998
    %v6294 = vunpack.c.l.b16 %v3999
    %v6295 = vunpack.c.h.b16 %v3999
    %v6296 = vunpack.c.l.b16 %v4000
    %v6297 = vunpack.c.h.b16 %v4000
    %v6298 = vunpack.c.l.b16 %v4001
    %v6299 = vunpack.c.h.b16 %v4001
    %v6300 = vunpack.c.l.b16 %v4002
    %v6301 = vunpack.c.h.b16 %v4002
    %v6302 = vunpack.c.l.b16 %v4003
    %v6303 = vunpack.c.h.b16 %v4003
    %v6304 = vunpack.c.l.b16 %v4004
    %v6305 = vunpack.c.h.b16 %v4004
    %v6306 = vunpack.c.l.b16 %v4005
    %v6307 = vunpack.c.h.b16 %v4005
    %v6308 = vunpack.c.l.b16 %v4006
    %v6309 = vunpack.c.h.b16 %v4006
    %v6310 = vunpack.c.l.b16 %v4007
    %v6311 = vunpack.c.h.b16 %v4007
    %v6312 = vunpack.c.l.b16 %v4008
    %v6313 = vunpack.c.h.b16 %v4008
    %v6314 = vunpack.c.l.b16 %v4009
    %v6315 = vunpack.c.h.b16 %v4009
    %v6316 = vunpack.c.l.b16 %v4010
    %v6317 = vunpack.c.h.b16 %v4010
    %v6318 = vunpack.c.l.b16 %v4011
    %v6319 = vunpack.c.h.b16 %v4011
    %v6320 = vunpack.c.l.b16 %v4012
    %v6321 = vunpack.c.h.b16 %v4012
    %v6322 = vunpack.c.l.b16 %v4013
    %v6323 = vunpack.c.h.b16 %v4013
    %v6324 = vunpack.c.l.b16 %v4014
    %v6325 = vunpack.c.h.b16 %v4014
    %v6326 = vunpack.c.l.b16 %v4015
    %v6327 = vunpack.c.h.b16 %v4015
    %v6328 = vunpack.c.l.b16 %v4016
    %v6329 = vunpack.c.h.b16 %v4016
    %v6330 = vunpack.c.l.b16 %v4017
    %v6331 = vunpack.c.h.b16 %v4017
    %v6332 = vunpack.c.l.b16 %v4018
    %v6333 = vunpack.c.h.b16 %v4018
    %v6334 = vunpack.c.l.b16 %v4019
    %v6335 = vunpack.c.h.b16 %v4019
    %v6336 = vunpack.c.l.b16 %v4020
    %v6337 = vunpack.c.h.b16 %v4020
    %v6338 = vunpack.c.l.b16 %v4021
    %v6339 = vunpack.c.h.b16 %v4021
    %v6340 = vunpack.c.l.b16 %v4022
    %v6341 = vunpack.c.h.b16 %v4022
    %v6342 = vunpack.c.l.b16 %v4023
    %v6343 = vunpack.c.h.b16 %v4023
    %v6344 = vunpack.c.l.b16 %v4024
    %v6345 = vunpack.c.h.b16 %v4024
    %v6346 = vunpack.c.l.b16 %v4025
    %v6347 = vunpack.c.h.b16 %v4025
    %v6348 = vunpack.c.l.b16 %v4026
    %v6349 = vunpack.c.h.b16 %v4026
    %v6350 = vunpack.c.l.b16 %v4027
    %v6351 = vunpack.c.h.b16 %v4027
    %v6352 = vunpack.c.l.b16 %v4028
    %v6353 = vunpack.c.h.b16 %v4028
    %v6354 = vunpack.c.l.b16 %v4029
    %v6355 = vunpack.c.h.b16 %v4029
    %v6356 = vunpack.c.l.b16 %v4030
    %v6357 = vunpack.c.h.b16 %v4030
    %v6358 = vunpack.c.l.b16 %v4031
    %v6359 = vunpack.c.h.b16 %v4031
    %v6360 = vunpack.c.l.b16 %v4032
    %v6361 = vunpack.c.h.b16 %v4032
    %v6362 = vunpack.c.l.b16 %v4033
    %v6363 = vunpack.c.h.b16 %v4033
    %v6364 = vunpack.c.l.b16 %v4034
    %v6365 = vunpack.c.h.b16 %v4034
    %v6366 = vunpack.c.l.b16 %v4035
    %v6367 = vunpack.c.h.b16 %v4035
    %v6368 = vunpack.c.l.b16 %v4036
    %v6369 = vunpack.c.h.b16 %v4036
    %v6370 = vunpack.c.l.b16 %v4037
    %v6371 = vunpack.c.h.b16 %v4037
    %v6372 = vunpack.c.l.b16 %v4038
    %v6373 = vunpack.c.h.b16 %v4038
    %v6374 = vunpack.c.l.b16 %v4039
    %v6375 = vunpack.c.h.b16 %v4039
    %v6376 = vunpack.c.l.b16 %v4040
    %v6377 = vunpack.c.h.b16 %v4040
    %v6378 = vunpack.c.l.b16 %v4041
    %v6379 = vunpack.c.h.b16 %v4041
    %v6380 = vunpack.c.l.b16 %v4042
    %v6381 = vunpack.c.h.b16 %v4042
    %v6382 = vunpack.c.l.b16 %v4043
    %v6383 = vunpack.c.h.b16 %v4043
    %v6384 = vunpack.c.l.b16 %v4044
    %v6385 = vunpack.c.h.b16 %v4044
    %v6386 = vunpack.c.l.b16 %v4045
    %v6387 = vunpack.c.h.b16 %v4045
    %v6388 = vunpack.c.l.b16 %v4046
    %v6389 = vunpack.c.h.b16 %v4046
    %v6390 = vunpack.c.l.b16 %v4047
    %v6391 = vunpack.c.h.b16 %v4047
    %v6392 = vunpack.c.l.b16 %v4048
    %v6393 = vunpack.c.h.b16 %v4048
    %v6394 = vunpack.c.l.b16 %v4049
    %v6395 = vunpack.c.h.b16 %v4049
    %v6396 = vunpack.c.l.b16 %v4050
    %v6397 = vunpack.c.h.b16 %v4050
    %v6398 = vunpack.c.l.b16 %v4051
    %v6399 = vunpack.c.h.b16 %v4051
    %v6400 = vunpack.c.l.b16 %v4052
    %v6401 = vunpack.c.h.b16 %v4052
    %v6402 = vunpack.c.l.b16 %v4053
    %v6403 = vunpack.c.h.b16 %v4053
    %v6404 = vunpack.c.l.b16 %v4054
    %v6405 = vunpack.c.h.b16 %v4054
    %v6406 = vunpack.c.l.b16 %v4055
    %v6407 = vunpack.c.h.b16 %v4055
    %v6408 = vunpack.c.l.b16 %v4056
    %v6409 = vunpack.c.h.b16 %v4056
    %v6410 = vunpack.c.l.b16 %v4057
    %v6411 = vunpack.c.h.b16 %v4057
    %v6412 = vunpack.c.l.b16 %v4058
    %v6413 = vunpack.c.h.b16 %v4058
    %v6414 = vunpack.c.l.b16 %v4059
    %v6415 = vunpack.c.h.b16 %v4059
    %v6416 = vunpack.c.l.b16 %v4060
    %v6417 = vunpack.c.h.b16 %v4060
    %v6418 = vunpack.c.l.b16 %v4061
    %v6419 = vunpack.c.h.b16 %v4061
    %v6420 = vunpack.c.l.b16 %v4062
    %v6421 = vunpack.c.h.b16 %v4062
    %v6422 = vunpack.c.l.b16 %v4063
    %v6423 = vunpack.c.h.b16 %v4063
    %v6424 = vunpack.c.l.b16 %v4064
    %v6425 = vunpack.c.h.b16 %v4064
    %v6426 = vunpack.c.l.b16 %v4065
    %v6427 = vunpack.c.h.b16 %v4065
    %v6428 = vunpack.c.l.b16 %v4066
    %v6429 = vunpack.c.h.b16 %v4066
    %v6430 = vunpack.c.l.b16 %v4067
    %v6431 = vunpack.c.h.b16 %v4067
    %v6432 = vunpack.c.l.b16 %v4068
    %v6433 = vunpack.c.h.b16 %v4068
    %v6434 = vunpack.c.l.b16 %v4069
    %v6435 = vunpack.c.h.b16 %v4069
    %v6436 = vunpack.c.l.b16 %v4070
    %v6437 = vunpack.c.h.b16 %v4070
    %v6438 = vunpack.c.l.b16 %v4071
    %v6439 = vunpack.c.h.b16 %v4071
    %v6440 = vunpack.c.l.b16 %v4072
    %v6441 = vunpack.c.h.b16 %v4072
    %v6442 = vunpack.c.l.b16 %v4073
    %v6443 = vunpack.c.h.b16 %v4073
    %v6444 = vunpack.c.l.b16 %v4074
    %v6445 = vunpack.c.h.b16 %v4074
    %v6446 = vunpack.c.l.b16 %v4075
    %v6447 = vunpack.c.h.b16 %v4075
    %v6448 = vunpack.c.l.b16 %v4076
    %v6449 = vunpack.c.h.b16 %v4076
    %v6450 = vunpack.c.l.b16 %v4077
    %v6451 = vunpack.c.h.b16 %v4077
    %v6452 = vunpack.c.l.b16 %v4078
    %v6453 = vunpack.c.h.b16 %v4078
    %v6454 = vunpack.c.l.b16 %v4079
    %v6455 = vunpack.c.h.b16 %v4079
    %v6456 = vunpack.c.l.b16 %v4080
    %v6457 = vunpack.c.h.b16 %v4080
    %v6458 = vunpack.c.l.b16 %v4081
    %v6459 = vunpack.c.h.b16 %v4081
    %v6460 = vunpack.c.l.b16 %v4082
    %v6461 = vunpack.c.h.b16 %v4082
    %v6462 = vunpack.c.l.b16 %v4083
    %v6463 = vunpack.c.h.b16 %v4083
    %v6464 = vunpack.c.l.b16 %v4084
    %v6465 = vunpack.c.h.b16 %v4084
    %v6466 = vunpack.c.l.b16 %v4085
    %v6467 = vunpack.c.h.b16 %v4085
    %v6468 = vunpack.c.l.b16 %v4086
    %v6469 = vunpack.c.h.b16 %v4086
    %v6470 = vunpack.c.l.b16 %v4087
    %v6471 = vunpack.c.h.b16 %v4087
    %v6472 = vunpack.c.l.b16 %v4088
    %v6473 = vunpack.c.h.b16 %v4088
    %v6474 = vunpack.c.l.b16 %v4089
    %v6475 = vunpack.c.h.b16 %v4089
    %v6476 = vunpack.c.l.b16 %v4090
    %v6477 = vunpack.c.h.b16 %v4090
    %v6478 = vunpack.c.l.b16 %v4091
    %v6479 = vunpack.c.h.b16 %v4091
    %v6480 = vunpack.c.l.b16 %v4092
    %v6481 = vunpack.c.h.b16 %v4092
    %v6482 = vunpack.c.l.b16 %v4093
    %v6483 = vunpack.c.h.b16 %v4093
    %v6484 = vunpack.c.l.b16 %v4094
    %v6485 = vunpack.c.h.b16 %v4094
    %v6486 = vunpack.c.l.b16 %v4095
    %v6487 = vunpack.c.h.b16 %v4095
    %v6488 = vunpack.c.l.b16 %v4096
    %v6489 = vunpack.c.h.b16 %v4096
    %v6490 = vunpack.c.l.b16 %v4097
    %v6491 = vunpack.c.h.b16 %v4097
    %v6492 = vunpack.c.l.b16 %v4098
    %v6493 = vunpack.c.h.b16 %v4098
    %v6494 = vunpack.c.l.b16 %v4099
    %v6495 = vunpack.c.h.b16 %v4099
    %v6496 = vunpack.c.l.b16 %v4100
    %v6497 = vunpack.c.h.b16 %v4100
    %v6498 = vunpack.c.l.b16 %v4101
    %v6499 = vunpack.c.h.b16 %v4101
    %v6500 = vunpack.c.l.b16 %v4102
    %v6501 = vunpack.c.h.b16 %v4102
    %v6502 = vunpack.c.l.b16 %v4103
    %v6503 = vunpack.c.h.b16 %v4103
    %v6504 = vunpack.c.l.b16 %v4104
    %v6505 = vunpack.c.h.b16 %v4104
    %v6506 = vunpack.c.l.b16 %v4105
    %v6507 = vunpack.c.h.b16 %v4105
    %v6508 = vunpack.c.l.b16 %v4106
    %v6509 = vunpack.c.h.b16 %v4106
    %v6510 = vunpack.c.l.b16 %v4107
    %v6511 = vunpack.c.h.b16 %v4107
    %v6512 = vunpack.c.l.b16 %v4108
    %v6513 = vunpack.c.h.b16 %v4108
    %v6514 = vunpack.c.l.b16 %v4109
    %v6515 = vunpack.c.h.b16 %v4109
    %v6516 = vunpack.c.l.b16 %v4110
    %v6517 = vunpack.c.h.b16 %v4110
    %v6518 = vunpack.c.l.b16 %v4111
    %v6519 = vunpack.c.h.b16 %v4111
    %v6520 = vunpack.c.l.b16 %v4112
    %v6521 = vunpack.c.h.b16 %v4112
    %v6522 = vunpack.c.l.b16 %v4113
    %v6523 = vunpack.c.h.b16 %v4113
    %v6524 = vunpack.c.l.b16 %v4114
    %v6525 = vunpack.c.h.b16 %v4114
    %v6526 = vunpack.c.l.b16 %v4115
    %v6527 = vunpack.c.h.b16 %v4115
    %v6528 = vunpack.c.l.b16 %v4116
    %v6529 = vunpack.c.h.b16 %v4116
    %v6530 = vunpack.c.l.b16 %v4117
    %v6531 = vunpack.c.h.b16 %v4117
    %v6532 = vunpack.c.l.b16 %v4118
    %v6533 = vunpack.c.h.b16 %v4118
    %v6534 = vunpack.c.l.b16 %v4119
    %v6535 = vunpack.c.h.b16 %v4119
    %v6536 = vunpack.c.l.b16 %v4120
    %v6537 = vunpack.c.h.b16 %v4120
    %v6538 = vunpack.c.l.b16 %v4121
    %v6539 = vunpack.c.h.b16 %v4121
    %v6540 = vunpack.c.l.b16 %v4122
    %v6541 = vunpack.c.h.b16 %v4122
    %v6542 = vunpack.c.l.b16 %v4123
    %v6543 = vunpack.c.h.b16 %v4123
    %v6544 = vunpack.c.l.b16 %v4124
    %v6545 = vunpack.c.h.b16 %v4124
    %v6546 = vunpack.c.l.b16 %v4125
    %v6547 = vunpack.c.h.b16 %v4125
    %v6548 = vunpack.c.l.b16 %v4126
    %v6549 = vunpack.c.h.b16 %v4126
    %v6550 = vunpack.c.l.b16 %v4127
    %v6551 = vunpack.c.h.b16 %v4127
    %v6552 = vunpack.c.l.b16 %v4128
    %v6553 = vunpack.c.h.b16 %v4128
    %v6554 = vunpack.c.l.b16 %v4129
    %v6555 = vunpack.c.h.b16 %v4129
    %v6556 = vunpack.c.l.b16 %v4130
    %v6557 = vunpack.c.h.b16 %v4130
    %v6558 = vunpack.c.l.b16 %v4131
    %v6559 = vunpack.c.h.b16 %v4131
    %v6560 = vunpack.c.l.b16 %v4132
    %v6561 = vunpack.c.h.b16 %v4132
    %v6562 = vunpack.c.l.b16 %v4133
    %v6563 = vunpack.c.h.b16 %v4133
    %v6564 = vunpack.c.l.b16 %v4134
    %v6565 = vunpack.c.h.b16 %v4134
    %v6566 = vunpack.c.l.b16 %v4135
    %v6567 = vunpack.c.h.b16 %v4135
    %v6568 = vunpack.c.l.b16 %v4136
    %v6569 = vunpack.c.h.b16 %v4136
    %v6570 = vunpack.c.l.b16 %v4137
    %v6571 = vunpack.c.h.b16 %v4137
    %v6572 = vunpack.c.l.b16 %v4138
    %v6573 = vunpack.c.h.b16 %v4138
    %v6574 = vunpack.c.l.b16 %v4139
    %v6575 = vunpack.c.h.b16 %v4139
    %v6576 = vunpack.c.l.b16 %v4140
    %v6577 = vunpack.c.h.b16 %v4140
    %v6578 = vunpack.c.l.b16 %v4141
    %v6579 = vunpack.c.h.b16 %v4141
    %v6580 = vunpack.c.l.b16 %v4142
    %v6581 = vunpack.c.h.b16 %v4142
    %v6582 = vunpack.c.l.b16 %v4143
    %v6583 = vunpack.c.h.b16 %v4143
    %v6584 = vunpack.c.l.b16 %v4144
    %v6585 = vunpack.c.h.b16 %v4144
    %v6586 = vunpack.c.l.b16 %v4145
    %v6587 = vunpack.c.h.b16 %v4145
    %v6588 = vunpack.c.l.b16 %v4146
    %v6589 = vunpack.c.h.b16 %v4146
    %v6590 = vunpack.c.l.b16 %v4147
    %v6591 = vunpack.c.h.b16 %v4147
    %v6592 = vunpack.c.l.b16 %v4148
    %v6593 = vunpack.c.h.b16 %v4148
    %v6594 = vunpack.c.l.b16 %v4149
    %v6595 = vunpack.c.h.b16 %v4149
    %v6596 = vunpack.c.l.b16 %v4150
    %v6597 = vunpack.c.h.b16 %v4150
    %v6598 = vunpack.c.l.b16 %v4151
    %v6599 = vunpack.c.h.b16 %v4151
    %v6600 = vunpack.c.l.b16 %v4152
    %v6601 = vunpack.c.h.b16 %v4152
    %v6602 = vunpack.c.l.b16 %v4153
    %v6603 = vunpack.c.h.b16 %v4153
    %v6604 = vunpack.c.l.b16 %v4154
    %v6605 = vunpack.c.h.b16 %v4154
    %v6606 = vunpack.c.l.b16 %v4155
    %v6607 = vunpack.c.h.b16 %v4155
    %v6608 = vunpack.c.l.b16 %v4156
    %v6609 = vunpack.c.h.b16 %v4156
    %v6610 = vunpack.c.l.b16 %v4157
    %v6611 = vunpack.c.h.b16 %v4157
    %v6612 = vunpack.c.l.b16 %v4158
    %v6613 = vunpack.c.h.b16 %v4158
    %v6614 = vunpack.c.l.b16 %v4159
    %v6615 = vunpack.c.h.b16 %v4159
    %v6616 = vunpack.c.l.b16 %v4160
    %v6617 = vunpack.c.h.b16 %v4160
    %v6618 = vunpack.c.l.b16 %v4161
    %v6619 = vunpack.c.h.b16 %v4161
    %v6620 = vunpack.c.l.b16 %v4162
    %v6621 = vunpack.c.h.b16 %v4162
    %v6622 = vunpack.c.l.b16 %v4163
    %v6623 = vunpack.c.h.b16 %v4163
    %v6624 = vunpack.c.l.b16 %v4164
    %v6625 = vunpack.c.h.b16 %v4164
    %v6626 = vunpack.c.l.b16 %v4165
    %v6627 = vunpack.c.h.b16 %v4165
    %v6628 = vunpack.c.l.b16 %v4166
    %v6629 = vunpack.c.h.b16 %v4166
    %v6630 = vunpack.c.l.b16 %v4167
    %v6631 = vunpack.c.h.b16 %v4167
    %v6632 = vunpack.c.l.b16 %v4168
    %v6633 = vunpack.c.h.b16 %v4168
    %v6634 = vunpack.c.l.b16 %v4169
    %v6635 = vunpack.c.h.b16 %v4169
    %v6636 = vunpack.c.l.b16 %v4170
    %v6637 = vunpack.c.h.b16 %v4170
    %v6638 = vunpack.c.l.b16 %v4171
    %v6639 = vunpack.c.h.b16 %v4171
    %v6640 = vunpack.c.l.b16 %v4172
    %v6641 = vunpack.c.h.b16 %v4172
    %v6642 = vunpack.c.l.b16 %v4173
    %v6643 = vunpack.c.h.b16 %v4173
    %v6644 = vunpack.c.l.b16 %v4174
    %v6645 = vunpack.c.h.b16 %v4174
    %v6646 = vunpack.c.l.b16 %v4175
    %v6647 = vunpack.c.h.b16 %v4175
    %v6648 = vunpack.c.l.b16 %v4176
    %v6649 = vunpack.c.h.b16 %v4176
    %v6650 = vunpack.c.l.b16 %v4177
    %v6651 = vunpack.c.h.b16 %v4177
    %v6652 = vunpack.c.l.b16 %v4178
    %v6653 = vunpack.c.h.b16 %v4178
    %v6654 = vunpack.c.l.b16 %v4179
    %v6655 = vunpack.c.h.b16 %v4179
    %v6656 = vunpack.c.l.b16 %v4180
    %v6657 = vunpack.c.h.b16 %v4180
    %v6658 = vunpack.c.l.b16 %v4181
    %v6659 = vunpack.c.h.b16 %v4181
    %v6660 = vunpack.c.l.b16 %v4182
    %v6661 = vunpack.c.h.b16 %v4182
    %v6662 = vunpack.c.l.b16 %v4183
    %v6663 = vunpack.c.h.b16 %v4183
    %v6664 = vunpack.c.l.b16 %v4184
    %v6665 = vunpack.c.h.b16 %v4184
    %v6666 = vunpack.c.l.b16 %v4185
    %v6667 = vunpack.c.h.b16 %v4185
    %v6668 = vunpack.c.l.b16 %v4186
    %v6669 = vunpack.c.h.b16 %v4186
    %v6670 = vunpack.c.l.b16 %v4187
    %v6671 = vunpack.c.h.b16 %v4187
    %v6672 = vunpack.c.l.b16 %v4188
    %v6673 = vunpack.c.h.b16 %v4188
    %v6674 = vunpack.c.l.b16 %v4189
    %v6675 = vunpack.c.h.b16 %v4189
    %v6676 = vunpack.c.l.b16 %v4190
    %v6677 = vunpack.c.h.b16 %v4190
    %v6678 = vunpack.c.l.b16 %v4191
    %v6679 = vunpack.c.h.b16 %v4191
    %v6680 = vunpack.c.l.b16 %v4192
    %v6681 = vunpack.c.h.b16 %v4192
    %v6682 = vunpack.c.l.b16 %v4193
    %v6683 = vunpack.c.h.b16 %v4193
    %v6684 = vunpack.c.l.b16 %v4194
    %v6685 = vunpack.c.h.b16 %v4194
    %v6686 = vunpack.c.l.b16 %v4195
    %v6687 = vunpack.c.h.b16 %v4195
    %v6688 = vunpack.c.l.b16 %v4196
    %v6689 = vunpack.c.h.b16 %v4196
    %v6690 = vunpack.c.l.b16 %v4197
    %v6691 = vunpack.c.h.b16 %v4197
    %v6692 = vunpack.c.l.b16 %v4198
    %v6693 = vunpack.c.h.b16 %v4198
    %v6694 = vunpack.c.l.b16 %v4199
    %v6695 = vunpack.c.h.b16 %v4199
    %v6696 = vunpack.c.l.b16 %v4200
    %v6697 = vunpack.c.h.b16 %v4200
    %v6698 = vunpack.c.l.b16 %v4201
    %v6699 = vunpack.c.h.b16 %v4201
    %v6700 = vunpack.c.l.b16 %v4202
    %v6701 = vunpack.c.h.b16 %v4202
    %v6702 = vunpack.c.l.b16 %v4203
    %v6703 = vunpack.c.h.b16 %v4203
    %v6704 = vunpack.c.l.b16 %v4204
    %v6705 = vunpack.c.h.b16 %v4204
    %v6706 = vunpack.c.l.b16 %v4205
    %v6707 = vunpack.c.h.b16 %v4205
    %v6708 = vunpack.c.l.b16 %v4206
    %v6709 = vunpack.c.h.b16 %v4206
    %v6710 = vunpack.c.l.b16 %v4207
    %v6711 = vunpack.c.h.b16 %v4207
    %v6712 = vunpack.c.l.b16 %v4208
    %v6713 = vunpack.c.h.b16 %v4208
    %v6714 = vunpack.c.l.b16 %v4209
    %v6715 = vunpack.c.h.b16 %v4209
    %v6716 = vunpack.c.l.b16 %v4210
    %v6717 = vunpack.c.h.b16 %v4210
    %v6718 = vunpack.c.l.b16 %v4211
    %v6719 = vunpack.c.h.b16 %v4211
    %v6720 = vunpack.c.l.b16 %v4212
    %v6721 = vunpack.c.h.b16 %v4212
    %v6722 = vunpack.c.l.b16 %v4213
    %v6723 = vunpack.c.h.b16 %v4213
    %v6724 = vunpack.c.l.b16 %v4214
    %v6725 = vunpack.c.h.b16 %v4214
    %v6726 = vunpack.c.l.b16 %v4215
    %v6727 = vunpack.c.h.b16 %v4215
    %v6728 = vunpack.c.l.b16 %v4216
    %v6729 = vunpack.c.h.b16 %v4216
    %v6730 = vunpack.c.l.b16 %v4217
    %v6731 = vunpack.c.h.b16 %v4217
    %v6732 = vunpack.c.l.b16 %v4218
    %v6733 = vunpack.c.h.b16 %v4218
    %v6734 = vunpack.c.l.b16 %v4219
    %v6735 = vunpack.c.h.b16 %v4219
    %v6736 = vunpack.c.l.b16 %v4220
    %v6737 = vunpack.c.h.b16 %v4220
    %v6738 = vunpack.c.l.b16 %v4221
    %v6739 = vunpack.c.h.b16 %v4221
    %v6740 = vunpack.c.l.b16 %v4222
    %v6741 = vunpack.c.h.b16 %v4222
    %v6742 = vunpack.c.l.b16 %v4223
    %v6743 = vunpack.c.h.b16 %v4223
    %v6744 = vunpack.c.l.b16 %v4224
    %v6745 = vunpack.c.h.b16 %v4224
    %v6746 = vunpack.c.l.b16 %v4225
    %v6747 = vunpack.c.h.b16 %v4225
    %v6748 = vunpack.c.l.b16 %v4226
    %v6749 = vunpack.c.h.b16 %v4226
    %v6750 = vunpack.c.l.b16 %v4227
    %v6751 = vunpack.c.h.b16 %v4227
    %v6752 = vunpack.c.l.b16 %v4228
    %v6753 = vunpack.c.h.b16 %v4228
    %v6754 = vunpack.c.l.b16 %v4229
    %v6755 = vunpack.c.h.b16 %v4229
    %v6756 = vunpack.c.l.b16 %v4230
    %v6757 = vunpack.c.h.b16 %v4230
    %v6758 = vunpack.c.l.b16 %v4231
    %v6759 = vunpack.c.h.b16 %v4231
    %v6760 = vunpack.c.l.b16 %v4232
    %v6761 = vunpack.c.h.b16 %v4232
    %v6762 = vunpack.c.l.b16 %v4233
    %v6763 = vunpack.c.h.b16 %v4233
    %v6764 = vunpack.c.l.b16 %v4234
    %v6765 = vunpack.c.h.b16 %v4234
    %v6766 = vunpack.c.l.b16 %v4235
    %v6767 = vunpack.c.h.b16 %v4235
    %v6768 = vunpack.c.l.b16 %v4236
    %v6769 = vunpack.c.h.b16 %v4236
    %v6770 = vunpack.c.l.b16 %v4237
    %v6771 = vunpack.c.h.b16 %v4237
    %v6772 = vunpack.c.l.b16 %v4238
    %v6773 = vunpack.c.h.b16 %v4238
    %v6774 = vunpack.c.l.b16 %v4239
    %v6775 = vunpack.c.h.b16 %v4239
    %v6776 = vunpack.c.l.b16 %v4240
    %v6777 = vunpack.c.h.b16 %v4240
    %v6778 = vunpack.c.l.b16 %v4241
    %v6779 = vunpack.c.h.b16 %v4241
    %v6780 = vunpack.c.l.b16 %v4242
    %v6781 = vunpack.c.h.b16 %v4242
    %v6782 = vunpack.c.l.b16 %v4243
    %v6783 = vunpack.c.h.b16 %v4243
    %v6784 = vunpack.c.l.b16 %v4244
    %v6785 = vunpack.c.h.b16 %v4244
    %v6786 = vunpack.c.l.b16 %v4245
    %v6787 = vunpack.c.h.b16 %v4245
    %v6788 = vunpack.c.l.b16 %v4246
    %v6789 = vunpack.c.h.b16 %v4246
    %v6790 = vunpack.c.l.b16 %v4247
    %v6791 = vunpack.c.h.b16 %v4247
    %v6792 = vunpack.c.l.b16 %v4248
    %v6793 = vunpack.c.h.b16 %v4248
    %v6794 = vunpack.c.l.b16 %v4249
    %v6795 = vunpack.c.h.b16 %v4249
    %v6796 = vunpack.c.l.b16 %v4250
    %v6797 = vunpack.c.h.b16 %v4250
    %v6798 = vunpack.c.l.b16 %v4251
    %v6799 = vunpack.c.h.b16 %v4251
    %v6800 = vunpack.c.l.b16 %v4252
    %v6801 = vunpack.c.h.b16 %v4252
    %v6802 = vunpack.c.l.b16 %v4253
    %v6803 = vunpack.c.h.b16 %v4253
    %v6804 = vunpack.c.l.b16 %v4254
    %v6805 = vunpack.c.h.b16 %v4254
    %v6806 = vunpack.c.l.b16 %v4255
    %v6807 = vunpack.c.h.b16 %v4255
    %v6808 = vunpack.c.l.b16 %v4256
    %v6809 = vunpack.c.h.b16 %v4256
    %v6810 = vunpack.c.l.b16 %v4257
    %v6811 = vunpack.c.h.b16 %v4257
    %v6812 = vunpack.c.l.b16 %v4258
    %v6813 = vunpack.c.h.b16 %v4258
    %v6814 = vunpack.c.l.b16 %v4259
    %v6815 = vunpack.c.h.b16 %v4259
    %v6816 = vunpack.c.l.b16 %v4260
    %v6817 = vunpack.c.h.b16 %v4260
    %v6818 = vunpack.c.l.b16 %v4261
    %v6819 = vunpack.c.h.b16 %v4261
    %v6820 = vunpack.c.l.b16 %v4262
    %v6821 = vunpack.c.h.b16 %v4262
    %v6822 = vunpack.c.l.b16 %v4263
    %v6823 = vunpack.c.h.b16 %v4263
    %v6824 = vunpack.c.l.b16 %v4264
    %v6825 = vunpack.c.h.b16 %v4264
    %v6826 = vunpack.c.l.b16 %v4265
    %v6827 = vunpack.c.h.b16 %v4265
    %v6828 = vunpack.c.l.b16 %v4266
    %v6829 = vunpack.c.h.b16 %v4266
    %v6830 = vunpack.c.l.b16 %v4267
    %v6831 = vunpack.c.h.b16 %v4267
    %v6832 = vunpack.c.l.b16 %v4268
    %v6833 = vunpack.c.h.b16 %v4268
    %v6834 = vunpack.c.l.b16 %v4269
    %v6835 = vunpack.c.h.b16 %v4269
    %v6836 = vunpack.c.l.b16 %v4270
    %v6837 = vunpack.c.h.b16 %v4270
    %v6838 = vunpack.c.l.b16 %v4271
    %v6839 = vunpack.c.h.b16 %v4271
    %v6840 = vunpack.c.l.b16 %v4272
    %v6841 = vunpack.c.h.b16 %v4272
    %v6842 = vunpack.c.l.b16 %v4273
    %v6843 = vunpack.c.h.b16 %v4273
    %v6844 = vunpack.c.l.b16 %v4274
    %v6845 = vunpack.c.h.b16 %v4274
    %v6846 = vunpack.c.l.b16 %v4275
    %v6847 = vunpack.c.h.b16 %v4275
    %v6848 = vunpack.c.l.b16 %v4276
    %v6849 = vunpack.c.h.b16 %v4276
    %v6850 = vunpack.c.l.b16 %v4277
    %v6851 = vunpack.c.h.b16 %v4277
    %v6852 = vunpack.c.l.b16 %v4278
    %v6853 = vunpack.c.h.b16 %v4278
    %v6854 = vunpack.c.l.b16 %v4279
    %v6855 = vunpack.c.h.b16 %v4279
    %v6856 = vunpack.c.l.b16 %v4280
    %v6857 = vunpack.c.h.b16 %v4280
    %v6858 = vunpack.c.l.b16 %v4281
    %v6859 = vunpack.c.h.b16 %v4281
    %v6860 = vunpack.c.l.b16 %v4282
    %v6861 = vunpack.c.h.b16 %v4282
    %v6862 = vunpack.c.l.b16 %v4283
    %v6863 = vunpack.c.h.b16 %v4283
    %v6864 = vunpack.c.l.b16 %v4284
    %v6865 = vunpack.c.h.b16 %v4284
    %v6866 = vunpack.c.l.b16 %v4285
    %v6867 = vunpack.c.h.b16 %v4285
    %v6868 = vunpack.c.l.b16 %v4286
    %v6869 = vunpack.c.h.b16 %v4286
    %v6870 = vunpack.c.l.b16 %v4287
    %v6871 = vunpack.c.h.b16 %v4287
    %v6872 = vunpack.c.l.b16 %v4288
    %v6873 = vunpack.c.h.b16 %v4288
    %v6874 = vunpack.c.l.b16 %v4289
    %v6875 = vunpack.c.h.b16 %v4289
    %v6876 = vunpack.c.l.b16 %v4290
    %v6877 = vunpack.c.h.b16 %v4290
    %v6878 = vunpack.c.l.b16 %v4291
    %v6879 = vunpack.c.h.b16 %v4291
    %v6880 = vunpack.c.l.b16 %v4292
    %v6881 = vunpack.c.h.b16 %v4292
    %v6882 = vunpack.c.l.b16 %v4293
    %v6883 = vunpack.c.h.b16 %v4293
    %v6884 = vunpack.c.l.b16 %v4294
    %v6885 = vunpack.c.h.b16 %v4294
    %v6886 = vunpack.c.l.b16 %v4295
    %v6887 = vunpack.c.h.b16 %v4295
    %v6888 = vunpack.c.l.b16 %v4296
    %v6889 = vunpack.c.h.b16 %v4296
    %v6890 = vunpack.c.l.b16 %v4297
    %v6891 = vunpack.c.h.b16 %v4297
    %v6892 = vunpack.c.l.b16 %v4298
    %v6893 = vunpack.c.h.b16 %v4298
    %v6894 = vunpack.c.l.b16 %v4299
    %v6895 = vunpack.c.h.b16 %v4299
    %v6896 = vunpack.c.l.b16 %v4300
    %v6897 = vunpack.c.h.b16 %v4300
    %v6898 = vunpack.c.l.b16 %v4301
    %v6899 = vunpack.c.h.b16 %v4301
    %v6900 = vunpack.c.l.b16 %v4302
    %v6901 = vunpack.c.h.b16 %v4302
    %v6902 = vunpack.c.l.b16 %v4303
    %v6903 = vunpack.c.h.b16 %v4303
    %v6904 = vunpack.c.l.b16 %v4304
    %v6905 = vunpack.c.h.b16 %v4304
    %v6906 = vunpack.c.l.b16 %v4305
    %v6907 = vunpack.c.h.b16 %v4305
    %v6908 = vunpack.c.l.b16 %v4306
    %v6909 = vunpack.c.h.b16 %v4306
    %v6910 = vunpack.c.l.b16 %v4307
    %v6911 = vunpack.c.h.b16 %v4307
    %v6912 = vunpack.c.l.b16 %v4308
    %v6913 = vunpack.c.h.b16 %v4308
    %v6914 = vunpack.c.l.b16 %v4309
    %v6915 = vunpack.c.h.b16 %v4309
    %v6916 = vunpack.c.l.b16 %v4310
    %v6917 = vunpack.c.h.b16 %v4310
    %v6918 = vunpack.c.l.b16 %v4311
    %v6919 = vunpack.c.h.b16 %v4311
    %v6920 = vunpack.c.l.b16 %v4312
    %v6921 = vunpack.c.h.b16 %v4312
    %v6922 = vunpack.c.l.b16 %v4313
    %v6923 = vunpack.c.h.b16 %v4313
    %v6924 = vunpack.c.l.b16 %v4314
    %v6925 = vunpack.c.h.b16 %v4314
    %v6926 = vunpack.c.l.b16 %v4315
    %v6927 = vunpack.c.h.b16 %v4315
    %v6928 = vunpack.c.l.b16 %v4316
    %v6929 = vunpack.c.h.b16 %v4316
    %v6930 = vunpack.c.l.b16 %v4317
    %v6931 = vunpack.c.h.b16 %v4317
    %v6932 = vunpack.c.l.b16 %v4318
    %v6933 = vunpack.c.h.b16 %v4318
    %v6934 = vunpack.c.l.b16 %v4319
    %v6935 = vunpack.c.h.b16 %v4319
    %v6936 = vunpack.c.l.b16 %v4320
    %v6937 = vunpack.c.h.b16 %v4320
    %v6938 = vunpack.c.l.b16 %v4321
    %v6939 = vunpack.c.h.b16 %v4321
    %v6940 = vunpack.c.l.b16 %v4322
    %v6941 = vunpack.c.h.b16 %v4322
    %v6942 = vunpack.c.l.b16 %v4323
    %v6943 = vunpack.c.h.b16 %v4323
    %v6944 = vunpack.c.l.b16 %v4324
    %v6945 = vunpack.c.h.b16 %v4324
    %v6946 = vunpack.c.l.b16 %v4325
    %v6947 = vunpack.c.h.b16 %v4325
    %v6948 = vunpack.c.l.b16 %v4326
    %v6949 = vunpack.c.h.b16 %v4326
    %v6950 = vunpack.c.l.b16 %v4327
    %v6951 = vunpack.c.h.b16 %v4327
    %v6952 = vunpack.c.l.b16 %v4328
    %v6953 = vunpack.c.h.b16 %v4328
    %v6954 = vunpack.c.l.b16 %v4329
    %v6955 = vunpack.c.h.b16 %v4329
    %v6956 = vunpack.c.l.b16 %v4330
    %v6957 = vunpack.c.h.b16 %v4330
    %v6958 = vunpack.c.l.b16 %v4331
    %v6959 = vunpack.c.h.b16 %v4331
    %v6960 = vunpack.c.l.b16 %v4332
    %v6961 = vunpack.c.h.b16 %v4332
    %v6962 = vunpack.c.l.b16 %v4333
    %v6963 = vunpack.c.h.b16 %v4333
    %v6964 = vunpack.c.l.b16 %v4334
    %v6965 = vunpack.c.h.b16 %v4334
    %v6966 = vunpack.c.l.b16 %v4335
    %v6967 = vunpack.c.h.b16 %v4335
    %v6968 = vunpack.c.l.b16 %v4336
    %v6969 = vunpack.c.h.b16 %v4336
    %v6970 = vunpack.c.l.b16 %v4337
    %v6971 = vunpack.c.h.b16 %v4337
    %v6972 = vunpack.c.l.b16 %v4338
    %v6973 = vunpack.c.h.b16 %v4338
    %v6974 = vunpack.c.l.b16 %v4339
    %v6975 = vunpack.c.h.b16 %v4339
    %v6976 = vunpack.c.l.b16 %v4340
    %v6977 = vunpack.c.h.b16 %v4340
    %v6978 = vunpack.c.l.b16 %v4341
    %v6979 = vunpack.c.h.b16 %v4341
    %v6980 = vunpack.c.l.b16 %v4342
    %v6981 = vunpack.c.h.b16 %v4342
    %v6982 = vunpack.c.l.b16 %v4343
    %v6983 = vunpack.c.h.b16 %v4343
    %v6984 = vunpack.c.l.b16 %v4344
    %v6985 = vunpack.c.h.b16 %v4344
    %v6986 = vunpack.c.l.b16 %v4345
    %v6987 = vunpack.c.h.b16 %v4345
    %v6988 = vunpack.c.l.b16 %v4346
    %v6989 = vunpack.c.h.b16 %v4346
    %v6990 = vunpack.c.l.b16 %v4347
    %v6991 = vunpack.c.h.b16 %v4347
    %v6992 = vunpack.c.l.b16 %v4348
    %v6993 = vunpack.c.h.b16 %v4348
    %v6994 = vunpack.c.l.b16 %v4349
    %v6995 = vunpack.c.h.b16 %v4349
    %v6996 = vunpack.c.l.b16 %v4350
    %v6997 = vunpack.c.h.b16 %v4350
    %v6998 = vunpack.c.l.b16 %v4351
    %v6999 = vunpack.c.h.b16 %v4351
    %v7000 = vunpack.c.l.b16 %v4352
    %v7001 = vunpack.c.h.b16 %v4352
    %v7002 = vunpack.c.l.b16 %v4353
    %v7003 = vunpack.c.h.b16 %v4353
    %v7004 = vunpack.c.l.b16 %v4354
    %v7005 = vunpack.c.h.b16 %v4354
    %v7006 = vunpack.c.l.b16 %v4355
    %v7007 = vunpack.c.h.b16 %v4355
    %v7008 = vunpack.c.l.b16 %v4356
    %v7009 = vunpack.c.h.b16 %v4356
    %v7010 = vunpack.c.l.b16 %v4357
    %v7011 = vunpack.c.h.b16 %v4357
    %v7012 = vunpack.c.l.b16 %v4358
    %v7013 = vunpack.c.h.b16 %v4358
    %v7014 = vunpack.c.l.b16 %v4359
    %v7015 = vunpack.c.h.b16 %v4359
    %v7016 = vunpack.c.l.b16 %v4360
    %v7017 = vunpack.c.h.b16 %v4360
    %v7018 = vunpack.c.l.b16 %v4361
    %v7019 = vunpack.c.h.b16 %v4361
    %v7020 = vunpack.c.l.b16 %v4362
    %v7021 = vunpack.c.h.b16 %v4362
    %v7022 = vunpack.c.l.b16 %v4363
    %v7023 = vunpack.c.h.b16 %v4363
    %v7024 = vunpack.c.l.b16 %v4364
    %v7025 = vunpack.c.h.b16 %v4364
    %v7026 = vunpack.c.l.b16 %v4365
    %v7027 = vunpack.c.h.b16 %v4365
    %v7028 = vunpack.c.l.b16 %v4366
    %v7029 = vunpack.c.h.b16 %v4366
    %v7030 = vunpack.c.l.b16 %v4367
    %v7031 = vunpack.c.h.b16 %v4367
    %v7032 = vunpack.c.l.b16 %v4368
    %v7033 = vunpack.c.h.b16 %v4368
    %v7034 = vunpack.c.l.b16 %v4369
    %v7035 = vunpack.c.h.b16 %v4369
    %v7036 = vunpack.c.l.b16 %v4370
    %v7037 = vunpack.c.h.b16 %v4370
    %v7038 = vunpack.c.l.b16 %v4371
    %v7039 = vunpack.c.h.b16 %v4371
    %v7040 = vunpack.c.l.b16 %v4372
    %v7041 = vunpack.c.h.b16 %v4372
    %v7042 = vunpack.c.l.b16 %v4373
    %v7043 = vunpack.c.h.b16 %v4373
    %v7044 = vunpack.c.l.b16 %v4374
    %v7045 = vunpack.c.h.b16 %v4374
    %v7046 = vunpack.c.l.b16 %v4375
    %v7047 = vunpack.c.h.b16 %v4375
    %v7048 = vunpack.c.l.b16 %v4376
    %v7049 = vunpack.c.h.b16 %v4376
    %v7050 = vunpack.c.l.b16 %v4377
    %v7051 = vunpack.c.h.b16 %v4377
    %v7052 = vunpack.c.l.b16 %v4378
    %v7053 = vunpack.c.h.b16 %v4378
    %v7054 = vunpack.c.l.b16 %v4379
    %v7055 = vunpack.c.h.b16 %v4379
    %v7056 = vunpack.c.l.b16 %v4380
    %v7057 = vunpack.c.h.b16 %v4380
    %v7058 = vunpack.c.l.b16 %v4381
    %v7059 = vunpack.c.h.b16 %v4381
    %v7060 = vunpack.c.l.b16 %v4382
    %v7061 = vunpack.c.h.b16 %v4382
    %v7062 = vunpack.c.l.b16 %v4383
    %v7063 = vunpack.c.h.b16 %v4383
    %v7064 = vunpack.c.l.b16 %v4384
    %v7065 = vunpack.c.h.b16 %v4384
    %v7066 = vunpack.c.l.b16 %v4385
    %v7067 = vunpack.c.h.b16 %v4385
    %v7068 = vunpack.c.l.b16 %v4386
    %v7069 = vunpack.c.h.b16 %v4386
    %v7070 = vunpack.c.l.b16 %v4387
    %v7071 = vunpack.c.h.b16 %v4387
    %v7072 = vunpack.c.l.b16 %v4388
    %v7073 = vunpack.c.h.b16 %v4388
    %v7074 = vunpack.c.l.b16 %v4389
    %v7075 = vunpack.c.h.b16 %v4389
    %v7076 = vunpack.c.l.b16 %v4390
    %v7077 = vunpack.c.h.b16 %v4390
    %v7078 = vunpack.c.l.b16 %v4391
    %v7079 = vunpack.c.h.b16 %v4391
    %v7080 = vunpack.c.l.b16 %v4392
    %v7081 = vunpack.c.h.b16 %v4392
    %v7082 = vunpack.c.l.b16 %v4393
    %v7083 = vunpack.c.h.b16 %v4393
    %v7084 = vunpack.c.l.b16 %v4394
    %v7085 = vunpack.c.h.b16 %v4394
    %v7086 = vunpack.c.l.b16 %v4395
    %v7087 = vunpack.c.h.b16 %v4395
    %v7088 = vunpack.c.l.b16 %v4396
    %v7089 = vunpack.c.h.b16 %v4396
    %v7090 = vunpack.c.l.b16 %v4397
    %v7091 = vunpack.c.h.b16 %v4397
    %v7092 = vunpack.c.l.b16 %v4398
    %v7093 = vunpack.c.h.b16 %v4398
    %v7094 = vunpack.c.l.b16 %v4399
    %v7095 = vunpack.c.h.b16 %v4399
    %v7096 = vunpack.c.l.b16 %v4400
    %v7097 = vunpack.c.h.b16 %v4400
    %v7098 = vunpack.c.l.b16 %v4401
    %v7099 = vunpack.c.h.b16 %v4401
    %v7100 = vunpack.c.l.b16 %v4402
    %v7101 = vunpack.c.h.b16 %v4402
    %v7102 = vunpack.c.l.b16 %v4403
    %v7103 = vunpack.c.h.b16 %v4403
    %v7104 = vunpack.c.l.b16 %v4404
    %v7105 = vunpack.c.h.b16 %v4404
    %v7106 = vunpack.c.l.b16 %v4405
    %v7107 = vunpack.c.h.b16 %v4405
    %v7108 = vunpack.c.l.b16 %v4406
    %v7109 = vunpack.c.h.b16 %v4406
    %v7110 = vunpack.c.l.b16 %v4407
    %v7111 = vunpack.c.h.b16 %v4407
    %v7112 = vunpack.c.l.b16 %v4408
    %v7113 = vunpack.c.h.b16 %v4408
    %v7114 = vunpack.c.l.b16 %v4409
    %v7115 = vunpack.c.h.b16 %v4409
    %v7116 = vunpack.c.l.b16 %v4410
    %v7117 = vunpack.c.h.b16 %v4410
    %v7118 = vunpack.c.l.b16 %v4411
    %v7119 = vunpack.c.h.b16 %v4411
    %v7120 = vunpack.c.l.b16 %v4412
    %v7121 = vunpack.c.h.b16 %v4412
    %v7122 = vunpack.c.l.b16 %v4413
    %v7123 = vunpack.c.h.b16 %v4413
    %v7124 = vunpack.c.l.b16 %v4414
    %v7125 = vunpack.c.h.b16 %v4414
    %v7126 = vunpack.c.l.b16 %v4415
    %v7127 = vunpack.c.h.b16 %v4415
    %v7128 = vunpack.c.l.b16 %v4416
    %v7129 = vunpack.c.h.b16 %v4416
    %v7130 = vunpack.c.l.b16 %v4417
    %v7131 = vunpack.c.h.b16 %v4417
    %v7132 = vunpack.c.l.b16 %v4418
    %v7133 = vunpack.c.h.b16 %v4418
    %v7134 = vunpack.c.l.b16 %v4419
    %v7135 = vunpack.c.h.b16 %v4419
    %v7136 = vunpack.c.l.b16 %v4420
    %v7137 = vunpack.c.h.b16 %v4420
    %v7138 = vunpack.c.l.b16 %v4421
    %v7139 = vunpack.c.h.b16 %v4421
    %v7140 = vunpack.c.l.b16 %v4422
    %v7141 = vunpack.c.h.b16 %v4422
    %v7142 = vunpack.c.l.b16 %v4423
    %v7143 = vunpack.c.h.b16 %v4423
    %v7144 = vunpack.c.l.b16 %v4424
    %v7145 = vunpack.c.h.b16 %v4424
    %v7146 = vunpack.c.l.b16 %v4425
    %v7147 = vunpack.c.h.b16 %v4425
    %v7148 = vunpack.c.l.b16 %v4426
    %v7149 = vunpack.c.h.b16 %v4426
    %v7150 = vunpack.c.l.b16 %v4427
    %v7151 = vunpack.c.h.b16 %v4427
    %v7152 = vunpack.c.l.b16 %v4428
    %v7153 = vunpack.c.h.b16 %v4428
    %v7154 = vunpack.c.l.b16 %v4429
    %v7155 = vunpack.c.h.b16 %v4429
    %v7156 = vunpack.c.l.b16 %v4430
    %v7157 = vunpack.c.h.b16 %v4430
    %v7158 = vunpack.c.l.b16 %v4431
    %v7159 = vunpack.c.h.b16 %v4431
    %v7160 = vunpack.c.l.b16 %v4432
    %v7161 = vunpack.c.h.b16 %v4432
    %v7162 = vunpack.c.l.b16 %v4433
    %v7163 = vunpack.c.h.b16 %v4433
    %v7164 = vunpack.c.l.b16 %v4434
    %v7165 = vunpack.c.h.b16 %v4434
    %v7166 = vunpack.c.l.b16 %v4435
    %v7167 = vunpack.c.h.b16 %v4435
    %v7168 = vunpack.c.l.b16 %v4436
    %v7169 = vunpack.c.h.b16 %v4436
    %v7170 = vunpack.c.l.b16 %v4437
    %v7171 = vunpack.c.h.b16 %v4437
    %v7172 = vunpack.c.l.b16 %v4438
    %v7173 = vunpack.c.h.b16 %v4438
    %v7174 = vunpack.c.l.b16 %v4439
    %v7175 = vunpack.c.h.b16 %v4439
    %v7176 = vunpack.c.l.b16 %v4440
    %v7177 = vunpack.c.h.b16 %v4440
    %v7178 = vunpack.c.l.b16 %v4441
    %v7179 = vunpack.c.h.b16 %v4441
    %v7180 = vunpack.c.l.b16 %v4442
    %v7181 = vunpack.c.h.b16 %v4442
    %v7182 = vunpack.c.l.b16 %v4443
    %v7183 = vunpack.c.h.b16 %v4443
    %v7184 = vunpack.c.l.b16 %v4444
    %v7185 = vunpack.c.h.b16 %v4444
    %v7186 = vunpack.c.l.b16 %v4445
    %v7187 = vunpack.c.h.b16 %v4445
    %v7188 = vunpack.c.l.b16 %v4446
    %v7189 = vunpack.c.h.b16 %v4446
    %v7190 = vunpack.c.l.b16 %v4447
    %v7191 = vunpack.c.h.b16 %v4447
    %v7192 = vunpack.c.l.b16 %v4448
    %v7193 = vunpack.c.h.b16 %v4448
    %v7194 = vunpack.c.l.b16 %v4449
    %v7195 = vunpack.c.h.b16 %v4449
    %v7196 = vunpack.c.l.b16 %v4450
    %v7197 = vunpack.c.h.b16 %v4450
    %v7198 = vunpack.c.l.b16 %v4451
    %v7199 = vunpack.c.h.b16 %v4451
    %v7200 = vunpack.c.l.b16 %v4452
    %v7201 = vunpack.c.h.b16 %v4452
    %v7202 = vunpack.c.l.b16 %v4453
    %v7203 = vunpack.c.h.b16 %v4453
    %v7204 = vunpack.c.l.b16 %v4454
    %v7205 = vunpack.c.h.b16 %v4454
    %v7206 = vunpack.c.l.b16 %v4455
    %v7207 = vunpack.c.h.b16 %v4455
    %v7208 = vunpack.c.l.b16 %v4456
    %v7209 = vunpack.c.h.b16 %v4456
    %v7210 = vunpack.c.l.b16 %v4457
    %v7211 = vunpack.c.h.b16 %v4457
    %v7212 = vunpack.c.l.b16 %v4458
    %v7213 = vunpack.c.h.b16 %v4458
    %v7214 = vunpack.c.l.b16 %v4459
    %v7215 = vunpack.c.h.b16 %v4459
    %v7216 = vunpack.c.l.b16 %v4460
    %v7217 = vunpack.c.h.b16 %v4460
    %v7218 = vunpack.c.l.b16 %v4461
    %v7219 = vunpack.c.h.b16 %v4461
    %v7220 = vunpack.c.l.b16 %v4462
    %v7221 = vunpack.c.h.b16 %v4462
    %v7222 = vunpack.c.l.b16 %v4463
    %v7223 = vunpack.c.h.b16 %v4463
    %v7224 = vunpack.c.l.b16 %v4464
    %v7225 = vunpack.c.h.b16 %v4464
    %v7226 = vunpack.c.l.b16 %v4465
    %v7227 = vunpack.c.h.b16 %v4465
    %v7228 = vunpack.c.l.b16 %v4466
    %v7229 = vunpack.c.h.b16 %v4466
    %v7230 = vunpack.c.l.b16 %v4467
    %v7231 = vunpack.c.h.b16 %v4467
    %v7232 = vunpack.c.l.b16 %v4468
    %v7233 = vunpack.c.h.b16 %v4468
    %v7234 = vunpack.c.l.b16 %v4469
    %v7235 = vunpack.c.h.b16 %v4469
    %v7236 = vunpack.c.l.b16 %v4470
    %v7237 = vunpack.c.h.b16 %v4470
    %v7238 = vunpack.c.l.b16 %v4471
    %v7239 = vunpack.c.h.b16 %v4471
    %v7240 = vunpack.c.l.b16 %v4472
    %v7241 = vunpack.c.h.b16 %v4472
    %v7242 = vunpack.c.l.b16 %v4473
    %v7243 = vunpack.c.h.b16 %v4473
    %v7244 = vunpack.c.l.b16 %v4474
    %v7245 = vunpack.c.h.b16 %v4474
    %v7246 = vunpack.c.l.b16 %v4475
    %v7247 = vunpack.c.h.b16 %v4475
    %v7248 = vunpack.c.l.b16 %v4476
    %v7249 = vunpack.c.h.b16 %v4476
    %v7250 = vunpack.c.l.b16 %v4477
    %v7251 = vunpack.c.h.b16 %v4477
    %v7252 = vunpack.c.l.b16 %v4478
    %v7253 = vunpack.c.h.b16 %v4478
    %v7254 = vunpack.c.l.b16 %v4479
    %v7255 = vunpack.c.h.b16 %v4479
    %v7256 = vunpack.c.l.b16 %v4480
    %v7257 = vunpack.c.h.b16 %v4480
    %v7258 = vunpack.c.l.b16 %v4481
    %v7259 = vunpack.c.h.b16 %v4481
    %v7260 = vunpack.c.l.b16 %v4482
    %v7261 = vunpack.c.h.b16 %v4482
    %v7262 = vunpack.c.l.b16 %v4483
    %v7263 = vunpack.c.h.b16 %v4483
    %v7264 = vunpack.c.l.b16 %v4484
    %v7265 = vunpack.c.h.b16 %v4484
    %v7266 = vunpack.c.l.b16 %v4485
    %v7267 = vunpack.c.h.b16 %v4485
    %v7268 = vunpack.c.l.b16 %v4486
    %v7269 = vunpack.c.h.b16 %v4486
    %v7270 = vunpack.c.l.b16 %v4487
    %v7271 = vunpack.c.h.b16 %v4487
    %v7272 = vunpack.c.l.b16 %v4488
    %v7273 = vunpack.c.h.b16 %v4488
    %v7274 = vunpack.c.l.b16 %v4489
    %v7275 = vunpack.c.h.b16 %v4489
    %v7276 = vunpack.c.l.b16 %v4490
    %v7277 = vunpack.c.h.b16 %v4490
    %v7278 = vunpack.c.l.b16 %v4491
    %v7279 = vunpack.c.h.b16 %v4491
    %v7280 = vunpack.c.l.b16 %v4492
    %v7281 = vunpack.c.h.b16 %v4492
    %v7282 = vunpack.c.l.b16 %v4493
    %v7283 = vunpack.c.h.b16 %v4493
    %v7284 = vunpack.c.l.b16 %v4494
    %v7285 = vunpack.c.h.b16 %v4494
    %v7286 = vunpack.c.l.b16 %v4495
    %v7287 = vunpack.c.h.b16 %v4495
    %v7288 = vunpack.c.l.b16 %v4496
    %v7289 = vunpack.c.h.b16 %v4496
    %v7290 = vunpack.c.l.b16 %v4497
    %v7291 = vunpack.c.h.b16 %v4497
    %v7292 = vunpack.c.l.b16 %v4498
    %v7293 = vunpack.c.h.b16 %v4498
    %v7294 = vunpack.c.l.b16 %v4499
    %v7295 = vunpack.c.h.b16 %v4499
    %v7296 = vunpack.c.l.b16 %v4500
    %v7297 = vunpack.c.h.b16 %v4500
    %v7298 = vunpack.c.l.b16 %v4501
    %v7299 = vunpack.c.h.b16 %v4501
    %v7300 = vunpack.c.l.b16 %v4502
    %v7301 = vunpack.c.h.b16 %v4502
    %v7302 = vunpack.c.l.b16 %v4503
    %v7303 = vunpack.c.h.b16 %v4503
    %v7304 = vunpack.c.l.b16 %v4504
    %v7305 = vunpack.c.h.b16 %v4504
    %v7306 = vunpack.c.l.b16 %v4505
    %v7307 = vunpack.c.h.b16 %v4505
    %v7308 = vunpack.c.l.b16 %v4506
    %v7309 = vunpack.c.h.b16 %v4506
    %v7310 = vunpack.c.l.b16 %v4507
    %v7311 = vunpack.c.h.b16 %v4507
    %v7312 = vunpack.c.l.b16 %v4508
    %v7313 = vunpack.c.h.b16 %v4508
    %v7314 = vunpack.c.l.b16 %v4509
    %v7315 = vunpack.c.h.b16 %v4509
    %v7316 = vunpack.c.l.b16 %v4510
    %v7317 = vunpack.c.h.b16 %v4510
    %v7318 = vunpack.c.l.b16 %v4511
    %v7319 = vunpack.c.h.b16 %v4511
    %v7320 = vunpack.c.l.b16 %v4512
    %v7321 = vunpack.c.h.b16 %v4512
    %v7322 = vunpack.c.l.b16 %v4513
    %v7323 = vunpack.c.h.b16 %v4513
    %v7324 = vunpack.c.l.b16 %v4514
    %v7325 = vunpack.c.h.b16 %v4514
    %v7326 = vunpack.c.l.b16 %v4515
    %v7327 = vunpack.c.h.b16 %v4515
    %v7328 = vunpack.c.l.b16 %v4516
    %v7329 = vunpack.c.h.b16 %v4516
    %v7330 = vunpack.c.l.b16 %v4517
    %v7331 = vunpack.c.h.b16 %v4517
    %v7332 = vunpack.c.l.b16 %v4518
    %v7333 = vunpack.c.h.b16 %v4518
    %v7334 = vunpack.c.l.b16 %v4519
    %v7335 = vunpack.c.h.b16 %v4519
    %v7336 = vunpack.c.l.b16 %v4520
    %v7337 = vunpack.c.h.b16 %v4520
    %v7338 = vunpack.c.l.b16 %v4521
    %v7339 = vunpack.c.h.b16 %v4521
    %v7340 = vunpack.c.l.b16 %v4522
    %v7341 = vunpack.c.h.b16 %v4522
    %v7342 = vunpack.c.l.b16 %v4523
    %v7343 = vunpack.c.h.b16 %v4523
    %v7344 = vunpack.c.l.b16 %v4524
    %v7345 = vunpack.c.h.b16 %v4524
    %v7346 = vunpack.c.l.b16 %v4525
    %v7347 = vunpack.c.h.b16 %v4525
    %v7348 = vunpack.c.l.b16 %v4526
    %v7349 = vunpack.c.h.b16 %v4526
    %v7350 = vunpack.c.l.b16 %v4527
    %v7351 = vunpack.c.h.b16 %v4527
    %v7352 = vunpack.c.l.b16 %v4528
    %v7353 = vunpack.c.h.b16 %v4528
    %v7354 = vunpack.c.l.b16 %v4529
    %v7355 = vunpack.c.h.b16 %v4529
    %v7356 = vunpack.c.l.b16 %v4530
    %v7357 = vunpack.c.h.b16 %v4530
    %v7358 = vunpack.c.l.b16 %v4531
    %v7359 = vunpack.c.h.b16 %v4531
    %v7360 = vunpack.c.l.b16 %v4532
    %v7361 = vunpack.c.h.b16 %v4532
    %v7362 = vunpack.c.l.b16 %v4533
    %v7363 = vunpack.c.h.b16 %v4533
    %v7364 = vunpack.c.l.b16 %v4534
    %v7365 = vunpack.c.h.b16 %v4534
    %v7366 = vunpack.c.l.b16 %v4535
    %v7367 = vunpack.c.h.b16 %v4535
    %v7368 = vunpack.c.l.b16 %v4536
    %v7369 = vunpack.c.h.b16 %v4536
    %v7370 = vunpack.c.l.b16 %v4537
    %v7371 = vunpack.c.h.b16 %v4537
    %v7372 = vunpack.c.l.b16 %v4538
    %v7373 = vunpack.c.h.b16 %v4538
    %v7374 = vunpack.c.l.b16 %v4539
    %v7375 = vunpack.c.h.b16 %v4539
    %v7376 = vunpack.c.l.b16 %v4540
    %v7377 = vunpack.c.h.b16 %v4540
    %v7378 = vunpack.c.l.b16 %v4541
    %v7379 = vunpack.c.h.b16 %v4541
    %v7380 = vunpack.c.l.b16 %v4542
    %v7381 = vunpack.c.h.b16 %v4542
    %v7382 = vunpack.c.l.b16 %v4543
    %v7383 = vunpack.c.h.b16 %v4543
    %v7384 = vunpack.c.l.b16 %v4544
    %v7385 = vunpack.c.h.b16 %v4544
    %v7386 = vunpack.c.l.b16 %v4545
    %v7387 = vunpack.c.h.b16 %v4545
    %v7388 = vunpack.c.l.b16 %v4546
    %v7389 = vunpack.c.h.b16 %v4546
    %v7390 = vunpack.c.l.b16 %v4547
    %v7391 = vunpack.c.h.b16 %v4547
    %v7392 = vunpack.c.l.b16 %v4548
    %v7393 = vunpack.c.h.b16 %v4548
    %v7394 = vunpack.c.l.b16 %v4549
    %v7395 = vunpack.c.h.b16 %v4549
    %v7396 = vunpack.c.l.b16 %v4550
    %v7397 = vunpack.c.h.b16 %v4550
    %v7398 = vunpack.c.l.b16 %v4551
    %v7399 = vunpack.c.h.b16 %v4551
    %v7400 = vunpack.c.l.b16 %v4552
    %v7401 = vunpack.c.h.b16 %v4552
    %v7402 = vunpack.c.l.b16 %v4553
    %v7403 = vunpack.c.h.b16 %v4553
    %v7404 = vunpack.c.l.b16 %v4554
    %v7405 = vunpack.c.h.b16 %v4554
    %v7406 = vunpack.c.l.b16 %v4555
    %v7407 = vunpack.c.h.b16 %v4555
    %v7408 = vunpack.c.l.b16 %v4556
    %v7409 = vunpack.c.h.b16 %v4556
    %v7410 = vunpack.c.l.b16 %v4557
    %v7411 = vunpack.c.h.b16 %v4557
    %v7412 = vpack.c.b16 %v5528, %v5524
    %v7413 = vpack.c.b16 %v5529, %v5525
    %v7414 = vpack.c.b16 %v5530, %v5526
    %v7415 = vpack.c.b16 %v5531, %v5527
    %v7416 = vpack.c.b16 %v5536, %v5532
    %v7417 = vpack.c.b16 %v5537, %v5533
    %v7418 = vpack.c.b16 %v5538, %v5534
    %v7419 = vpack.c.b16 %v5539, %v5535
    %v7420 = vpack.c.b16 %v5544, %v5540
    %v7421 = vpack.c.b16 %v5545, %v5541
    %v7422 = vpack.c.b16 %v5546, %v5542
    %v7423 = vpack.c.b16 %v5547, %v5543
    %v7424 = vpack.c.b16 %v5552, %v5548
    %v7425 = vpack.c.b16 %v5553, %v5549
    %v7426 = vpack.c.b16 %v5554, %v5550
    %v7427 = vpack.c.b16 %v5555, %v5551
    %v7428 = vpack.c.b16 %v5560, %v5556
    %v7429 = vpack.c.b16 %v5561, %v5557
    %v7430 = vpack.c.b16 %v5562, %v5558
    %v7431 = vpack.c.b16 %v5563, %v5559
    %v7432 = vpack.c.b16 %v5568, %v5564
    %v7433 = vpack.c.b16 %v5569, %v5565
    %v7434 = vpack.c.b16 %v5570, %v5566
    %v7435 = vpack.c.b16 %v5571, %v5567
    %v7436 = vpack.c.b16 %v5576, %v5572
    %v7437 = vpack.c.b16 %v5577, %v5573
    %v7438 = vpack.c.b16 %v5578, %v5574
    %v7439 = vpack.c.b16 %v5579, %v5575
    %v7440 = vpack.c.b16 %v5584, %v5580
    %v7441 = vpack.c.b16 %v5585, %v5581
    %v7442 = vpack.c.b16 %v5586, %v5582
    %v7443 = vpack.c.b16 %v5587, %v5583
    %v7444 = vpack.c.b16 %v5592, %v5588
    %v7445 = vpack.c.b16 %v5593, %v5589
    %v7446 = vpack.c.b16 %v5594, %v5590
    %v7447 = vpack.c.b16 %v5595, %v5591
    %v7448 = vpack.c.b16 %v5600, %v5596
    %v7449 = vpack.c.b16 %v5601, %v5597
    %v7450 = vpack.c.b16 %v5602, %v5598
    %v7451 = vpack.c.b16 %v5603, %v5599
    %v7452 = vpack.c.b16 %v5608, %v5604
    %v7453 = vpack.c.b16 %v5609, %v5605
    %v7454 = vpack.c.b16 %v5610, %v5606
    %v7455 = vpack.c.b16 %v5611, %v5607
    %v7456 = vpack.c.b16 %v5616, %v5612
    %v7457 = vpack.c.b16 %v5617, %v5613
    %v7458 = vpack.c.b16 %v5618, %v5614
    %v7459 = vpack.c.b16 %v5619, %v5615
    %v7460 = vpack.c.b16 %v5624, %v5620
    %v7461 = vpack.c.b16 %v5625, %v5621
    %v7462 = vpack.c.b16 %v5626, %v5622
    %v7463 = vpack.c.b16 %v5627, %v5623
    %v7464 = vpack.c.b16 %v5632, %v5628
    %v7465 = vpack.c.b16 %v5633, %v5629
    %v7466 = vpack.c.b16 %v5634, %v5630
    %v7467 = vpack.c.b16 %v5635, %v5631
    %v7468 = vpack.c.b16 %v5640, %v5636
    %v7469 = vpack.c.b16 %v5641, %v5637
    %v7470 = vpack.c.b16 %v5642, %v5638
    %v7471 = vpack.c.b16 %v5643, %v5639
    %v7472 = vpack.c.b16 %v5648, %v5644
    %v7473 = vpack.c.b16 %v5649, %v5645
    %v7474 = vpack.c.b16 %v5650, %v5646
    %v7475 = vpack.c.b16 %v5651, %v5647
    %v7476 = vpack.c.b16 %v5656, %v5652
    %v7477 = vpack.c.b16 %v5657, %v5653
    %v7478 = vpack.c.b16 %v5658, %v5654
    %v7479 = vpack.c.b16 %v5659, %v5655
    %v7480 = vpack.c.b16 %v5664, %v5660
    %v7481 = vpack.c.b16 %v5665, %v5661
    %v7482 = vpack.c.b16 %v5666, %v5662
    %v7483 = vpack.c.b16 %v5667, %v5663
    %v7484 = vpack.c.b16 %v5672, %v5668
    %v7485 = vpack.c.b16 %v5673, %v5669
    %v7486 = vpack.c.b16 %v5674, %v5670
    %v7487 = vpack.c.b16 %v5675, %v5671
    %v7488 = vpack.c.b16 %v5680, %v5676
    %v7489 = vpack.c.b16 %v5681, %v5677
    %v7490 = vpack.c.b16 %v5682, %v5678
    %v7491 = vpack.c.b16 %v5683, %v5679
    %v7492 = vpack.c.b16 %v5688, %v5684
    %v7493 = vpack.c.b16 %v5689, %v5685
    %v7494 = vpack.c.b16 %v5690, %v5686
    %v7495 = vpack.c.b16 %v5691, %v5687
    %v7496 = vpack.c.b16 %v5696, %v5692
    %v7497 = vpack.c.b16 %v5697, %v5693
    %v7498 = vpack.c.b16 %v5698, %v5694
    %v7499 = vpack.c.b16 %v5699, %v5695
    %v7500 = vpack.c.b16 %v5704, %v5700
    %v7501 = vpack.c.b16 %v5705, %v5701
    %v7502 = vpack.c.b16 %v5706, %v5702
    %v7503 = vpack.c.b16 %v5707, %v5703
    %v7504 = vpack.c.b16 %v5712, %v5708
    %v7505 = vpack.c.b16 %v5713, %v5709
    %v7506 = vpack.c.b16 %v5714, %v5710
    %v7507 = vpack.c.b16 %v5715, %v5711
    %v7508 = vpack.c.b16 %v5720, %v5716
    %v7509 = vpack.c.b16 %v5721, %v5717
    %v7510 = vpack.c.b16 %v5722, %v5718
    %v7511 = vpack.c.b16 %v5723, %v5719
    %v7512 = vpack.c.b16 %v5728, %v5724
    %v7513 = vpack.c.b16 %v5729, %v5725
    %v7514 = vpack.c.b16 %v5730, %v5726
    %v7515 = vpack.c.b16 %v5731, %v5727
    %v7516 = vpack.c.b16 %v5736, %v5732
    %v7517 = vpack.c.b16 %v5737, %v5733
    %v7518 = vpack.c.b16 %v5738, %v5734
    %v7519 = vpack.c.b16 %v5739, %v5735
    %v7520 = vpack.c.b16 %v5744, %v5740
    %v7521 = vpack.c.b16 %v5745, %v5741
    %v7522 = vpack.c.b16 %v5746, %v5742
    %v7523 = vpack.c.b16 %v5747, %v5743
    %v7524 = vpack.c.b16 %v5752, %v5748
    %v7525 = vpack.c.b16 %v5753, %v5749
    %v7526 = vpack.c.b16 %v5754, %v5750
    %v7527 = vpack.c.b16 %v5755, %v5751
    %v7528 = vpack.c.b16 %v5760, %v5756
    %v7529 = vpack.c.b16 %v5761, %v5757
    %v7530 = vpack.c.b16 %v5762, %v5758
    %v7531 = vpack.c.b16 %v5763, %v5759
    %v7532 = vpack.c.b16 %v5768, %v5764
    %v7533 = vpack.c.b16 %v5769, %v5765
    %v7534 = vpack.c.b16 %v5770, %v5766
    %v7535 = vpack.c.b16 %v5771, %v5767
    %v7536 = vpack.c.b16 %v5776, %v5772
    %v7537 = vpack.c.b16 %v5777, %v5773
    %v7538 = vpack.c.b16 %v5778, %v5774
    %v7539 = vpack.c.b16 %v5779, %v5775
    %v7540 = vpack.c.b16 %v5784, %v5780
    %v7541 = vpack.c.b16 %v5785, %v5781
    %v7542 = vpack.c.b16 %v5786, %v5782
    %v7543 = vpack.c.b16 %v5787, %v5783
    %v7544 = vpack.c.b16 %v5792, %v5788
    %v7545 = vpack.c.b16 %v5793, %v5789
    %v7546 = vpack.c.b16 %v5794, %v5790
    %v7547 = vpack.c.b16 %v5795, %v5791
    %v7548 = vpack.c.b16 %v5800, %v5796
    %v7549 = vpack.c.b16 %v5801, %v5797
    %v7550 = vpack.c.b16 %v5802, %v5798
    %v7551 = vpack.c.b16 %v5803, %v5799
    %v7552 = vpack.c.b16 %v5808, %v5804
    %v7553 = vpack.c.b16 %v5809, %v5805
    %v7554 = vpack.c.b16 %v5810, %v5806
    %v7555 = vpack.c.b16 %v5811, %v5807
    %v7556 = vpack.c.b16 %v5816, %v5812
    %v7557 = vpack.c.b16 %v5817, %v5813
    %v7558 = vpack.c.b16 %v5818, %v5814
    %v7559 = vpack.c.b16 %v5819, %v5815
    %v7560 = vpack.c.b16 %v5824, %v5820
    %v7561 = vpack.c.b16 %v5825, %v5821
    %v7562 = vpack.c.b16 %v5826, %v5822
    %v7563 = vpack.c.b16 %v5827, %v5823
    %v7564 = vpack.c.b16 %v5832, %v5828
    %v7565 = vpack.c.b16 %v5833, %v5829
    %v7566 = vpack.c.b16 %v5834, %v5830
    %v7567 = vpack.c.b16 %v5835, %v5831
    %v7568 = vpack.c.b16 %v5840, %v5836
    %v7569 = vpack.c.b16 %v5841, %v5837
    %v7570 = vpack.c.b16 %v5842, %v5838
    %v7571 = vpack.c.b16 %v5843, %v5839
    %v7572 = vpack.c.b16 %v5848, %v5844
    %v7573 = vpack.c.b16 %v5849, %v5845
    %v7574 = vpack.c.b16 %v5850, %v5846
    %v7575 = vpack.c.b16 %v5851, %v5847
    %v7576 = vpack.c.b16 %v5856, %v5852
    %v7577 = vpack.c.b16 %v5857, %v5853
    %v7578 = vpack.c.b16 %v5858, %v5854
    %v7579 = vpack.c.b16 %v5859, %v5855
    %v7580 = vpack.c.b16 %v5864, %v5860
    %v7581 = vpack.c.b16 %v5865, %v5861
    %v7582 = vpack.c.b16 %v5866, %v5862
    %v7583 = vpack.c.b16 %v5867, %v5863
    %v7584 = vpack.c.b16 %v5872, %v5868
    %v7585 = vpack.c.b16 %v5873, %v5869
    %v7586 = vpack.c.b16 %v5874, %v5870
    %v7587 = vpack.c.b16 %v5875, %v5871
    %v7588 = vpack.c.b16 %v5880, %v5876
    %v7589 = vpack.c.b16 %v5881, %v5877
    %v7590 = vpack.c.b16 %v5882, %v5878
    %v7591 = vpack.c.b16 %v5883, %v5879
    %v7592 = vpack.c.b16 %v5888, %v5884
    %v7593 = vpack.c.b16 %v5889, %v5885
    %v7594 = vpack.c.b16 %v5890, %v5886
    %v7595 = vpack.c.b16 %v5891, %v5887
    %v7596 = vpack.c.b16 %v5896, %v5892
    %v7597 = vpack.c.b16 %v5897, %v5893
    %v7598 = vpack.c.b16 %v5898, %v5894
    %v7599 = vpack.c.b16 %v5899, %v5895
    %v7600 = vpack.c.b16 %v5904, %v5900
    %v7601 = vpack.c.b16 %v5905, %v5901
    %v7602 = vpack.c.b16 %v5906, %v5902
    %v7603 = vpack.c.b16 %v5907, %v5903
    %v7604 = vpack.c.b16 %v5912, %v5908
    %v7605 = vpack.c.b16 %v5913, %v5909
    %v7606 = vpack.c.b16 %v5914, %v5910
    %v7607 = vpack.c.b16 %v5915, %v5911
    %v7608 = vpack.c.b16 %v5920, %v5916
    %v7609 = vpack.c.b16 %v5921, %v5917
    %v7610 = vpack.c.b16 %v5922, %v5918
    %v7611 = vpack.c.b16 %v5923, %v5919
    %v7612 = vpack.c.b16 %v5928, %v5924
    %v7613 = vpack.c.b16 %v5929, %v5925
    %v7614 = vpack.c.b16 %v5930, %v5926
    %v7615 = vpack.c.b16 %v5931, %v5927
    %v7616 = vpack.c.b16 %v5936, %v5932
    %v7617 = vpack.c.b16 %v5937, %v5933
    %v7618 = vpack.c.b16 %v5938, %v5934
    %v7619 = vpack.c.b16 %v5939, %v5935
    %v7620 = vpack.c.b16 %v5944, %v5940
    %v7621 = vpack.c.b16 %v5945, %v5941
    %v7622 = vpack.c.b16 %v5946, %v5942
    %v7623 = vpack.c.b16 %v5947, %v5943
    %v7624 = vpack.c.b16 %v5952, %v5948
    %v7625 = vpack.c.b16 %v5953, %v5949
    %v7626 = vpack.c.b16 %v5954, %v5950
    %v7627 = vpack.c.b16 %v5955, %v5951
    %v7628 = vpack.c.b16 %v5960, %v5956
    %v7629 = vpack.c.b16 %v5961, %v5957
    %v7630 = vpack.c.b16 %v5962, %v5958
    %v7631 = vpack.c.b16 %v5963, %v5959
    %v7632 = vpack.c.b16 %v5968, %v5964
    %v7633 = vpack.c.b16 %v5969, %v5965
    %v7634 = vpack.c.b16 %v5970, %v5966
    %v7635 = vpack.c.b16 %v5971, %v5967
    %v7636 = vpack.c.b16 %v5976, %v5972
    %v7637 = vpack.c.b16 %v5977, %v5973
    %v7638 = vpack.c.b16 %v5978, %v5974
    %v7639 = vpack.c.b16 %v5979, %v5975
    %v7640 = vpack.c.b16 %v5984, %v5980
    %v7641 = vpack.c.b16 %v5985, %v5981
    %v7642 = vpack.c.b16 %v5986, %v5982
    %v7643 = vpack.c.b16 %v5987, %v5983
    %v7644 = vpack.c.b16 %v5992, %v5988
    %v7645 = vpack.c.b16 %v5993, %v5989
    %v7646 = vpack.c.b16 %v5994, %v5990
    %v7647 = vpack.c.b16 %v5995, %v5991
    %v7648 = vpack.c.b16 %v6000, %v5996
    %v7649 = vpack.c.b16 %v6001, %v5997
    %v7650 = vpack.c.b16 %v6002, %v5998
    %v7651 = vpack.c.b16 %v6003, %v5999
    %v7652 = vpack.c.b16 %v6008, %v6004
    %v7653 = vpack.c.b16 %v6009, %v6005
    %v7654 = vpack.c.b16 %v6010, %v6006
    %v7655 = vpack.c.b16 %v6011, %v6007
    %v7656 = vpack.c.b16 %v6016, %v6012
    %v7657 = vpack.c.b16 %v6017, %v6013
    %v7658 = vpack.c.b16 %v6018, %v6014
    %v7659 = vpack.c.b16 %v6019, %v6015
    %v7660 = vpack.c.b16 %v6024, %v6020
    %v7661 = vpack.c.b16 %v6025, %v6021
    %v7662 = vpack.c.b16 %v6026, %v6022
    %v7663 = vpack.c.b16 %v6027, %v6023
    %v7664 = vpack.c.b16 %v6032, %v6028
    %v7665 = vpack.c.b16 %v6033, %v6029
    %v7666 = vpack.c.b16 %v6034, %v6030
    %v7667 = vpack.c.b16 %v6035, %v6031
    %v7668 = vpack.c.b16 %v6040, %v6036
    %v7669 = vpack.c.b16 %v6041, %v6037
    %v7670 = vpack.c.b16 %v6042, %v6038
    %v7671 = vpack.c.b16 %v6043, %v6039
    %v7672 = vpack.c.b16 %v6048, %v6044
    %v7673 = vpack.c.b16 %v6049, %v6045
    %v7674 = vpack.c.b16 %v6050, %v6046
    %v7675 = vpack.c.b16 %v6051, %v6047
    %v7676 = vpack.c.b16 %v6056, %v6052
    %v7677 = vpack.c.b16 %v6057, %v6053
    %v7678 = vpack.c.b16 %v6058, %v6054
    %v7679 = vpack.c.b16 %v6059, %v6055
    %v7680 = vpack.c.b16 %v6064, %v6060
    %v7681 = vpack.c.b16 %v6065, %v6061
    %v7682 = vpack.c.b16 %v6066, %v6062
    %v7683 = vpack.c.b16 %v6067, %v6063
    %v7684 = vpack.c.b16 %v6072, %v6068
    %v7685 = vpack.c.b16 %v6073, %v6069
    %v7686 = vpack.c.b16 %v6074, %v6070
    %v7687 = vpack.c.b16 %v6075, %v6071
    %v7688 = vpack.c.b16 %v6080, %v6076
    %v7689 = vpack.c.b16 %v6081, %v6077
    %v7690 = vpack.c.b16 %v6082, %v6078
    %v7691 = vpack.c.b16 %v6083, %v6079
    %v7692 = vpack.c.b16 %v6088, %v6084
    %v7693 = vpack.c.b16 %v6089, %v6085
    %v7694 = vpack.c.b16 %v6090, %v6086
    %v7695 = vpack.c.b16 %v6091, %v6087
    %v7696 = vpack.c.b16 %v6096, %v6092
    %v7697 = vpack.c.b16 %v6097, %v6093
    %v7698 = vpack.c.b16 %v6098, %v6094
    %v7699 = vpack.c.b16 %v6099, %v6095
    %v7700 = vpack.c.b16 %v6104, %v6100
    %v7701 = vpack.c.b16 %v6105, %v6101
    %v7702 = vpack.c.b16 %v6106, %v6102
    %v7703 = vpack.c.b16 %v6107, %v6103
    %v7704 = vpack.c.b16 %v6112, %v6108
    %v7705 = vpack.c.b16 %v6113, %v6109
    %v7706 = vpack.c.b16 %v6114, %v6110
    %v7707 = vpack.c.b16 %v6115, %v6111
    %v7708 = vpack.c.b16 %v6120, %v6116
    %v7709 = vpack.c.b16 %v6121, %v6117
    %v7710 = vpack.c.b16 %v6122, %v6118
    %v7711 = vpack.c.b16 %v6123, %v6119
    %v7712 = vpack.c.b16 %v6128, %v6124
    %v7713 = vpack.c.b16 %v6129, %v6125
    %v7714 = vpack.c.b16 %v6130, %v6126
    %v7715 = vpack.c.b16 %v6131, %v6127
    %v7716 = vpack.c.b16 %v6136, %v6132
    %v7717 = vpack.c.b16 %v6137, %v6133
    %v7718 = vpack.c.b16 %v6138, %v6134
    %v7719 = vpack.c.b16 %v6139, %v6135
    %v7720 = vpack.c.b16 %v6144, %v6140
    %v7721 = vpack.c.b16 %v6145, %v6141
    %v7722 = vpack.c.b16 %v6146, %v6142
    %v7723 = vpack.c.b16 %v6147, %v6143
    %v7724 = vpack.c.b16 %v6152, %v6148
    %v7725 = vpack.c.b16 %v6153, %v6149
    %v7726 = vpack.c.b16 %v6154, %v6150
    %v7727 = vpack.c.b16 %v6155, %v6151
    %v7728 = vpack.c.b16 %v6160, %v6156
    %v7729 = vpack.c.b16 %v6161, %v6157
    %v7730 = vpack.c.b16 %v6162, %v6158
    %v7731 = vpack.c.b16 %v6163, %v6159
    %v7732 = vpack.c.b16 %v6168, %v6164
    %v7733 = vpack.c.b16 %v6169, %v6165
    %v7734 = vpack.c.b16 %v6170, %v6166
    %v7735 = vpack.c.b16 %v6171, %v6167
    %v7736 = vpack.c.b16 %v6176, %v6172
    %v7737 = vpack.c.b16 %v6177, %v6173
    %v7738 = vpack.c.b16 %v6178, %v6174
    %v7739 = vpack.c.b16 %v6179, %v6175
    %v7740 = vpack.c.b16 %v6184, %v6180
    %v7741 = vpack.c.b16 %v6185, %v6181
    %v7742 = vpack.c.b16 %v6186, %v6182
    %v7743 = vpack.c.b16 %v6187, %v6183
    %v7744 = vpack.c.b16 %v6192, %v6188
    %v7745 = vpack.c.b16 %v6193, %v6189
    %v7746 = vpack.c.b16 %v6194, %v6190
    %v7747 = vpack.c.b16 %v6195, %v6191
    %v7748 = vpack.c.b16 %v6200, %v6196
    %v7749 = vpack.c.b16 %v6201, %v6197
    %v7750 = vpack.c.b16 %v6202, %v6198
    %v7751 = vpack.c.b16 %v6203, %v6199
    %v7752 = vpack.c.b16 %v6208, %v6204
    %v7753 = vpack.c.b16 %v6209, %v6205
    %v7754 = vpack.c.b16 %v6210, %v6206
    %v7755 = vpack.c.b16 %v6211, %v6207
    %v7756 = vpack.c.b16 %v6216, %v6212
    %v7757 = vpack.c.b16 %v6217, %v6213
    %v7758 = vpack.c.b16 %v6218, %v6214
    %v7759 = vpack.c.b16 %v6219, %v6215
    %v7760 = vpack.c.b16 %v6224, %v6220
    %v7761 = vpack.c.b16 %v6225, %v6221
    %v7762 = vpack.c.b16 %v6226, %v6222
    %v7763 = vpack.c.b16 %v6227, %v6223
    %v7764 = vpack.c.b16 %v6232, %v6228
    %v7765 = vpack.c.b16 %v6233, %v6229
    %v7766 = vpack.c.b16 %v6234, %v6230
    %v7767 = vpack.c.b16 %v6235, %v6231
    %v7768 = vpack.c.b16 %v6240, %v6236
    %v7769 = vpack.c.b16 %v6241, %v6237
    %v7770 = vpack.c.b16 %v6242, %v6238
    %v7771 = vpack.c.b16 %v6243, %v6239
    %v7772 = vpack.c.b16 %v6248, %v6244
    %v7773 = vpack.c.b16 %v6249, %v6245
    %v7774 = vpack.c.b16 %v6250, %v6246
    %v7775 = vpack.c.b16 %v6251, %v6247
    %v7776 = vpack.c.b16 %v6256, %v6252
    %v7777 = vpack.c.b16 %v6257, %v6253
    %v7778 = vpack.c.b16 %v6258, %v6254
    %v7779 = vpack.c.b16 %v6259, %v6255
    %v7780 = vpack.c.b16 %v6264, %v6260
    %v7781 = vpack.c.b16 %v6265, %v6261
    %v7782 = vpack.c.b16 %v6266, %v6262
    %v7783 = vpack.c.b16 %v6267, %v6263
    %v7784 = vpack.c.b16 %v6272, %v6268
    %v7785 = vpack.c.b16 %v6273, %v6269
    %v7786 = vpack.c.b16 %v6274, %v6270
    %v7787 = vpack.c.b16 %v6275, %v6271
    %v7788 = vpack.c.b16 %v6280, %v6276
    %v7789 = vpack.c.b16 %v6281, %v6277
    %v7790 = vpack.c.b16 %v6282, %v6278
    %v7791 = vpack.c.b16 %v6283, %v6279
    %v7792 = vpack.c.b16 %v6288, %v6284
    %v7793 = vpack.c.b16 %v6289, %v6285
    %v7794 = vpack.c.b16 %v6290, %v6286
    %v7795 = vpack.c.b16 %v6291, %v6287
    %v7796 = vpack.c.b16 %v6296, %v6292
    %v7797 = vpack.c.b16 %v6297, %v6293
    %v7798 = vpack.c.b16 %v6298, %v6294
    %v7799 = vpack.c.b16 %v6299, %v6295
    %v7800 = vpack.c.b16 %v6304, %v6300
    %v7801 = vpack.c.b16 %v6305, %v6301
    %v7802 = vpack.c.b16 %v6306, %v6302
    %v7803 = vpack.c.b16 %v6307, %v6303
    %v7804 = vpack.c.b16 %v6312, %v6308
    %v7805 = vpack.c.b16 %v6313, %v6309
    %v7806 = vpack.c.b16 %v6314, %v6310
    %v7807 = vpack.c.b16 %v6315, %v6311
    %v7808 = vpack.c.b16 %v6320, %v6316
    %v7809 = vpack.c.b16 %v6321, %v6317
    %v7810 = vpack.c.b16 %v6322, %v6318
    %v7811 = vpack.c.b16 %v6323, %v6319
    %v7812 = vpack.c.b16 %v6328, %v6324
    %v7813 = vpack.c.b16 %v6329, %v6325
    %v7814 = vpack.c.b16 %v6330, %v6326
    %v7815 = vpack.c.b16 %v6331, %v6327
    %v7816 = vpack.c.b16 %v6336, %v6332
    %v7817 = vpack.c.b16 %v6337, %v6333
    %v7818 = vpack.c.b16 %v6338, %v6334
    %v7819 = vpack.c.b16 %v6339, %v6335
    %v7820 = vpack.c.b16 %v6344, %v6340
    %v7821 = vpack.c.b16 %v6345, %v6341
    %v7822 = vpack.c.b16 %v6346, %v6342
    %v7823 = vpack.c.b16 %v6347, %v6343
    %v7824 = vpack.c.b16 %v6352, %v6348
    %v7825 = vpack.c.b16 %v6353, %v6349
    %v7826 = vpack.c.b16 %v6354, %v6350
    %v7827 = vpack.c.b16 %v6355, %v6351
    %v7828 = vpack.c.b16 %v6360, %v6356
    %v7829 = vpack.c.b16 %v6361, %v6357
    %v7830 = vpack.c.b16 %v6362, %v6358
    %v7831 = vpack.c.b16 %v6363, %v6359
    %v7832 = vpack.c.b16 %v6368, %v6364
    %v7833 = vpack.c.b16 %v6369, %v6365
    %v7834 = vpack.c.b16 %v6370, %v6366
    %v7835 = vpack.c.b16 %v6371, %v6367
    %v7836 = vpack.c.b16 %v6376, %v6372
    %v7837 = vpack.c.b16 %v6377, %v6373
    %v7838 = vpack.c.b16 %v6378, %v6374
    %v7839 = vpack.c.b16 %v6379, %v6375
    %v7840 = vpack.c.b16 %v6384, %v6380
    %v7841 = vpack.c.b16 %v6385, %v6381
    %v7842 = vpack.c.b16 %v6386, %v6382
    %v7843 = vpack.c.b16 %v6387, %v6383
    %v7844 = vpack.c.b16 %v6392, %v6388
    %v7845 = vpack.c.b16 %v6393, %v6389
    %v7846 = vpack.c.b16 %v6394, %v6390
    %v7847 = vpack.c.b16 %v6395, %v6391
    %v7848 = vpack.c.b16 %v6400, %v6396
    %v7849 = vpack.c.b16 %v6401, %v6397
    %v7850 = vpack.c.b16 %v6402, %v6398
    %v7851 = vpack.c.b16 %v6403, %v6399
    %v7852 = vpack.c.b16 %v6408, %v6404
    %v7853 = vpack.c.b16 %v6409, %v6405
    %v7854 = vpack.c.b16 %v6410, %v6406
    %v7855 = vpack.c.b16 %v6411, %v6407
    %v7856 = vpack.c.b16 %v6416, %v6412
    %v7857 = vpack.c.b16 %v6417, %v6413
    %v7858 = vpack.c.b16 %v6418, %v6414
    %v7859 = vpack.c.b16 %v6419, %v6415
    %v7860 = vpack.c.b16 %v6424, %v6420
    %v7861 = vpack.c.b16 %v6425, %v6421
    %v7862 = vpack.c.b16 %v6426, %v6422
    %v7863 = vpack.c.b16 %v6427, %v6423
    %v7864 = vpack.c.b16 %v6432, %v6428
    %v7865 = vpack.c.b16 %v6433, %v6429
    %v7866 = vpack.c.b16 %v6434, %v6430
    %v7867 = vpack.c.b16 %v6435, %v6431
    %v7868 = vpack.c.b16 %v6440, %v6436
    %v7869 = vpack.c.b16 %v6441, %v6437
    %v7870 = vpack.c.b16 %v6442, %v6438
    %v7871 = vpack.c.b16 %v6443, %v6439
    %v7872 = vpack.c.b16 %v6448, %v6444
    %v7873 = vpack.c.b16 %v6449, %v6445
    %v7874 = vpack.c.b16 %v6450, %v6446
    %v7875 = vpack.c.b16 %v6451, %v6447
    %v7876 = vpack.c.b16 %v6456, %v6452
    %v7877 = vpack.c.b16 %v6457, %v6453
    %v7878 = vpack.c.b16 %v6458, %v6454
    %v7879 = vpack.c.b16 %v6459, %v6455
    %v7880 = vpack.c.b16 %v6464, %v6460
    %v7881 = vpack.c.b16 %v6465, %v6461
    %v7882 = vpack.c.b16 %v6466, %v6462
    %v7883 = vpack.c.b16 %v6467, %v6463
    %v7884 = vpack.c.b16 %v6472, %v6468
    %v7885 = vpack.c.b16 %v6473, %v6469
    %v7886 = vpack.c.b16 %v6474, %v6470
    %v7887 = vpack.c.b16 %v6475, %v6471
    %v7888 = vpack.c.b16 %v6480, %v6476
    %v7889 = vpack.c.b16 %v6481, %v6477
    %v7890 = vpack.c.b16 %v6482, %v6478
    %v7891 = vpack.c.b16 %v6483, %v6479
    %v7892 = vpack.c.b16 %v6488, %v6484
    %v7893 = vpack.c.b16 %v6489, %v6485
    %v7894 = vpack.c.b16 %v6490, %v6486
    %v7895 = vpack.c.b16 %v6491, %v6487
    %v7896 = vpack.c.b16 %v6496, %v6492
    %v7897 = vpack.c.b16 %v6497, %v6493
    %v7898 = vpack.c.b16 %v6498, %v6494
    %v7899 = vpack.c.b16 %v6499, %v6495
    %v7900 = vpack.c.b16 %v6504, %v6500
    %v7901 = vpack.c.b16 %v6505, %v6501
    %v7902 = vpack.c.b16 %v6506, %v6502
    %v7903 = vpack.c.b16 %v6507, %v6503
    %v7904 = vpack.c.b16 %v6512, %v6508
    %v7905 = vpack.c.b16 %v6513, %v6509
    %v7906 = vpack.c.b16 %v6514, %v6510
    %v7907 = vpack.c.b16 %v6515, %v6511
    %v7908 = vpack.c.b16 %v6520, %v6516
    %v7909 = vpack.c.b16 %v6521, %v6517
    %v7910 = vpack.c.b16 %v6522, %v6518
    %v7911 = vpack.c.b16 %v6523, %v6519
    %v7912 = vpack.c.b16 %v6528, %v6524
    %v7913 = vpack.c.b16 %v6529, %v6525
    %v7914 = vpack.c.b16 %v6530, %v6526
    %v7915 = vpack.c.b16 %v6531, %v6527
    %v7916 = vpack.c.b16 %v6536, %v6532
    %v7917 = vpack.c.b16 %v6537, %v6533
    %v7918 = vpack.c.b16 %v6538, %v6534
    %v7919 = vpack.c.b16 %v6539, %v6535
    %v7920 = vpack.c.b16 %v6544, %v6540
    %v7921 = vpack.c.b16 %v6545, %v6541
    %v7922 = vpack.c.b16 %v6546, %v6542
    %v7923 = vpack.c.b16 %v6547, %v6543
    %v7924 = vpack.c.b16 %v6552, %v6548
    %v7925 = vpack.c.b16 %v6553, %v6549
    %v7926 = vpack.c.b16 %v6554, %v6550
    %v7927 = vpack.c.b16 %v6555, %v6551
    %v7928 = vpack.c.b16 %v6560, %v6556
    %v7929 = vpack.c.b16 %v6561, %v6557
    %v7930 = vpack.c.b16 %v6562, %v6558
    %v7931 = vpack.c.b16 %v6563, %v6559
    %v7932 = vpack.c.b16 %v6568, %v6564
    %v7933 = vpack.c.b16 %v6569, %v6565
    %v7934 = vpack.c.b16 %v6570, %v6566
    %v7935 = vpack.c.b16 %v6571, %v6567
    %v7936 = vpack.c.b16 %v6576, %v6572
    %v7937 = vpack.c.b16 %v6577, %v6573
    %v7938 = vpack.c.b16 %v6578, %v6574
    %v7939 = vpack.c.b16 %v6579, %v6575
    %v7940 = vpack.c.b16 %v6584, %v6580
    %v7941 = vpack.c.b16 %v6585, %v6581
    %v7942 = vpack.c.b16 %v6586, %v6582
    %v7943 = vpack.c.b16 %v6587, %v6583
    %v7944 = vpack.c.b16 %v6592, %v6588
    %v7945 = vpack.c.b16 %v6593, %v6589
    %v7946 = vpack.c.b16 %v6594, %v6590
    %v7947 = vpack.c.b16 %v6595, %v6591
    %v7948 = vpack.c.b16 %v6600, %v6596
    %v7949 = vpack.c.b16 %v6601, %v6597
    %v7950 = vpack.c.b16 %v6602, %v6598
    %v7951 = vpack.c.b16 %v6603, %v6599
    %v7952 = vpack.c.b16 %v6608, %v6604
    %v7953 = vpack.c.b16 %v6609, %v6605
    %v7954 = vpack.c.b16 %v6610, %v6606
    %v7955 = vpack.c.b16 %v6611, %v6607
    %v7956 = vpack.c.b16 %v6616, %v6612
    %v7957 = vpack.c.b16 %v6617, %v6613
    %v7958 = vpack.c.b16 %v6618, %v6614
    %v7959 = vpack.c.b16 %v6619, %v6615
    %v7960 = vpack.c.b16 %v6624, %v6620
    %v7961 = vpack.c.b16 %v6625, %v6621
    %v7962 = vpack.c.b16 %v6626, %v6622
    %v7963 = vpack.c.b16 %v6627, %v6623
    %v7964 = vpack.c.b16 %v6632, %v6628
    %v7965 = vpack.c.b16 %v6633, %v6629
    %v7966 = vpack.c.b16 %v6634, %v6630
    %v7967 = vpack.c.b16 %v6635, %v6631
    %v7968 = vpack.c.b16 %v6640, %v6636
    %v7969 = vpack.c.b16 %v6641, %v6637
    %v7970 = vpack.c.b16 %v6642, %v6638
    %v7971 = vpack.c.b16 %v6643, %v6639
    %v7972 = vpack.c.b16 %v6648, %v6644
    %v7973 = vpack.c.b16 %v6649, %v6645
    %v7974 = vpack.c.b16 %v6650, %v6646
    %v7975 = vpack.c.b16 %v6651, %v6647
    %v7976 = vpack.c.b16 %v6656, %v6652
    %v7977 = vpack.c.b16 %v6657, %v6653
    %v7978 = vpack.c.b16 %v6658, %v6654
    %v7979 = vpack.c.b16 %v6659, %v6655
    %v7980 = vpack.c.b16 %v6664, %v6660
    %v7981 = vpack.c.b16 %v6665, %v6661
    %v7982 = vpack.c.b16 %v6666, %v6662
    %v7983 = vpack.c.b16 %v6667, %v6663
    %v7984 = vpack.c.b16 %v6672, %v6668
    %v7985 = vpack.c.b16 %v6673, %v6669
    %v7986 = vpack.c.b16 %v6674, %v6670
    %v7987 = vpack.c.b16 %v6675, %v6671
    %v7988 = vpack.c.b16 %v6680, %v6676
    %v7989 = vpack.c.b16 %v6681, %v6677
    %v7990 = vpack.c.b16 %v6682, %v6678
    %v7991 = vpack.c.b16 %v6683, %v6679
    %v7992 = vpack.c.b16 %v6688, %v6684
    %v7993 = vpack.c.b16 %v6689, %v6685
    %v7994 = vpack.c.b16 %v6690, %v6686
    %v7995 = vpack.c.b16 %v6691, %v6687
    %v7996 = vpack.c.b16 %v6696, %v6692
    %v7997 = vpack.c.b16 %v6697, %v6693
    %v7998 = vpack.c.b16 %v6698, %v6694
    %v7999 = vpack.c.b16 %v6699, %v6695
    %v8000 = vpack.c.b16 %v6704, %v6700
    %v8001 = vpack.c.b16 %v6705, %v6701
    %v8002 = vpack.c.b16 %v6706, %v6702
    %v8003 = vpack.c.b16 %v6707, %v6703
    %v8004 = vpack.c.b16 %v6712, %v6708
    %v8005 = vpack.c.b16 %v6713, %v6709
    %v8006 = vpack.c.b16 %v6714, %v6710
    %v8007 = vpack.c.b16 %v6715, %v6711
    %v8008 = vpack.c.b16 %v6720, %v6716
    %v8009 = vpack.c.b16 %v6721, %v6717
    %v8010 = vpack.c.b16 %v6722, %v6718
    %v8011 = vpack.c.b16 %v6723, %v6719
    %v8012 = vpack.c.b16 %v6728, %v6724
    %v8013 = vpack.c.b16 %v6729, %v6725
    %v8014 = vpack.c.b16 %v6730, %v6726
    %v8015 = vpack.c.b16 %v6731, %v6727
    %v8016 = vpack.c.b16 %v6736, %v6732
    %v8017 = vpack.c.b16 %v6737, %v6733
    %v8018 = vpack.c.b16 %v6738, %v6734
    %v8019 = vpack.c.b16 %v6739, %v6735
    %v8020 = vpack.c.b16 %v6744, %v6740
    %v8021 = vpack.c.b16 %v6745, %v6741
    %v8022 = vpack.c.b16 %v6746, %v6742
    %v8023 = vpack.c.b16 %v6747, %v6743
    %v8024 = vpack.c.b16 %v6752, %v6748
    %v8025 = vpack.c.b16 %v6753, %v6749
    %v8026 = vpack.c.b16 %v6754, %v6750
    %v8027 = vpack.c.b16 %v6755, %v6751
    %v8028 = vpack.c.b16 %v6760, %v6756
    %v8029 = vpack.c.b16 %v6761, %v6757
    %v8030 = vpack.c.b16 %v6762, %v6758
    %v8031 = vpack.c.b16 %v6763, %v6759
    %v8032 = vpack.c.b16 %v6768, %v6764
    %v8033 = vpack.c.b16 %v6769, %v6765
    %v8034 = vpack.c.b16 %v6770, %v6766
    %v8035 = vpack.c.b16 %v6771, %v6767
    %v8036 = vpack.c.b16 %v6776, %v6772
    %v8037 = vpack.c.b16 %v6777, %v6773
    %v8038 = vpack.c.b16 %v6778, %v6774
    %v8039 = vpack.c.b16 %v6779, %v6775
    %v8040 = vpack.c.b16 %v6784, %v6780
    %v8041 = vpack.c.b16 %v6785, %v6781
    %v8042 = vpack.c.b16 %v6786, %v6782
    %v8043 = vpack.c.b16 %v6787, %v6783
    %v8044 = vpack.c.b16 %v6792, %v6788
    %v8045 = vpack.c.b16 %v6793, %v6789
    %v8046 = vpack.c.b16 %v6794, %v6790
    %v8047 = vpack.c.b16 %v6795, %v6791
    %v8048 = vpack.c.b16 %v6800, %v6796
    %v8049 = vpack.c.b16 %v6801, %v6797
    %v8050 = vpack.c.b16 %v6802, %v6798
    %v8051 = vpack.c.b16 %v6803, %v6799
    %v8052 = vpack.c.b16 %v6808, %v6804
    %v8053 = vpack.c.b16 %v6809, %v6805
    %v8054 = vpack.c.b16 %v6810, %v6806
    %v8055 = vpack.c.b16 %v6811, %v6807
    %v8056 = vpack.c.b16 %v6816, %v6812
    %v8057 = vpack.c.b16 %v6817, %v6813
    %v8058 = vpack.c.b16 %v6818, %v6814
    %v8059 = vpack.c.b16 %v6819, %v6815
    %v8060 = vpack.c.b16 %v6824, %v6820
    %v8061 = vpack.c.b16 %v6825, %v6821
    %v8062 = vpack.c.b16 %v6826, %v6822
    %v8063 = vpack.c.b16 %v6827, %v6823
    %v8064 = vpack.c.b16 %v6832, %v6828
    %v8065 = vpack.c.b16 %v6833, %v6829
    %v8066 = vpack.c.b16 %v6834, %v6830
    %v8067 = vpack.c.b16 %v6835, %v6831
    %v8068 = vpack.c.b16 %v6840, %v6836
    %v8069 = vpack.c.b16 %v6841, %v6837
    %v8070 = vpack.c.b16 %v6842, %v6838
    %v8071 = vpack.c.b16 %v6843, %v6839
    %v8072 = vpack.c.b16 %v6848, %v6844
    %v8073 = vpack.c.b16 %v6849, %v6845
    %v8074 = vpack.c.b16 %v6850, %v6846
    %v8075 = vpack.c.b16 %v6851, %v6847
    %v8076 = vpack.c.b16 %v6856, %v6852
    %v8077 = vpack.c.b16 %v6857, %v6853
    %v8078 = vpack.c.b16 %v6858, %v6854
    %v8079 = vpack.c.b16 %v6859, %v6855
    %v8080 = vpack.c.b16 %v6864, %v6860
    %v8081 = vpack.c.b16 %v6865, %v6861
    %v8082 = vpack.c.b16 %v6866, %v6862
    %v8083 = vpack.c.b16 %v6867, %v6863
    %v8084 = vpack.c.b16 %v6872, %v6868
    %v8085 = vpack.c.b16 %v6873, %v6869
    %v8086 = vpack.c.b16 %v6874, %v6870
    %v8087 = vpack.c.b16 %v6875, %v6871
    %v8088 = vpack.c.b16 %v6880, %v6876
    %v8089 = vpack.c.b16 %v6881, %v6877
    %v8090 = vpack.c.b16 %v6882, %v6878
    %v8091 = vpack.c.b16 %v6883, %v6879
    %v8092 = vpack.c.b16 %v6888, %v6884
    %v8093 = vpack.c.b16 %v6889, %v6885
    %v8094 = vpack.c.b16 %v6890, %v6886
    %v8095 = vpack.c.b16 %v6891, %v6887
    %v8096 = vpack.c.b16 %v6896, %v6892
    %v8097 = vpack.c.b16 %v6897, %v6893
    %v8098 = vpack.c.b16 %v6898, %v6894
    %v8099 = vpack.c.b16 %v6899, %v6895
    %v8100 = vpack.c.b16 %v6904, %v6900
    %v8101 = vpack.c.b16 %v6905, %v6901
    %v8102 = vpack.c.b16 %v6906, %v6902
    %v8103 = vpack.c.b16 %v6907, %v6903
    %v8104 = vpack.c.b16 %v6912, %v6908
    %v8105 = vpack.c.b16 %v6913, %v6909
    %v8106 = vpack.c.b16 %v6914, %v6910
    %v8107 = vpack.c.b16 %v6915, %v6911
    %v8108 = vpack.c.b16 %v6920, %v6916
    %v8109 = vpack.c.b16 %v6921, %v6917
    %v8110 = vpack.c.b16 %v6922, %v6918
    %v8111 = vpack.c.b16 %v6923, %v6919
    %v8112 = vpack.c.b16 %v6928, %v6924
    %v8113 = vpack.c.b16 %v6929, %v6925
    %v8114 = vpack.c.b16 %v6930, %v6926
    %v8115 = vpack.c.b16 %v6931, %v6927
    %v8116 = vpack.c.b16 %v6936, %v6932
    %v8117 = vpack.c.b16 %v6937, %v6933
    %v8118 = vpack.c.b16 %v6938, %v6934
    %v8119 = vpack.c.b16 %v6939, %v6935
    %v8120 = vpack.c.b16 %v6944, %v6940
    %v8121 = vpack.c.b16 %v6945, %v6941
    %v8122 = vpack.c.b16 %v6946, %v6942
    %v8123 = vpack.c.b16 %v6947, %v6943
    %v8124 = vpack.c.b16 %v6952, %v6948
    %v8125 = vpack.c.b16 %v6953, %v6949
    %v8126 = vpack.c.b16 %v6954, %v6950
    %v8127 = vpack.c.b16 %v6955, %v6951
    %v8128 = vpack.c.b16 %v6960, %v6956
    %v8129 = vpack.c.b16 %v6961, %v6957
    %v8130 = vpack.c.b16 %v6962, %v6958
    %v8131 = vpack.c.b16 %v6963, %v6959
    %v8132 = vpack.c.b16 %v6968, %v6964
    %v8133 = vpack.c.b16 %v6969, %v6965
    %v8134 = vpack.c.b16 %v6970, %v6966
    %v8135 = vpack.c.b16 %v6971, %v6967
    %v8136 = vpack.c.b16 %v6976, %v6972
    %v8137 = vpack.c.b16 %v6977, %v6973
    %v8138 = vpack.c.b16 %v6978, %v6974
    %v8139 = vpack.c.b16 %v6979, %v6975
    %v8140 = vpack.c.b16 %v6984, %v6980
    %v8141 = vpack.c.b16 %v6985, %v6981
    %v8142 = vpack.c.b16 %v6986, %v6982
    %v8143 = vpack.c.b16 %v6987, %v6983
    %v8144 = vpack.c.b16 %v6992, %v6988
    %v8145 = vpack.c.b16 %v6993, %v6989
    %v8146 = vpack.c.b16 %v6994, %v6990
    %v8147 = vpack.c.b16 %v6995, %v6991
    %v8148 = vpack.c.b16 %v7000, %v6996
    %v8149 = vpack.c.b16 %v7001, %v6997
    %v8150 = vpack.c.b16 %v7002, %v6998
    %v8151 = vpack.c.b16 %v7003, %v6999
    %v8152 = vpack.c.b16 %v7008, %v7004
    %v8153 = vpack.c.b16 %v7009, %v7005
    %v8154 = vpack.c.b16 %v7010, %v7006
    %v8155 = vpack.c.b16 %v7011, %v7007
    %v8156 = vpack.c.b16 %v7016, %v7012
    %v8157 = vpack.c.b16 %v7017, %v7013
    %v8158 = vpack.c.b16 %v7018, %v7014
    %v8159 = vpack.c.b16 %v7019, %v7015
    %v8160 = vpack.c.b16 %v7024, %v7020
    %v8161 = vpack.c.b16 %v7025, %v7021
    %v8162 = vpack.c.b16 %v7026, %v7022
    %v8163 = vpack.c.b16 %v7027, %v7023
    %v8164 = vpack.c.b16 %v7032, %v7028
    %v8165 = vpack.c.b16 %v7033, %v7029
    %v8166 = vpack.c.b16 %v7034, %v7030
    %v8167 = vpack.c.b16 %v7035, %v7031
    %v8168 = vpack.c.b16 %v7040, %v7036
    %v8169 = vpack.c.b16 %v7041, %v7037
    %v8170 = vpack.c.b16 %v7042, %v7038
    %v8171 = vpack.c.b16 %v7043, %v7039
    %v8172 = vpack.c.b16 %v7048, %v7044
    %v8173 = vpack.c.b16 %v7049, %v7045
    %v8174 = vpack.c.b16 %v7050, %v7046
    %v8175 = vpack.c.b16 %v7051, %v7047
    %v8176 = vpack.c.b16 %v7056, %v7052
    %v8177 = vpack.c.b16 %v7057, %v7053
    %v8178 = vpack.c.b16 %v7058, %v7054
    %v8179 = vpack.c.b16 %v7059, %v7055
    %v8180 = vpack.c.b16 %v7064, %v7060
    %v8181 = vpack.c.b16 %v7065, %v7061
    %v8182 = vpack.c.b16 %v7066, %v7062
    %v8183 = vpack.c.b16 %v7067, %v7063
    %v8184 = vpack.c.b16 %v7072, %v7068
    %v8185 = vpack.c.b16 %v7073, %v7069
    %v8186 = vpack.c.b16 %v7074, %v7070
    %v8187 = vpack.c.b16 %v7075, %v7071
    %v8188 = vpack.c.b16 %v7080, %v7076
    %v8189 = vpack.c.b16 %v7081, %v7077
    %v8190 = vpack.c.b16 %v7082, %v7078
    %v8191 = vpack.c.b16 %v7083, %v7079
    %v8192 = vpack.c.b16 %v7088, %v7084
    %v8193 = vpack.c.b16 %v7089, %v7085
    %v8194 = vpack.c.b16 %v7090, %v7086
    %v8195 = vpack.c.b16 %v7091, %v7087
    %v8196 = vpack.c.b16 %v7096, %v7092
    %v8197 = vpack.c.b16 %v7097, %v7093
    %v8198 = vpack.c.b16 %v7098, %v7094
    %v8199 = vpack.c.b16 %v7099, %v7095
    %v8200 = vpack.c.b16 %v7104, %v7100
    %v8201 = vpack.c.b16 %v7105, %v7101
    %v8202 = vpack.c.b16 %v7106, %v7102
    %v8203 = vpack.c.b16 %v7107, %v7103
    %v8204 = vpack.c.b16 %v7112, %v7108
    %v8205 = vpack.c.b16 %v7113, %v7109
    %v8206 = vpack.c.b16 %v7114, %v7110
    %v8207 = vpack.c.b16 %v7115, %v7111
    %v8208 = vpack.c.b16 %v7120, %v7116
    %v8209 = vpack.c.b16 %v7121, %v7117
    %v8210 = vpack.c.b16 %v7122, %v7118
    %v8211 = vpack.c.b16 %v7123, %v7119
    %v8212 = vpack.c.b16 %v7128, %v7124
    %v8213 = vpack.c.b16 %v7129, %v7125
    %v8214 = vpack.c.b16 %v7130, %v7126
    %v8215 = vpack.c.b16 %v7131, %v7127
    %v8216 = vpack.c.b16 %v7136, %v7132
    %v8217 = vpack.c.b16 %v7137, %v7133
    %v8218 = vpack.c.b16 %v7138, %v7134
    %v8219 = vpack.c.b16 %v7139, %v7135
    %v8220 = vpack.c.b16 %v7144, %v7140
    %v8221 = vpack.c.b16 %v7145, %v7141
    %v8222 = vpack.c.b16 %v7146, %v7142
    %v8223 = vpack.c.b16 %v7147, %v7143
    %v8224 = vpack.c.b16 %v7152, %v7148
    %v8225 = vpack.c.b16 %v7153, %v7149
    %v8226 = vpack.c.b16 %v7154, %v7150
    %v8227 = vpack.c.b16 %v7155, %v7151
    %v8228 = vpack.c.b16 %v7160, %v7156
    %v8229 = vpack.c.b16 %v7161, %v7157
    %v8230 = vpack.c.b16 %v7162, %v7158
    %v8231 = vpack.c.b16 %v7163, %v7159
    %v8232 = vpack.c.b16 %v7168, %v7164
    %v8233 = vpack.c.b16 %v7169, %v7165
    %v8234 = vpack.c.b16 %v7170, %v7166
    %v8235 = vpack.c.b16 %v7171, %v7167
    %v8236 = vpack.c.b16 %v7176, %v7172
    %v8237 = vpack.c.b16 %v7177, %v7173
    %v8238 = vpack.c.b16 %v7178, %v7174
    %v8239 = vpack.c.b16 %v7179, %v7175
    %v8240 = vpack.c.b16 %v7184, %v7180
    %v8241 = vpack.c.b16 %v7185, %v7181
    %v8242 = vpack.c.b16 %v7186, %v7182
    %v8243 = vpack.c.b16 %v7187, %v7183
    %v8244 = vpack.c.b16 %v7192, %v7188
    %v8245 = vpack.c.b16 %v7193, %v7189
    %v8246 = vpack.c.b16 %v7194, %v7190
    %v8247 = vpack.c.b16 %v7195, %v7191
    %v8248 = vpack.c.b16 %v7200, %v7196
    %v8249 = vpack.c.b16 %v7201, %v7197
    %v8250 = vpack.c.b16 %v7202, %v7198
    %v8251 = vpack.c.b16 %v7203, %v7199
    %v8252 = vpack.c.b16 %v7208, %v7204
    %v8253 = vpack.c.b16 %v7209, %v7205
    %v8254 = vpack.c.b16 %v7210, %v7206
    %v8255 = vpack.c.b16 %v7211, %v7207
    %v8256 = vpack.c.b16 %v7216, %v7212
    %v8257 = vpack.c.b16 %v7217, %v7213
    %v8258 = vpack.c.b16 %v7218, %v7214
    %v8259 = vpack.c.b16 %v7219, %v7215
    %v8260 = vpack.c.b16 %v7224, %v7220
    %v8261 = vpack.c.b16 %v7225, %v7221
    %v8262 = vpack.c.b16 %v7226, %v7222
    %v8263 = vpack.c.b16 %v7227, %v7223
    %v8264 = vpack.c.b16 %v7232, %v7228
    %v8265 = vpack.c.b16 %v7233, %v7229
    %v8266 = vpack.c.b16 %v7234, %v7230
    %v8267 = vpack.c.b16 %v7235, %v7231
    %v8268 = vpack.c.b16 %v7240, %v7236
    %v8269 = vpack.c.b16 %v7241, %v7237
    %v8270 = vpack.c.b16 %v7242, %v7238
    %v8271 = vpack.c.b16 %v7243, %v7239
    %v8272 = vpack.c.b16 %v7248, %v7244
    %v8273 = vpack.c.b16 %v7249, %v7245
    %v8274 = vpack.c.b16 %v7250, %v7246
    %v8275 = vpack.c.b16 %v7251, %v7247
    %v8276 = vpack.c.b16 %v7256, %v7252
    %v8277 = vpack.c.b16 %v7257, %v7253
    %v8278 = vpack.c.b16 %v7258, %v7254
    %v8279 = vpack.c.b16 %v7259, %v7255
    %v8280 = vpack.c.b16 %v7264, %v7260
    %v8281 = vpack.c.b16 %v7265, %v7261
    %v8282 = vpack.c.b16 %v7266, %v7262
    %v8283 = vpack.c.b16 %v7267, %v7263
    %v8284 = vpack.c.b16 %v7272, %v7268
    %v8285 = vpack.c.b16 %v7273, %v7269
    %v8286 = vpack.c.b16 %v7274, %v7270
    %v8287 = vpack.c.b16 %v7275, %v7271
    %v8288 = vpack.c.b16 %v7280, %v7276
    %v8289 = vpack.c.b16 %v7281, %v7277
    %v8290 = vpack.c.b16 %v7282, %v7278
    %v8291 = vpack.c.b16 %v7283, %v7279
    %v8292 = vpack.c.b16 %v7288, %v7284
    %v8293 = vpack.c.b16 %v7289, %v7285
    %v8294 = vpack.c.b16 %v7290, %v7286
    %v8295 = vpack.c.b16 %v7291, %v7287
    %v8296 = vpack.c.b16 %v7296, %v7292
    %v8297 = vpack.c.b16 %v7297, %v7293
    %v8298 = vpack.c.b16 %v7298, %v7294
    %v8299 = vpack.c.b16 %v7299, %v7295
    %v8300 = vpack.c.b16 %v7304, %v7300
    %v8301 = vpack.c.b16 %v7305, %v7301
    %v8302 = vpack.c.b16 %v7306, %v7302
    %v8303 = vpack.c.b16 %v7307, %v7303
    %v8304 = vpack.c.b16 %v7312, %v7308
    %v8305 = vpack.c.b16 %v7313, %v7309
    %v8306 = vpack.c.b16 %v7314, %v7310
    %v8307 = vpack.c.b16 %v7315, %v7311
    %v8308 = vpack.c.b16 %v7320, %v7316
    %v8309 = vpack.c.b16 %v7321, %v7317
    %v8310 = vpack.c.b16 %v7322, %v7318
    %v8311 = vpack.c.b16 %v7323, %v7319
    %v8312 = vpack.c.b16 %v7328, %v7324
    %v8313 = vpack.c.b16 %v7329, %v7325
    %v8314 = vpack.c.b16 %v7330, %v7326
    %v8315 = vpack.c.b16 %v7331, %v7327
    %v8316 = vpack.c.b16 %v7336, %v7332
    %v8317 = vpack.c.b16 %v7337, %v7333
    %v8318 = vpack.c.b16 %v7338, %v7334
    %v8319 = vpack.c.b16 %v7339, %v7335
    %v8320 = vpack.c.b16 %v7344, %v7340
    %v8321 = vpack.c.b16 %v7345, %v7341
    %v8322 = vpack.c.b16 %v7346, %v7342
    %v8323 = vpack.c.b16 %v7347, %v7343
    %v8324 = vpack.c.b16 %v7352, %v7348
    %v8325 = vpack.c.b16 %v7353, %v7349
    %v8326 = vpack.c.b16 %v7354, %v7350
    %v8327 = vpack.c.b16 %v7355, %v7351
    %v8328 = vpack.c.b16 %v7360, %v7356
    %v8329 = vpack.c.b16 %v7361, %v7357
    %v8330 = vpack.c.b16 %v7362, %v7358
    %v8331 = vpack.c.b16 %v7363, %v7359
    %v8332 = vpack.c.b16 %v7368, %v7364
    %v8333 = vpack.c.b16 %v7369, %v7365
    %v8334 = vpack.c.b16 %v7370, %v7366
    %v8335 = vpack.c.b16 %v7371, %v7367
    %v8336 = vpack.c.b16 %v7376, %v7372
    %v8337 = vpack.c.b16 %v7377, %v7373
    %v8338 = vpack.c.b16 %v7378, %v7374
    %v8339 = vpack.c.b16 %v7379, %v7375
    %v8340 = vpack.c.b16 %v7384, %v7380
    %v8341 = vpack.c.b16 %v7385, %v7381
    %v8342 = vpack.c.b16 %v7386, %v7382
    %v8343 = vpack.c.b16 %v7387, %v7383
    %v8344 = vpack.c.b16 %v7392, %v7388
    %v8345 = vpack.c.b16 %v7393, %v7389
    %v8346 = vpack.c.b16 %v7394, %v7390
    %v8347 = vpack.c.b16 %v7395, %v7391
    %v8348 = vpack.c.b16 %v7400, %v7396
    %v8349 = vpack.c.b16 %v7401, %v7397
    %v8350 = vpack.c.b16 %v7402, %v7398
    %v8351 = vpack.c.b16 %v7403, %v7399
    %v8352 = vpack.c.b16 %v7408, %v7404
    %v8353 = vpack.c.b16 %v7409, %v7405
    %v8354 = vpack.c.b16 %v7410, %v7406
    %v8355 = vpack.c.b16 %v7411, %v7407
    %v9301 = vsel %vm517, %v3613, 0
    %9303 = vmatprep.subr.bf16.mxu0 %v7413
    %9304 = vmatpush1.bf16.msra.mxu0 %v7412
    %9305 = vmatprep.subr.bf16.mxu0 %v7417
    %9306 = vmatpush1.bf16.msra.mxu0 %v7416
    %9307 = vmatprep.subr.bf16.mxu0 %v7421
    %9308 = vmatpush1.bf16.msra.mxu0 %v7420
    %9309 = vmatprep.subr.bf16.mxu0 %v7425
    %9310 = vmatpush1.bf16.msra.mxu0 %v7424
    %9311 = vmatprep.subr.bf16.mxu0 %v7429
    %9312 = vmatpush1.bf16.msra.mxu0 %v7428
    %9313 = vmatprep.subr.bf16.mxu0 %v7433
    %9314 = vmatpush1.bf16.msra.mxu0 %v7432
    %9315 = vmatprep.subr.bf16.mxu0 %v7437
    %9316 = vmatpush1.bf16.msra.mxu0 %v7436
    %9317 = vmatprep.subr.bf16.mxu0 %v7441
    %9318 = vmatpush1.bf16.msra.mxu0 %v7440
    %9319 = vmatprep.subr.bf16.mxu0 %v7445
    %9320 = vmatpush1.bf16.msra.mxu0 %v7444
    %9321 = vmatprep.subr.bf16.mxu0 %v7449
    %9322 = vmatpush1.bf16.msra.mxu0 %v7448
    %9323 = vmatprep.subr.bf16.mxu0 %v7453
    %9324 = vmatpush1.bf16.msra.mxu0 %v7452
    %9325 = vmatprep.subr.bf16.mxu0 %v7457
    %9326 = vmatpush1.bf16.msra.mxu0 %v7456
    %9327 = vmatprep.subr.bf16.mxu0 %v7461
    %9328 = vmatpush1.bf16.msra.mxu0 %v7460
    %9329 = vmatprep.subr.bf16.mxu0 %v7465
    %9330 = vmatpush1.bf16.msra.mxu0 %v7464
    %9331 = vmatprep.subr.bf16.mxu0 %v7469
    %9332 = vmatpush1.bf16.msra.mxu0 %v7468
    %9333 = vmatprep.subr.bf16.mxu0 %v7473
    %9334 = vmatpush1.bf16.msra.mxu0 %v7472
    %9335 = vmatprep.mubr.bf16.mxu0 %v3585
    %9336 = vmatmul.mubr.bf16.gmra.mrb[0].mxu0 %v3584
    %v9337 = vpop.f32.mrb[0].mxu0
    %v9338 = vadd.f32 %v4563, %v9337
    %v9339 = vpop.f32.mrb[0].mxu0
    %v9340 = vadd.f32 %v4567, %v9339
    %v9341 = vpop.f32.mrb[0].mxu0
    %v9342 = vpop.f32.mrb[0].mxu0
    %9343 = vdwg.mxu0
    %9344 = vmatprep.subr.bf16.mxu0 %v7477
    %9345 = vmatpush1.bf16.msra.mxu0 %v7476
    %9346 = vmatprep.subr.bf16.mxu0 %v7481
    %9347 = vmatpush1.bf16.msra.mxu0 %v7480
    %9348 = vmatprep.subr.bf16.mxu0 %v7485
    %9349 = vmatpush1.bf16.msra.mxu0 %v7484
    %9350 = vmatprep.subr.bf16.mxu0 %v7489
    %9351 = vmatpush1.bf16.msra.mxu0 %v7488
    %9352 = vmatprep.subr.bf16.mxu0 %v7493
    %9353 = vmatpush1.bf16.msra.mxu0 %v7492
    %9354 = vmatprep.subr.bf16.mxu0 %v7497
    %9355 = vmatpush1.bf16.msra.mxu0 %v7496
    %9356 = vmatprep.subr.bf16.mxu0 %v7501
    %9357 = vmatpush1.bf16.msra.mxu0 %v7500
    %9358 = vmatprep.subr.bf16.mxu0 %v7505
    %9359 = vmatpush1.bf16.msra.mxu0 %v7504
    %9360 = vmatprep.subr.bf16.mxu0 %v7509
    %9361 = vmatpush1.bf16.msra.mxu0 %v7508
    %9362 = vmatprep.subr.bf16.mxu0 %v7513
    %9363 = vmatpush1.bf16.msra.mxu0 %v7512
    %9364 = vmatprep.subr.bf16.mxu0 %v7517
    %9365 = vmatpush1.bf16.msra.mxu0 %v7516
    %9366 = vmatprep.subr.bf16.mxu0 %v7521
    %9367 = vmatpush1.bf16.msra.mxu0 %v7520
    %9368 = vmatprep.subr.bf16.mxu0 %v7525
    %9369 = vmatpush1.bf16.msra.mxu0 %v7524
    %9370 = vmatprep.subr.bf16.mxu0 %v7529
    %9371 = vmatpush1.bf16.msra.mxu0 %v7528
    %9372 = vmatprep.subr.bf16.mxu0 %v7533
    %9373 = vmatpush1.bf16.msra.mxu0 %v7532
    %9374 = vmatprep.subr.bf16.mxu0 %v7537
    %9375 = vmatpush1.bf16.msra.mxu0 %v7536
    %9376 = vmatprep.mubr.bf16.mxu0 %v3587
    %9377 = vmatmul.mubr.bf16.gmra.mrb[0].mxu0 %v3586
    %v9378 = vpop.f32.mrb[0].mxu0
    %v9379 = vadd.f32 %v9338, %v9378
    %v9380 = vpop.f32.mrb[0].mxu0
    %v9381 = vadd.f32 %v9340, %v9380
    %v9382 = vpop.f32.mrb[0].mxu0
    %v9383 = vpop.f32.mrb[0].mxu0
    %9384 = vdwg.mxu0
    %9385 = vmatprep.subr.bf16.mxu0 %v7541
    %9386 = vmatpush1.bf16.msra.mxu0 %v7540
    %9387 = vmatprep.subr.bf16.mxu0 %v7545
    %9388 = vmatpush1.bf16.msra.mxu0 %v7544
    %9389 = vmatprep.subr.bf16.mxu0 %v7549
    %9390 = vmatpush1.bf16.msra.mxu0 %v7548
    %9391 = vmatprep.subr.bf16.mxu0 %v7553
    %9392 = vmatpush1.bf16.msra.mxu0 %v7552
    %9393 = vmatprep.subr.bf16.mxu0 %v7557
    %9394 = vmatpush1.bf16.msra.mxu0 %v7556
    %9395 = vmatprep.subr.bf16.mxu0 %v7561
    %9396 = vmatpush1.bf16.msra.mxu0 %v7560
    %9397 = vmatprep.subr.bf16.mxu0 %v7565
    %9398 = vmatpush1.bf16.msra.mxu0 %v7564
    %9399 = vmatprep.subr.bf16.mxu0 %v7569
    %9400 = vmatpush1.bf16.msra.mxu0 %v7568
    %9401 = vmatprep.subr.bf16.mxu0 %v7573
    %9402 = vmatpush1.bf16.msra.mxu0 %v7572
    %9403 = vmatprep.subr.bf16.mxu0 %v7577
    %9404 = vmatpush1.bf16.msra.mxu0 %v7576
    %9405 = vmatprep.subr.bf16.mxu0 %v7581
    %9406 = vmatpush1.bf16.msra.mxu0 %v7580
    %9407 = vmatprep.subr.bf16.mxu0 %v7585
    %9408 = vmatpush1.bf16.msra.mxu0 %v7584
    %9409 = vmatprep.subr.bf16.mxu0 %v7589
    %9410 = vmatpush1.bf16.msra.mxu0 %v7588
    %9411 = vmatprep.subr.bf16.mxu0 %v7593
    %9412 = vmatpush1.bf16.msra.mxu0 %v7592
    %9413 = vmatprep.subr.bf16.mxu0 %v7597
    %9414 = vmatpush1.bf16.msra.mxu0 %v7596
    %9415 = vmatprep.subr.bf16.mxu0 %v7601
    %9416 = vmatpush1.bf16.msra.mxu0 %v7600
    %9417 = vmatprep.mubr.bf16.mxu0 %v3589
    %9418 = vmatmul.mubr.bf16.gmra.mrb[0].mxu0 %v3588
    %v9419 = vpop.f32.mrb[0].mxu0
    %v9420 = vadd.f32 %v9379, %v9419
    %v9421 = vpop.f32.mrb[0].mxu0
    %v9422 = vadd.f32 %v9381, %v9421
    %v9423 = vpop.f32.mrb[0].mxu0
    %v9424 = vpop.f32.mrb[0].mxu0
    %9425 = vdwg.mxu0
    %9426 = vmatprep.subr.bf16.mxu0 %v7605
    %9427 = vmatpush1.bf16.msra.mxu0 %v7604
    %9428 = vmatprep.subr.bf16.mxu0 %v7609
    %9429 = vmatpush1.bf16.msra.mxu0 %v7608
    %9430 = vmatprep.subr.bf16.mxu0 %v7613
    %9431 = vmatpush1.bf16.msra.mxu0 %v7612
    %9432 = vmatprep.subr.bf16.mxu0 %v7617
    %9433 = vmatpush1.bf16.msra.mxu0 %v7616
    %9434 = vmatprep.subr.bf16.mxu0 %v7621
    %9435 = vmatpush1.bf16.msra.mxu0 %v7620
    %9436 = vmatprep.subr.bf16.mxu0 %v7625
    %9437 = vmatpush1.bf16.msra.mxu0 %v7624
    %9438 = vmatprep.subr.bf16.mxu0 %v7629
    %9439 = vmatpush1.bf16.msra.mxu0 %v7628
    %9440 = vmatprep.subr.bf16.mxu0 %v7633
    %9441 = vmatpush1.bf16.msra.mxu0 %v7632
    %9442 = vmatprep.subr.bf16.mxu0 %v7637
    %9443 = vmatpush1.bf16.msra.mxu0 %v7636
    %9444 = vmatprep.subr.bf16.mxu0 %v7641
    %9445 = vmatpush1.bf16.msra.mxu0 %v7640
    %9446 = vmatprep.subr.bf16.mxu0 %v7645
    %9447 = vmatpush1.bf16.msra.mxu0 %v7644
    %9448 = vmatprep.subr.bf16.mxu0 %v7649
    %9449 = vmatpush1.bf16.msra.mxu0 %v7648
    %9450 = vmatprep.subr.bf16.mxu0 %v7653
    %9451 = vmatpush1.bf16.msra.mxu0 %v7652
    %9452 = vmatprep.subr.bf16.mxu0 %v7657
    %9453 = vmatpush1.bf16.msra.mxu0 %v7656
    %9454 = vmatprep.subr.bf16.mxu0 %v7661
    %9455 = vmatpush1.bf16.msra.mxu0 %v7660
    %9456 = vmatprep.subr.bf16.mxu0 %v7665
    %9457 = vmatpush1.bf16.msra.mxu0 %v7664
    %9458 = vmatprep.mubr.bf16.mxu0 %v3591
    %9459 = vmatmul.mubr.bf16.gmra.mrb[0].mxu0 %v3590
    %v9460 = vpop.f32.mrb[0].mxu0
    %v9461 = vadd.f32 %v9420, %v9460
    %v9462 = vpop.f32.mrb[0].mxu0
    %v9463 = vadd.f32 %v9422, %v9462
    %v9464 = vpop.f32.mrb[0].mxu0
    %v9465 = vpop.f32.mrb[0].mxu0
    %9466 = vdwg.mxu0
    %9467 = vmatprep.subr.bf16.mxu0 %v7669
    %9468 = vmatpush1.bf16.msra.mxu0 %v7668
    %9469 = vmatprep.subr.bf16.mxu0 %v7673
    %9470 = vmatpush1.bf16.msra.mxu0 %v7672
    %9471 = vmatprep.subr.bf16.mxu0 %v7677
    %9472 = vmatpush1.bf16.msra.mxu0 %v7676
    %9473 = vmatprep.subr.bf16.mxu0 %v7681
    %9474 = vmatpush1.bf16.msra.mxu0 %v7680
    %9475 = vmatprep.subr.bf16.mxu0 %v7685
    %9476 = vmatpush1.bf16.msra.mxu0 %v7684
    %9477 = vmatprep.subr.bf16.mxu0 %v7689
    %9478 = vmatpush1.bf16.msra.mxu0 %v7688
    %9479 = vmatprep.subr.bf16.mxu0 %v7693
    %9480 = vmatpush1.bf16.msra.mxu0 %v7692
    %9481 = vmatprep.subr.bf16.mxu0 %v7697
    %9482 = vmatpush1.bf16.msra.mxu0 %v7696
    %9483 = vmatprep.subr.bf16.mxu0 %v7701
    %9484 = vmatpush1.bf16.msra.mxu0 %v7700
    %9485 = vmatprep.subr.bf16.mxu0 %v7705
    %9486 = vmatpush1.bf16.msra.mxu0 %v7704
    %9487 = vmatprep.subr.bf16.mxu0 %v7709
    %9488 = vmatpush1.bf16.msra.mxu0 %v7708
    %9489 = vmatprep.subr.bf16.mxu0 %v7713
    %9490 = vmatpush1.bf16.msra.mxu0 %v7712
    %9491 = vmatprep.subr.bf16.mxu0 %v7717
    %9492 = vmatpush1.bf16.msra.mxu0 %v7716
    %9493 = vmatprep.subr.bf16.mxu0 %v7721
    %9494 = vmatpush1.bf16.msra.mxu0 %v7720
    %9495 = vmatprep.subr.bf16.mxu0 %v7725
    %9496 = vmatpush1.bf16.msra.mxu0 %v7724
    %9497 = vmatprep.subr.bf16.mxu0 %v7729
    %9498 = vmatpush1.bf16.msra.mxu0 %v7728
    %9499 = vmatprep.mubr.bf16.mxu0 %v3593
    %9500 = vmatmul.mubr.bf16.gmra.mrb[0].mxu0 %v3592
    %v9501 = vpop.f32.mrb[0].mxu0
    %v9502 = vadd.f32 %v9461, %v9501
    %v9503 = vpop.f32.mrb[0].mxu0
    %v9504 = vadd.f32 %v9463, %v9503
    %v9505 = vpop.f32.mrb[0].mxu0
    %v9506 = vpop.f32.mrb[0].mxu0
    %9507 = vdwg.mxu0
    %9508 = vmatprep.subr.bf16.mxu0 %v7733
    %9509 = vmatpush1.bf16.msra.mxu0 %v7732
    %9510 = vmatprep.subr.bf16.mxu0 %v7737
    %9511 = vmatpush1.bf16.msra.mxu0 %v7736
    %9512 = vmatprep.subr.bf16.mxu0 %v7741
    %9513 = vmatpush1.bf16.msra.mxu0 %v7740
    %9514 = vmatprep.subr.bf16.mxu0 %v7745
    %9515 = vmatpush1.bf16.msra.mxu0 %v7744
    %9516 = vmatprep.subr.bf16.mxu0 %v7749
    %9517 = vmatpush1.bf16.msra.mxu0 %v7748
    %9518 = vmatprep.subr.bf16.mxu0 %v7753
    %9519 = vmatpush1.bf16.msra.mxu0 %v7752
    %9520 = vmatprep.subr.bf16.mxu0 %v7757
    %9521 = vmatpush1.bf16.msra.mxu0 %v7756
    %9522 = vmatprep.subr.bf16.mxu0 %v7761
    %9523 = vmatpush1.bf16.msra.mxu0 %v7760
    %9524 = vmatprep.subr.bf16.mxu0 %v7765
    %9525 = vmatpush1.bf16.msra.mxu0 %v7764
    %9526 = vmatprep.subr.bf16.mxu0 %v7769
    %9527 = vmatpush1.bf16.msra.mxu0 %v7768
    %9528 = vmatprep.subr.bf16.mxu0 %v7773
    %9529 = vmatpush1.bf16.msra.mxu0 %v7772
    %9530 = vmatprep.subr.bf16.mxu0 %v7777
    %9531 = vmatpush1.bf16.msra.mxu0 %v7776
    %9532 = vmatprep.subr.bf16.mxu0 %v7781
    %9533 = vmatpush1.bf16.msra.mxu0 %v7780
    %9534 = vmatprep.subr.bf16.mxu0 %v7785
    %9535 = vmatpush1.bf16.msra.mxu0 %v7784
    %9536 = vmatprep.subr.bf16.mxu0 %v7789
    %9537 = vmatpush1.bf16.msra.mxu0 %v7788
    %9538 = vmatprep.subr.bf16.mxu0 %v7793
    %9539 = vmatpush1.bf16.msra.mxu0 %v7792
    %9540 = vmatprep.mubr.bf16.mxu0 %v3595
    %9541 = vmatmul.mubr.bf16.gmra.mrb[0].mxu0 %v3594
    %v9542 = vpop.f32.mrb[0].mxu0
    %v9543 = vadd.f32 %v9502, %v9542
    %v9544 = vpop.f32.mrb[0].mxu0
    %v9545 = vadd.f32 %v9504, %v9544
    %v9546 = vpop.f32.mrb[0].mxu0
    %v9547 = vpop.f32.mrb[0].mxu0
    %9548 = vdwg.mxu0
    %9549 = vmatprep.subr.bf16.mxu0 %v7797
    %9550 = vmatpush1.bf16.msra.mxu0 %v7796
    %9551 = vmatprep.subr.bf16.mxu0 %v7801
    %9552 = vmatpush1.bf16.msra.mxu0 %v7800
    %9553 = vmatprep.subr.bf16.mxu0 %v7805
    %9554 = vmatpush1.bf16.msra.mxu0 %v7804
    %9555 = vmatprep.subr.bf16.mxu0 %v7809
    %9556 = vmatpush1.bf16.msra.mxu0 %v7808
    %9557 = vmatprep.subr.bf16.mxu0 %v7813
    %9558 = vmatpush1.bf16.msra.mxu0 %v7812
    %9559 = vmatprep.subr.bf16.mxu0 %v7817
    %9560 = vmatpush1.bf16.msra.mxu0 %v7816
    %9561 = vmatprep.subr.bf16.mxu0 %v7821
    %9562 = vmatpush1.bf16.msra.mxu0 %v7820
    %9563 = vmatprep.subr.bf16.mxu0 %v7825
    %9564 = vmatpush1.bf16.msra.mxu0 %v7824
    %9565 = vmatprep.subr.bf16.mxu0 %v7829
    %9566 = vmatpush1.bf16.msra.mxu0 %v7828
    %9567 = vmatprep.subr.bf16.mxu0 %v7833
    %9568 = vmatpush1.bf16.msra.mxu0 %v7832
    %9569 = vmatprep.subr.bf16.mxu0 %v7837
    %9570 = vmatpush1.bf16.msra.mxu0 %v7836
    %9571 = vmatprep.subr.bf16.mxu0 %v7841
    %9572 = vmatpush1.bf16.msra.mxu0 %v7840
    %9573 = vmatprep.subr.bf16.mxu0 %v7845
    %9574 = vmatpush1.bf16.msra.mxu0 %v7844
    %9575 = vmatprep.subr.bf16.mxu0 %v7849
    %9576 = vmatpush1.bf16.msra.mxu0 %v7848
    %9577 = vmatprep.subr.bf16.mxu0 %v7853
    %9578 = vmatpush1.bf16.msra.mxu0 %v7852
    %9579 = vmatprep.subr.bf16.mxu0 %v7857
    %9580 = vmatpush1.bf16.msra.mxu0 %v7856
    %9581 = vmatprep.mubr.bf16.mxu0 %v3597
    %9582 = vmatmul.mubr.bf16.gmra.mrb[0].mxu0 %v3596
    %v9583 = vpop.f32.mrb[0].mxu0
    %v9584 = vadd.f32 %v9543, %v9583
    %v9585 = vpop.f32.mrb[0].mxu0
    %v9586 = vadd.f32 %v9545, %v9585
    %v9587 = vpop.f32.mrb[0].mxu0
    %v9588 = vpop.f32.mrb[0].mxu0
    %9589 = vdwg.mxu0
    %9590 = vmatprep.subr.bf16.mxu0 %v7861
    %9591 = vmatpush1.bf16.msra.mxu0 %v7860
    %9592 = vmatprep.subr.bf16.mxu0 %v7865
    %9593 = vmatpush1.bf16.msra.mxu0 %v7864
    %9594 = vmatprep.subr.bf16.mxu0 %v7869
    %9595 = vmatpush1.bf16.msra.mxu0 %v7868
    %9596 = vmatprep.subr.bf16.mxu0 %v7873
    %9597 = vmatpush1.bf16.msra.mxu0 %v7872
    %9598 = vmatprep.subr.bf16.mxu0 %v7877
    %9599 = vmatpush1.bf16.msra.mxu0 %v7876
    %9600 = vmatprep.subr.bf16.mxu0 %v7881
    %9601 = vmatpush1.bf16.msra.mxu0 %v7880
    %9602 = vmatprep.subr.bf16.mxu0 %v7885
    %9603 = vmatpush1.bf16.msra.mxu0 %v7884
    %9604 = vmatprep.subr.bf16.mxu0 %v7889
    %9605 = vmatpush1.bf16.msra.mxu0 %v7888
    %9606 = vmatprep.subr.bf16.mxu0 %v7893
    %9607 = vmatpush1.bf16.msra.mxu0 %v7892
    %9608 = vmatprep.subr.bf16.mxu0 %v7897
    %9609 = vmatpush1.bf16.msra.mxu0 %v7896
    %9610 = vmatprep.subr.bf16.mxu0 %v7901
    %9611 = vmatpush1.bf16.msra.mxu0 %v7900
    %9612 = vmatprep.subr.bf16.mxu0 %v7905
    %9613 = vmatpush1.bf16.msra.mxu0 %v7904
    %9614 = vmatprep.subr.bf16.mxu0 %v7909
    %9615 = vmatpush1.bf16.msra.mxu0 %v7908
    %9616 = vmatprep.subr.bf16.mxu0 %v7913
    %9617 = vmatpush1.bf16.msra.mxu0 %v7912
    %9618 = vmatprep.subr.bf16.mxu0 %v7917
    %9619 = vmatpush1.bf16.msra.mxu0 %v7916
    %9620 = vmatprep.subr.bf16.mxu0 %v7921
    %9621 = vmatpush1.bf16.msra.mxu0 %v7920
    %9622 = vmatprep.mubr.bf16.mxu0 %v3599
    %9623 = vmatmul.mubr.bf16.gmra.mrb[0].mxu0 %v3598
    %v9624 = vpop.f32.mrb[0].mxu0
    %v9625 = vadd.f32 %v9584, %v9624
    %v9626 = vpop.f32.mrb[0].mxu0
    %v9627 = vadd.f32 %v9586, %v9626
    %v9628 = vpop.f32.mrb[0].mxu0
    %v9629 = vpop.f32.mrb[0].mxu0
    %9630 = vdwg.mxu0
    %9631 = vmatprep.subr.bf16.mxu0 %v7925
    %9632 = vmatpush1.bf16.msra.mxu0 %v7924
    %9633 = vmatprep.subr.bf16.mxu0 %v7929
    %9634 = vmatpush1.bf16.msra.mxu0 %v7928
    %9635 = vmatprep.subr.bf16.mxu0 %v7933
    %9636 = vmatpush1.bf16.msra.mxu0 %v7932
    %9637 = vmatprep.subr.bf16.mxu0 %v7937
    %9638 = vmatpush1.bf16.msra.mxu0 %v7936
    %9639 = vmatprep.subr.bf16.mxu0 %v7941
    %9640 = vmatpush1.bf16.msra.mxu0 %v7940
    %9641 = vmatprep.subr.bf16.mxu0 %v7945
    %9642 = vmatpush1.bf16.msra.mxu0 %v7944
    %9643 = vmatprep.subr.bf16.mxu0 %v7949
    %9644 = vmatpush1.bf16.msra.mxu0 %v7948
    %9645 = vmatprep.subr.bf16.mxu0 %v7953
    %9646 = vmatpush1.bf16.msra.mxu0 %v7952
    %9647 = vmatprep.subr.bf16.mxu0 %v7957
    %9648 = vmatpush1.bf16.msra.mxu0 %v7956
    %9649 = vmatprep.subr.bf16.mxu0 %v7961
    %9650 = vmatpush1.bf16.msra.mxu0 %v7960
    %9651 = vmatprep.subr.bf16.mxu0 %v7965
    %9652 = vmatpush1.bf16.msra.mxu0 %v7964
    %9653 = vmatprep.subr.bf16.mxu0 %v7969
    %9654 = vmatpush1.bf16.msra.mxu0 %v7968
    %9655 = vmatprep.subr.bf16.mxu0 %v7973
    %9656 = vmatpush1.bf16.msra.mxu0 %v7972
    %9657 = vmatprep.subr.bf16.mxu0 %v7977
    %9658 = vmatpush1.bf16.msra.mxu0 %v7976
    %9659 = vmatprep.subr.bf16.mxu0 %v7981
    %9660 = vmatpush1.bf16.msra.mxu0 %v7980
    %9661 = vmatprep.subr.bf16.mxu0 %v7985
    %9662 = vmatpush1.bf16.msra.mxu0 %v7984
    %9663 = vmatprep.mubr.bf16.mxu0 %v3601
    %9664 = vmatmul.mubr.bf16.gmra.mrb[0].mxu0 %v3600
    %v9665 = vpop.f32.mrb[0].mxu0
    %v9666 = vadd.f32 %v9625, %v9665
    %v9667 = vpop.f32.mrb[0].mxu0
    %v9668 = vadd.f32 %v9627, %v9667
    %v9669 = vpop.f32.mrb[0].mxu0
    %v9670 = vpop.f32.mrb[0].mxu0
    %9671 = vdwg.mxu0
    %9672 = vmatprep.subr.bf16.mxu0 %v7989
    %9673 = vmatpush1.bf16.msra.mxu0 %v7988
    %9674 = vmatprep.subr.bf16.mxu0 %v7993
    %9675 = vmatpush1.bf16.msra.mxu0 %v7992
    %9676 = vmatprep.subr.bf16.mxu0 %v7997
    %9677 = vmatpush1.bf16.msra.mxu0 %v7996
    %9678 = vmatprep.subr.bf16.mxu0 %v8001
    %9679 = vmatpush1.bf16.msra.mxu0 %v8000
    %9680 = vmatprep.subr.bf16.mxu0 %v8005
    %9681 = vmatpush1.bf16.msra.mxu0 %v8004
    %9682 = vmatprep.subr.bf16.mxu0 %v8009
    %9683 = vmatpush1.bf16.msra.mxu0 %v8008
    %9684 = vmatprep.subr.bf16.mxu0 %v8013
    %9685 = vmatpush1.bf16.msra.mxu0 %v8012
    %9686 = vmatprep.subr.bf16.mxu0 %v8017
    %9687 = vmatpush1.bf16.msra.mxu0 %v8016
    %9688 = vmatprep.subr.bf16.mxu0 %v8021
    %9689 = vmatpush1.bf16.msra.mxu0 %v8020
    %9690 = vmatprep.subr.bf16.mxu0 %v8025
    %9691 = vmatpush1.bf16.msra.mxu0 %v8024
    %9692 = vmatprep.subr.bf16.mxu0 %v8029
    %9693 = vmatpush1.bf16.msra.mxu0 %v8028
    %9694 = vmatprep.subr.bf16.mxu0 %v8033
    %9695 = vmatpush1.bf16.msra.mxu0 %v8032
    %9696 = vmatprep.subr.bf16.mxu0 %v8037
    %9697 = vmatpush1.bf16.msra.mxu0 %v8036
    %9698 = vmatprep.subr.bf16.mxu0 %v8041
    %9699 = vmatpush1.bf16.msra.mxu0 %v8040
    %9700 = vmatprep.subr.bf16.mxu0 %v8045
    %9701 = vmatpush1.bf16.msra.mxu0 %v8044
    %9702 = vmatprep.subr.bf16.mxu0 %v8049
    %9703 = vmatpush1.bf16.msra.mxu0 %v8048
    %9704 = vmatprep.mubr.bf16.mxu0 %v3603
    %9705 = vmatmul.mubr.bf16.gmra.mrb[0].mxu0 %v3602
    %v9706 = vpop.f32.mrb[0].mxu0
    %v9707 = vadd.f32 %v9666, %v9706
    %v9708 = vpop.f32.mrb[0].mxu0
    %v9709 = vadd.f32 %v9668, %v9708
    %v9710 = vpop.f32.mrb[0].mxu0
    %v9711 = vpop.f32.mrb[0].mxu0
    %9712 = vdwg.mxu0
    %9713 = vmatprep.subr.bf16.mxu0 %v8053
    %9714 = vmatpush1.bf16.msra.mxu0 %v8052
    %9715 = vmatprep.subr.bf16.mxu0 %v8057
    %9716 = vmatpush1.bf16.msra.mxu0 %v8056
    %9717 = vmatprep.subr.bf16.mxu0 %v8061
    %9718 = vmatpush1.bf16.msra.mxu0 %v8060
    %9719 = vmatprep.subr.bf16.mxu0 %v8065
    %9720 = vmatpush1.bf16.msra.mxu0 %v8064
    %9721 = vmatprep.subr.bf16.mxu0 %v8069
    %9722 = vmatpush1.bf16.msra.mxu0 %v8068
    %9723 = vmatprep.subr.bf16.mxu0 %v8073
    %9724 = vmatpush1.bf16.msra.mxu0 %v8072
    %9725 = vmatprep.subr.bf16.mxu0 %v8077
    %9726 = vmatpush1.bf16.msra.mxu0 %v8076
    %9727 = vmatprep.subr.bf16.mxu0 %v8081
    %9728 = vmatpush1.bf16.msra.mxu0 %v8080
    %9729 = vmatprep.subr.bf16.mxu0 %v8085
    %9730 = vmatpush1.bf16.msra.mxu0 %v8084
    %9731 = vmatprep.subr.bf16.mxu0 %v8089
    %9732 = vmatpush1.bf16.msra.mxu0 %v8088
    %9733 = vmatprep.subr.bf16.mxu0 %v8093
    %9734 = vmatpush1.bf16.msra.mxu0 %v8092
    %9735 = vmatprep.subr.bf16.mxu0 %v8097
    %9736 = vmatpush1.bf16.msra.mxu0 %v8096
    %9737 = vmatprep.subr.bf16.mxu0 %v8101
    %9738 = vmatpush1.bf16.msra.mxu0 %v8100
    %9739 = vmatprep.subr.bf16.mxu0 %v8105
    %9740 = vmatpush1.bf16.msra.mxu0 %v8104
    %9741 = vmatprep.subr.bf16.mxu0 %v8109
    %9742 = vmatpush1.bf16.msra.mxu0 %v8108
    %9743 = vmatprep.subr.bf16.mxu0 %v8113
    %9744 = vmatpush1.bf16.msra.mxu0 %v8112
    %9745 = vmatprep.mubr.bf16.mxu0 %v3605
    %9746 = vmatmul.mubr.bf16.gmra.mrb[0].mxu0 %v3604
    %v9747 = vpop.f32.mrb[0].mxu0
    %v9748 = vadd.f32 %v9707, %v9747
    %v9749 = vpop.f32.mrb[0].mxu0
    %v9750 = vadd.f32 %v9709, %v9749
    %v9751 = vpop.f32.mrb[0].mxu0
    %v9752 = vpop.f32.mrb[0].mxu0
    %9753 = vdwg.mxu0
    %9754 = vmatprep.subr.bf16.mxu0 %v8117
    %9755 = vmatpush1.bf16.msra.mxu0 %v8116
    %9756 = vmatprep.subr.bf16.mxu0 %v8121
    %9757 = vmatpush1.bf16.msra.mxu0 %v8120
    %9758 = vmatprep.subr.bf16.mxu0 %v8125
    %9759 = vmatpush1.bf16.msra.mxu0 %v8124
    %9760 = vmatprep.subr.bf16.mxu0 %v8129
    %9761 = vmatpush1.bf16.msra.mxu0 %v8128
    %9762 = vmatprep.subr.bf16.mxu0 %v8133
    %9763 = vmatpush1.bf16.msra.mxu0 %v8132
    %9764 = vmatprep.subr.bf16.mxu0 %v8137
    %9765 = vmatpush1.bf16.msra.mxu0 %v8136
    %9766 = vmatprep.subr.bf16.mxu0 %v8141
    %9767 = vmatpush1.bf16.msra.mxu0 %v8140
    %9768 = vmatprep.subr.bf16.mxu0 %v8145
    %9769 = vmatpush1.bf16.msra.mxu0 %v8144
    %9770 = vmatprep.subr.bf16.mxu0 %v8149
    %9771 = vmatpush1.bf16.msra.mxu0 %v8148
    %9772 = vmatprep.subr.bf16.mxu0 %v8153
    %9773 = vmatpush1.bf16.msra.mxu0 %v8152
    %9774 = vmatprep.subr.bf16.mxu0 %v8157
    %9775 = vmatpush1.bf16.msra.mxu0 %v8156
    %9776 = vmatprep.subr.bf16.mxu0 %v8161
    %9777 = vmatpush1.bf16.msra.mxu0 %v8160
    %9778 = vmatprep.subr.bf16.mxu0 %v8165
    %9779 = vmatpush1.bf16.msra.mxu0 %v8164
    %9780 = vmatprep.subr.bf16.mxu0 %v8169
    %9781 = vmatpush1.bf16.msra.mxu0 %v8168
    %9782 = vmatprep.subr.bf16.mxu0 %v8173
    %9783 = vmatpush1.bf16.msra.mxu0 %v8172
    %9784 = vmatprep.subr.bf16.mxu0 %v8177
    %9785 = vmatpush1.bf16.msra.mxu0 %v8176
    %9786 = vmatprep.mubr.bf16.mxu0 %v3607
    %9787 = vmatmul.mubr.bf16.gmra.mrb[0].mxu0 %v3606
    %v9788 = vpop.f32.mrb[0].mxu0
    %v9789 = vadd.f32 %v9748, %v9788
    %v9790 = vpop.f32.mrb[0].mxu0
    %v9791 = vadd.f32 %v9750, %v9790
    %v9792 = vpop.f32.mrb[0].mxu0
    %v9793 = vpop.f32.mrb[0].mxu0
    %9794 = vdwg.mxu0
    %9795 = vmatprep.subr.bf16.mxu0 %v8181
    %9796 = vmatpush1.bf16.msra.mxu0 %v8180
    %9797 = vmatprep.subr.bf16.mxu0 %v8185
    %9798 = vmatpush1.bf16.msra.mxu0 %v8184
    %9799 = vmatprep.subr.bf16.mxu0 %v8189
    %9800 = vmatpush1.bf16.msra.mxu0 %v8188
    %9801 = vmatprep.subr.bf16.mxu0 %v8193
    %9802 = vmatpush1.bf16.msra.mxu0 %v8192
    %9803 = vmatprep.subr.bf16.mxu0 %v8197
    %9804 = vmatpush1.bf16.msra.mxu0 %v8196
    %9805 = vmatprep.subr.bf16.mxu0 %v8201
    %9806 = vmatpush1.bf16.msra.mxu0 %v8200
    %9807 = vmatprep.subr.bf16.mxu0 %v8205
    %9808 = vmatpush1.bf16.msra.mxu0 %v8204
    %9809 = vmatprep.subr.bf16.mxu0 %v8209
    %9810 = vmatpush1.bf16.msra.mxu0 %v8208
    %9811 = vmatprep.subr.bf16.mxu0 %v8213
    %9812 = vmatpush1.bf16.msra.mxu0 %v8212
    %9813 = vmatprep.subr.bf16.mxu0 %v8217
    %9814 = vmatpush1.bf16.msra.mxu0 %v8216
    %9815 = vmatprep.subr.bf16.mxu0 %v8221
    %9816 = vmatpush1.bf16.msra.mxu0 %v8220
    %9817 = vmatprep.subr.bf16.mxu0 %v8225
    %9818 = vmatpush1.bf16.msra.mxu0 %v8224
    %9819 = vmatprep.subr.bf16.mxu0 %v8229
    %9820 = vmatpush1.bf16.msra.mxu0 %v8228
    %9821 = vmatprep.subr.bf16.mxu0 %v8233
    %9822 = vmatpush1.bf16.msra.mxu0 %v8232
    %9823 = vmatprep.subr.bf16.mxu0 %v8237
    %9824 = vmatpush1.bf16.msra.mxu0 %v8236
    %9825 = vmatprep.subr.bf16.mxu0 %v8241
    %9826 = vmatpush1.bf16.msra.mxu0 %v8240
    %9827 = vmatprep.mubr.bf16.mxu0 %v3609
    %9828 = vmatmul.mubr.bf16.gmra.mrb[0].mxu0 %v3608
    %v9829 = vpop.f32.mrb[0].mxu0
    %v9830 = vadd.f32 %v9789, %v9829
    %v9831 = vpop.f32.mrb[0].mxu0
    %v9832 = vadd.f32 %v9791, %v9831
    %v9833 = vpop.f32.mrb[0].mxu0
    %v9834 = vpop.f32.mrb[0].mxu0
    %9835 = vdwg.mxu0
    %9836 = vmatprep.subr.bf16.mxu0 %v8245
    %9837 = vmatpush1.bf16.msra.mxu0 %v8244
    %9838 = vmatprep.subr.bf16.mxu0 %v8249
    %9839 = vmatpush1.bf16.msra.mxu0 %v8248
    %9840 = vmatprep.subr.bf16.mxu0 %v8253
    %9841 = vmatpush1.bf16.msra.mxu0 %v8252
    %9842 = vmatprep.subr.bf16.mxu0 %v8257
    %9843 = vmatpush1.bf16.msra.mxu0 %v8256
    %9844 = vmatprep.subr.bf16.mxu0 %v8261
    %9845 = vmatpush1.bf16.msra.mxu0 %v8260
    %9846 = vmatprep.subr.bf16.mxu0 %v8265
    %9847 = vmatpush1.bf16.msra.mxu0 %v8264
    %9848 = vmatprep.subr.bf16.mxu0 %v8269
    %9849 = vmatpush1.bf16.msra.mxu0 %v8268
    %9850 = vmatprep.subr.bf16.mxu0 %v8273
    %9851 = vmatpush1.bf16.msra.mxu0 %v8272
    %9852 = vmatprep.subr.bf16.mxu0 %v8277
    %9853 = vmatpush1.bf16.msra.mxu0 %v8276
    %9854 = vmatprep.subr.bf16.mxu0 %v8281
    %9855 = vmatpush1.bf16.msra.mxu0 %v8280
    %9856 = vmatprep.subr.bf16.mxu0 %v8285
    %9857 = vmatpush1.bf16.msra.mxu0 %v8284
    %9858 = vmatprep.subr.bf16.mxu0 %v8289
    %9859 = vmatpush1.bf16.msra.mxu0 %v8288
    %9860 = vmatprep.subr.bf16.mxu0 %v8293
    %9861 = vmatpush1.bf16.msra.mxu0 %v8292
    %9862 = vmatprep.subr.bf16.mxu0 %v8297
    %9863 = vmatpush1.bf16.msra.mxu0 %v8296
    %9864 = vmatprep.subr.bf16.mxu0 %v8301
    %9865 = vmatpush1.bf16.msra.mxu0 %v8300
    %9866 = vmatprep.subr.bf16.mxu0 %v8305
    %9867 = vmatpush1.bf16.msra.mxu0 %v8304
    %9868 = vmatprep.mubr.bf16.mxu0 %v3611
    %9869 = vmatmul.mubr.bf16.gmra.mrb[0].mxu0 %v3610
    %v9870 = vpop.f32.mrb[0].mxu0
    %v9871 = vadd.f32 %v9830, %v9870
    %v9872 = vpop.f32.mrb[0].mxu0
    %v9873 = vadd.f32 %v9832, %v9872
    %v9874 = vpop.f32.mrb[0].mxu0
    %v9875 = vpop.f32.mrb[0].mxu0
    %9876 = vdwg.mxu0
    %9877 = vmatprep.subr.bf16.mxu0 %v8309
    %9878 = vmatpush1.bf16.msra.mxu0 %v8308
    %9879 = vmatprep.subr.bf16.mxu0 %v8313
    %9880 = vmatpush1.bf16.msra.mxu0 %v8312
    %9881 = vmatprep.subr.bf16.mxu0 %v8317
    %9882 = vmatpush1.bf16.msra.mxu0 %v8316
    %9883 = vmatprep.subr.bf16.mxu0 %v8321
    %9884 = vmatpush1.bf16.msra.mxu0 %v8320
    %9885 = vmatprep.subr.bf16.mxu0 %v8325
    %9886 = vmatpush1.bf16.msra.mxu0 %v8324
    %9887 = vmatprep.subr.bf16.mxu0 %v8329
    %9888 = vmatpush1.bf16.msra.mxu0 %v8328
    %9889 = vmatprep.subr.bf16.mxu0 %v8333
    %9890 = vmatpush1.bf16.msra.mxu0 %v8332
    %9891 = vmatprep.subr.bf16.mxu0 %v8337
    %9892 = vmatpush1.bf16.msra.mxu0 %v8336
    %9893 = vmatprep.subr.bf16.mxu0 %v8341
    %9894 = vmatpush1.bf16.msra.mxu0 %v8340
    %9895 = vmatprep.subr.bf16.mxu0 %v8345
    %9896 = vmatpush1.bf16.msra.mxu0 %v8344
    %9897 = vmatprep.subr.bf16.mxu0 %v8349
    %9898 = vmatpush1.bf16.msra.mxu0 %v8348
    %9899 = vmatprep.subr.bf16.mxu0 %v8353
    %9900 = vmatpush1.bf16.msra.mxu0 %v8352
    %9901 = vmatprep.subr.bf16.mxu0 0
    %9902 = vmatpush1.bf16.msra.mxu0 0
    %9903 = vmatprep.subr.bf16.mxu0 0
    %9904 = vmatpush1.bf16.msra.mxu0 0
    %9905 = vmatprep.subr.bf16.mxu0 0
    %9906 = vmatpush1.bf16.msra.mxu0 0
    %9907 = vmatprep.subr.bf16.mxu0 0
    %9908 = vmatpush1.bf16.msra.mxu0 0
    %9909 = vmatprep.mubr.bf16.mxu0 %v9301
    %9910 = vmatmul.mubr.bf16.gmra.mrb[0].mxu0 %v3612
    %v9911 = vpop.f32.mrb[0].mxu0
    %v9912 = vadd.f32 %v9871, %v9911
    %v9913 = vpop.f32.mrb[0].mxu0
    %v9914 = vadd.f32 %v9873, %v9913
    %v9915 = vpop.f32.mrb[0].mxu0
    %v9916 = vpop.f32.mrb[0].mxu0
    %9917 = vdwg.mxu0
    %9918 = vmatprep.subr.bf16.mxu0 %v7415
    %9919 = vmatpush1.bf16.msra.mxu0 %v7414
    %9920 = vmatprep.subr.bf16.mxu0 %v7419
    %9921 = vmatpush1.bf16.msra.mxu0 %v7418
    %9922 = vmatprep.subr.bf16.mxu0 %v7423
    %9923 = vmatpush1.bf16.msra.mxu0 %v7422
    %9924 = vmatprep.subr.bf16.mxu0 %v7427
    %9925 = vmatpush1.bf16.msra.mxu0 %v7426
    %9926 = vmatprep.subr.bf16.mxu0 %v7431
    %9927 = vmatpush1.bf16.msra.mxu0 %v7430
    %9928 = vmatprep.subr.bf16.mxu0 %v7435
    %9929 = vmatpush1.bf16.msra.mxu0 %v7434
    %9930 = vmatprep.subr.bf16.mxu0 %v7439
    %9931 = vmatpush1.bf16.msra.mxu0 %v7438
    %9932 = vmatprep.subr.bf16.mxu0 %v7443
    %9933 = vmatpush1.bf16.msra.mxu0 %v7442
    %9934 = vmatprep.subr.bf16.mxu0 %v7447
    %9935 = vmatpush1.bf16.msra.mxu0 %v7446
    %9936 = vmatprep.subr.bf16.mxu0 %v7451
    %9937 = vmatpush1.bf16.msra.mxu0 %v7450
    %9938 = vmatprep.subr.bf16.mxu0 %v7455
    %9939 = vmatpush1.bf16.msra.mxu0 %v7454
    %9940 = vmatprep.subr.bf16.mxu0 %v7459
    %9941 = vmatpush1.bf16.msra.mxu0 %v7458
    %9942 = vmatprep.subr.bf16.mxu0 %v7463
    %9943 = vmatpush1.bf16.msra.mxu0 %v7462
    %9944 = vmatprep.subr.bf16.mxu0 %v7467
    %9945 = vmatpush1.bf16.msra.mxu0 %v7466
    %9946 = vmatprep.subr.bf16.mxu0 %v7471
    %9947 = vmatpush1.bf16.msra.mxu0 %v7470
    %9948 = vmatprep.subr.bf16.mxu0 %v7475
    %9949 = vmatpush1.bf16.msra.mxu0 %v7474
    %9950 = vmatprep.mubr.bf16.mxu0 %v3585
    %9951 = vmatmul.mubr.bf16.gmra.mrb[0].mxu0 %v3584
    %v9952 = vpop.f32.mrb[0].mxu0
    %v9953 = vadd.f32 %v4571, %v9952
    %v9954 = vpop.f32.mrb[0].mxu0
    %v9955 = vadd.f32 %v4575, %v9954
    %v9956 = vpop.f32.mrb[0].mxu0
    %v9957 = vpop.f32.mrb[0].mxu0
    %9958 = vdwg.mxu0
    %9959 = vmatprep.subr.bf16.mxu0 %v7479
    %9960 = vmatpush1.bf16.msra.mxu0 %v7478
    %9961 = vmatprep.subr.bf16.mxu0 %v7483
    %9962 = vmatpush1.bf16.msra.mxu0 %v7482
    %9963 = vmatprep.subr.bf16.mxu0 %v7487
    %9964 = vmatpush1.bf16.msra.mxu0 %v7486
    %9965 = vmatprep.subr.bf16.mxu0 %v7491
    %9966 = vmatpush1.bf16.msra.mxu0 %v7490
    %9967 = vmatprep.subr.bf16.mxu0 %v7495
    %9968 = vmatpush1.bf16.msra.mxu0 %v7494
    %9969 = vmatprep.subr.bf16.mxu0 %v7499
    %9970 = vmatpush1.bf16.msra.mxu0 %v7498
    %9971 = vmatprep.subr.bf16.mxu0 %v7503
    %9972 = vmatpush1.bf16.msra.mxu0 %v7502
    %9973 = vmatprep.subr.bf16.mxu0 %v7507
    %9974 = vmatpush1.bf16.msra.mxu0 %v7506
    %9975 = vmatprep.subr.bf16.mxu0 %v7511
    %9976 = vmatpush1.bf16.msra.mxu0 %v7510
    %9977 = vmatprep.subr.bf16.mxu0 %v7515
    %9978 = vmatpush1.bf16.msra.mxu0 %v7514
    %9979 = vmatprep.subr.bf16.mxu0 %v7519
    %9980 = vmatpush1.bf16.msra.mxu0 %v7518
    %9981 = vmatprep.subr.bf16.mxu0 %v7523
    %9982 = vmatpush1.bf16.msra.mxu0 %v7522
    %9983 = vmatprep.subr.bf16.mxu0 %v7527
    %9984 = vmatpush1.bf16.msra.mxu0 %v7526
    %9985 = vmatprep.subr.bf16.mxu0 %v7531
    %9986 = vmatpush1.bf16.msra.mxu0 %v7530
    %9987 = vmatprep.subr.bf16.mxu0 %v7535
    %9988 = vmatpush1.bf16.msra.mxu0 %v7534
    %9989 = vmatprep.subr.bf16.mxu0 %v7539
    %9990 = vmatpush1.bf16.msra.mxu0 %v7538
    %9991 = vmatprep.mubr.bf16.mxu0 %v3587
    %9992 = vmatmul.mubr.bf16.gmra.mrb[0].mxu0 %v3586
    %v9993 = vpop.f32.mrb[0].mxu0
    %v9994 = vadd.f32 %v9953, %v9993
    %v9995 = vpop.f32.mrb[0].mxu0
    %v9996 = vadd.f32 %v9955, %v9995
    %v9997 = vpop.f32.mrb[0].mxu0
    %v9998 = vpop.f32.mrb[0].mxu0
    %9999 = vdwg.mxu0
    %10000 = vmatprep.subr.bf16.mxu0 %v7543
    %10001 = vmatpush1.bf16.msra.mxu0 %v7542
    %10002 = vmatprep.subr.bf16.mxu0 %v7547
    %10003 = vmatpush1.bf16.msra.mxu0 %v7546
    %10004 = vmatprep.subr.bf16.mxu0 %v7551
    %10005 = vmatpush1.bf16.msra.mxu0 %v7550
    %10006 = vmatprep.subr.bf16.mxu0 %v7555
    %10007 = vmatpush1.bf16.msra.mxu0 %v7554
    %10008 = vmatprep.subr.bf16.mxu0 %v7559
    %10009 = vmatpush1.bf16.msra.mxu0 %v7558
    %10010 = vmatprep.subr.bf16.mxu0 %v7563
    %10011 = vmatpush1.bf16.msra.mxu0 %v7562
    %10012 = vmatprep.subr.bf16.mxu0 %v7567
    %10013 = vmatpush1.bf16.msra.mxu0 %v7566
    %10014 = vmatprep.subr.bf16.mxu0 %v7571
    %10015 = vmatpush1.bf16.msra.mxu0 %v7570
    %10016 = vmatprep.subr.bf16.mxu0 %v7575
    %10017 = vmatpush1.bf16.msra.mxu0 %v7574
    %10018 = vmatprep.subr.bf16.mxu0 %v7579
    %10019 = vmatpush1.bf16.msra.mxu0 %v7578
    %10020 = vmatprep.subr.bf16.mxu0 %v7583
    %10021 = vmatpush1.bf16.msra.mxu0 %v7582
    %10022 = vmatprep.subr.bf16.mxu0 %v7587
    %10023 = vmatpush1.bf16.msra.mxu0 %v7586
    %10024 = vmatprep.subr.bf16.mxu0 %v7591
    %10025 = vmatpush1.bf16.msra.mxu0 %v7590
    %10026 = vmatprep.subr.bf16.mxu0 %v7595
    %10027 = vmatpush1.bf16.msra.mxu0 %v7594
    %10028 = vmatprep.subr.bf16.mxu0 %v7599
    %10029 = vmatpush1.bf16.msra.mxu0 %v7598
    %10030 = vmatprep.subr.bf16.mxu0 %v7603
    %10031 = vmatpush1.bf16.msra.mxu0 %v7602
    %10032 = vmatprep.mubr.bf16.mxu0 %v3589
    %10033 = vmatmul.mubr.bf16.gmra.mrb[0].mxu0 %v3588
    %v10034 = vpop.f32.mrb[0].mxu0
    %v10035 = vadd.f32 %v9994, %v10034
    %v10036 = vpop.f32.mrb[0].mxu0
    %v10037 = vadd.f32 %v9996, %v10036
    %v10038 = vpop.f32.mrb[0].mxu0
    %v10039 = vpop.f32.mrb[0].mxu0
    %10040 = vdwg.mxu0
    %10041 = vmatprep.subr.bf16.mxu0 %v7607
    %10042 = vmatpush1.bf16.msra.mxu0 %v7606
    %10043 = vmatprep.subr.bf16.mxu0 %v7611
    %10044 = vmatpush1.bf16.msra.mxu0 %v7610
    %10045 = vmatprep.subr.bf16.mxu0 %v7615
    %10046 = vmatpush1.bf16.msra.mxu0 %v7614
    %10047 = vmatprep.subr.bf16.mxu0 %v7619
    %10048 = vmatpush1.bf16.msra.mxu0 %v7618
    %10049 = vmatprep.subr.bf16.mxu0 %v7623
    %10050 = vmatpush1.bf16.msra.mxu0 %v7622
    %10051 = vmatprep.subr.bf16.mxu0 %v7627
    %10052 = vmatpush1.bf16.msra.mxu0 %v7626
    %10053 = vmatprep.subr.bf16.mxu0 %v7631
    %10054 = vmatpush1.bf16.msra.mxu0 %v7630
    %10055 = vmatprep.subr.bf16.mxu0 %v7635
    %10056 = vmatpush1.bf16.msra.mxu0 %v7634
    %10057 = vmatprep.subr.bf16.mxu0 %v7639
    %10058 = vmatpush1.bf16.msra.mxu0 %v7638
    %10059 = vmatprep.subr.bf16.mxu0 %v7643
    %10060 = vmatpush1.bf16.msra.mxu0 %v7642
    %10061 = vmatprep.subr.bf16.mxu0 %v7647
    %10062 = vmatpush1.bf16.msra.mxu0 %v7646
    %10063 = vmatprep.subr.bf16.mxu0 %v7651
    %10064 = vmatpush1.bf16.msra.mxu0 %v7650
    %10065 = vmatprep.subr.bf16.mxu0 %v7655
    %10066 = vmatpush1.bf16.msra.mxu0 %v7654
    %10067 = vmatprep.subr.bf16.mxu0 %v7659
    %10068 = vmatpush1.bf16.msra.mxu0 %v7658
    %10069 = vmatprep.subr.bf16.mxu0 %v7663
    %10070 = vmatpush1.bf16.msra.mxu0 %v7662
    %10071 = vmatprep.subr.bf16.mxu0 %v7667
    %10072 = vmatpush1.bf16.msra.mxu0 %v7666
    %10073 = vmatprep.mubr.bf16.mxu0 %v3591
    %10074 = vmatmul.mubr.bf16.gmra.mrb[0].mxu0 %v3590
    %v10075 = vpop.f32.mrb[0].mxu0
    %v10076 = vadd.f32 %v10035, %v10075
    %v10077 = vpop.f32.mrb[0].mxu0
    %v10078 = vadd.f32 %v10037, %v10077
    %v10079 = vpop.f32.mrb[0].mxu0
    %v10080 = vpop.f32.mrb[0].mxu0
    %10081 = vdwg.mxu0
    %10082 = vmatprep.subr.bf16.mxu0 %v7671
    %10083 = vmatpush1.bf16.msra.mxu0 %v7670
    %10084 = vmatprep.subr.bf16.mxu0 %v7675
    %10085 = vmatpush1.bf16.msra.mxu0 %v7674
    %10086 = vmatprep.subr.bf16.mxu0 %v7679
    %10087 = vmatpush1.bf16.msra.mxu0 %v7678
    %10088 = vmatprep.subr.bf16.mxu0 %v7683
    %10089 = vmatpush1.bf16.msra.mxu0 %v7682
    %10090 = vmatprep.subr.bf16.mxu0 %v7687
    %10091 = vmatpush1.bf16.msra.mxu0 %v7686
    %10092 = vmatprep.subr.bf16.mxu0 %v7691
    %10093 = vmatpush1.bf16.msra.mxu0 %v7690
    %10094 = vmatprep.subr.bf16.mxu0 %v7695
    %10095 = vmatpush1.bf16.msra.mxu0 %v7694
    %10096 = vmatprep.subr.bf16.mxu0 %v7699
    %10097 = vmatpush1.bf16.msra.mxu0 %v7698
    %10098 = vmatprep.subr.bf16.mxu0 %v7703
    %10099 = vmatpush1.bf16.msra.mxu0 %v7702
    %10100 = vmatprep.subr.bf16.mxu0 %v7707
    %10101 = vmatpush1.bf16.msra.mxu0 %v7706
    %10102 = vmatprep.subr.bf16.mxu0 %v7711
    %10103 = vmatpush1.bf16.msra.mxu0 %v7710
    %10104 = vmatprep.subr.bf16.mxu0 %v7715
    %10105 = vmatpush1.bf16.msra.mxu0 %v7714
    %10106 = vmatprep.subr.bf16.mxu0 %v7719
    %10107 = vmatpush1.bf16.msra.mxu0 %v7718
    %10108 = vmatprep.subr.bf16.mxu0 %v7723
    %10109 = vmatpush1.bf16.msra.mxu0 %v7722
    %10110 = vmatprep.subr.bf16.mxu0 %v7727
    %10111 = vmatpush1.bf16.msra.mxu0 %v7726
    %10112 = vmatprep.subr.bf16.mxu0 %v7731
    %10113 = vmatpush1.bf16.msra.mxu0 %v7730
    %10114 = vmatprep.mubr.bf16.mxu0 %v3593
    %10115 = vmatmul.mubr.bf16.gmra.mrb[0].mxu0 %v3592
    %v10116 = vpop.f32.mrb[0].mxu0
    %v10117 = vadd.f32 %v10076, %v10116
    %v10118 = vpop.f32.mrb[0].mxu0
    %v10119 = vadd.f32 %v10078, %v10118
    %v10120 = vpop.f32.mrb[0].mxu0
    %v10121 = vpop.f32.mrb[0].mxu0
    %10122 = vdwg.mxu0
    %10123 = vmatprep.subr.bf16.mxu0 %v7735
    %10124 = vmatpush1.bf16.msra.mxu0 %v7734
    %10125 = vmatprep.subr.bf16.mxu0 %v7739
    %10126 = vmatpush1.bf16.msra.mxu0 %v7738
    %10127 = vmatprep.subr.bf16.mxu0 %v7743
    %10128 = vmatpush1.bf16.msra.mxu0 %v7742
    %10129 = vmatprep.subr.bf16.mxu0 %v7747
    %10130 = vmatpush1.bf16.msra.mxu0 %v7746
    %10131 = vmatprep.subr.bf16.mxu0 %v7751
    %10132 = vmatpush1.bf16.msra.mxu0 %v7750
    %10133 = vmatprep.subr.bf16.mxu0 %v7755
    %10134 = vmatpush1.bf16.msra.mxu0 %v7754
    %10135 = vmatprep.subr.bf16.mxu0 %v7759
    %10136 = vmatpush1.bf16.msra.mxu0 %v7758
    %10137 = vmatprep.subr.bf16.mxu0 %v7763
    %10138 = vmatpush1.bf16.msra.mxu0 %v7762
    %10139 = vmatprep.subr.bf16.mxu0 %v7767
    %10140 = vmatpush1.bf16.msra.mxu0 %v7766
    %10141 = vmatprep.subr.bf16.mxu0 %v7771
    %10142 = vmatpush1.bf16.msra.mxu0 %v7770
    %10143 = vmatprep.subr.bf16.mxu0 %v7775
    %10144 = vmatpush1.bf16.msra.mxu0 %v7774
    %10145 = vmatprep.subr.bf16.mxu0 %v7779
    %10146 = vmatpush1.bf16.msra.mxu0 %v7778
    %10147 = vmatprep.subr.bf16.mxu0 %v7783
    %10148 = vmatpush1.bf16.msra.mxu0 %v7782
    %10149 = vmatprep.subr.bf16.mxu0 %v7787
    %10150 = vmatpush1.bf16.msra.mxu0 %v7786
    %10151 = vmatprep.subr.bf16.mxu0 %v7791
    %10152 = vmatpush1.bf16.msra.mxu0 %v7790
    %10153 = vmatprep.subr.bf16.mxu0 %v7795
    %10154 = vmatpush1.bf16.msra.mxu0 %v7794
    %10155 = vmatprep.mubr.bf16.mxu0 %v3595
    %10156 = vmatmul.mubr.bf16.gmra.mrb[0].mxu0 %v3594
    %v10157 = vpop.f32.mrb[0].mxu0
    %v10158 = vadd.f32 %v10117, %v10157
    %v10159 = vpop.f32.mrb[0].mxu0
    %v10160 = vadd.f32 %v10119, %v10159
    %v10161 = vpop.f32.mrb[0].mxu0
    %v10162 = vpop.f32.mrb[0].mxu0
    %10163 = vdwg.mxu0
    %10164 = vmatprep.subr.bf16.mxu0 %v7799
    %10165 = vmatpush1.bf16.msra.mxu0 %v7798
    %10166 = vmatprep.subr.bf16.mxu0 %v7803
    %10167 = vmatpush1.bf16.msra.mxu0 %v7802
    %10168 = vmatprep.subr.bf16.mxu0 %v7807
    %10169 = vmatpush1.bf16.msra.mxu0 %v7806
    %10170 = vmatprep.subr.bf16.mxu0 %v7811
    %10171 = vmatpush1.bf16.msra.mxu0 %v7810
    %10172 = vmatprep.subr.bf16.mxu0 %v7815
    %10173 = vmatpush1.bf16.msra.mxu0 %v7814
    %10174 = vmatprep.subr.bf16.mxu0 %v7819
    %10175 = vmatpush1.bf16.msra.mxu0 %v7818
    %10176 = vmatprep.subr.bf16.mxu0 %v7823
    %10177 = vmatpush1.bf16.msra.mxu0 %v7822
    %10178 = vmatprep.subr.bf16.mxu0 %v7827
    %10179 = vmatpush1.bf16.msra.mxu0 %v7826
    %10180 = vmatprep.subr.bf16.mxu0 %v7831
    %10181 = vmatpush1.bf16.msra.mxu0 %v7830
    %10182 = vmatprep.subr.bf16.mxu0 %v7835
    %10183 = vmatpush1.bf16.msra.mxu0 %v7834
    %10184 = vmatprep.subr.bf16.mxu0 %v7839
    %10185 = vmatpush1.bf16.msra.mxu0 %v7838
    %10186 = vmatprep.subr.bf16.mxu0 %v7843
    %10187 = vmatpush1.bf16.msra.mxu0 %v7842
    %10188 = vmatprep.subr.bf16.mxu0 %v7847
    %10189 = vmatpush1.bf16.msra.mxu0 %v7846
    %10190 = vmatprep.subr.bf16.mxu0 %v7851
    %10191 = vmatpush1.bf16.msra.mxu0 %v7850
    %10192 = vmatprep.subr.bf16.mxu0 %v7855
    %10193 = vmatpush1.bf16.msra.mxu0 %v7854
    %10194 = vmatprep.subr.bf16.mxu0 %v7859
    %10195 = vmatpush1.bf16.msra.mxu0 %v7858
    %10196 = vmatprep.mubr.bf16.mxu0 %v3597
    %10197 = vmatmul.mubr.bf16.gmra.mrb[0].mxu0 %v3596
    %v10198 = vpop.f32.mrb[0].mxu0
    %v10199 = vadd.f32 %v10158, %v10198
    %v10200 = vpop.f32.mrb[0].mxu0
    %v10201 = vadd.f32 %v10160, %v10200
    %v10202 = vpop.f32.mrb[0].mxu0
    %v10203 = vpop.f32.mrb[0].mxu0
    %10204 = vdwg.mxu0
    %10205 = vmatprep.subr.bf16.mxu0 %v7863
    %10206 = vmatpush1.bf16.msra.mxu0 %v7862
    %10207 = vmatprep.subr.bf16.mxu0 %v7867
    %10208 = vmatpush1.bf16.msra.mxu0 %v7866
    %10209 = vmatprep.subr.bf16.mxu0 %v7871
    %10210 = vmatpush1.bf16.msra.mxu0 %v7870
    %10211 = vmatprep.subr.bf16.mxu0 %v7875
    %10212 = vmatpush1.bf16.msra.mxu0 %v7874
    %10213 = vmatprep.subr.bf16.mxu0 %v7879
    %10214 = vmatpush1.bf16.msra.mxu0 %v7878
    %10215 = vmatprep.subr.bf16.mxu0 %v7883
    %10216 = vmatpush1.bf16.msra.mxu0 %v7882
    %10217 = vmatprep.subr.bf16.mxu0 %v7887
    %10218 = vmatpush1.bf16.msra.mxu0 %v7886
    %10219 = vmatprep.subr.bf16.mxu0 %v7891
    %10220 = vmatpush1.bf16.msra.mxu0 %v7890
    %10221 = vmatprep.subr.bf16.mxu0 %v7895
    %10222 = vmatpush1.bf16.msra.mxu0 %v7894
    %10223 = vmatprep.subr.bf16.mxu0 %v7899
    %10224 = vmatpush1.bf16.msra.mxu0 %v7898
    %10225 = vmatprep.subr.bf16.mxu0 %v7903
    %10226 = vmatpush1.bf16.msra.mxu0 %v7902
    %10227 = vmatprep.subr.bf16.mxu0 %v7907
    %10228 = vmatpush1.bf16.msra.mxu0 %v7906
    %10229 = vmatprep.subr.bf16.mxu0 %v7911
    %10230 = vmatpush1.bf16.msra.mxu0 %v7910
    %10231 = vmatprep.subr.bf16.mxu0 %v7915
    %10232 = vmatpush1.bf16.msra.mxu0 %v7914
    %10233 = vmatprep.subr.bf16.mxu0 %v7919
    %10234 = vmatpush1.bf16.msra.mxu0 %v7918
    %10235 = vmatprep.subr.bf16.mxu0 %v7923
    %10236 = vmatpush1.bf16.msra.mxu0 %v7922
    %10237 = vmatprep.mubr.bf16.mxu0 %v3599
    %10238 = vmatmul.mubr.bf16.gmra.mrb[0].mxu0 %v3598
    %v10239 = vpop.f32.mrb[0].mxu0
    %v10240 = vadd.f32 %v10199, %v10239
    %v10241 = vpop.f32.mrb[0].mxu0
    %v10242 = vadd.f32 %v10201, %v10241
    %v10243 = vpop.f32.mrb[0].mxu0
    %v10244 = vpop.f32.mrb[0].mxu0
    %10245 = vdwg.mxu0
    %10246 = vmatprep.subr.bf16.mxu0 %v7927
    %10247 = vmatpush1.bf16.msra.mxu0 %v7926
    %10248 = vmatprep.subr.bf16.mxu0 %v7931
    %10249 = vmatpush1.bf16.msra.mxu0 %v7930
    %10250 = vmatprep.subr.bf16.mxu0 %v7935
    %10251 = vmatpush1.bf16.msra.mxu0 %v7934
    %10252 = vmatprep.subr.bf16.mxu0 %v7939
    %10253 = vmatpush1.bf16.msra.mxu0 %v7938
    %10254 = vmatprep.subr.bf16.mxu0 %v7943
    %10255 = vmatpush1.bf16.msra.mxu0 %v7942
    %10256 = vmatprep.subr.bf16.mxu0 %v7947
    %10257 = vmatpush1.bf16.msra.mxu0 %v7946
    %10258 = vmatprep.subr.bf16.mxu0 %v7951
    %10259 = vmatpush1.bf16.msra.mxu0 %v7950
    %10260 = vmatprep.subr.bf16.mxu0 %v7955
    %10261 = vmatpush1.bf16.msra.mxu0 %v7954
    %10262 = vmatprep.subr.bf16.mxu0 %v7959
    %10263 = vmatpush1.bf16.msra.mxu0 %v7958
    %10264 = vmatprep.subr.bf16.mxu0 %v7963
    %10265 = vmatpush1.bf16.msra.mxu0 %v7962
    %10266 = vmatprep.subr.bf16.mxu0 %v7967
    %10267 = vmatpush1.bf16.msra.mxu0 %v7966
    %10268 = vmatprep.subr.bf16.mxu0 %v7971
    %10269 = vmatpush1.bf16.msra.mxu0 %v7970
    %10270 = vmatprep.subr.bf16.mxu0 %v7975
    %10271 = vmatpush1.bf16.msra.mxu0 %v7974
    %10272 = vmatprep.subr.bf16.mxu0 %v7979
    %10273 = vmatpush1.bf16.msra.mxu0 %v7978
    %10274 = vmatprep.subr.bf16.mxu0 %v7983
    %10275 = vmatpush1.bf16.msra.mxu0 %v7982
    %10276 = vmatprep.subr.bf16.mxu0 %v7987
    %10277 = vmatpush1.bf16.msra.mxu0 %v7986
    %10278 = vmatprep.mubr.bf16.mxu0 %v3601
    %10279 = vmatmul.mubr.bf16.gmra.mrb[0].mxu0 %v3600
    %v10280 = vpop.f32.mrb[0].mxu0
    %v10281 = vadd.f32 %v10240, %v10280
    %v10282 = vpop.f32.mrb[0].mxu0
    %v10283 = vadd.f32 %v10242, %v10282
    %v10284 = vpop.f32.mrb[0].mxu0
    %v10285 = vpop.f32.mrb[0].mxu0
    %10286 = vdwg.mxu0
    %10287 = vmatprep.subr.bf16.mxu0 %v7991
    %10288 = vmatpush1.bf16.msra.mxu0 %v7990
    %10289 = vmatprep.subr.bf16.mxu0 %v7995
    %10290 = vmatpush1.bf16.msra.mxu0 %v7994
    %10291 = vmatprep.subr.bf16.mxu0 %v7999
    %10292 = vmatpush1.bf16.msra.mxu0 %v7998
    %10293 = vmatprep.subr.bf16.mxu0 %v8003
    %10294 = vmatpush1.bf16.msra.mxu0 %v8002
    %10295 = vmatprep.subr.bf16.mxu0 %v8007
    %10296 = vmatpush1.bf16.msra.mxu0 %v8006
    %10297 = vmatprep.subr.bf16.mxu0 %v8011
    %10298 = vmatpush1.bf16.msra.mxu0 %v8010
    %10299 = vmatprep.subr.bf16.mxu0 %v8015
    %10300 = vmatpush1.bf16.msra.mxu0 %v8014
    %10301 = vmatprep.subr.bf16.mxu0 %v8019
    %10302 = vmatpush1.bf16.msra.mxu0 %v8018
    %10303 = vmatprep.subr.bf16.mxu0 %v8023
    %10304 = vmatpush1.bf16.msra.mxu0 %v8022
    %10305 = vmatprep.subr.bf16.mxu0 %v8027
    %10306 = vmatpush1.bf16.msra.mxu0 %v8026
    %10307 = vmatprep.subr.bf16.mxu0 %v8031
    %10308 = vmatpush1.bf16.msra.mxu0 %v8030
    %10309 = vmatprep.subr.bf16.mxu0 %v8035
    %10310 = vmatpush1.bf16.msra.mxu0 %v8034
    %10311 = vmatprep.subr.bf16.mxu0 %v8039
    %10312 = vmatpush1.bf16.msra.mxu0 %v8038
    %10313 = vmatprep.subr.bf16.mxu0 %v8043
    %10314 = vmatpush1.bf16.msra.mxu0 %v8042
    %10315 = vmatprep.subr.bf16.mxu0 %v8047
    %10316 = vmatpush1.bf16.msra.mxu0 %v8046
    %10317 = vmatprep.subr.bf16.mxu0 %v8051
    %10318 = vmatpush1.bf16.msra.mxu0 %v8050
    %10319 = vmatprep.mubr.bf16.mxu0 %v3603
    %10320 = vmatmul.mubr.bf16.gmra.mrb[0].mxu0 %v3602
    %v10321 = vpop.f32.mrb[0].mxu0
    %v10322 = vadd.f32 %v10281, %v10321
    %v10323 = vpop.f32.mrb[0].mxu0
    %v10324 = vadd.f32 %v10283, %v10323
    %v10325 = vpop.f32.mrb[0].mxu0
    %v10326 = vpop.f32.mrb[0].mxu0
    %10327 = vdwg.mxu0
    %10328 = vmatprep.subr.bf16.mxu0 %v8055
    %10329 = vmatpush1.bf16.msra.mxu0 %v8054
    %10330 = vmatprep.subr.bf16.mxu0 %v8059
    %10331 = vmatpush1.bf16.msra.mxu0 %v8058
    %10332 = vmatprep.subr.bf16.mxu0 %v8063
    %10333 = vmatpush1.bf16.msra.mxu0 %v8062
    %10334 = vmatprep.subr.bf16.mxu0 %v8067
    %10335 = vmatpush1.bf16.msra.mxu0 %v8066
    %10336 = vmatprep.subr.bf16.mxu0 %v8071
    %10337 = vmatpush1.bf16.msra.mxu0 %v8070
    %10338 = vmatprep.subr.bf16.mxu0 %v8075
    %10339 = vmatpush1.bf16.msra.mxu0 %v8074
    %10340 = vmatprep.subr.bf16.mxu0 %v8079
    %10341 = vmatpush1.bf16.msra.mxu0 %v8078
    %10342 = vmatprep.subr.bf16.mxu0 %v8083
    %10343 = vmatpush1.bf16.msra.mxu0 %v8082
    %10344 = vmatprep.subr.bf16.mxu0 %v8087
    %10345 = vmatpush1.bf16.msra.mxu0 %v8086
    %10346 = vmatprep.subr.bf16.mxu0 %v8091
    %10347 = vmatpush1.bf16.msra.mxu0 %v8090
    %10348 = vmatprep.subr.bf16.mxu0 %v8095
    %10349 = vmatpush1.bf16.msra.mxu0 %v8094
    %10350 = vmatprep.subr.bf16.mxu0 %v8099
    %10351 = vmatpush1.bf16.msra.mxu0 %v8098
    %10352 = vmatprep.subr.bf16.mxu0 %v8103
    %10353 = vmatpush1.bf16.msra.mxu0 %v8102
    %10354 = vmatprep.subr.bf16.mxu0 %v8107
    %10355 = vmatpush1.bf16.msra.mxu0 %v8106
    %10356 = vmatprep.subr.bf16.mxu0 %v8111
    %10357 = vmatpush1.bf16.msra.mxu0 %v8110
    %10358 = vmatprep.subr.bf16.mxu0 %v8115
    %10359 = vmatpush1.bf16.msra.mxu0 %v8114
    %10360 = vmatprep.mubr.bf16.mxu0 %v3605
    %10361 = vmatmul.mubr.bf16.gmra.mrb[0].mxu0 %v3604
    %v10362 = vpop.f32.mrb[0].mxu0
    %v10363 = vadd.f32 %v10322, %v10362
    %v10364 = vpop.f32.mrb[0].mxu0
    %v10365 = vadd.f32 %v10324, %v10364
    %v10366 = vpop.f32.mrb[0].mxu0
    %v10367 = vpop.f32.mrb[0].mxu0
    %10368 = vdwg.mxu0
    %10369 = vmatprep.subr.bf16.mxu0 %v8119
    %10370 = vmatpush1.bf16.msra.mxu0 %v8118
    %10371 = vmatprep.subr.bf16.mxu0 %v8123
    %10372 = vmatpush1.bf16.msra.mxu0 %v8122
    %10373 = vmatprep.subr.bf16.mxu0 %v8127
    %10374 = vmatpush1.bf16.msra.mxu0 %v8126
    %10375 = vmatprep.subr.bf16.mxu0 %v8131
    %10376 = vmatpush1.bf16.msra.mxu0 %v8130
    %10377 = vmatprep.subr.bf16.mxu0 %v8135
    %10378 = vmatpush1.bf16.msra.mxu0 %v8134
    %10379 = vmatprep.subr.bf16.mxu0 %v8139
    %10380 = vmatpush1.bf16.msra.mxu0 %v8138
    %10381 = vmatprep.subr.bf16.mxu0 %v8143
    %10382 = vmatpush1.bf16.msra.mxu0 %v8142
    %10383 = vmatprep.subr.bf16.mxu0 %v8147
    %10384 = vmatpush1.bf16.msra.mxu0 %v8146
    %10385 = vmatprep.subr.bf16.mxu0 %v8151
    %10386 = vmatpush1.bf16.msra.mxu0 %v8150
    %10387 = vmatprep.subr.bf16.mxu0 %v8155
    %10388 = vmatpush1.bf16.msra.mxu0 %v8154
    %10389 = vmatprep.subr.bf16.mxu0 %v8159
    %10390 = vmatpush1.bf16.msra.mxu0 %v8158
    %10391 = vmatprep.subr.bf16.mxu0 %v8163
    %10392 = vmatpush1.bf16.msra.mxu0 %v8162
    %10393 = vmatprep.subr.bf16.mxu0 %v8167
    %10394 = vmatpush1.bf16.msra.mxu0 %v8166
    %10395 = vmatprep.subr.bf16.mxu0 %v8171
    %10396 = vmatpush1.bf16.msra.mxu0 %v8170
    %10397 = vmatprep.subr.bf16.mxu0 %v8175
    %10398 = vmatpush1.bf16.msra.mxu0 %v8174
    %10399 = vmatprep.subr.bf16.mxu0 %v8179
    %10400 = vmatpush1.bf16.msra.mxu0 %v8178
    %10401 = vmatprep.mubr.bf16.mxu0 %v3607
    %10402 = vmatmul.mubr.bf16.gmra.mrb[0].mxu0 %v3606
    %v10403 = vpop.f32.mrb[0].mxu0
    %v10404 = vadd.f32 %v10363, %v10403
    %v10405 = vpop.f32.mrb[0].mxu0
    %v10406 = vadd.f32 %v10365, %v10405
    %v10407 = vpop.f32.mrb[0].mxu0
    %v10408 = vpop.f32.mrb[0].mxu0
    %10409 = vdwg.mxu0
    %10410 = vmatprep.subr.bf16.mxu0 %v8183
    %10411 = vmatpush1.bf16.msra.mxu0 %v8182
    %10412 = vmatprep.subr.bf16.mxu0 %v8187
    %10413 = vmatpush1.bf16.msra.mxu0 %v8186
    %10414 = vmatprep.subr.bf16.mxu0 %v8191
    %10415 = vmatpush1.bf16.msra.mxu0 %v8190
    %10416 = vmatprep.subr.bf16.mxu0 %v8195
    %10417 = vmatpush1.bf16.msra.mxu0 %v8194
    %10418 = vmatprep.subr.bf16.mxu0 %v8199
    %10419 = vmatpush1.bf16.msra.mxu0 %v8198
    %10420 = vmatprep.subr.bf16.mxu0 %v8203
    %10421 = vmatpush1.bf16.msra.mxu0 %v8202
    %10422 = vmatprep.subr.bf16.mxu0 %v8207
    %10423 = vmatpush1.bf16.msra.mxu0 %v8206
    %10424 = vmatprep.subr.bf16.mxu0 %v8211
    %10425 = vmatpush1.bf16.msra.mxu0 %v8210
    %10426 = vmatprep.subr.bf16.mxu0 %v8215
    %10427 = vmatpush1.bf16.msra.mxu0 %v8214
    %10428 = vmatprep.subr.bf16.mxu0 %v8219
    %10429 = vmatpush1.bf16.msra.mxu0 %v8218
    %10430 = vmatprep.subr.bf16.mxu0 %v8223
    %10431 = vmatpush1.bf16.msra.mxu0 %v8222
    %10432 = vmatprep.subr.bf16.mxu0 %v8227
    %10433 = vmatpush1.bf16.msra.mxu0 %v8226
    %10434 = vmatprep.subr.bf16.mxu0 %v8231
    %10435 = vmatpush1.bf16.msra.mxu0 %v8230
    %10436 = vmatprep.subr.bf16.mxu0 %v8235
    %10437 = vmatpush1.bf16.msra.mxu0 %v8234
    %10438 = vmatprep.subr.bf16.mxu0 %v8239
    %10439 = vmatpush1.bf16.msra.mxu0 %v8238
    %10440 = vmatprep.subr.bf16.mxu0 %v8243
    %10441 = vmatpush1.bf16.msra.mxu0 %v8242
    %10442 = vmatprep.mubr.bf16.mxu0 %v3609
    %10443 = vmatmul.mubr.bf16.gmra.mrb[0].mxu0 %v3608
    %v10444 = vpop.f32.mrb[0].mxu0
    %v10445 = vadd.f32 %v10404, %v10444
    %v10446 = vpop.f32.mrb[0].mxu0
    %v10447 = vadd.f32 %v10406, %v10446
    %v10448 = vpop.f32.mrb[0].mxu0
    %v10449 = vpop.f32.mrb[0].mxu0
    %10450 = vdwg.mxu0
    %10451 = vmatprep.subr.bf16.mxu0 %v8247
    %10452 = vmatpush1.bf16.msra.mxu0 %v8246
    %10453 = vmatprep.subr.bf16.mxu0 %v8251
    %10454 = vmatpush1.bf16.msra.mxu0 %v8250
    %10455 = vmatprep.subr.bf16.mxu0 %v8255
    %10456 = vmatpush1.bf16.msra.mxu0 %v8254
    %10457 = vmatprep.subr.bf16.mxu0 %v8259
    %10458 = vmatpush1.bf16.msra.mxu0 %v8258
    %10459 = vmatprep.subr.bf16.mxu0 %v8263
    %10460 = vmatpush1.bf16.msra.mxu0 %v8262
    %10461 = vmatprep.subr.bf16.mxu0 %v8267
    %10462 = vmatpush1.bf16.msra.mxu0 %v8266
    %10463 = vmatprep.subr.bf16.mxu0 %v8271
    %10464 = vmatpush1.bf16.msra.mxu0 %v8270
    %10465 = vmatprep.subr.bf16.mxu0 %v8275
    %10466 = vmatpush1.bf16.msra.mxu0 %v8274
    %10467 = vmatprep.subr.bf16.mxu0 %v8279
    %10468 = vmatpush1.bf16.msra.mxu0 %v8278
    %10469 = vmatprep.subr.bf16.mxu0 %v8283
    %10470 = vmatpush1.bf16.msra.mxu0 %v8282
    %10471 = vmatprep.subr.bf16.mxu0 %v8287
    %10472 = vmatpush1.bf16.msra.mxu0 %v8286
    %10473 = vmatprep.subr.bf16.mxu0 %v8291
    %10474 = vmatpush1.bf16.msra.mxu0 %v8290
    %10475 = vmatprep.subr.bf16.mxu0 %v8295
    %10476 = vmatpush1.bf16.msra.mxu0 %v8294
    %10477 = vmatprep.subr.bf16.mxu0 %v8299
    %10478 = vmatpush1.bf16.msra.mxu0 %v8298
    %10479 = vmatprep.subr.bf16.mxu0 %v8303
    %10480 = vmatpush1.bf16.msra.mxu0 %v8302
    %10481 = vmatprep.subr.bf16.mxu0 %v8307
    %10482 = vmatpush1.bf16.msra.mxu0 %v8306
    %10483 = vmatprep.mubr.bf16.mxu0 %v3611
    %10484 = vmatmul.mubr.bf16.gmra.mrb[0].mxu0 %v3610
    %v10485 = vpop.f32.mrb[0].mxu0
    %v10486 = vadd.f32 %v10445, %v10485
    %v10487 = vpop.f32.mrb[0].mxu0
    %v10488 = vadd.f32 %v10447, %v10487
    %v10489 = vpop.f32.mrb[0].mxu0
    %v10490 = vpop.f32.mrb[0].mxu0
    %10491 = vdwg.mxu0
    %10492 = vmatprep.subr.bf16.mxu0 %v8311
    %10493 = vmatpush1.bf16.msra.mxu0 %v8310
    %10494 = vmatprep.subr.bf16.mxu0 %v8315
    %10495 = vmatpush1.bf16.msra.mxu0 %v8314
    %10496 = vmatprep.subr.bf16.mxu0 %v8319
    %10497 = vmatpush1.bf16.msra.mxu0 %v8318
    %10498 = vmatprep.subr.bf16.mxu0 %v8323
    %10499 = vmatpush1.bf16.msra.mxu0 %v8322
    %10500 = vmatprep.subr.bf16.mxu0 %v8327
    %10501 = vmatpush1.bf16.msra.mxu0 %v8326
    %10502 = vmatprep.subr.bf16.mxu0 %v8331
    %10503 = vmatpush1.bf16.msra.mxu0 %v8330
    %10504 = vmatprep.subr.bf16.mxu0 %v8335
    %10505 = vmatpush1.bf16.msra.mxu0 %v8334
    %10506 = vmatprep.subr.bf16.mxu0 %v8339
    %10507 = vmatpush1.bf16.msra.mxu0 %v8338
    %10508 = vmatprep.subr.bf16.mxu0 %v8343
    %10509 = vmatpush1.bf16.msra.mxu0 %v8342
    %10510 = vmatprep.subr.bf16.mxu0 %v8347
    %10511 = vmatpush1.bf16.msra.mxu0 %v8346
    %10512 = vmatprep.subr.bf16.mxu0 %v8351
    %10513 = vmatpush1.bf16.msra.mxu0 %v8350
    %10514 = vmatprep.subr.bf16.mxu0 %v8355
    %10515 = vmatpush1.bf16.msra.mxu0 %v8354
    %10516 = vmatprep.subr.bf16.mxu0 0
    %10517 = vmatpush1.bf16.msra.mxu0 0
    %10518 = vmatprep.subr.bf16.mxu0 0
    %10519 = vmatpush1.bf16.msra.mxu0 0
    %10520 = vmatprep.subr.bf16.mxu0 0
    %10521 = vmatpush1.bf16.msra.mxu0 0
    %10522 = vmatprep.subr.bf16.mxu0 0
    %10523 = vmatpush1.bf16.msra.mxu0 0
    %10524 = vmatprep.mubr.bf16.mxu0 %v9301
    %10525 = vmatmul.mubr.bf16.gmra.mrb[0].mxu0 %v3612
    %v10526 = vpop.f32.mrb[0].mxu0
    %v10527 = vadd.f32 %v10486, %v10526
    %v10528 = vpop.f32.mrb[0].mxu0
    %v10529 = vadd.f32 %v10488, %v10528
    %v10530 = vpop.f32.mrb[0].mxu0
    %v10531 = vpop.f32.mrb[0].mxu0
    %10532 = vdwg.mxu0
    %v10533 = vmax.f32 %v9912, 0.0
    %v10534 = vmax.f32 %v9914, 0.0
    %v10535 = vmax.f32 %v10527, 0.0
    %v10536 = vmax.f32 %v10529, 0.0
    %v10541 = vcombine.low %v10533, %v10534
    %v10542 = vcombine.low %v10535, %v10536
    %v10544 = vunpack.c.l.s4 1983009808
    %v10545 = vunpack.c.0.s8 %v10544
    %v10546 = vlaneseq
    %v10547 = vshrl.u32 %v10546, 7
    %v10548 = vsub.s32 %v10545, %v10547
    %v10549 = vrot.slane %v10541, %v10548
    %v10551 = vunpack.c.l.s4 1983009808
    %v10552 = vunpack.c.0.s8 %v10551
    %v10553 = vlaneseq
    %v10554 = vshrl.u32 %v10553, 7
    %v10555 = vsub.s32 %v10552, %v10554
    %v10556 = vrot.slane %v10542, %v10555
    %v10557 = vcombine.low %v10549, %v10556
    %10559 = vst [vmem:[#allocation15] sm:$0xff] %v10557
    // Predicated region
    $region54: #{actor_cnn_forward.1} parent=1 // pred_check
      _
    $region55: #{actor_cnn_forward.1} parent=1 // pred_check_branch
      %10561 = sbr.rel (0) target = $region57
    $region56: #{actor_cnn_forward.1} parent=1 // pred_region
      %s10563 = ssub.s32 128, 128
      %10564 = vsyncadd [#allocation6], %s10563
      %s10566 = sshll.u32 [#allocation15], 4
      %s10567 = int_to_ptr.vmem [resolvable:$true] %s10566
      %10569 = dma.vmem_to_hbm [thread:$0]  %s10567, 128, %s7, [#allocation6]
    $region57: #{actor_cnn_forward.1} parent=1 // pred_fallthru
      _
    // Predicated region
    $region58: #{actor_cnn_forward.1} parent=1 // pred_check
      _
    $region59: #{actor_cnn_forward.1} parent=1 // pred_check_branch
      %10571 = sbr.rel (0) target = $region61
    $region60: #{actor_cnn_forward.1} parent=1 // pred_region
      %10572 = dma.done [#allocation6], 128
    $region61: #{actor_cnn_forward.1} parent=1 // pred_fallthru
      _
    %10573 = vsyncpa [#allocation5], 1
    %10574 = vsyncpa [#allocation8], 1
    %10575 = vsyncpa [#allocation11], 1
    %10576 = vsyncpa [#allocation14], 1
    %10577 = vsyncpa [#allocation6], 1

</llo_original>
